<compile_context>
chip_gen: v7x
topology: tpu7x:2x2x1
jax: 0.10.0
libtpu: 0.0.40
codegen_flags: <defaults>
</compile_context>

<pallas_src>
import functools

import jax
import jax.numpy as jnp
from jax import lax
from jax.experimental import pallas as pl
from jax.experimental.pallas import tpu as pltpu


# ----------------------------------------------------------------------------
# TaenzerLRLCBlock hyper-parameters
# (rank=2, in_channels=4, out_channels=8, in_shape=(16,16), lcw=False,
#  local_dim=None, dropout=0)
# ----------------------------------------------------------------------------
BATCH = 2
IN_CHANNELS = 4
OUT_CHANNELS = 8
IN_SHAPE = (16, 16)
RANK = 2
KSIZE = 3            # LowRankLocallyConnected kernel size
PAD = 2              # LowRankLocallyConnected padding (each layer grows H,W by 2)
POOL = 3             # nn.MaxPool2d(3, 3)
BN_EPS = 1e-5
MARGIN = 2 * PAD     # zero margin of the shared flat grid (covers both LRLC layers)


# ----------------------------------------------------------------------------
# The single fused Pallas kernel
# ----------------------------------------------------------------------------
def _taenzer_lrlc_block_kernel(x_ref, w1_ref, b1_ref, cw1_ref,
                               w2_ref, b2_ref, cw2_ref, o_ref, pool_ref, *,
                               nb, cout, rank, wg, ksize, pool, n_pool, g):
    """Fully fused TaenzerLRLCBlock forward on VMEM-resident data.

    All activations live on a flattened, zero-margined grid of shape
    [nb * hg * wg, channels] (row-major over (n, grid_i, grid_j)); every conv /
    pool tap is a constant-offset slice, and the 9 conv taps of each layer are
    lane-concatenated into one im2col patch matrix feeding a single MXU dot.
    """
    f32 = jnp.float32
    m = nb * g                               # flat grid rows in this block
    span = (ksize - 1) * wg + (ksize - 1)
    m1 = m - span                            # rows carrying LRLC1 outputs
    m2 = m1 - span                           # rows carrying LRLC2 outputs
    pspan = (pool - 1) * wg + (pool - 1)
    mp = m2 - pspan                          # rows carrying 3x3 window maxima

    def lrlc(src, w_ref, rows):
        # One matmul per layer: build [rows, 9*C] im2col patch in two lane
        # concats, then a single K=9*C dot against the [9*C, rank*cout] slab.
        l1 = rows + (ksize - 1) * wg
        # fold the dj (column) taps into lanes: the only 2 misaligned sublane
        # shifts of the whole layer (dj = 1, 2).
        src3 = jnp.concatenate([src[dj:dj + l1, :] for dj in range(ksize)],
                               axis=-1)                       # [l1, 3*C]
        # fold the di (row) taps: di*wg offsets are 8-aligned (wg % 8 == 0).
        patch = jnp.concatenate(
            [src3[di * wg:di * wg + rows, :] for di in range(ksize)],
            axis=-1)                                          # [rows, 9*C]
        return jnp.dot(patch, w_ref[...], preferred_element_type=f32)

    def combine(y, cw_ref, b_ref, rows, zero_margin):
        # Per-location rank combination + bias (BN pre-folded) + ReLU.
        # cw_ref holds lane-expanded weights [m, rank*cout] (col = r*cout+co),
        # already tiled over batch in the wrapper -> pure VPU work here.
        cw = cw_ref[0:rows, :]
        out = y[:, 0:cout] * cw[:, 0:cout]
        for r in range(1, rank):
            out = out + y[:, r * cout:(r + 1) * cout] * cw[:, r * cout:(r + 1) * cout]
        out = jnp.maximum(out + b_ref[...], 0.0)
        if zero_margin:
            # sum over rank of the (softmax) weights is 1 on valid output
            # sites and 0 on the grid margin -> zeroes the margin, which then
            # serves as the next layer's zero padding.
            mask = cw[:, 0:cout]
            for r in range(1, rank):
                mask = mask + cw[:, r * cout:(r + 1) * cout]
            out = out * mask
        return out

    # ---- LRLC1 + BN1 (folded) + ReLU --------------------------------------
    a1 = combine(lrlc(x_ref[...], w1_ref, m1), cw1_ref, b1_ref, m1, True)

    # ---- LRLC2 + BN2 (folded) + ReLU --------------------------------------
    a2 = combine(lrlc(a1, w2_ref, m2), cw2_ref, b2_ref, m2, False)

    # ---- MaxPool2d(3, 3): window maxima via constant-offset slices --------
    lp = mp + (pool - 1) * wg
    colmax = a2[0:lp, :]
    for pb in range(1, pool):                # column taps (2 misaligned shifts)
        colmax = jnp.maximum(colmax, a2[pb:pb + lp, :])
    pooled = colmax[0:mp, :]
    for pa in range(1, pool):                # row taps (aligned, pa*wg % 8 == 0)
        pooled = jnp.maximum(pooled, colmax[pa * wg:pa * wg + mp, :])
    pool_ref[...] = pooled                   # stage once in VMEM scratch

    # ---- stride-3 subsample: strided loads + block stores ------------------
    # (nb*n_pool strided pl.ds loads + block stores instead of 72 single-row
    #  extracts + masked 1x8 stores.)
    for n in range(nb):
        for pi in range(n_pool):
            vals = pool_ref[pl.ds(n * g + pool * pi * wg, n_pool, stride=pool), :]
            o_ref[n, pl.ds(pi * n_pool, n_pool), :] = vals


# ----------------------------------------------------------------------------
# Wrapper: parameter folding + layout prep (tiny XLA ops) + single pallas_call
# ----------------------------------------------------------------------------
def _fold_bn(w, b, gamma, beta, mean, var):
    """Fold an eval-mode BatchNorm2d into the preceding LRLC weights / bias."""
    s = gamma * lax.rsqrt(var + BN_EPS)
    t = beta - mean * s
    return w * s, b * s + t


def _outer_combining_weights(row_logits, col_logits):
    """OuterCombiningWeights(): softmax over rank of separable row+col logits."""
    return jax.nn.softmax(row_logits[:, :, None] + col_logits[:, None, :], axis=0)


def _use_batch_grid():
    """Grid over batch only on v7x (2 TensorCores); 1-TC chips stay ungridded."""
    try:
        kind = jax.devices()[0].device_kind.lower()
    except Exception:
        return False
    return ("v7" in kind) or ("7x" in kind)


def taenzer_lrlc_block_forward(x_nchw, p):
    batch, cin, h, w = x_nchw.shape
    cout, rank, k, pool = OUT_CHANNELS, RANK, KSIZE, POOL
    h1, w1 = h + 2 * PAD - k + 1, w + 2 * PAD - k + 1      # lrlc1.L  (18, 18)
    h2, w2 = h1 + 2 * PAD - k + 1, w1 + 2 * PAD - k + 1    # lrlc2.L  (20, 20)
    n_pool = h2 // pool                                    # 6
    hg, wg = h + 2 * MARGIN, w + 2 * MARGIN                # shared 24x24 grid
    g = hg * wg

    # per-program batch: 1 image per TensorCore on v7x, whole batch otherwise
    nb = 1 if (_use_batch_grid() and batch > 1) else batch

    # input: NCHW -> NHWC, zero margin, flatten to the shared grid [N*hg*wg, cin]
    # (no channel padding: layer-1 im2col K is 9*cin = 36 of real data)
    x = jnp.transpose(x_nchw, (0, 2, 3, 1)).astype(jnp.float32)
    x = jnp.pad(x, ((0, 0), (MARGIN, MARGIN), (MARGIN, MARGIN), (0, 0)))
    x_flat = x.reshape(batch * g, cin)

    # fold eval-mode BN1 / BN2 into the LRLC basis weights and biases
    w1f, b1f = _fold_bn(p['lrlc1_w'], p['lrlc1_b'], p['bn1_gamma'],
                        p['bn1_beta'], p['bn1_mean'], p['bn1_var'])
    w2f, b2f = _fold_bn(p['lrlc2_w'], p['lrlc2_b'], p['bn2_gamma'],
                        p['bn2_beta'], p['bn2_mean'], p['bn2_var'])

    def wmat(wf):  # [rank, k, k, c, cout] -> [k*k*c, rank*cout], row=(di,dj,c)
        r, _, _, c, co = wf.shape
        return jnp.transpose(wf.reshape(r, k * k * c, co),
                             (1, 0, 2)).reshape(k * k * c, r * co)

    # combining-weight maps on the shared grid, lane-expanded to rank*cout and
    # tiled over batch in the wrapper (removes in-kernel concat / broadcast)
    cw1 = _outer_combining_weights(p['cw1_row'], p['cw1_col'])   # [rank, 18, 18]
    cw2 = _outer_combining_weights(p['cw2_row'], p['cw2_col'])   # [rank, 20, 20]
    off1 = MARGIN - PAD   # lrlc1 outputs sit at grid offset 2, lrlc2 at offset 0
    cw1g = jnp.pad(cw1, ((0, 0), (off1, hg - off1 - h1), (off1, wg - off1 - w1)))
    cw2g = jnp.pad(cw2, ((0, 0), (0, hg - h2), (0, wg - w2)))

    def expand(cwg):  # [rank, hg, wg] -> [batch*g, rank*cout]
        mmap = cwg.reshape(rank, g).T                    # [g, rank]
        mmap = jnp.repeat(mmap, cout, axis=1)            # col = r*cout + co
        return jnp.tile(mmap, (batch, 1))
    cw1e = expand(cw1g)
    cw2e = expand(cw2g)

    span = (k - 1) * wg + (k - 1)
    pspan = (pool - 1) * wg + (pool - 1)
    mp = nb * g - 2 * span - pspan                       # pooled rows per block

    kernel = functools.partial(
        _taenzer_lrlc_block_kernel,
        nb=nb, cout=cout, rank=rank, wg=wg, ksize=k, pool=pool,
        n_pool=n_pool, g=g)

    out = pl.pallas_call(
        kernel,
        grid=(batch // nb,),
        out_shape=jax.ShapeDtypeStruct((batch, n_pool * n_pool, cout),
                                       jnp.float32),
        in_specs=[
            pl.BlockSpec((nb * g, cin), lambda b: (b, 0)),
            pl.BlockSpec((k * k * cin, rank * cout), lambda b: (0, 0)),
            pl.BlockSpec((1, cout), lambda b: (0, 0)),
            pl.BlockSpec((nb * g, rank * cout), lambda b: (b, 0)),
            pl.BlockSpec((k * k * cout, rank * cout), lambda b: (0, 0)),
            pl.BlockSpec((1, cout), lambda b: (0, 0)),
            pl.BlockSpec((nb * g, rank * cout), lambda b: (b, 0)),
        ],
        out_specs=pl.BlockSpec((nb, n_pool * n_pool, cout),
                               lambda b: (b, 0, 0)),
        scratch_shapes=[pltpu.VMEM((mp, cout), jnp.float32)],
        compiler_params=pltpu.CompilerParams(
            dimension_semantics=("parallel",)),
    )(x_flat, wmat(w1f), b1f.reshape(1, cout), cw1e,
      wmat(w2f), b2f.reshape(1, cout), cw2e)

    # [N, 36, C] -> NCHW [N, C, 6, 6]  (tiny, off hot path)
    out = out.reshape(batch, n_pool, n_pool, cout)
    return jnp.transpose(out, (0, 3, 1, 2))


# ----------------------------------------------------------------------------
# Pure-JAX reference (for a numerical check of the fused kernel)
# ----------------------------------------------------------------------------
def reference_forward(x_nchw, p):
    x = jnp.transpose(x_nchw, (0, 2, 3, 1)).astype(jnp.float32)   # NHWC

    def lrlc_bn_relu(x, wb, b, row, col, gamma, beta, mean, var):
        rank = wb.shape[0]
        cw = _outer_combining_weights(row, col)                   # [rank, Ho, Wo]
        y = None
        for r in range(rank):
            yr = lax.conv_general_dilated(
                x, wb[r], window_strides=(1, 1),
                padding=((PAD, PAD), (PAD, PAD)),
                dimension_numbers=('NHWC', 'HWIO', 'NHWC'))
            yr = cw[r][None, :, :, None] * yr
            y = yr if y is None else y + yr
        y = y + b
        s = gamma * lax.rsqrt(var + BN_EPS)
        t = beta - mean * s
        return jax.nn.relu(y * s + t)

    x = lrlc_bn_relu(x, p['lrlc1_w'], p['lrlc1_b'], p['cw1_row'], p['cw1_col'],
                     p['bn1_gamma'], p['bn1_beta'], p['bn1_mean'], p['bn1_var'])
    x = lrlc_bn_relu(x, p['lrlc2_w'], p['lrlc2_b'], p['cw2_row'], p['cw2_col'],
                     p['bn2_gamma'], p['bn2_beta'], p['bn2_mean'], p['bn2_var'])
    x = lax.reduce_window(x, -jnp.inf, lax.max,
                          (1, POOL, POOL, 1), (1, POOL, POOL, 1), 'VALID')
    return jnp.transpose(x, (0, 3, 1, 2))


# ----------------------------------------------------------------------------
# Deterministic parameter init (PyTorch __init__ shapes; eval mode)
# ----------------------------------------------------------------------------
def init_params(key):
    k = KSIZE
    cin, cout, rank = IN_CHANNELS, OUT_CHANNELS, RANK
    h1 = IN_SHAPE[0] + 2 * PAD - k + 1       # 18  (lrlc1.L)
    h2 = h1 + 2 * PAD - k + 1                # 20  (lrlc2.L)
    keys = jax.random.split(key, 12)
    p = {}
    p['lrlc1_w'] = (jax.random.normal(keys[0], (rank, k, k, cin, cout),
                                      jnp.float32) / jnp.sqrt(k * k * cin))
    p['lrlc1_b'] = 0.1 * jax.random.normal(keys[1], (cout,), jnp.float32)
    p['cw1_row'] = jax.random.normal(keys[2], (rank, h1), jnp.float32)
    p['cw1_col'] = jax.random.normal(keys[3], (rank, h1), jnp.float32)
    p['lrlc2_w'] = (jax.random.normal(keys[4], (rank, k, k, cout, cout),
                                      jnp.float32) / jnp.sqrt(k * k * cout))
    p['lrlc2_b'] = 0.1 * jax.random.normal(keys[5], (cout,), jnp.float32)
    p['cw2_row'] = jax.random.normal(keys[6], (rank, h2), jnp.float32)
    p['cw2_col'] = jax.random.normal(keys[7], (rank, h2), jnp.float32)
    # non-trivial eval-mode BatchNorm2d statistics so the BN-folding path is
    # exercised (same formula as PyTorch running-stat inference).
    for i, name in enumerate(('bn1', 'bn2')):
        kk = jax.random.split(keys[8 + i], 4)
        p[f'{name}_gamma'] = 1.0 + 0.1 * jax.random.normal(kk[0], (cout,), jnp.float32)
        p[f'{name}_beta'] = 0.1 * jax.random.normal(kk[1], (cout,), jnp.float32)
        p[f'{name}_mean'] = 0.1 * jax.random.normal(kk[2], (cout,), jnp.float32)
        p[f'{name}_var'] = 1.0 + 0.1 * jnp.abs(
            jax.random.normal(kk[3], (cout,), jnp.float32))
    return p


if __name__ == "__main__":
    key = jax.random.PRNGKey(0)
    pkey, xkey = jax.random.split(key)
    params = init_params(pkey)
    x = jax.random.normal(xkey, (BATCH, IN_CHANNELS, *IN_SHAPE), jnp.float32)

    out = jax.block_until_ready(jax.jit(taenzer_lrlc_block_forward)(x, params))
    ref = jax.block_until_ready(jax.jit(reference_forward)(x, params))

    assert out.shape == (BATCH, OUT_CHANNELS, 6, 6), out.shape
    assert out.shape == ref.shape, (out.shape, ref.shape)
    assert jnp.all(jnp.isfinite(out))
    err = float(jnp.max(jnp.abs(out - ref)))
    assert err < 1e-3, f"max abs error vs reference = {err}"
    print("KERNEL_OK")
</pallas_src>

<mosaic_0001>
module attributes {stable_mosaic.version = 11 : i64} {
  func.func @_taenzer_lrlc_block_kernel(%arg0: i32, %arg1: memref<1152x4xf32, #tpu.memory_space<vmem>>, %arg2: memref<36x16xf32, #tpu.memory_space<vmem>>, %arg3: memref<1x8xf32, #tpu.memory_space<vmem>>, %arg4: memref<1152x16xf32, #tpu.memory_space<vmem>>, %arg5: memref<72x16xf32, #tpu.memory_space<vmem>>, %arg6: memref<1x8xf32, #tpu.memory_space<vmem>>, %arg7: memref<1152x16xf32, #tpu.memory_space<vmem>>, %arg8: memref<2x36x8xf32, #tpu.memory_space<vmem>>, %arg9: memref<1002x8xf32, #tpu.memory_space<vmem>>) attributes {dimension_semantics = [#tpu.dimension_semantics<parallel>], iteration_bounds = array<i64: 1>, scalar_prefetch = 0 : i64, scratch_operands = 1 : i64, tpu.core_type = #tpu.core_type<tc>, window_params = [{transform_indices = @transform_0, window_bounds = array<i64: 1152, 4>}, {pipeline_mode = #tpu.pipeline_mode<synchronous>, transform_indices = @transform_1, window_bounds = array<i64: 36, 16>}, {pipeline_mode = #tpu.pipeline_mode<synchronous>, transform_indices = @transform_2, window_bounds = array<i64: 1, 8>}, {transform_indices = @transform_3, window_bounds = array<i64: 1152, 16>}, {pipeline_mode = #tpu.pipeline_mode<synchronous>, transform_indices = @transform_4, window_bounds = array<i64: 72, 16>}, {pipeline_mode = #tpu.pipeline_mode<synchronous>, transform_indices = @transform_5, window_bounds = array<i64: 1, 8>}, {transform_indices = @transform_6, window_bounds = array<i64: 1152, 16>}, {transform_indices = @transform_7, window_bounds = array<i64: 2, 36, 8>}]} {
    %c0 = arith.constant 0 : index
    %c0_0 = arith.constant 0 : index
    %0 = vector.load %arg1[%c0, %c0_0] : memref<1152x4xf32, #tpu.memory_space<vmem>>, vector<1152x4xf32>
    %1 = vector.extract_strided_slice %0 {offsets = [0, 0], sizes = [1150, 4], strides = [1, 1]} : vector<1152x4xf32> to vector<1150x4xf32>
    %2 = vector.extract_strided_slice %0 {offsets = [1, 0], sizes = [1150, 4], strides = [1, 1]} : vector<1152x4xf32> to vector<1150x4xf32>
    %3 = vector.extract_strided_slice %0 {offsets = [2, 0], sizes = [1150, 4], strides = [1, 1]} : vector<1152x4xf32> to vector<1150x4xf32>
    %4 = tpu.concatenate %1, %2, %3 in 1 : vector<1150x4xf32>, vector<1150x4xf32>, vector<1150x4xf32> -> vector<1150x12xf32>
    %5 = vector.extract_strided_slice %4 {offsets = [0, 0], sizes = [1102, 12], strides = [1, 1]} : vector<1150x12xf32> to vector<1102x12xf32>
    %6 = vector.extract_strided_slice %4 {offsets = [24, 0], sizes = [1102, 12], strides = [1, 1]} : vector<1150x12xf32> to vector<1102x12xf32>
    %7 = vector.extract_strided_slice %4 {offsets = [48, 0], sizes = [1102, 12], strides = [1, 1]} : vector<1150x12xf32> to vector<1102x12xf32>
    %8 = tpu.concatenate %5, %6, %7 in 1 : vector<1102x12xf32>, vector<1102x12xf32>, vector<1102x12xf32> -> vector<1102x36xf32>
    %c0_1 = arith.constant 0 : index
    %c0_2 = arith.constant 0 : index
    %9 = vector.load %arg2[%c0_1, %c0_2] : memref<36x16xf32, #tpu.memory_space<vmem>>, vector<36x16xf32>
    %cst = arith.constant dense<0.000000e+00> : vector<1102x16xf32>
    %10 = tpu.matmul %8, %9, %cst {dimension_numbers = #tpu.dot_dimension_numbers<[1], [0], [0], [1], [0, 0, 1, 1], [], []>} : vector<1102x36xf32>, vector<36x16xf32>, vector<1102x16xf32> -> vector<1102x16xf32>
    %c0_3 = arith.constant 0 : index
    %c0_4 = arith.constant 0 : index
    %11 = vector.load %arg4[%c0_3, %c0_4] : memref<1152x16xf32, #tpu.memory_space<vmem>>, vector<1102x16xf32>
    %12 = vector.extract_strided_slice %10 {offsets = [0, 0], sizes = [1102, 8], strides = [1, 1]} : vector<1102x16xf32> to vector<1102x8xf32>
    %13 = vector.extract_strided_slice %11 {offsets = [0, 0], sizes = [1102, 8], strides = [1, 1]} : vector<1102x16xf32> to vector<1102x8xf32>
    %14 = arith.mulf %12, %13 : vector<1102x8xf32>
    %15 = vector.extract_strided_slice %10 {offsets = [0, 8], sizes = [1102, 8], strides = [1, 1]} : vector<1102x16xf32> to vector<1102x8xf32>
    %16 = vector.extract_strided_slice %11 {offsets = [0, 8], sizes = [1102, 8], strides = [1, 1]} : vector<1102x16xf32> to vector<1102x8xf32>
    %17 = arith.mulf %15, %16 : vector<1102x8xf32>
    %18 = arith.addf %14, %17 : vector<1102x8xf32>
    %c0_5 = arith.constant 0 : index
    %c0_6 = arith.constant 0 : index
    %19 = vector.load %arg3[%c0_5, %c0_6] : memref<1x8xf32, #tpu.memory_space<vmem>>, vector<1x8xf32>
    %20 = vector.broadcast %19 : vector<1x8xf32> to vector<1102x8xf32>
    %21 = arith.addf %18, %20 : vector<1102x8xf32>
    %cst_7 = arith.constant 0.000000e+00 : f32
    %22 = vector.broadcast %cst_7 : f32 to vector<1102x8xf32>
    %23 = arith.maximumf %21, %22 : vector<1102x8xf32>
    %24 = vector.extract_strided_slice %11 {offsets = [0, 0], sizes = [1102, 8], strides = [1, 1]} : vector<1102x16xf32> to vector<1102x8xf32>
    %25 = vector.extract_strided_slice %11 {offsets = [0, 8], sizes = [1102, 8], strides = [1, 1]} : vector<1102x16xf32> to vector<1102x8xf32>
    %26 = arith.addf %24, %25 : vector<1102x8xf32>
    %27 = arith.mulf %23, %26 : vector<1102x8xf32>
    %28 = vector.extract_strided_slice %27 {offsets = [0, 0], sizes = [1100, 8], strides = [1, 1]} : vector<1102x8xf32> to vector<1100x8xf32>
    %29 = vector.extract_strided_slice %27 {offsets = [1, 0], sizes = [1100, 8], strides = [1, 1]} : vector<1102x8xf32> to vector<1100x8xf32>
    %30 = vector.extract_strided_slice %27 {offsets = [2, 0], sizes = [1100, 8], strides = [1, 1]} : vector<1102x8xf32> to vector<1100x8xf32>
    %31 = tpu.concatenate %28, %29, %30 in 1 : vector<1100x8xf32>, vector<1100x8xf32>, vector<1100x8xf32> -> vector<1100x24xf32>
    %32 = vector.extract_strided_slice %31 {offsets = [0, 0], sizes = [1052, 24], strides = [1, 1]} : vector<1100x24xf32> to vector<1052x24xf32>
    %33 = vector.extract_strided_slice %31 {offsets = [24, 0], sizes = [1052, 24], strides = [1, 1]} : vector<1100x24xf32> to vector<1052x24xf32>
    %34 = vector.extract_strided_slice %31 {offsets = [48, 0], sizes = [1052, 24], strides = [1, 1]} : vector<1100x24xf32> to vector<1052x24xf32>
    %35 = tpu.concatenate %32, %33, %34 in 1 : vector<1052x24xf32>, vector<1052x24xf32>, vector<1052x24xf32> -> vector<1052x72xf32>
    %c0_8 = arith.constant 0 : index
    %c0_9 = arith.constant 0 : index
    %36 = vector.load %arg5[%c0_8, %c0_9] : memref<72x16xf32, #tpu.memory_space<vmem>>, vector<72x16xf32>
    %cst_10 = arith.constant dense<0.000000e+00> : vector<1052x16xf32>
    %37 = tpu.matmul %35, %36, %cst_10 {dimension_numbers = #tpu.dot_dimension_numbers<[1], [0], [0], [1], [0, 0, 1, 1], [], []>} : vector<1052x72xf32>, vector<72x16xf32>, vector<1052x16xf32> -> vector<1052x16xf32>
    %c0_11 = arith.constant 0 : index
    %c0_12 = arith.constant 0 : index
    %38 = vector.load %arg7[%c0_11, %c0_12] : memref<1152x16xf32, #tpu.memory_space<vmem>>, vector<1052x16xf32>
    %39 = vector.extract_strided_slice %37 {offsets = [0, 0], sizes = [1052, 8], strides = [1, 1]} : vector<1052x16xf32> to vector<1052x8xf32>
    %40 = vector.extract_strided_slice %38 {offsets = [0, 0], sizes = [1052, 8], strides = [1, 1]} : vector<1052x16xf32> to vector<1052x8xf32>
    %41 = arith.mulf %39, %40 : vector<1052x8xf32>
    %42 = vector.extract_strided_slice %37 {offsets = [0, 8], sizes = [1052, 8], strides = [1, 1]} : vector<1052x16xf32> to vector<1052x8xf32>
    %43 = vector.extract_strided_slice %38 {offsets = [0, 8], sizes = [1052, 8], strides = [1, 1]} : vector<1052x16xf32> to vector<1052x8xf32>
    %44 = arith.mulf %42, %43 : vector<1052x8xf32>
    %45 = arith.addf %41, %44 : vector<1052x8xf32>
    %c0_13 = arith.constant 0 : index
    %c0_14 = arith.constant 0 : index
    %46 = vector.load %arg6[%c0_13, %c0_14] : memref<1x8xf32, #tpu.memory_space<vmem>>, vector<1x8xf32>
    %47 = vector.broadcast %46 : vector<1x8xf32> to vector<1052x8xf32>
    %48 = arith.addf %45, %47 : vector<1052x8xf32>
    %cst_15 = arith.constant 0.000000e+00 : f32
    %49 = vector.broadcast %cst_15 : f32 to vector<1052x8xf32>
    %50 = arith.maximumf %48, %49 : vector<1052x8xf32>
    %51 = vector.extract_strided_slice %50 {offsets = [0, 0], sizes = [1050, 8], strides = [1, 1]} : vector<1052x8xf32> to vector<1050x8xf32>
    %52 = vector.extract_strided_slice %50 {offsets = [1, 0], sizes = [1050, 8], strides = [1, 1]} : vector<1052x8xf32> to vector<1050x8xf32>
    %53 = arith.maximumf %51, %52 : vector<1050x8xf32>
    %54 = vector.extract_strided_slice %50 {offsets = [2, 0], sizes = [1050, 8], strides = [1, 1]} : vector<1052x8xf32> to vector<1050x8xf32>
    %55 = arith.maximumf %53, %54 : vector<1050x8xf32>
    %56 = vector.extract_strided_slice %55 {offsets = [0, 0], sizes = [1002, 8], strides = [1, 1]} : vector<1050x8xf32> to vector<1002x8xf32>
    %57 = vector.extract_strided_slice %55 {offsets = [24, 0], sizes = [1002, 8], strides = [1, 1]} : vector<1050x8xf32> to vector<1002x8xf32>
    %58 = arith.maximumf %56, %57 : vector<1002x8xf32>
    %59 = vector.extract_strided_slice %55 {offsets = [48, 0], sizes = [1002, 8], strides = [1, 1]} : vector<1050x8xf32> to vector<1002x8xf32>
    %60 = arith.maximumf %58, %59 : vector<1002x8xf32>
    %c0_16 = arith.constant 0 : index
    %c0_17 = arith.constant 0 : index
    %61 = vector.load %arg9[%c0_16, %c0_17] : memref<1002x8xf32, #tpu.memory_space<vmem>>, vector<1002x8xf32>
    tpu.vector_store %arg9[%c0_16, %c0_17], %60 {strides = array<i32>} : memref<1002x8xf32, #tpu.memory_space<vmem>>, vector<1002x8xf32>,
    %c0_18 = arith.constant 0 : index
    %c0_19 = arith.constant 0 : index
    %62 = tpu.strided_load %arg9[%c0_18, %c0_19] {strides = array<i32: 3, 1>} : memref<1002x8xf32, #tpu.memory_space<vmem>>, vector<6x8xf32>
    %c0_20 = arith.constant 0 : index
    %c0_21 = arith.constant 0 : index
    %c0_22 = arith.constant 0 : index
    %63 = vector.load %arg8[%c0_20, %c0_21, %c0_22] : memref<2x36x8xf32, #tpu.memory_space<vmem>>, vector<1x6x8xf32>
    %64 = vector.shape_cast %63 : vector<1x6x8xf32> to vector<6x8xf32>
    %65 = vector.shape_cast %62 : vector<6x8xf32> to vector<1x6x8xf32>
    tpu.vector_store %arg8[%c0_20, %c0_21, %c0_22], %65 {strides = array<i32>} : memref<2x36x8xf32, #tpu.memory_space<vmem>>, vector<1x6x8xf32>,
    %c72 = arith.constant 72 : index
    %c0_23 = arith.constant 0 : index
    %66 = tpu.strided_load %arg9[%c72, %c0_23] {strides = array<i32: 3, 1>} : memref<1002x8xf32, #tpu.memory_space<vmem>>, vector<6x8xf32>
    %c0_24 = arith.constant 0 : index
    %c6 = arith.constant 6 : index
    %c0_25 = arith.constant 0 : index
    %67 = vector.load %arg8[%c0_24, %c6, %c0_25] : memref<2x36x8xf32, #tpu.memory_space<vmem>>, vector<1x6x8xf32>
    %68 = vector.shape_cast %67 : vector<1x6x8xf32> to vector<6x8xf32>
    %69 = vector.shape_cast %66 : vector<6x8xf32> to vector<1x6x8xf32>
    tpu.vector_store %arg8[%c0_24, %c6, %c0_25], %69 {strides = array<i32>} : memref<2x36x8xf32, #tpu.memory_space<vmem>>, vector<1x6x8xf32>,
    %c144 = arith.constant 144 : index
    %c0_26 = arith.constant 0 : index
    %70 = tpu.strided_load %arg9[%c144, %c0_26] {strides = array<i32: 3, 1>} : memref<1002x8xf32, #tpu.memory_space<vmem>>, vector<6x8xf32>
    %c0_27 = arith.constant 0 : index
    %c12 = arith.constant 12 : index
    %c0_28 = arith.constant 0 : index
    %71 = vector.load %arg8[%c0_27, %c12, %c0_28] : memref<2x36x8xf32, #tpu.memory_space<vmem>>, vector<1x6x8xf32>
    %72 = vector.shape_cast %71 : vector<1x6x8xf32> to vector<6x8xf32>
    %73 = vector.shape_cast %70 : vector<6x8xf32> to vector<1x6x8xf32>
    tpu.vector_store %arg8[%c0_27, %c12, %c0_28], %73 {strides = array<i32>} : memref<2x36x8xf32, #tpu.memory_space<vmem>>, vector<1x6x8xf32>,
    %c216 = arith.constant 216 : index
    %c0_29 = arith.constant 0 : index
    %74 = tpu.strided_load %arg9[%c216, %c0_29] {strides = array<i32: 3, 1>} : memref<1002x8xf32, #tpu.memory_space<vmem>>, vector<6x8xf32>
    %c0_30 = arith.constant 0 : index
    %c18 = arith.constant 18 : index
    %c0_31 = arith.constant 0 : index
    %75 = vector.load %arg8[%c0_30, %c18, %c0_31] : memref<2x36x8xf32, #tpu.memory_space<vmem>>, vector<1x6x8xf32>
    %76 = vector.shape_cast %75 : vector<1x6x8xf32> to vector<6x8xf32>
    %77 = vector.shape_cast %74 : vector<6x8xf32> to vector<1x6x8xf32>
    tpu.vector_store %arg8[%c0_30, %c18, %c0_31], %77 {strides = array<i32>} : memref<2x36x8xf32, #tpu.memory_space<vmem>>, vector<1x6x8xf32>,
    %c288 = arith.constant 288 : index
    %c0_32 = arith.constant 0 : index
    %78 = tpu.strided_load %arg9[%c288, %c0_32] {strides = array<i32: 3, 1>} : memref<1002x8xf32, #tpu.memory_space<vmem>>, vector<6x8xf32>
    %c0_33 = arith.constant 0 : index
    %c24 = arith.constant 24 : index
    %c0_34 = arith.constant 0 : index
    %79 = vector.load %arg8[%c0_33, %c24, %c0_34] : memref<2x36x8xf32, #tpu.memory_space<vmem>>, vector<1x6x8xf32>
    %80 = vector.shape_cast %79 : vector<1x6x8xf32> to vector<6x8xf32>
    %81 = vector.shape_cast %78 : vector<6x8xf32> to vector<1x6x8xf32>
    tpu.vector_store %arg8[%c0_33, %c24, %c0_34], %81 {strides = array<i32>} : memref<2x36x8xf32, #tpu.memory_space<vmem>>, vector<1x6x8xf32>,
    %c360 = arith.constant 360 : index
    %c0_35 = arith.constant 0 : index
    %82 = tpu.strided_load %arg9[%c360, %c0_35] {strides = array<i32: 3, 1>} : memref<1002x8xf32, #tpu.memory_space<vmem>>, vector<6x8xf32>
    %c0_36 = arith.constant 0 : index
    %c30 = arith.constant 30 : index
    %c0_37 = arith.constant 0 : index
    %83 = vector.load %arg8[%c0_36, %c30, %c0_37] : memref<2x36x8xf32, #tpu.memory_space<vmem>>, vector<1x6x8xf32>
    %84 = vector.shape_cast %83 : vector<1x6x8xf32> to vector<6x8xf32>
    %85 = vector.shape_cast %82 : vector<6x8xf32> to vector<1x6x8xf32>
    tpu.vector_store %arg8[%c0_36, %c30, %c0_37], %85 {strides = array<i32>} : memref<2x36x8xf32, #tpu.memory_space<vmem>>, vector<1x6x8xf32>,
    %c576 = arith.constant 576 : index
    %c0_38 = arith.constant 0 : index
    %86 = tpu.strided_load %arg9[%c576, %c0_38] {strides = array<i32: 3, 1>} : memref<1002x8xf32, #tpu.memory_space<vmem>>, vector<6x8xf32>
    %c1 = arith.constant 1 : index
    %c0_39 = arith.constant 0 : index
    %c0_40 = arith.constant 0 : index
    %87 = vector.load %arg8[%c1, %c0_39, %c0_40] : memref<2x36x8xf32, #tpu.memory_space<vmem>>, vector<1x6x8xf32>
    %88 = vector.shape_cast %87 : vector<1x6x8xf32> to vector<6x8xf32>
    %89 = vector.shape_cast %86 : vector<6x8xf32> to vector<1x6x8xf32>
    tpu.vector_store %arg8[%c1, %c0_39, %c0_40], %89 {strides = array<i32>} : memref<2x36x8xf32, #tpu.memory_space<vmem>>, vector<1x6x8xf32>,
    %c648 = arith.constant 648 : index
    %c0_41 = arith.constant 0 : index
    %90 = tpu.strided_load %arg9[%c648, %c0_41] {strides = array<i32: 3, 1>} : memref<1002x8xf32, #tpu.memory_space<vmem>>, vector<6x8xf32>
    %c1_42 = arith.constant 1 : index
    %c6_43 = arith.constant 6 : index
    %c0_44 = arith.constant 0 : index
    %91 = vector.load %arg8[%c1_42, %c6_43, %c0_44] : memref<2x36x8xf32, #tpu.memory_space<vmem>>, vector<1x6x8xf32>
    %92 = vector.shape_cast %91 : vector<1x6x8xf32> to vector<6x8xf32>
    %93 = vector.shape_cast %90 : vector<6x8xf32> to vector<1x6x8xf32>
    tpu.vector_store %arg8[%c1_42, %c6_43, %c0_44], %93 {strides = array<i32>} : memref<2x36x8xf32, #tpu.memory_space<vmem>>, vector<1x6x8xf32>,
    %c720 = arith.constant 720 : index
    %c0_45 = arith.constant 0 : index
    %94 = tpu.strided_load %arg9[%c720, %c0_45] {strides = array<i32: 3, 1>} : memref<1002x8xf32, #tpu.memory_space<vmem>>, vector<6x8xf32>
    %c1_46 = arith.constant 1 : index
    %c12_47 = arith.constant 12 : index
    %c0_48 = arith.constant 0 : index
    %95 = vector.load %arg8[%c1_46, %c12_47, %c0_48] : memref<2x36x8xf32, #tpu.memory_space<vmem>>, vector<1x6x8xf32>
    %96 = vector.shape_cast %95 : vector<1x6x8xf32> to vector<6x8xf32>
    %97 = vector.shape_cast %94 : vector<6x8xf32> to vector<1x6x8xf32>
    tpu.vector_store %arg8[%c1_46, %c12_47, %c0_48], %97 {strides = array<i32>} : memref<2x36x8xf32, #tpu.memory_space<vmem>>, vector<1x6x8xf32>,
    %c792 = arith.constant 792 : index
    %c0_49 = arith.constant 0 : index
    %98 = tpu.strided_load %arg9[%c792, %c0_49] {strides = array<i32: 3, 1>} : memref<1002x8xf32, #tpu.memory_space<vmem>>, vector<6x8xf32>
    %c1_50 = arith.constant 1 : index
    %c18_51 = arith.constant 18 : index
    %c0_52 = arith.constant 0 : index
    %99 = vector.load %arg8[%c1_50, %c18_51, %c0_52] : memref<2x36x8xf32, #tpu.memory_space<vmem>>, vector<1x6x8xf32>
    %100 = vector.shape_cast %99 : vector<1x6x8xf32> to vector<6x8xf32>
    %101 = vector.shape_cast %98 : vector<6x8xf32> to vector<1x6x8xf32>
    tpu.vector_store %arg8[%c1_50, %c18_51, %c0_52], %101 {strides = array<i32>} : memref<2x36x8xf32, #tpu.memory_space<vmem>>, vector<1x6x8xf32>,
    %c864 = arith.constant 864 : index
    %c0_53 = arith.constant 0 : index
    %102 = tpu.strided_load %arg9[%c864, %c0_53] {strides = array<i32: 3, 1>} : memref<1002x8xf32, #tpu.memory_space<vmem>>, vector<6x8xf32>
    %c1_54 = arith.constant 1 : index
    %c24_55 = arith.constant 24 : index
    %c0_56 = arith.constant 0 : index
    %103 = vector.load %arg8[%c1_54, %c24_55, %c0_56] : memref<2x36x8xf32, #tpu.memory_space<vmem>>, vector<1x6x8xf32>
    %104 = vector.shape_cast %103 : vector<1x6x8xf32> to vector<6x8xf32>
    %105 = vector.shape_cast %102 : vector<6x8xf32> to vector<1x6x8xf32>
    tpu.vector_store %arg8[%c1_54, %c24_55, %c0_56], %105 {strides = array<i32>} : memref<2x36x8xf32, #tpu.memory_space<vmem>>, vector<1x6x8xf32>,
    %c936 = arith.constant 936 : index
    %c0_57 = arith.constant 0 : index
    %106 = tpu.strided_load %arg9[%c936, %c0_57] {strides = array<i32: 3, 1>} : memref<1002x8xf32, #tpu.memory_space<vmem>>, vector<6x8xf32>
    %c1_58 = arith.constant 1 : index
    %c30_59 = arith.constant 30 : index
    %c0_60 = arith.constant 0 : index
    %107 = vector.load %arg8[%c1_58, %c30_59, %c0_60] : memref<2x36x8xf32, #tpu.memory_space<vmem>>, vector<1x6x8xf32>
    %108 = vector.shape_cast %107 : vector<1x6x8xf32> to vector<6x8xf32>
    %109 = vector.shape_cast %106 : vector<6x8xf32> to vector<1x6x8xf32>
    tpu.vector_store %arg8[%c1_58, %c30_59, %c0_60], %109 {strides = array<i32>} : memref<2x36x8xf32, #tpu.memory_space<vmem>>, vector<1x6x8xf32>,
    return
  }
  func.func @transform_0(%arg0: i32) -> (i32, i32) {
    %c0_i32 = arith.constant 0 : i32
    %c0_i32_0 = arith.constant 0 : i32
    return %arg0, %c0_i32 : i32, i32
  }
  func.func @transform_1(%arg0: i32) -> (i32, i32) {
    %c0_i32 = arith.constant 0 : i32
    %c0_i32_0 = arith.constant 0 : i32
    %c0_i32_1 = arith.constant 0 : i32
    return %c0_i32, %c0_i32_0 : i32, i32
  }
  func.func @transform_2(%arg0: i32) -> (i32, i32) {
    %c0_i32 = arith.constant 0 : i32
    %c0_i32_0 = arith.constant 0 : i32
    %c0_i32_1 = arith.constant 0 : i32
    return %c0_i32, %c0_i32_0 : i32, i32
  }
  func.func @transform_3(%arg0: i32) -> (i32, i32) {
    %c0_i32 = arith.constant 0 : i32
    %c0_i32_0 = arith.constant 0 : i32
    return %arg0, %c0_i32 : i32, i32
  }
  func.func @transform_4(%arg0: i32) -> (i32, i32) {
    %c0_i32 = arith.constant 0 : i32
    %c0_i32_0 = arith.constant 0 : i32
    %c0_i32_1 = arith.constant 0 : i32
    return %c0_i32, %c0_i32_0 : i32, i32
  }
  func.func @transform_5(%arg0: i32) -> (i32, i32) {
    %c0_i32 = arith.constant 0 : i32
    %c0_i32_0 = arith.constant 0 : i32
    %c0_i32_1 = arith.constant 0 : i32
    return %c0_i32, %c0_i32_0 : i32, i32
  }
  func.func @transform_6(%arg0: i32) -> (i32, i32) {
    %c0_i32 = arith.constant 0 : i32
    %c0_i32_0 = arith.constant 0 : i32
    return %arg0, %c0_i32 : i32, i32
  }
  func.func @transform_7(%arg0: i32) -> (i32, i32, i32) {
    %c0_i32 = arith.constant 0 : i32
    %c0_i32_0 = arith.constant 0 : i32
    %c0_i32_1 = arith.constant 0 : i32
    return %arg0, %c0_i32, %c0_i32_0 : i32, i32, i32
  }
}

</mosaic_0001>

<llo_original>
// kernel: taenzer_lrlc_block_forward.1
$region0: #{taenzer_lrlc_block_forward.1}
  #allocation0 [shape = 'u32[]', space=smem, size = 0x4, offset = 0x4, fixed_abs, tag = 'smem constant byte address 0x4 - core index']
  #allocation1 [shape = 'u32[144,128]{1,0:T(1,128)}', space=vmem, size = 0x12000, scoped, tag = 'internal scratch']
  #allocation2 [shape = 'f32[1002,8]{1,0:T(8,128)}', space=vmem, size = 0x7e000, scoped, tag = 'scratch operand']
  %s0 = inlined_call_operand.vmem [shape: f32[1152,4], index: 0, kind: input, shape index: {}]
  %s1 = inlined_call_operand.vmem [shape: f32[36,16], index: 1, kind: input, shape index: {}]
  %s2 = inlined_call_operand.vmem [shape: f32[1,8], index: 2, kind: input, shape index: {}]
  %s3 = inlined_call_operand.vmem [shape: f32[1152,16], index: 3, kind: input, shape index: {}]
  %s4 = inlined_call_operand.vmem [shape: f32[72,16], index: 4, kind: input, shape index: {}]
  %s5 = inlined_call_operand.vmem [shape: f32[1,8], index: 5, kind: input, shape index: {}]
  %s6 = inlined_call_operand.vmem [shape: f32[1152,16], index: 6, kind: input, shape index: {}]
  %s7 = inlined_call_operand.vmem [shape: f32[2,36,8], index: 7, kind: output, shape index: {}]
  %s8 = sld [smem:[#allocation0]]
  $region38: #{taenzer_lrlc_block_forward.1} parent=0
    _
  %s10 = ssub.s32 1, %s8
  %s11 = scalar_select 0, %s10, %s8
  // Predicated region
  $region2: #{taenzer_lrlc_block_forward.1} parent=0 // pred_check
    _
  $region3: #{taenzer_lrlc_block_forward.1} parent=0 // pred_check_branch
    %13 = sbr.rel (0) target = $region5
  $region4: #{taenzer_lrlc_block_forward.1} parent=0 // pred_region
    _
  $region5: #{taenzer_lrlc_block_forward.1} parent=0 // pred_fallthru
    _
  // Predicated region
  $region6: #{taenzer_lrlc_block_forward.1} parent=0 // pred_check
    _
  $region7: #{taenzer_lrlc_block_forward.1} parent=0 // pred_check_branch
    %15 = sbr.rel (0) target = $region9
  $region8: #{taenzer_lrlc_block_forward.1} parent=0 // pred_region
    _
  $region9: #{taenzer_lrlc_block_forward.1} parent=0 // pred_fallthru
    _
  // Predicated region
  $region10: #{taenzer_lrlc_block_forward.1} parent=0 // pred_check
    _
  $region11: #{taenzer_lrlc_block_forward.1} parent=0 // pred_check_branch
    %17 = sbr.rel (0) target = $region13
  $region12: #{taenzer_lrlc_block_forward.1} parent=0 // pred_region
    _
  $region13: #{taenzer_lrlc_block_forward.1} parent=0 // pred_fallthru
    _
  // Predicated region
  $region14: #{taenzer_lrlc_block_forward.1} parent=0 // pred_check
    _
  $region15: #{taenzer_lrlc_block_forward.1} parent=0 // pred_check_branch
    %19 = sbr.rel (0) target = $region17
  $region16: #{taenzer_lrlc_block_forward.1} parent=0 // pred_region
    _
  $region17: #{taenzer_lrlc_block_forward.1} parent=0 // pred_fallthru
    _
  // Predicated region
  $region18: #{taenzer_lrlc_block_forward.1} parent=0 // pred_check
    _
  $region19: #{taenzer_lrlc_block_forward.1} parent=0 // pred_check_branch
    %21 = sbr.rel (0) target = $region21
  $region20: #{taenzer_lrlc_block_forward.1} parent=0 // pred_region
    _
  $region21: #{taenzer_lrlc_block_forward.1} parent=0 // pred_fallthru
    _
  // Predicated region
  $region22: #{taenzer_lrlc_block_forward.1} parent=0 // pred_check
    _
  $region23: #{taenzer_lrlc_block_forward.1} parent=0 // pred_check_branch
    %23 = sbr.rel (0) target = $region25
  $region24: #{taenzer_lrlc_block_forward.1} parent=0 // pred_region
    _
  $region25: #{taenzer_lrlc_block_forward.1} parent=0 // pred_fallthru
    _
  // Predicated region
  $region26: #{taenzer_lrlc_block_forward.1} parent=0 // pred_check
    _
  $region27: #{taenzer_lrlc_block_forward.1} parent=0 // pred_check_branch
    %25 = sbr.rel (0) target = $region29
  $region28: #{taenzer_lrlc_block_forward.1} parent=0 // pred_region
    _
  $region29: #{taenzer_lrlc_block_forward.1} parent=0 // pred_fallthru
    _
  %v26 = vld [vmem:[%s0] sm:$0xff]
  %v27 = vld [vmem:[%s0 + $0x8] sm:$0xff]
  %v28 = vld [vmem:[%s0 + $0x10] sm:$0xff]
  %v29 = vld [vmem:[%s0 + $0x18] sm:$0xff]
  %v30 = vld [vmem:[%s0 + $0x20] sm:$0xff]
  %v31 = vld [vmem:[%s0 + $0x28] sm:$0xff]
  %v32 = vld [vmem:[%s0 + $0x30] sm:$0xff]
  %v33 = vld [vmem:[%s0 + $0x38] sm:$0xff]
  %v34 = vld [vmem:[%s0 + $0x40] sm:$0xff]
  %v35 = vld [vmem:[%s0 + $0x48] sm:$0xff]
  %v36 = vld [vmem:[%s0 + $0x50] sm:$0xff]
  %v37 = vld [vmem:[%s0 + $0x58] sm:$0xff]
  %v38 = vld [vmem:[%s0 + $0x60] sm:$0xff]
  %v39 = vld [vmem:[%s0 + $0x68] sm:$0xff]
  %v40 = vld [vmem:[%s0 + $0x70] sm:$0xff]
  %v41 = vld [vmem:[%s0 + $0x78] sm:$0xff]
  %v42 = vld [vmem:[%s0 + $0x80] sm:$0xff]
  %v43 = vld [vmem:[%s0 + $0x88] sm:$0xff]
  %v44 = vld [vmem:[%s0 + $0x90] sm:$0xff]
  %v45 = vld [vmem:[%s0 + $0x98] sm:$0xff]
  %v46 = vld [vmem:[%s0 + $0xa0] sm:$0xff]
  %v47 = vld [vmem:[%s0 + $0xa8] sm:$0xff]
  %v48 = vld [vmem:[%s0 + $0xb0] sm:$0xff]
  %v49 = vld [vmem:[%s0 + $0xb8] sm:$0xff]
  %v50 = vld [vmem:[%s0 + $0xc0] sm:$0xff]
  %v51 = vld [vmem:[%s0 + $0xc8] sm:$0xff]
  %v52 = vld [vmem:[%s0 + $0xd0] sm:$0xff]
  %v53 = vld [vmem:[%s0 + $0xd8] sm:$0xff]
  %v54 = vld [vmem:[%s0 + $0xe0] sm:$0xff]
  %v55 = vld [vmem:[%s0 + $0xe8] sm:$0xff]
  %v56 = vld [vmem:[%s0 + $0xf0] sm:$0xff]
  %v57 = vld [vmem:[%s0 + $0xf8] sm:$0xff]
  %v58 = vld [vmem:[%s0 + $0x100] sm:$0xff]
  %v59 = vld [vmem:[%s0 + $0x108] sm:$0xff]
  %v60 = vld [vmem:[%s0 + $0x110] sm:$0xff]
  %v61 = vld [vmem:[%s0 + $0x118] sm:$0xff]
  %v62 = vld [vmem:[%s0 + $0x120] sm:$0xff]
  %v63 = vld [vmem:[%s0 + $0x128] sm:$0xff]
  %v64 = vld [vmem:[%s0 + $0x130] sm:$0xff]
  %v65 = vld [vmem:[%s0 + $0x138] sm:$0xff]
  %v66 = vld [vmem:[%s0 + $0x140] sm:$0xff]
  %v67 = vld [vmem:[%s0 + $0x148] sm:$0xff]
  %v68 = vld [vmem:[%s0 + $0x150] sm:$0xff]
  %v69 = vld [vmem:[%s0 + $0x158] sm:$0xff]
  %v70 = vld [vmem:[%s0 + $0x160] sm:$0xff]
  %v71 = vld [vmem:[%s0 + $0x168] sm:$0xff]
  %v72 = vld [vmem:[%s0 + $0x170] sm:$0xff]
  %v73 = vld [vmem:[%s0 + $0x178] sm:$0xff]
  %v74 = vld [vmem:[%s0 + $0x180] sm:$0xff]
  %v75 = vld [vmem:[%s0 + $0x188] sm:$0xff]
  %v76 = vld [vmem:[%s0 + $0x190] sm:$0xff]
  %v77 = vld [vmem:[%s0 + $0x198] sm:$0xff]
  %v78 = vld [vmem:[%s0 + $0x1a0] sm:$0xff]
  %v79 = vld [vmem:[%s0 + $0x1a8] sm:$0xff]
  %v80 = vld [vmem:[%s0 + $0x1b0] sm:$0xff]
  %v81 = vld [vmem:[%s0 + $0x1b8] sm:$0xff]
  %v82 = vld [vmem:[%s0 + $0x1c0] sm:$0xff]
  %v83 = vld [vmem:[%s0 + $0x1c8] sm:$0xff]
  %v84 = vld [vmem:[%s0 + $0x1d0] sm:$0xff]
  %v85 = vld [vmem:[%s0 + $0x1d8] sm:$0xff]
  %v86 = vld [vmem:[%s0 + $0x1e0] sm:$0xff]
  %v87 = vld [vmem:[%s0 + $0x1e8] sm:$0xff]
  %v88 = vld [vmem:[%s0 + $0x1f0] sm:$0xff]
  %v89 = vld [vmem:[%s0 + $0x1f8] sm:$0xff]
  %v90 = vld [vmem:[%s0 + $0x200] sm:$0xff]
  %v91 = vld [vmem:[%s0 + $0x208] sm:$0xff]
  %v92 = vld [vmem:[%s0 + $0x210] sm:$0xff]
  %v93 = vld [vmem:[%s0 + $0x218] sm:$0xff]
  %v94 = vld [vmem:[%s0 + $0x220] sm:$0xff]
  %v95 = vld [vmem:[%s0 + $0x228] sm:$0xff]
  %v96 = vld [vmem:[%s0 + $0x230] sm:$0xff]
  %v97 = vld [vmem:[%s0 + $0x238] sm:$0xff]
  %v98 = vld [vmem:[%s0 + $0x240] sm:$0xff]
  %v99 = vld [vmem:[%s0 + $0x248] sm:$0xff]
  %v100 = vld [vmem:[%s0 + $0x250] sm:$0xff]
  %v101 = vld [vmem:[%s0 + $0x258] sm:$0xff]
  %v102 = vld [vmem:[%s0 + $0x260] sm:$0xff]
  %v103 = vld [vmem:[%s0 + $0x268] sm:$0xff]
  %v104 = vld [vmem:[%s0 + $0x270] sm:$0xff]
  %v105 = vld [vmem:[%s0 + $0x278] sm:$0xff]
  %v106 = vld [vmem:[%s0 + $0x280] sm:$0xff]
  %v107 = vld [vmem:[%s0 + $0x288] sm:$0xff]
  %v108 = vld [vmem:[%s0 + $0x290] sm:$0xff]
  %v109 = vld [vmem:[%s0 + $0x298] sm:$0xff]
  %v110 = vld [vmem:[%s0 + $0x2a0] sm:$0xff]
  %v111 = vld [vmem:[%s0 + $0x2a8] sm:$0xff]
  %v112 = vld [vmem:[%s0 + $0x2b0] sm:$0xff]
  %v113 = vld [vmem:[%s0 + $0x2b8] sm:$0xff]
  %v114 = vld [vmem:[%s0 + $0x2c0] sm:$0xff]
  %v115 = vld [vmem:[%s0 + $0x2c8] sm:$0xff]
  %v116 = vld [vmem:[%s0 + $0x2d0] sm:$0xff]
  %v117 = vld [vmem:[%s0 + $0x2d8] sm:$0xff]
  %v118 = vld [vmem:[%s0 + $0x2e0] sm:$0xff]
  %v119 = vld [vmem:[%s0 + $0x2e8] sm:$0xff]
  %v120 = vld [vmem:[%s0 + $0x2f0] sm:$0xff]
  %v121 = vld [vmem:[%s0 + $0x2f8] sm:$0xff]
  %v122 = vld [vmem:[%s0 + $0x300] sm:$0xff]
  %v123 = vld [vmem:[%s0 + $0x308] sm:$0xff]
  %v124 = vld [vmem:[%s0 + $0x310] sm:$0xff]
  %v125 = vld [vmem:[%s0 + $0x318] sm:$0xff]
  %v126 = vld [vmem:[%s0 + $0x320] sm:$0xff]
  %v127 = vld [vmem:[%s0 + $0x328] sm:$0xff]
  %v128 = vld [vmem:[%s0 + $0x330] sm:$0xff]
  %v129 = vld [vmem:[%s0 + $0x338] sm:$0xff]
  %v130 = vld [vmem:[%s0 + $0x340] sm:$0xff]
  %v131 = vld [vmem:[%s0 + $0x348] sm:$0xff]
  %v132 = vld [vmem:[%s0 + $0x350] sm:$0xff]
  %v133 = vld [vmem:[%s0 + $0x358] sm:$0xff]
  %v134 = vld [vmem:[%s0 + $0x360] sm:$0xff]
  %v135 = vld [vmem:[%s0 + $0x368] sm:$0xff]
  %v136 = vld [vmem:[%s0 + $0x370] sm:$0xff]
  %v137 = vld [vmem:[%s0 + $0x378] sm:$0xff]
  %v138 = vld [vmem:[%s0 + $0x380] sm:$0xff]
  %v139 = vld [vmem:[%s0 + $0x388] sm:$0xff]
  %v140 = vld [vmem:[%s0 + $0x390] sm:$0xff]
  %v141 = vld [vmem:[%s0 + $0x398] sm:$0xff]
  %v142 = vld [vmem:[%s0 + $0x3a0] sm:$0xff]
  %v143 = vld [vmem:[%s0 + $0x3a8] sm:$0xff]
  %v144 = vld [vmem:[%s0 + $0x3b0] sm:$0xff]
  %v145 = vld [vmem:[%s0 + $0x3b8] sm:$0xff]
  %v146 = vld [vmem:[%s0 + $0x3c0] sm:$0xff]
  %v147 = vld [vmem:[%s0 + $0x3c8] sm:$0xff]
  %v148 = vld [vmem:[%s0 + $0x3d0] sm:$0xff]
  %v149 = vld [vmem:[%s0 + $0x3d8] sm:$0xff]
  %v150 = vld [vmem:[%s0 + $0x3e0] sm:$0xff]
  %v151 = vld [vmem:[%s0 + $0x3e8] sm:$0xff]
  %v152 = vld [vmem:[%s0 + $0x3f0] sm:$0xff]
  %v153 = vld [vmem:[%s0 + $0x3f8] sm:$0xff]
  %v154 = vld [vmem:[%s0 + $0x400] sm:$0xff]
  %v155 = vld [vmem:[%s0 + $0x408] sm:$0xff]
  %v156 = vld [vmem:[%s0 + $0x410] sm:$0xff]
  %v157 = vld [vmem:[%s0 + $0x418] sm:$0xff]
  %v158 = vld [vmem:[%s0 + $0x420] sm:$0xff]
  %v159 = vld [vmem:[%s0 + $0x428] sm:$0xff]
  %v160 = vld [vmem:[%s0 + $0x430] sm:$0xff]
  %v161 = vld [vmem:[%s0 + $0x438] sm:$0xff]
  %v162 = vld [vmem:[%s0 + $0x440] sm:$0xff]
  %v163 = vld [vmem:[%s0 + $0x448] sm:$0xff]
  %v164 = vld [vmem:[%s0 + $0x450] sm:$0xff]
  %v165 = vld [vmem:[%s0 + $0x458] sm:$0xff]
  %v166 = vld [vmem:[%s0 + $0x460] sm:$0xff]
  %v167 = vld [vmem:[%s0 + $0x468] sm:$0xff]
  %v168 = vld [vmem:[%s0 + $0x470] sm:$0xff]
  %v169 = vld [vmem:[%s0 + $0x478] sm:$0xff]
  %vm314 = vcmask 1046528
  %v315 = vrot.slane %v26, 1
  %v316 = vrot.slane %v27, 1
  %v317 = vsel %vm314, %v315, %v316
  %v318 = vrot.slane %v28, 1
  %v319 = vsel %vm314, %v316, %v318
  %v320 = vrot.slane %v29, 1
  %v321 = vsel %vm314, %v318, %v320
  %v322 = vrot.slane %v30, 1
  %v323 = vsel %vm314, %v320, %v322
  %v324 = vrot.slane %v31, 1
  %v325 = vsel %vm314, %v322, %v324
  %v326 = vrot.slane %v32, 1
  %v327 = vsel %vm314, %v324, %v326
  %v328 = vrot.slane %v33, 1
  %v329 = vsel %vm314, %v326, %v328
  %v330 = vrot.slane %v34, 1
  %v331 = vsel %vm314, %v328, %v330
  %v332 = vrot.slane %v35, 1
  %v333 = vsel %vm314, %v330, %v332
  %v334 = vrot.slane %v36, 1
  %v335 = vsel %vm314, %v332, %v334
  %v336 = vrot.slane %v37, 1
  %v337 = vsel %vm314, %v334, %v336
  %v338 = vrot.slane %v38, 1
  %v339 = vsel %vm314, %v336, %v338
  %v340 = vrot.slane %v39, 1
  %v341 = vsel %vm314, %v338, %v340
  %v342 = vrot.slane %v40, 1
  %v343 = vsel %vm314, %v340, %v342
  %v344 = vrot.slane %v41, 1
  %v345 = vsel %vm314, %v342, %v344
  %v346 = vrot.slane %v42, 1
  %v347 = vsel %vm314, %v344, %v346
  %v348 = vrot.slane %v43, 1
  %v349 = vsel %vm314, %v346, %v348
  %v350 = vrot.slane %v44, 1
  %v351 = vsel %vm314, %v348, %v350
  %v352 = vrot.slane %v45, 1
  %v353 = vsel %vm314, %v350, %v352
  %v354 = vrot.slane %v46, 1
  %v355 = vsel %vm314, %v352, %v354
  %v356 = vrot.slane %v47, 1
  %v357 = vsel %vm314, %v354, %v356
  %v358 = vrot.slane %v48, 1
  %v359 = vsel %vm314, %v356, %v358
  %v360 = vrot.slane %v49, 1
  %v361 = vsel %vm314, %v358, %v360
  %v362 = vrot.slane %v50, 1
  %v363 = vsel %vm314, %v360, %v362
  %v364 = vrot.slane %v51, 1
  %v365 = vsel %vm314, %v362, %v364
  %v366 = vrot.slane %v52, 1
  %v367 = vsel %vm314, %v364, %v366
  %v368 = vrot.slane %v53, 1
  %v369 = vsel %vm314, %v366, %v368
  %v370 = vrot.slane %v54, 1
  %v371 = vsel %vm314, %v368, %v370
  %v372 = vrot.slane %v55, 1
  %v373 = vsel %vm314, %v370, %v372
  %v374 = vrot.slane %v56, 1
  %v375 = vsel %vm314, %v372, %v374
  %v376 = vrot.slane %v57, 1
  %v377 = vsel %vm314, %v374, %v376
  %v378 = vrot.slane %v58, 1
  %v379 = vsel %vm314, %v376, %v378
  %v380 = vrot.slane %v59, 1
  %v381 = vsel %vm314, %v378, %v380
  %v382 = vrot.slane %v60, 1
  %v383 = vsel %vm314, %v380, %v382
  %v384 = vrot.slane %v61, 1
  %v385 = vsel %vm314, %v382, %v384
  %v386 = vrot.slane %v62, 1
  %v387 = vsel %vm314, %v384, %v386
  %v388 = vrot.slane %v63, 1
  %v389 = vsel %vm314, %v386, %v388
  %v390 = vrot.slane %v64, 1
  %v391 = vsel %vm314, %v388, %v390
  %v392 = vrot.slane %v65, 1
  %v393 = vsel %vm314, %v390, %v392
  %v394 = vrot.slane %v66, 1
  %v395 = vsel %vm314, %v392, %v394
  %v396 = vrot.slane %v67, 1
  %v397 = vsel %vm314, %v394, %v396
  %v398 = vrot.slane %v68, 1
  %v399 = vsel %vm314, %v396, %v398
  %v400 = vrot.slane %v69, 1
  %v401 = vsel %vm314, %v398, %v400
  %v402 = vrot.slane %v70, 1
  %v403 = vsel %vm314, %v400, %v402
  %v404 = vrot.slane %v71, 1
  %v405 = vsel %vm314, %v402, %v404
  %v406 = vrot.slane %v72, 1
  %v407 = vsel %vm314, %v404, %v406
  %v408 = vrot.slane %v73, 1
  %v409 = vsel %vm314, %v406, %v408
  %v410 = vrot.slane %v74, 1
  %v411 = vsel %vm314, %v408, %v410
  %v412 = vrot.slane %v75, 1
  %v413 = vsel %vm314, %v410, %v412
  %v414 = vrot.slane %v76, 1
  %v415 = vsel %vm314, %v412, %v414
  %v416 = vrot.slane %v77, 1
  %v417 = vsel %vm314, %v414, %v416
  %v418 = vrot.slane %v78, 1
  %v419 = vsel %vm314, %v416, %v418
  %v420 = vrot.slane %v79, 1
  %v421 = vsel %vm314, %v418, %v420
  %v422 = vrot.slane %v80, 1
  %v423 = vsel %vm314, %v420, %v422
  %v424 = vrot.slane %v81, 1
  %v425 = vsel %vm314, %v422, %v424
  %v426 = vrot.slane %v82, 1
  %v427 = vsel %vm314, %v424, %v426
  %v428 = vrot.slane %v83, 1
  %v429 = vsel %vm314, %v426, %v428
  %v430 = vrot.slane %v84, 1
  %v431 = vsel %vm314, %v428, %v430
  %v432 = vrot.slane %v85, 1
  %v433 = vsel %vm314, %v430, %v432
  %v434 = vrot.slane %v86, 1
  %v435 = vsel %vm314, %v432, %v434
  %v436 = vrot.slane %v87, 1
  %v437 = vsel %vm314, %v434, %v436
  %v438 = vrot.slane %v88, 1
  %v439 = vsel %vm314, %v436, %v438
  %v440 = vrot.slane %v89, 1
  %v441 = vsel %vm314, %v438, %v440
  %v442 = vrot.slane %v90, 1
  %v443 = vsel %vm314, %v440, %v442
  %v444 = vrot.slane %v91, 1
  %v445 = vsel %vm314, %v442, %v444
  %v446 = vrot.slane %v92, 1
  %v447 = vsel %vm314, %v444, %v446
  %v448 = vrot.slane %v93, 1
  %v449 = vsel %vm314, %v446, %v448
  %v450 = vrot.slane %v94, 1
  %v451 = vsel %vm314, %v448, %v450
  %v452 = vrot.slane %v95, 1
  %v453 = vsel %vm314, %v450, %v452
  %v454 = vrot.slane %v96, 1
  %v455 = vsel %vm314, %v452, %v454
  %v456 = vrot.slane %v97, 1
  %v457 = vsel %vm314, %v454, %v456
  %v458 = vrot.slane %v98, 1
  %v459 = vsel %vm314, %v456, %v458
  %v460 = vrot.slane %v99, 1
  %v461 = vsel %vm314, %v458, %v460
  %v462 = vrot.slane %v100, 1
  %v463 = vsel %vm314, %v460, %v462
  %v464 = vrot.slane %v101, 1
  %v465 = vsel %vm314, %v462, %v464
  %v466 = vrot.slane %v102, 1
  %v467 = vsel %vm314, %v464, %v466
  %v468 = vrot.slane %v103, 1
  %v469 = vsel %vm314, %v466, %v468
  %v470 = vrot.slane %v104, 1
  %v471 = vsel %vm314, %v468, %v470
  %v472 = vrot.slane %v105, 1
  %v473 = vsel %vm314, %v470, %v472
  %v474 = vrot.slane %v106, 1
  %v475 = vsel %vm314, %v472, %v474
  %v476 = vrot.slane %v107, 1
  %v477 = vsel %vm314, %v474, %v476
  %v478 = vrot.slane %v108, 1
  %v479 = vsel %vm314, %v476, %v478
  %v480 = vrot.slane %v109, 1
  %v481 = vsel %vm314, %v478, %v480
  %v482 = vrot.slane %v110, 1
  %v483 = vsel %vm314, %v480, %v482
  %v484 = vrot.slane %v111, 1
  %v485 = vsel %vm314, %v482, %v484
  %v486 = vrot.slane %v112, 1
  %v487 = vsel %vm314, %v484, %v486
  %v488 = vrot.slane %v113, 1
  %v489 = vsel %vm314, %v486, %v488
  %v490 = vrot.slane %v114, 1
  %v491 = vsel %vm314, %v488, %v490
  %v492 = vrot.slane %v115, 1
  %v493 = vsel %vm314, %v490, %v492
  %v494 = vrot.slane %v116, 1
  %v495 = vsel %vm314, %v492, %v494
  %v496 = vrot.slane %v117, 1
  %v497 = vsel %vm314, %v494, %v496
  %v498 = vrot.slane %v118, 1
  %v499 = vsel %vm314, %v496, %v498
  %v500 = vrot.slane %v119, 1
  %v501 = vsel %vm314, %v498, %v500
  %v502 = vrot.slane %v120, 1
  %v503 = vsel %vm314, %v500, %v502
  %v504 = vrot.slane %v121, 1
  %v505 = vsel %vm314, %v502, %v504
  %v506 = vrot.slane %v122, 1
  %v507 = vsel %vm314, %v504, %v506
  %v508 = vrot.slane %v123, 1
  %v509 = vsel %vm314, %v506, %v508
  %v510 = vrot.slane %v124, 1
  %v511 = vsel %vm314, %v508, %v510
  %v512 = vrot.slane %v125, 1
  %v513 = vsel %vm314, %v510, %v512
  %v514 = vrot.slane %v126, 1
  %v515 = vsel %vm314, %v512, %v514
  %v516 = vrot.slane %v127, 1
  %v517 = vsel %vm314, %v514, %v516
  %v518 = vrot.slane %v128, 1
  %v519 = vsel %vm314, %v516, %v518
  %v520 = vrot.slane %v129, 1
  %v521 = vsel %vm314, %v518, %v520
  %v522 = vrot.slane %v130, 1
  %v523 = vsel %vm314, %v520, %v522
  %v524 = vrot.slane %v131, 1
  %v525 = vsel %vm314, %v522, %v524
  %v526 = vrot.slane %v132, 1
  %v527 = vsel %vm314, %v524, %v526
  %v528 = vrot.slane %v133, 1
  %v529 = vsel %vm314, %v526, %v528
  %v530 = vrot.slane %v134, 1
  %v531 = vsel %vm314, %v528, %v530
  %v532 = vrot.slane %v135, 1
  %v533 = vsel %vm314, %v530, %v532
  %v534 = vrot.slane %v136, 1
  %v535 = vsel %vm314, %v532, %v534
  %v536 = vrot.slane %v137, 1
  %v537 = vsel %vm314, %v534, %v536
  %v538 = vrot.slane %v138, 1
  %v539 = vsel %vm314, %v536, %v538
  %v540 = vrot.slane %v139, 1
  %v541 = vsel %vm314, %v538, %v540
  %v542 = vrot.slane %v140, 1
  %v543 = vsel %vm314, %v540, %v542
  %v544 = vrot.slane %v141, 1
  %v545 = vsel %vm314, %v542, %v544
  %v546 = vrot.slane %v142, 1
  %v547 = vsel %vm314, %v544, %v546
  %v548 = vrot.slane %v143, 1
  %v549 = vsel %vm314, %v546, %v548
  %v550 = vrot.slane %v144, 1
  %v551 = vsel %vm314, %v548, %v550
  %v552 = vrot.slane %v145, 1
  %v553 = vsel %vm314, %v550, %v552
  %v554 = vrot.slane %v146, 1
  %v555 = vsel %vm314, %v552, %v554
  %v556 = vrot.slane %v147, 1
  %v557 = vsel %vm314, %v554, %v556
  %v558 = vrot.slane %v148, 1
  %v559 = vsel %vm314, %v556, %v558
  %v560 = vrot.slane %v149, 1
  %v561 = vsel %vm314, %v558, %v560
  %v562 = vrot.slane %v150, 1
  %v563 = vsel %vm314, %v560, %v562
  %v564 = vrot.slane %v151, 1
  %v565 = vsel %vm314, %v562, %v564
  %v566 = vrot.slane %v152, 1
  %v567 = vsel %vm314, %v564, %v566
  %v568 = vrot.slane %v153, 1
  %v569 = vsel %vm314, %v566, %v568
  %v570 = vrot.slane %v154, 1
  %v571 = vsel %vm314, %v568, %v570
  %v572 = vrot.slane %v155, 1
  %v573 = vsel %vm314, %v570, %v572
  %v574 = vrot.slane %v156, 1
  %v575 = vsel %vm314, %v572, %v574
  %v576 = vrot.slane %v157, 1
  %v577 = vsel %vm314, %v574, %v576
  %v578 = vrot.slane %v158, 1
  %v579 = vsel %vm314, %v576, %v578
  %v580 = vrot.slane %v159, 1
  %v581 = vsel %vm314, %v578, %v580
  %v582 = vrot.slane %v160, 1
  %v583 = vsel %vm314, %v580, %v582
  %v584 = vrot.slane %v161, 1
  %v585 = vsel %vm314, %v582, %v584
  %v586 = vrot.slane %v162, 1
  %v587 = vsel %vm314, %v584, %v586
  %v588 = vrot.slane %v163, 1
  %v589 = vsel %vm314, %v586, %v588
  %v590 = vrot.slane %v164, 1
  %v591 = vsel %vm314, %v588, %v590
  %v592 = vrot.slane %v165, 1
  %v593 = vsel %vm314, %v590, %v592
  %v594 = vrot.slane %v166, 1
  %v595 = vsel %vm314, %v592, %v594
  %v596 = vrot.slane %v167, 1
  %v597 = vsel %vm314, %v594, %v596
  %v598 = vrot.slane %v168, 1
  %v599 = vsel %vm314, %v596, %v598
  %v600 = vrot.slane %v169, 1
  %v601 = vsel %vm314, %v598, %v600
  %602 = vrot.lane.b32.xlu0 %v317, 4
  %v603 = vpop.permute.xlu0 %602
  %604 = vrot.lane.b32.xlu0 %v319, 4
  %v605 = vpop.permute.xlu0 %604
  %606 = vrot.lane.b32.xlu0 %v321, 4
  %v607 = vpop.permute.xlu0 %606
  %608 = vrot.lane.b32.xlu0 %v323, 4
  %v609 = vpop.permute.xlu0 %608
  %610 = vrot.lane.b32.xlu0 %v325, 4
  %v611 = vpop.permute.xlu0 %610
  %612 = vrot.lane.b32.xlu0 %v327, 4
  %v613 = vpop.permute.xlu0 %612
  %614 = vrot.lane.b32.xlu0 %v329, 4
  %v615 = vpop.permute.xlu0 %614
  %616 = vrot.lane.b32.xlu0 %v331, 4
  %v617 = vpop.permute.xlu0 %616
  %618 = vrot.lane.b32.xlu0 %v333, 4
  %v619 = vpop.permute.xlu0 %618
  %620 = vrot.lane.b32.xlu0 %v335, 4
  %v621 = vpop.permute.xlu0 %620
  %622 = vrot.lane.b32.xlu0 %v337, 4
  %v623 = vpop.permute.xlu0 %622
  %624 = vrot.lane.b32.xlu0 %v339, 4
  %v625 = vpop.permute.xlu0 %624
  %626 = vrot.lane.b32.xlu0 %v341, 4
  %v627 = vpop.permute.xlu0 %626
  %628 = vrot.lane.b32.xlu0 %v343, 4
  %v629 = vpop.permute.xlu0 %628
  %630 = vrot.lane.b32.xlu0 %v345, 4
  %v631 = vpop.permute.xlu0 %630
  %632 = vrot.lane.b32.xlu0 %v347, 4
  %v633 = vpop.permute.xlu0 %632
  %634 = vrot.lane.b32.xlu0 %v349, 4
  %v635 = vpop.permute.xlu0 %634
  %636 = vrot.lane.b32.xlu0 %v351, 4
  %v637 = vpop.permute.xlu0 %636
  %638 = vrot.lane.b32.xlu0 %v353, 4
  %v639 = vpop.permute.xlu0 %638
  %640 = vrot.lane.b32.xlu0 %v355, 4
  %v641 = vpop.permute.xlu0 %640
  %642 = vrot.lane.b32.xlu0 %v357, 4
  %v643 = vpop.permute.xlu0 %642
  %644 = vrot.lane.b32.xlu0 %v359, 4
  %v645 = vpop.permute.xlu0 %644
  %646 = vrot.lane.b32.xlu0 %v361, 4
  %v647 = vpop.permute.xlu0 %646
  %648 = vrot.lane.b32.xlu0 %v363, 4
  %v649 = vpop.permute.xlu0 %648
  %650 = vrot.lane.b32.xlu0 %v365, 4
  %v651 = vpop.permute.xlu0 %650
  %652 = vrot.lane.b32.xlu0 %v367, 4
  %v653 = vpop.permute.xlu0 %652
  %654 = vrot.lane.b32.xlu0 %v369, 4
  %v655 = vpop.permute.xlu0 %654
  %656 = vrot.lane.b32.xlu0 %v371, 4
  %v657 = vpop.permute.xlu0 %656
  %658 = vrot.lane.b32.xlu0 %v373, 4
  %v659 = vpop.permute.xlu0 %658
  %660 = vrot.lane.b32.xlu0 %v375, 4
  %v661 = vpop.permute.xlu0 %660
  %662 = vrot.lane.b32.xlu0 %v377, 4
  %v663 = vpop.permute.xlu0 %662
  %664 = vrot.lane.b32.xlu0 %v379, 4
  %v665 = vpop.permute.xlu0 %664
  %666 = vrot.lane.b32.xlu0 %v381, 4
  %v667 = vpop.permute.xlu0 %666
  %668 = vrot.lane.b32.xlu0 %v383, 4
  %v669 = vpop.permute.xlu0 %668
  %670 = vrot.lane.b32.xlu0 %v385, 4
  %v671 = vpop.permute.xlu0 %670
  %672 = vrot.lane.b32.xlu0 %v387, 4
  %v673 = vpop.permute.xlu0 %672
  %674 = vrot.lane.b32.xlu0 %v389, 4
  %v675 = vpop.permute.xlu0 %674
  %676 = vrot.lane.b32.xlu0 %v391, 4
  %v677 = vpop.permute.xlu0 %676
  %678 = vrot.lane.b32.xlu0 %v393, 4
  %v679 = vpop.permute.xlu0 %678
  %680 = vrot.lane.b32.xlu0 %v395, 4
  %v681 = vpop.permute.xlu0 %680
  %682 = vrot.lane.b32.xlu0 %v397, 4
  %v683 = vpop.permute.xlu0 %682
  %684 = vrot.lane.b32.xlu0 %v399, 4
  %v685 = vpop.permute.xlu0 %684
  %686 = vrot.lane.b32.xlu0 %v401, 4
  %v687 = vpop.permute.xlu0 %686
  %688 = vrot.lane.b32.xlu0 %v403, 4
  %v689 = vpop.permute.xlu0 %688
  %690 = vrot.lane.b32.xlu0 %v405, 4
  %v691 = vpop.permute.xlu0 %690
  %692 = vrot.lane.b32.xlu0 %v407, 4
  %v693 = vpop.permute.xlu0 %692
  %694 = vrot.lane.b32.xlu0 %v409, 4
  %v695 = vpop.permute.xlu0 %694
  %696 = vrot.lane.b32.xlu0 %v411, 4
  %v697 = vpop.permute.xlu0 %696
  %698 = vrot.lane.b32.xlu0 %v413, 4
  %v699 = vpop.permute.xlu0 %698
  %700 = vrot.lane.b32.xlu0 %v415, 4
  %v701 = vpop.permute.xlu0 %700
  %702 = vrot.lane.b32.xlu0 %v417, 4
  %v703 = vpop.permute.xlu0 %702
  %704 = vrot.lane.b32.xlu0 %v419, 4
  %v705 = vpop.permute.xlu0 %704
  %706 = vrot.lane.b32.xlu0 %v421, 4
  %v707 = vpop.permute.xlu0 %706
  %708 = vrot.lane.b32.xlu0 %v423, 4
  %v709 = vpop.permute.xlu0 %708
  %710 = vrot.lane.b32.xlu0 %v425, 4
  %v711 = vpop.permute.xlu0 %710
  %712 = vrot.lane.b32.xlu0 %v427, 4
  %v713 = vpop.permute.xlu0 %712
  %714 = vrot.lane.b32.xlu0 %v429, 4
  %v715 = vpop.permute.xlu0 %714
  %716 = vrot.lane.b32.xlu0 %v431, 4
  %v717 = vpop.permute.xlu0 %716
  %718 = vrot.lane.b32.xlu0 %v433, 4
  %v719 = vpop.permute.xlu0 %718
  %720 = vrot.lane.b32.xlu0 %v435, 4
  %v721 = vpop.permute.xlu0 %720
  %722 = vrot.lane.b32.xlu0 %v437, 4
  %v723 = vpop.permute.xlu0 %722
  %724 = vrot.lane.b32.xlu0 %v439, 4
  %v725 = vpop.permute.xlu0 %724
  %726 = vrot.lane.b32.xlu0 %v441, 4
  %v727 = vpop.permute.xlu0 %726
  %728 = vrot.lane.b32.xlu0 %v443, 4
  %v729 = vpop.permute.xlu0 %728
  %730 = vrot.lane.b32.xlu0 %v445, 4
  %v731 = vpop.permute.xlu0 %730
  %732 = vrot.lane.b32.xlu0 %v447, 4
  %v733 = vpop.permute.xlu0 %732
  %734 = vrot.lane.b32.xlu0 %v449, 4
  %v735 = vpop.permute.xlu0 %734
  %736 = vrot.lane.b32.xlu0 %v451, 4
  %v737 = vpop.permute.xlu0 %736
  %738 = vrot.lane.b32.xlu0 %v453, 4
  %v739 = vpop.permute.xlu0 %738
  %740 = vrot.lane.b32.xlu0 %v455, 4
  %v741 = vpop.permute.xlu0 %740
  %742 = vrot.lane.b32.xlu0 %v457, 4
  %v743 = vpop.permute.xlu0 %742
  %744 = vrot.lane.b32.xlu0 %v459, 4
  %v745 = vpop.permute.xlu0 %744
  %746 = vrot.lane.b32.xlu0 %v461, 4
  %v747 = vpop.permute.xlu0 %746
  %748 = vrot.lane.b32.xlu0 %v463, 4
  %v749 = vpop.permute.xlu0 %748
  %750 = vrot.lane.b32.xlu0 %v465, 4
  %v751 = vpop.permute.xlu0 %750
  %752 = vrot.lane.b32.xlu0 %v467, 4
  %v753 = vpop.permute.xlu0 %752
  %754 = vrot.lane.b32.xlu0 %v469, 4
  %v755 = vpop.permute.xlu0 %754
  %756 = vrot.lane.b32.xlu0 %v471, 4
  %v757 = vpop.permute.xlu0 %756
  %758 = vrot.lane.b32.xlu0 %v473, 4
  %v759 = vpop.permute.xlu0 %758
  %760 = vrot.lane.b32.xlu0 %v475, 4
  %v761 = vpop.permute.xlu0 %760
  %762 = vrot.lane.b32.xlu0 %v477, 4
  %v763 = vpop.permute.xlu0 %762
  %764 = vrot.lane.b32.xlu0 %v479, 4
  %v765 = vpop.permute.xlu0 %764
  %766 = vrot.lane.b32.xlu0 %v481, 4
  %v767 = vpop.permute.xlu0 %766
  %768 = vrot.lane.b32.xlu0 %v483, 4
  %v769 = vpop.permute.xlu0 %768
  %770 = vrot.lane.b32.xlu0 %v485, 4
  %v771 = vpop.permute.xlu0 %770
  %772 = vrot.lane.b32.xlu0 %v487, 4
  %v773 = vpop.permute.xlu0 %772
  %774 = vrot.lane.b32.xlu0 %v489, 4
  %v775 = vpop.permute.xlu0 %774
  %776 = vrot.lane.b32.xlu0 %v491, 4
  %v777 = vpop.permute.xlu0 %776
  %778 = vrot.lane.b32.xlu0 %v493, 4
  %v779 = vpop.permute.xlu0 %778
  %780 = vrot.lane.b32.xlu0 %v495, 4
  %v781 = vpop.permute.xlu0 %780
  %782 = vrot.lane.b32.xlu0 %v497, 4
  %v783 = vpop.permute.xlu0 %782
  %784 = vrot.lane.b32.xlu0 %v499, 4
  %v785 = vpop.permute.xlu0 %784
  %786 = vrot.lane.b32.xlu0 %v501, 4
  %v787 = vpop.permute.xlu0 %786
  %788 = vrot.lane.b32.xlu0 %v503, 4
  %v789 = vpop.permute.xlu0 %788
  %790 = vrot.lane.b32.xlu0 %v505, 4
  %v791 = vpop.permute.xlu0 %790
  %792 = vrot.lane.b32.xlu0 %v507, 4
  %v793 = vpop.permute.xlu0 %792
  %794 = vrot.lane.b32.xlu0 %v509, 4
  %v795 = vpop.permute.xlu0 %794
  %796 = vrot.lane.b32.xlu0 %v511, 4
  %v797 = vpop.permute.xlu0 %796
  %798 = vrot.lane.b32.xlu0 %v513, 4
  %v799 = vpop.permute.xlu0 %798
  %800 = vrot.lane.b32.xlu0 %v515, 4
  %v801 = vpop.permute.xlu0 %800
  %802 = vrot.lane.b32.xlu0 %v517, 4
  %v803 = vpop.permute.xlu0 %802
  %804 = vrot.lane.b32.xlu0 %v519, 4
  %v805 = vpop.permute.xlu0 %804
  %806 = vrot.lane.b32.xlu0 %v521, 4
  %v807 = vpop.permute.xlu0 %806
  %808 = vrot.lane.b32.xlu0 %v523, 4
  %v809 = vpop.permute.xlu0 %808
  %810 = vrot.lane.b32.xlu0 %v525, 4
  %v811 = vpop.permute.xlu0 %810
  %812 = vrot.lane.b32.xlu0 %v527, 4
  %v813 = vpop.permute.xlu0 %812
  %814 = vrot.lane.b32.xlu0 %v529, 4
  %v815 = vpop.permute.xlu0 %814
  %816 = vrot.lane.b32.xlu0 %v531, 4
  %v817 = vpop.permute.xlu0 %816
  %818 = vrot.lane.b32.xlu0 %v533, 4
  %v819 = vpop.permute.xlu0 %818
  %820 = vrot.lane.b32.xlu0 %v535, 4
  %v821 = vpop.permute.xlu0 %820
  %822 = vrot.lane.b32.xlu0 %v537, 4
  %v823 = vpop.permute.xlu0 %822
  %824 = vrot.lane.b32.xlu0 %v539, 4
  %v825 = vpop.permute.xlu0 %824
  %826 = vrot.lane.b32.xlu0 %v541, 4
  %v827 = vpop.permute.xlu0 %826
  %828 = vrot.lane.b32.xlu0 %v543, 4
  %v829 = vpop.permute.xlu0 %828
  %830 = vrot.lane.b32.xlu0 %v545, 4
  %v831 = vpop.permute.xlu0 %830
  %832 = vrot.lane.b32.xlu0 %v547, 4
  %v833 = vpop.permute.xlu0 %832
  %834 = vrot.lane.b32.xlu0 %v549, 4
  %v835 = vpop.permute.xlu0 %834
  %836 = vrot.lane.b32.xlu0 %v551, 4
  %v837 = vpop.permute.xlu0 %836
  %838 = vrot.lane.b32.xlu0 %v553, 4
  %v839 = vpop.permute.xlu0 %838
  %840 = vrot.lane.b32.xlu0 %v555, 4
  %v841 = vpop.permute.xlu0 %840
  %842 = vrot.lane.b32.xlu0 %v557, 4
  %v843 = vpop.permute.xlu0 %842
  %844 = vrot.lane.b32.xlu0 %v559, 4
  %v845 = vpop.permute.xlu0 %844
  %846 = vrot.lane.b32.xlu0 %v561, 4
  %v847 = vpop.permute.xlu0 %846
  %848 = vrot.lane.b32.xlu0 %v563, 4
  %v849 = vpop.permute.xlu0 %848
  %850 = vrot.lane.b32.xlu0 %v565, 4
  %v851 = vpop.permute.xlu0 %850
  %852 = vrot.lane.b32.xlu0 %v567, 4
  %v853 = vpop.permute.xlu0 %852
  %854 = vrot.lane.b32.xlu0 %v569, 4
  %v855 = vpop.permute.xlu0 %854
  %856 = vrot.lane.b32.xlu0 %v571, 4
  %v857 = vpop.permute.xlu0 %856
  %858 = vrot.lane.b32.xlu0 %v573, 4
  %v859 = vpop.permute.xlu0 %858
  %860 = vrot.lane.b32.xlu0 %v575, 4
  %v861 = vpop.permute.xlu0 %860
  %862 = vrot.lane.b32.xlu0 %v577, 4
  %v863 = vpop.permute.xlu0 %862
  %864 = vrot.lane.b32.xlu0 %v579, 4
  %v865 = vpop.permute.xlu0 %864
  %866 = vrot.lane.b32.xlu0 %v581, 4
  %v867 = vpop.permute.xlu0 %866
  %868 = vrot.lane.b32.xlu0 %v583, 4
  %v869 = vpop.permute.xlu0 %868
  %870 = vrot.lane.b32.xlu0 %v585, 4
  %v871 = vpop.permute.xlu0 %870
  %872 = vrot.lane.b32.xlu0 %v587, 4
  %v873 = vpop.permute.xlu0 %872
  %874 = vrot.lane.b32.xlu0 %v589, 4
  %v875 = vpop.permute.xlu0 %874
  %876 = vrot.lane.b32.xlu0 %v591, 4
  %v877 = vpop.permute.xlu0 %876
  %878 = vrot.lane.b32.xlu0 %v593, 4
  %v879 = vpop.permute.xlu0 %878
  %880 = vrot.lane.b32.xlu0 %v595, 4
  %v881 = vpop.permute.xlu0 %880
  %882 = vrot.lane.b32.xlu0 %v597, 4
  %v883 = vpop.permute.xlu0 %882
  %884 = vrot.lane.b32.xlu0 %v599, 4
  %v885 = vpop.permute.xlu0 %884
  %886 = vrot.lane.b32.xlu0 %v601, 4
  %v887 = vpop.permute.xlu0 %886
  %888 = vrot.lane.b32.xlu0 %v600, 4
  %v889 = vpop.permute.xlu0 %888
  %vm1034 = vcmask 1045504
  %v1035 = vrot.slane %v26, 2
  %v1036 = vrot.slane %v27, 2
  %v1037 = vsel %vm1034, %v1035, %v1036
  %v1038 = vrot.slane %v28, 2
  %v1039 = vsel %vm1034, %v1036, %v1038
  %v1040 = vrot.slane %v29, 2
  %v1041 = vsel %vm1034, %v1038, %v1040
  %v1042 = vrot.slane %v30, 2
  %v1043 = vsel %vm1034, %v1040, %v1042
  %v1044 = vrot.slane %v31, 2
  %v1045 = vsel %vm1034, %v1042, %v1044
  %v1046 = vrot.slane %v32, 2
  %v1047 = vsel %vm1034, %v1044, %v1046
  %v1048 = vrot.slane %v33, 2
  %v1049 = vsel %vm1034, %v1046, %v1048
  %v1050 = vrot.slane %v34, 2
  %v1051 = vsel %vm1034, %v1048, %v1050
  %v1052 = vrot.slane %v35, 2
  %v1053 = vsel %vm1034, %v1050, %v1052
  %v1054 = vrot.slane %v36, 2
  %v1055 = vsel %vm1034, %v1052, %v1054
  %v1056 = vrot.slane %v37, 2
  %v1057 = vsel %vm1034, %v1054, %v1056
  %v1058 = vrot.slane %v38, 2
  %v1059 = vsel %vm1034, %v1056, %v1058
  %v1060 = vrot.slane %v39, 2
  %v1061 = vsel %vm1034, %v1058, %v1060
  %v1062 = vrot.slane %v40, 2
  %v1063 = vsel %vm1034, %v1060, %v1062
  %v1064 = vrot.slane %v41, 2
  %v1065 = vsel %vm1034, %v1062, %v1064
  %v1066 = vrot.slane %v42, 2
  %v1067 = vsel %vm1034, %v1064, %v1066
  %v1068 = vrot.slane %v43, 2
  %v1069 = vsel %vm1034, %v1066, %v1068
  %v1070 = vrot.slane %v44, 2
  %v1071 = vsel %vm1034, %v1068, %v1070
  %v1072 = vrot.slane %v45, 2
  %v1073 = vsel %vm1034, %v1070, %v1072
  %v1074 = vrot.slane %v46, 2
  %v1075 = vsel %vm1034, %v1072, %v1074
  %v1076 = vrot.slane %v47, 2
  %v1077 = vsel %vm1034, %v1074, %v1076
  %v1078 = vrot.slane %v48, 2
  %v1079 = vsel %vm1034, %v1076, %v1078
  %v1080 = vrot.slane %v49, 2
  %v1081 = vsel %vm1034, %v1078, %v1080
  %v1082 = vrot.slane %v50, 2
  %v1083 = vsel %vm1034, %v1080, %v1082
  %v1084 = vrot.slane %v51, 2
  %v1085 = vsel %vm1034, %v1082, %v1084
  %v1086 = vrot.slane %v52, 2
  %v1087 = vsel %vm1034, %v1084, %v1086
  %v1088 = vrot.slane %v53, 2
  %v1089 = vsel %vm1034, %v1086, %v1088
  %v1090 = vrot.slane %v54, 2
  %v1091 = vsel %vm1034, %v1088, %v1090
  %v1092 = vrot.slane %v55, 2
  %v1093 = vsel %vm1034, %v1090, %v1092
  %v1094 = vrot.slane %v56, 2
  %v1095 = vsel %vm1034, %v1092, %v1094
  %v1096 = vrot.slane %v57, 2
  %v1097 = vsel %vm1034, %v1094, %v1096
  %v1098 = vrot.slane %v58, 2
  %v1099 = vsel %vm1034, %v1096, %v1098
  %v1100 = vrot.slane %v59, 2
  %v1101 = vsel %vm1034, %v1098, %v1100
  %v1102 = vrot.slane %v60, 2
  %v1103 = vsel %vm1034, %v1100, %v1102
  %v1104 = vrot.slane %v61, 2
  %v1105 = vsel %vm1034, %v1102, %v1104
  %v1106 = vrot.slane %v62, 2
  %v1107 = vsel %vm1034, %v1104, %v1106
  %v1108 = vrot.slane %v63, 2
  %v1109 = vsel %vm1034, %v1106, %v1108
  %v1110 = vrot.slane %v64, 2
  %v1111 = vsel %vm1034, %v1108, %v1110
  %v1112 = vrot.slane %v65, 2
  %v1113 = vsel %vm1034, %v1110, %v1112
  %v1114 = vrot.slane %v66, 2
  %v1115 = vsel %vm1034, %v1112, %v1114
  %v1116 = vrot.slane %v67, 2
  %v1117 = vsel %vm1034, %v1114, %v1116
  %v1118 = vrot.slane %v68, 2
  %v1119 = vsel %vm1034, %v1116, %v1118
  %v1120 = vrot.slane %v69, 2
  %v1121 = vsel %vm1034, %v1118, %v1120
  %v1122 = vrot.slane %v70, 2
  %v1123 = vsel %vm1034, %v1120, %v1122
  %v1124 = vrot.slane %v71, 2
  %v1125 = vsel %vm1034, %v1122, %v1124
  %v1126 = vrot.slane %v72, 2
  %v1127 = vsel %vm1034, %v1124, %v1126
  %v1128 = vrot.slane %v73, 2
  %v1129 = vsel %vm1034, %v1126, %v1128
  %v1130 = vrot.slane %v74, 2
  %v1131 = vsel %vm1034, %v1128, %v1130
  %v1132 = vrot.slane %v75, 2
  %v1133 = vsel %vm1034, %v1130, %v1132
  %v1134 = vrot.slane %v76, 2
  %v1135 = vsel %vm1034, %v1132, %v1134
  %v1136 = vrot.slane %v77, 2
  %v1137 = vsel %vm1034, %v1134, %v1136
  %v1138 = vrot.slane %v78, 2
  %v1139 = vsel %vm1034, %v1136, %v1138
  %v1140 = vrot.slane %v79, 2
  %v1141 = vsel %vm1034, %v1138, %v1140
  %v1142 = vrot.slane %v80, 2
  %v1143 = vsel %vm1034, %v1140, %v1142
  %v1144 = vrot.slane %v81, 2
  %v1145 = vsel %vm1034, %v1142, %v1144
  %v1146 = vrot.slane %v82, 2
  %v1147 = vsel %vm1034, %v1144, %v1146
  %v1148 = vrot.slane %v83, 2
  %v1149 = vsel %vm1034, %v1146, %v1148
  %v1150 = vrot.slane %v84, 2
  %v1151 = vsel %vm1034, %v1148, %v1150
  %v1152 = vrot.slane %v85, 2
  %v1153 = vsel %vm1034, %v1150, %v1152
  %v1154 = vrot.slane %v86, 2
  %v1155 = vsel %vm1034, %v1152, %v1154
  %v1156 = vrot.slane %v87, 2
  %v1157 = vsel %vm1034, %v1154, %v1156
  %v1158 = vrot.slane %v88, 2
  %v1159 = vsel %vm1034, %v1156, %v1158
  %v1160 = vrot.slane %v89, 2
  %v1161 = vsel %vm1034, %v1158, %v1160
  %v1162 = vrot.slane %v90, 2
  %v1163 = vsel %vm1034, %v1160, %v1162
  %v1164 = vrot.slane %v91, 2
  %v1165 = vsel %vm1034, %v1162, %v1164
  %v1166 = vrot.slane %v92, 2
  %v1167 = vsel %vm1034, %v1164, %v1166
  %v1168 = vrot.slane %v93, 2
  %v1169 = vsel %vm1034, %v1166, %v1168
  %v1170 = vrot.slane %v94, 2
  %v1171 = vsel %vm1034, %v1168, %v1170
  %v1172 = vrot.slane %v95, 2
  %v1173 = vsel %vm1034, %v1170, %v1172
  %v1174 = vrot.slane %v96, 2
  %v1175 = vsel %vm1034, %v1172, %v1174
  %v1176 = vrot.slane %v97, 2
  %v1177 = vsel %vm1034, %v1174, %v1176
  %v1178 = vrot.slane %v98, 2
  %v1179 = vsel %vm1034, %v1176, %v1178
  %v1180 = vrot.slane %v99, 2
  %v1181 = vsel %vm1034, %v1178, %v1180
  %v1182 = vrot.slane %v100, 2
  %v1183 = vsel %vm1034, %v1180, %v1182
  %v1184 = vrot.slane %v101, 2
  %v1185 = vsel %vm1034, %v1182, %v1184
  %v1186 = vrot.slane %v102, 2
  %v1187 = vsel %vm1034, %v1184, %v1186
  %v1188 = vrot.slane %v103, 2
  %v1189 = vsel %vm1034, %v1186, %v1188
  %v1190 = vrot.slane %v104, 2
  %v1191 = vsel %vm1034, %v1188, %v1190
  %v1192 = vrot.slane %v105, 2
  %v1193 = vsel %vm1034, %v1190, %v1192
  %v1194 = vrot.slane %v106, 2
  %v1195 = vsel %vm1034, %v1192, %v1194
  %v1196 = vrot.slane %v107, 2
  %v1197 = vsel %vm1034, %v1194, %v1196
  %v1198 = vrot.slane %v108, 2
  %v1199 = vsel %vm1034, %v1196, %v1198
  %v1200 = vrot.slane %v109, 2
  %v1201 = vsel %vm1034, %v1198, %v1200
  %v1202 = vrot.slane %v110, 2
  %v1203 = vsel %vm1034, %v1200, %v1202
  %v1204 = vrot.slane %v111, 2
  %v1205 = vsel %vm1034, %v1202, %v1204
  %v1206 = vrot.slane %v112, 2
  %v1207 = vsel %vm1034, %v1204, %v1206
  %v1208 = vrot.slane %v113, 2
  %v1209 = vsel %vm1034, %v1206, %v1208
  %v1210 = vrot.slane %v114, 2
  %v1211 = vsel %vm1034, %v1208, %v1210
  %v1212 = vrot.slane %v115, 2
  %v1213 = vsel %vm1034, %v1210, %v1212
  %v1214 = vrot.slane %v116, 2
  %v1215 = vsel %vm1034, %v1212, %v1214
  %v1216 = vrot.slane %v117, 2
  %v1217 = vsel %vm1034, %v1214, %v1216
  %v1218 = vrot.slane %v118, 2
  %v1219 = vsel %vm1034, %v1216, %v1218
  %v1220 = vrot.slane %v119, 2
  %v1221 = vsel %vm1034, %v1218, %v1220
  %v1222 = vrot.slane %v120, 2
  %v1223 = vsel %vm1034, %v1220, %v1222
  %v1224 = vrot.slane %v121, 2
  %v1225 = vsel %vm1034, %v1222, %v1224
  %v1226 = vrot.slane %v122, 2
  %v1227 = vsel %vm1034, %v1224, %v1226
  %v1228 = vrot.slane %v123, 2
  %v1229 = vsel %vm1034, %v1226, %v1228
  %v1230 = vrot.slane %v124, 2
  %v1231 = vsel %vm1034, %v1228, %v1230
  %v1232 = vrot.slane %v125, 2
  %v1233 = vsel %vm1034, %v1230, %v1232
  %v1234 = vrot.slane %v126, 2
  %v1235 = vsel %vm1034, %v1232, %v1234
  %v1236 = vrot.slane %v127, 2
  %v1237 = vsel %vm1034, %v1234, %v1236
  %v1238 = vrot.slane %v128, 2
  %v1239 = vsel %vm1034, %v1236, %v1238
  %v1240 = vrot.slane %v129, 2
  %v1241 = vsel %vm1034, %v1238, %v1240
  %v1242 = vrot.slane %v130, 2
  %v1243 = vsel %vm1034, %v1240, %v1242
  %v1244 = vrot.slane %v131, 2
  %v1245 = vsel %vm1034, %v1242, %v1244
  %v1246 = vrot.slane %v132, 2
  %v1247 = vsel %vm1034, %v1244, %v1246
  %v1248 = vrot.slane %v133, 2
  %v1249 = vsel %vm1034, %v1246, %v1248
  %v1250 = vrot.slane %v134, 2
  %v1251 = vsel %vm1034, %v1248, %v1250
  %v1252 = vrot.slane %v135, 2
  %v1253 = vsel %vm1034, %v1250, %v1252
  %v1254 = vrot.slane %v136, 2
  %v1255 = vsel %vm1034, %v1252, %v1254
  %v1256 = vrot.slane %v137, 2
  %v1257 = vsel %vm1034, %v1254, %v1256
  %v1258 = vrot.slane %v138, 2
  %v1259 = vsel %vm1034, %v1256, %v1258
  %v1260 = vrot.slane %v139, 2
  %v1261 = vsel %vm1034, %v1258, %v1260
  %v1262 = vrot.slane %v140, 2
  %v1263 = vsel %vm1034, %v1260, %v1262
  %v1264 = vrot.slane %v141, 2
  %v1265 = vsel %vm1034, %v1262, %v1264
  %v1266 = vrot.slane %v142, 2
  %v1267 = vsel %vm1034, %v1264, %v1266
  %v1268 = vrot.slane %v143, 2
  %v1269 = vsel %vm1034, %v1266, %v1268
  %v1270 = vrot.slane %v144, 2
  %v1271 = vsel %vm1034, %v1268, %v1270
  %v1272 = vrot.slane %v145, 2
  %v1273 = vsel %vm1034, %v1270, %v1272
  %v1274 = vrot.slane %v146, 2
  %v1275 = vsel %vm1034, %v1272, %v1274
  %v1276 = vrot.slane %v147, 2
  %v1277 = vsel %vm1034, %v1274, %v1276
  %v1278 = vrot.slane %v148, 2
  %v1279 = vsel %vm1034, %v1276, %v1278
  %v1280 = vrot.slane %v149, 2
  %v1281 = vsel %vm1034, %v1278, %v1280
  %v1282 = vrot.slane %v150, 2
  %v1283 = vsel %vm1034, %v1280, %v1282
  %v1284 = vrot.slane %v151, 2
  %v1285 = vsel %vm1034, %v1282, %v1284
  %v1286 = vrot.slane %v152, 2
  %v1287 = vsel %vm1034, %v1284, %v1286
  %v1288 = vrot.slane %v153, 2
  %v1289 = vsel %vm1034, %v1286, %v1288
  %v1290 = vrot.slane %v154, 2
  %v1291 = vsel %vm1034, %v1288, %v1290
  %v1292 = vrot.slane %v155, 2
  %v1293 = vsel %vm1034, %v1290, %v1292
  %v1294 = vrot.slane %v156, 2
  %v1295 = vsel %vm1034, %v1292, %v1294
  %v1296 = vrot.slane %v157, 2
  %v1297 = vsel %vm1034, %v1294, %v1296
  %v1298 = vrot.slane %v158, 2
  %v1299 = vsel %vm1034, %v1296, %v1298
  %v1300 = vrot.slane %v159, 2
  %v1301 = vsel %vm1034, %v1298, %v1300
  %v1302 = vrot.slane %v160, 2
  %v1303 = vsel %vm1034, %v1300, %v1302
  %v1304 = vrot.slane %v161, 2
  %v1305 = vsel %vm1034, %v1302, %v1304
  %v1306 = vrot.slane %v162, 2
  %v1307 = vsel %vm1034, %v1304, %v1306
  %v1308 = vrot.slane %v163, 2
  %v1309 = vsel %vm1034, %v1306, %v1308
  %v1310 = vrot.slane %v164, 2
  %v1311 = vsel %vm1034, %v1308, %v1310
  %v1312 = vrot.slane %v165, 2
  %v1313 = vsel %vm1034, %v1310, %v1312
  %v1314 = vrot.slane %v166, 2
  %v1315 = vsel %vm1034, %v1312, %v1314
  %v1316 = vrot.slane %v167, 2
  %v1317 = vsel %vm1034, %v1314, %v1316
  %v1318 = vrot.slane %v168, 2
  %v1319 = vsel %vm1034, %v1316, %v1318
  %v1320 = vrot.slane %v169, 2
  %v1321 = vsel %vm1034, %v1318, %v1320
  %1322 = vrot.lane.b32.xlu0 %v1037, 8
  %v1323 = vpop.permute.xlu0 %1322
  %1324 = vrot.lane.b32.xlu0 %v1039, 8
  %v1325 = vpop.permute.xlu0 %1324
  %1326 = vrot.lane.b32.xlu0 %v1041, 8
  %v1327 = vpop.permute.xlu0 %1326
  %1328 = vrot.lane.b32.xlu0 %v1043, 8
  %v1329 = vpop.permute.xlu0 %1328
  %1330 = vrot.lane.b32.xlu0 %v1045, 8
  %v1331 = vpop.permute.xlu0 %1330
  %1332 = vrot.lane.b32.xlu0 %v1047, 8
  %v1333 = vpop.permute.xlu0 %1332
  %1334 = vrot.lane.b32.xlu0 %v1049, 8
  %v1335 = vpop.permute.xlu0 %1334
  %1336 = vrot.lane.b32.xlu0 %v1051, 8
  %v1337 = vpop.permute.xlu0 %1336
  %1338 = vrot.lane.b32.xlu0 %v1053, 8
  %v1339 = vpop.permute.xlu0 %1338
  %1340 = vrot.lane.b32.xlu0 %v1055, 8
  %v1341 = vpop.permute.xlu0 %1340
  %1342 = vrot.lane.b32.xlu0 %v1057, 8
  %v1343 = vpop.permute.xlu0 %1342
  %1344 = vrot.lane.b32.xlu0 %v1059, 8
  %v1345 = vpop.permute.xlu0 %1344
  %1346 = vrot.lane.b32.xlu0 %v1061, 8
  %v1347 = vpop.permute.xlu0 %1346
  %1348 = vrot.lane.b32.xlu0 %v1063, 8
  %v1349 = vpop.permute.xlu0 %1348
  %1350 = vrot.lane.b32.xlu0 %v1065, 8
  %v1351 = vpop.permute.xlu0 %1350
  %1352 = vrot.lane.b32.xlu0 %v1067, 8
  %v1353 = vpop.permute.xlu0 %1352
  %1354 = vrot.lane.b32.xlu0 %v1069, 8
  %v1355 = vpop.permute.xlu0 %1354
  %1356 = vrot.lane.b32.xlu0 %v1071, 8
  %v1357 = vpop.permute.xlu0 %1356
  %1358 = vrot.lane.b32.xlu0 %v1073, 8
  %v1359 = vpop.permute.xlu0 %1358
  %1360 = vrot.lane.b32.xlu0 %v1075, 8
  %v1361 = vpop.permute.xlu0 %1360
  %1362 = vrot.lane.b32.xlu0 %v1077, 8
  %v1363 = vpop.permute.xlu0 %1362
  %1364 = vrot.lane.b32.xlu0 %v1079, 8
  %v1365 = vpop.permute.xlu0 %1364
  %1366 = vrot.lane.b32.xlu0 %v1081, 8
  %v1367 = vpop.permute.xlu0 %1366
  %1368 = vrot.lane.b32.xlu0 %v1083, 8
  %v1369 = vpop.permute.xlu0 %1368
  %1370 = vrot.lane.b32.xlu0 %v1085, 8
  %v1371 = vpop.permute.xlu0 %1370
  %1372 = vrot.lane.b32.xlu0 %v1087, 8
  %v1373 = vpop.permute.xlu0 %1372
  %1374 = vrot.lane.b32.xlu0 %v1089, 8
  %v1375 = vpop.permute.xlu0 %1374
  %1376 = vrot.lane.b32.xlu0 %v1091, 8
  %v1377 = vpop.permute.xlu0 %1376
  %1378 = vrot.lane.b32.xlu0 %v1093, 8
  %v1379 = vpop.permute.xlu0 %1378
  %1380 = vrot.lane.b32.xlu0 %v1095, 8
  %v1381 = vpop.permute.xlu0 %1380
  %1382 = vrot.lane.b32.xlu0 %v1097, 8
  %v1383 = vpop.permute.xlu0 %1382
  %1384 = vrot.lane.b32.xlu0 %v1099, 8
  %v1385 = vpop.permute.xlu0 %1384
  %1386 = vrot.lane.b32.xlu0 %v1101, 8
  %v1387 = vpop.permute.xlu0 %1386
  %1388 = vrot.lane.b32.xlu0 %v1103, 8
  %v1389 = vpop.permute.xlu0 %1388
  %1390 = vrot.lane.b32.xlu0 %v1105, 8
  %v1391 = vpop.permute.xlu0 %1390
  %1392 = vrot.lane.b32.xlu0 %v1107, 8
  %v1393 = vpop.permute.xlu0 %1392
  %1394 = vrot.lane.b32.xlu0 %v1109, 8
  %v1395 = vpop.permute.xlu0 %1394
  %1396 = vrot.lane.b32.xlu0 %v1111, 8
  %v1397 = vpop.permute.xlu0 %1396
  %1398 = vrot.lane.b32.xlu0 %v1113, 8
  %v1399 = vpop.permute.xlu0 %1398
  %1400 = vrot.lane.b32.xlu0 %v1115, 8
  %v1401 = vpop.permute.xlu0 %1400
  %1402 = vrot.lane.b32.xlu0 %v1117, 8
  %v1403 = vpop.permute.xlu0 %1402
  %1404 = vrot.lane.b32.xlu0 %v1119, 8
  %v1405 = vpop.permute.xlu0 %1404
  %1406 = vrot.lane.b32.xlu0 %v1121, 8
  %v1407 = vpop.permute.xlu0 %1406
  %1408 = vrot.lane.b32.xlu0 %v1123, 8
  %v1409 = vpop.permute.xlu0 %1408
  %1410 = vrot.lane.b32.xlu0 %v1125, 8
  %v1411 = vpop.permute.xlu0 %1410
  %1412 = vrot.lane.b32.xlu0 %v1127, 8
  %v1413 = vpop.permute.xlu0 %1412
  %1414 = vrot.lane.b32.xlu0 %v1129, 8
  %v1415 = vpop.permute.xlu0 %1414
  %1416 = vrot.lane.b32.xlu0 %v1131, 8
  %v1417 = vpop.permute.xlu0 %1416
  %1418 = vrot.lane.b32.xlu0 %v1133, 8
  %v1419 = vpop.permute.xlu0 %1418
  %1420 = vrot.lane.b32.xlu0 %v1135, 8
  %v1421 = vpop.permute.xlu0 %1420
  %1422 = vrot.lane.b32.xlu0 %v1137, 8
  %v1423 = vpop.permute.xlu0 %1422
  %1424 = vrot.lane.b32.xlu0 %v1139, 8
  %v1425 = vpop.permute.xlu0 %1424
  %1426 = vrot.lane.b32.xlu0 %v1141, 8
  %v1427 = vpop.permute.xlu0 %1426
  %1428 = vrot.lane.b32.xlu0 %v1143, 8
  %v1429 = vpop.permute.xlu0 %1428
  %1430 = vrot.lane.b32.xlu0 %v1145, 8
  %v1431 = vpop.permute.xlu0 %1430
  %1432 = vrot.lane.b32.xlu0 %v1147, 8
  %v1433 = vpop.permute.xlu0 %1432
  %1434 = vrot.lane.b32.xlu0 %v1149, 8
  %v1435 = vpop.permute.xlu0 %1434
  %1436 = vrot.lane.b32.xlu0 %v1151, 8
  %v1437 = vpop.permute.xlu0 %1436
  %1438 = vrot.lane.b32.xlu0 %v1153, 8
  %v1439 = vpop.permute.xlu0 %1438
  %1440 = vrot.lane.b32.xlu0 %v1155, 8
  %v1441 = vpop.permute.xlu0 %1440
  %1442 = vrot.lane.b32.xlu0 %v1157, 8
  %v1443 = vpop.permute.xlu0 %1442
  %1444 = vrot.lane.b32.xlu0 %v1159, 8
  %v1445 = vpop.permute.xlu0 %1444
  %1446 = vrot.lane.b32.xlu0 %v1161, 8
  %v1447 = vpop.permute.xlu0 %1446
  %1448 = vrot.lane.b32.xlu0 %v1163, 8
  %v1449 = vpop.permute.xlu0 %1448
  %1450 = vrot.lane.b32.xlu0 %v1165, 8
  %v1451 = vpop.permute.xlu0 %1450
  %1452 = vrot.lane.b32.xlu0 %v1167, 8
  %v1453 = vpop.permute.xlu0 %1452
  %1454 = vrot.lane.b32.xlu0 %v1169, 8
  %v1455 = vpop.permute.xlu0 %1454
  %1456 = vrot.lane.b32.xlu0 %v1171, 8
  %v1457 = vpop.permute.xlu0 %1456
  %1458 = vrot.lane.b32.xlu0 %v1173, 8
  %v1459 = vpop.permute.xlu0 %1458
  %1460 = vrot.lane.b32.xlu0 %v1175, 8
  %v1461 = vpop.permute.xlu0 %1460
  %1462 = vrot.lane.b32.xlu0 %v1177, 8
  %v1463 = vpop.permute.xlu0 %1462
  %1464 = vrot.lane.b32.xlu0 %v1179, 8
  %v1465 = vpop.permute.xlu0 %1464
  %1466 = vrot.lane.b32.xlu0 %v1181, 8
  %v1467 = vpop.permute.xlu0 %1466
  %1468 = vrot.lane.b32.xlu0 %v1183, 8
  %v1469 = vpop.permute.xlu0 %1468
  %1470 = vrot.lane.b32.xlu0 %v1185, 8
  %v1471 = vpop.permute.xlu0 %1470
  %1472 = vrot.lane.b32.xlu0 %v1187, 8
  %v1473 = vpop.permute.xlu0 %1472
  %1474 = vrot.lane.b32.xlu0 %v1189, 8
  %v1475 = vpop.permute.xlu0 %1474
  %1476 = vrot.lane.b32.xlu0 %v1191, 8
  %v1477 = vpop.permute.xlu0 %1476
  %1478 = vrot.lane.b32.xlu0 %v1193, 8
  %v1479 = vpop.permute.xlu0 %1478
  %1480 = vrot.lane.b32.xlu0 %v1195, 8
  %v1481 = vpop.permute.xlu0 %1480
  %1482 = vrot.lane.b32.xlu0 %v1197, 8
  %v1483 = vpop.permute.xlu0 %1482
  %1484 = vrot.lane.b32.xlu0 %v1199, 8
  %v1485 = vpop.permute.xlu0 %1484
  %1486 = vrot.lane.b32.xlu0 %v1201, 8
  %v1487 = vpop.permute.xlu0 %1486
  %1488 = vrot.lane.b32.xlu0 %v1203, 8
  %v1489 = vpop.permute.xlu0 %1488
  %1490 = vrot.lane.b32.xlu0 %v1205, 8
  %v1491 = vpop.permute.xlu0 %1490
  %1492 = vrot.lane.b32.xlu0 %v1207, 8
  %v1493 = vpop.permute.xlu0 %1492
  %1494 = vrot.lane.b32.xlu0 %v1209, 8
  %v1495 = vpop.permute.xlu0 %1494
  %1496 = vrot.lane.b32.xlu0 %v1211, 8
  %v1497 = vpop.permute.xlu0 %1496
  %1498 = vrot.lane.b32.xlu0 %v1213, 8
  %v1499 = vpop.permute.xlu0 %1498
  %1500 = vrot.lane.b32.xlu0 %v1215, 8
  %v1501 = vpop.permute.xlu0 %1500
  %1502 = vrot.lane.b32.xlu0 %v1217, 8
  %v1503 = vpop.permute.xlu0 %1502
  %1504 = vrot.lane.b32.xlu0 %v1219, 8
  %v1505 = vpop.permute.xlu0 %1504
  %1506 = vrot.lane.b32.xlu0 %v1221, 8
  %v1507 = vpop.permute.xlu0 %1506
  %1508 = vrot.lane.b32.xlu0 %v1223, 8
  %v1509 = vpop.permute.xlu0 %1508
  %1510 = vrot.lane.b32.xlu0 %v1225, 8
  %v1511 = vpop.permute.xlu0 %1510
  %1512 = vrot.lane.b32.xlu0 %v1227, 8
  %v1513 = vpop.permute.xlu0 %1512
  %1514 = vrot.lane.b32.xlu0 %v1229, 8
  %v1515 = vpop.permute.xlu0 %1514
  %1516 = vrot.lane.b32.xlu0 %v1231, 8
  %v1517 = vpop.permute.xlu0 %1516
  %1518 = vrot.lane.b32.xlu0 %v1233, 8
  %v1519 = vpop.permute.xlu0 %1518
  %1520 = vrot.lane.b32.xlu0 %v1235, 8
  %v1521 = vpop.permute.xlu0 %1520
  %1522 = vrot.lane.b32.xlu0 %v1237, 8
  %v1523 = vpop.permute.xlu0 %1522
  %1524 = vrot.lane.b32.xlu0 %v1239, 8
  %v1525 = vpop.permute.xlu0 %1524
  %1526 = vrot.lane.b32.xlu0 %v1241, 8
  %v1527 = vpop.permute.xlu0 %1526
  %1528 = vrot.lane.b32.xlu0 %v1243, 8
  %v1529 = vpop.permute.xlu0 %1528
  %1530 = vrot.lane.b32.xlu0 %v1245, 8
  %v1531 = vpop.permute.xlu0 %1530
  %1532 = vrot.lane.b32.xlu0 %v1247, 8
  %v1533 = vpop.permute.xlu0 %1532
  %1534 = vrot.lane.b32.xlu0 %v1249, 8
  %v1535 = vpop.permute.xlu0 %1534
  %1536 = vrot.lane.b32.xlu0 %v1251, 8
  %v1537 = vpop.permute.xlu0 %1536
  %1538 = vrot.lane.b32.xlu0 %v1253, 8
  %v1539 = vpop.permute.xlu0 %1538
  %1540 = vrot.lane.b32.xlu0 %v1255, 8
  %v1541 = vpop.permute.xlu0 %1540
  %1542 = vrot.lane.b32.xlu0 %v1257, 8
  %v1543 = vpop.permute.xlu0 %1542
  %1544 = vrot.lane.b32.xlu0 %v1259, 8
  %v1545 = vpop.permute.xlu0 %1544
  %1546 = vrot.lane.b32.xlu0 %v1261, 8
  %v1547 = vpop.permute.xlu0 %1546
  %1548 = vrot.lane.b32.xlu0 %v1263, 8
  %v1549 = vpop.permute.xlu0 %1548
  %1550 = vrot.lane.b32.xlu0 %v1265, 8
  %v1551 = vpop.permute.xlu0 %1550
  %1552 = vrot.lane.b32.xlu0 %v1267, 8
  %v1553 = vpop.permute.xlu0 %1552
  %1554 = vrot.lane.b32.xlu0 %v1269, 8
  %v1555 = vpop.permute.xlu0 %1554
  %1556 = vrot.lane.b32.xlu0 %v1271, 8
  %v1557 = vpop.permute.xlu0 %1556
  %1558 = vrot.lane.b32.xlu0 %v1273, 8
  %v1559 = vpop.permute.xlu0 %1558
  %1560 = vrot.lane.b32.xlu0 %v1275, 8
  %v1561 = vpop.permute.xlu0 %1560
  %1562 = vrot.lane.b32.xlu0 %v1277, 8
  %v1563 = vpop.permute.xlu0 %1562
  %1564 = vrot.lane.b32.xlu0 %v1279, 8
  %v1565 = vpop.permute.xlu0 %1564
  %1566 = vrot.lane.b32.xlu0 %v1281, 8
  %v1567 = vpop.permute.xlu0 %1566
  %1568 = vrot.lane.b32.xlu0 %v1283, 8
  %v1569 = vpop.permute.xlu0 %1568
  %1570 = vrot.lane.b32.xlu0 %v1285, 8
  %v1571 = vpop.permute.xlu0 %1570
  %1572 = vrot.lane.b32.xlu0 %v1287, 8
  %v1573 = vpop.permute.xlu0 %1572
  %1574 = vrot.lane.b32.xlu0 %v1289, 8
  %v1575 = vpop.permute.xlu0 %1574
  %1576 = vrot.lane.b32.xlu0 %v1291, 8
  %v1577 = vpop.permute.xlu0 %1576
  %1578 = vrot.lane.b32.xlu0 %v1293, 8
  %v1579 = vpop.permute.xlu0 %1578
  %1580 = vrot.lane.b32.xlu0 %v1295, 8
  %v1581 = vpop.permute.xlu0 %1580
  %1582 = vrot.lane.b32.xlu0 %v1297, 8
  %v1583 = vpop.permute.xlu0 %1582
  %1584 = vrot.lane.b32.xlu0 %v1299, 8
  %v1585 = vpop.permute.xlu0 %1584
  %1586 = vrot.lane.b32.xlu0 %v1301, 8
  %v1587 = vpop.permute.xlu0 %1586
  %1588 = vrot.lane.b32.xlu0 %v1303, 8
  %v1589 = vpop.permute.xlu0 %1588
  %1590 = vrot.lane.b32.xlu0 %v1305, 8
  %v1591 = vpop.permute.xlu0 %1590
  %1592 = vrot.lane.b32.xlu0 %v1307, 8
  %v1593 = vpop.permute.xlu0 %1592
  %1594 = vrot.lane.b32.xlu0 %v1309, 8
  %v1595 = vpop.permute.xlu0 %1594
  %1596 = vrot.lane.b32.xlu0 %v1311, 8
  %v1597 = vpop.permute.xlu0 %1596
  %1598 = vrot.lane.b32.xlu0 %v1313, 8
  %v1599 = vpop.permute.xlu0 %1598
  %1600 = vrot.lane.b32.xlu0 %v1315, 8
  %v1601 = vpop.permute.xlu0 %1600
  %1602 = vrot.lane.b32.xlu0 %v1317, 8
  %v1603 = vpop.permute.xlu0 %1602
  %1604 = vrot.lane.b32.xlu0 %v1319, 8
  %v1605 = vpop.permute.xlu0 %1604
  %1606 = vrot.lane.b32.xlu0 %v1321, 8
  %v1607 = vpop.permute.xlu0 %1606
  %1608 = vrot.lane.b32.xlu0 %v1320, 8
  %v1609 = vpop.permute.xlu0 %1608
  %vm1754 = vcmask 31744
  %v1755 = vsel %vm1754, %v26, %v603
  %v1756 = vsel %vm1754, %v27, %v605
  %v1757 = vsel %vm1754, %v28, %v607
  %v1758 = vsel %vm1754, %v29, %v609
  %v1759 = vsel %vm1754, %v30, %v611
  %v1760 = vsel %vm1754, %v31, %v613
  %v1761 = vsel %vm1754, %v32, %v615
  %v1762 = vsel %vm1754, %v33, %v617
  %v1763 = vsel %vm1754, %v34, %v619
  %v1764 = vsel %vm1754, %v35, %v621
  %v1765 = vsel %vm1754, %v36, %v623
  %v1766 = vsel %vm1754, %v37, %v625
  %v1767 = vsel %vm1754, %v38, %v627
  %v1768 = vsel %vm1754, %v39, %v629
  %v1769 = vsel %vm1754, %v40, %v631
  %v1770 = vsel %vm1754, %v41, %v633
  %v1771 = vsel %vm1754, %v42, %v635
  %v1772 = vsel %vm1754, %v43, %v637
  %v1773 = vsel %vm1754, %v44, %v639
  %v1774 = vsel %vm1754, %v45, %v641
  %v1775 = vsel %vm1754, %v46, %v643
  %v1776 = vsel %vm1754, %v47, %v645
  %v1777 = vsel %vm1754, %v48, %v647
  %v1778 = vsel %vm1754, %v49, %v649
  %v1779 = vsel %vm1754, %v50, %v651
  %v1780 = vsel %vm1754, %v51, %v653
  %v1781 = vsel %vm1754, %v52, %v655
  %v1782 = vsel %vm1754, %v53, %v657
  %v1783 = vsel %vm1754, %v54, %v659
  %v1784 = vsel %vm1754, %v55, %v661
  %v1785 = vsel %vm1754, %v56, %v663
  %v1786 = vsel %vm1754, %v57, %v665
  %v1787 = vsel %vm1754, %v58, %v667
  %v1788 = vsel %vm1754, %v59, %v669
  %v1789 = vsel %vm1754, %v60, %v671
  %v1790 = vsel %vm1754, %v61, %v673
  %v1791 = vsel %vm1754, %v62, %v675
  %v1792 = vsel %vm1754, %v63, %v677
  %v1793 = vsel %vm1754, %v64, %v679
  %v1794 = vsel %vm1754, %v65, %v681
  %v1795 = vsel %vm1754, %v66, %v683
  %v1796 = vsel %vm1754, %v67, %v685
  %v1797 = vsel %vm1754, %v68, %v687
  %v1798 = vsel %vm1754, %v69, %v689
  %v1799 = vsel %vm1754, %v70, %v691
  %v1800 = vsel %vm1754, %v71, %v693
  %v1801 = vsel %vm1754, %v72, %v695
  %v1802 = vsel %vm1754, %v73, %v697
  %v1803 = vsel %vm1754, %v74, %v699
  %v1804 = vsel %vm1754, %v75, %v701
  %v1805 = vsel %vm1754, %v76, %v703
  %v1806 = vsel %vm1754, %v77, %v705
  %v1807 = vsel %vm1754, %v78, %v707
  %v1808 = vsel %vm1754, %v79, %v709
  %v1809 = vsel %vm1754, %v80, %v711
  %v1810 = vsel %vm1754, %v81, %v713
  %v1811 = vsel %vm1754, %v82, %v715
  %v1812 = vsel %vm1754, %v83, %v717
  %v1813 = vsel %vm1754, %v84, %v719
  %v1814 = vsel %vm1754, %v85, %v721
  %v1815 = vsel %vm1754, %v86, %v723
  %v1816 = vsel %vm1754, %v87, %v725
  %v1817 = vsel %vm1754, %v88, %v727
  %v1818 = vsel %vm1754, %v89, %v729
  %v1819 = vsel %vm1754, %v90, %v731
  %v1820 = vsel %vm1754, %v91, %v733
  %v1821 = vsel %vm1754, %v92, %v735
  %v1822 = vsel %vm1754, %v93, %v737
  %v1823 = vsel %vm1754, %v94, %v739
  %v1824 = vsel %vm1754, %v95, %v741
  %v1825 = vsel %vm1754, %v96, %v743
  %v1826 = vsel %vm1754, %v97, %v745
  %v1827 = vsel %vm1754, %v98, %v747
  %v1828 = vsel %vm1754, %v99, %v749
  %v1829 = vsel %vm1754, %v100, %v751
  %v1830 = vsel %vm1754, %v101, %v753
  %v1831 = vsel %vm1754, %v102, %v755
  %v1832 = vsel %vm1754, %v103, %v757
  %v1833 = vsel %vm1754, %v104, %v759
  %v1834 = vsel %vm1754, %v105, %v761
  %v1835 = vsel %vm1754, %v106, %v763
  %v1836 = vsel %vm1754, %v107, %v765
  %v1837 = vsel %vm1754, %v108, %v767
  %v1838 = vsel %vm1754, %v109, %v769
  %v1839 = vsel %vm1754, %v110, %v771
  %v1840 = vsel %vm1754, %v111, %v773
  %v1841 = vsel %vm1754, %v112, %v775
  %v1842 = vsel %vm1754, %v113, %v777
  %v1843 = vsel %vm1754, %v114, %v779
  %v1844 = vsel %vm1754, %v115, %v781
  %v1845 = vsel %vm1754, %v116, %v783
  %v1846 = vsel %vm1754, %v117, %v785
  %v1847 = vsel %vm1754, %v118, %v787
  %v1848 = vsel %vm1754, %v119, %v789
  %v1849 = vsel %vm1754, %v120, %v791
  %v1850 = vsel %vm1754, %v121, %v793
  %v1851 = vsel %vm1754, %v122, %v795
  %v1852 = vsel %vm1754, %v123, %v797
  %v1853 = vsel %vm1754, %v124, %v799
  %v1854 = vsel %vm1754, %v125, %v801
  %v1855 = vsel %vm1754, %v126, %v803
  %v1856 = vsel %vm1754, %v127, %v805
  %v1857 = vsel %vm1754, %v128, %v807
  %v1858 = vsel %vm1754, %v129, %v809
  %v1859 = vsel %vm1754, %v130, %v811
  %v1860 = vsel %vm1754, %v131, %v813
  %v1861 = vsel %vm1754, %v132, %v815
  %v1862 = vsel %vm1754, %v133, %v817
  %v1863 = vsel %vm1754, %v134, %v819
  %v1864 = vsel %vm1754, %v135, %v821
  %v1865 = vsel %vm1754, %v136, %v823
  %v1866 = vsel %vm1754, %v137, %v825
  %v1867 = vsel %vm1754, %v138, %v827
  %v1868 = vsel %vm1754, %v139, %v829
  %v1869 = vsel %vm1754, %v140, %v831
  %v1870 = vsel %vm1754, %v141, %v833
  %v1871 = vsel %vm1754, %v142, %v835
  %v1872 = vsel %vm1754, %v143, %v837
  %v1873 = vsel %vm1754, %v144, %v839
  %v1874 = vsel %vm1754, %v145, %v841
  %v1875 = vsel %vm1754, %v146, %v843
  %v1876 = vsel %vm1754, %v147, %v845
  %v1877 = vsel %vm1754, %v148, %v847
  %v1878 = vsel %vm1754, %v149, %v849
  %v1879 = vsel %vm1754, %v150, %v851
  %v1880 = vsel %vm1754, %v151, %v853
  %v1881 = vsel %vm1754, %v152, %v855
  %v1882 = vsel %vm1754, %v153, %v857
  %v1883 = vsel %vm1754, %v154, %v859
  %v1884 = vsel %vm1754, %v155, %v861
  %v1885 = vsel %vm1754, %v156, %v863
  %v1886 = vsel %vm1754, %v157, %v865
  %v1887 = vsel %vm1754, %v158, %v867
  %v1888 = vsel %vm1754, %v159, %v869
  %v1889 = vsel %vm1754, %v160, %v871
  %v1890 = vsel %vm1754, %v161, %v873
  %v1891 = vsel %vm1754, %v162, %v875
  %v1892 = vsel %vm1754, %v163, %v877
  %v1893 = vsel %vm1754, %v164, %v879
  %v1894 = vsel %vm1754, %v165, %v881
  %v1895 = vsel %vm1754, %v166, %v883
  %v1896 = vsel %vm1754, %v167, %v885
  %v1897 = vsel %vm1754, %v168, %v887
  %v1898 = vsel %vm1754, %v169, %v889
  %vm1899 = vcmask 64512
  %v1900 = vsel %vm1899, %v1755, %v1323
  %v1901 = vsel %vm1899, %v1756, %v1325
  %v1902 = vsel %vm1899, %v1757, %v1327
  %v1903 = vsel %vm1899, %v1758, %v1329
  %v1904 = vsel %vm1899, %v1759, %v1331
  %v1905 = vsel %vm1899, %v1760, %v1333
  %v1906 = vsel %vm1899, %v1761, %v1335
  %v1907 = vsel %vm1899, %v1762, %v1337
  %v1908 = vsel %vm1899, %v1763, %v1339
  %v1909 = vsel %vm1899, %v1764, %v1341
  %v1910 = vsel %vm1899, %v1765, %v1343
  %v1911 = vsel %vm1899, %v1766, %v1345
  %v1912 = vsel %vm1899, %v1767, %v1347
  %v1913 = vsel %vm1899, %v1768, %v1349
  %v1914 = vsel %vm1899, %v1769, %v1351
  %v1915 = vsel %vm1899, %v1770, %v1353
  %v1916 = vsel %vm1899, %v1771, %v1355
  %v1917 = vsel %vm1899, %v1772, %v1357
  %v1918 = vsel %vm1899, %v1773, %v1359
  %v1919 = vsel %vm1899, %v1774, %v1361
  %v1920 = vsel %vm1899, %v1775, %v1363
  %v1921 = vsel %vm1899, %v1776, %v1365
  %v1922 = vsel %vm1899, %v1777, %v1367
  %v1923 = vsel %vm1899, %v1778, %v1369
  %v1924 = vsel %vm1899, %v1779, %v1371
  %v1925 = vsel %vm1899, %v1780, %v1373
  %v1926 = vsel %vm1899, %v1781, %v1375
  %v1927 = vsel %vm1899, %v1782, %v1377
  %v1928 = vsel %vm1899, %v1783, %v1379
  %v1929 = vsel %vm1899, %v1784, %v1381
  %v1930 = vsel %vm1899, %v1785, %v1383
  %v1931 = vsel %vm1899, %v1786, %v1385
  %v1932 = vsel %vm1899, %v1787, %v1387
  %v1933 = vsel %vm1899, %v1788, %v1389
  %v1934 = vsel %vm1899, %v1789, %v1391
  %v1935 = vsel %vm1899, %v1790, %v1393
  %v1936 = vsel %vm1899, %v1791, %v1395
  %v1937 = vsel %vm1899, %v1792, %v1397
  %v1938 = vsel %vm1899, %v1793, %v1399
  %v1939 = vsel %vm1899, %v1794, %v1401
  %v1940 = vsel %vm1899, %v1795, %v1403
  %v1941 = vsel %vm1899, %v1796, %v1405
  %v1942 = vsel %vm1899, %v1797, %v1407
  %v1943 = vsel %vm1899, %v1798, %v1409
  %v1944 = vsel %vm1899, %v1799, %v1411
  %v1945 = vsel %vm1899, %v1800, %v1413
  %v1946 = vsel %vm1899, %v1801, %v1415
  %v1947 = vsel %vm1899, %v1802, %v1417
  %v1948 = vsel %vm1899, %v1803, %v1419
  %v1949 = vsel %vm1899, %v1804, %v1421
  %v1950 = vsel %vm1899, %v1805, %v1423
  %v1951 = vsel %vm1899, %v1806, %v1425
  %v1952 = vsel %vm1899, %v1807, %v1427
  %v1953 = vsel %vm1899, %v1808, %v1429
  %v1954 = vsel %vm1899, %v1809, %v1431
  %v1955 = vsel %vm1899, %v1810, %v1433
  %v1956 = vsel %vm1899, %v1811, %v1435
  %v1957 = vsel %vm1899, %v1812, %v1437
  %v1958 = vsel %vm1899, %v1813, %v1439
  %v1959 = vsel %vm1899, %v1814, %v1441
  %v1960 = vsel %vm1899, %v1815, %v1443
  %v1961 = vsel %vm1899, %v1816, %v1445
  %v1962 = vsel %vm1899, %v1817, %v1447
  %v1963 = vsel %vm1899, %v1818, %v1449
  %v1964 = vsel %vm1899, %v1819, %v1451
  %v1965 = vsel %vm1899, %v1820, %v1453
  %v1966 = vsel %vm1899, %v1821, %v1455
  %v1967 = vsel %vm1899, %v1822, %v1457
  %v1968 = vsel %vm1899, %v1823, %v1459
  %v1969 = vsel %vm1899, %v1824, %v1461
  %v1970 = vsel %vm1899, %v1825, %v1463
  %v1971 = vsel %vm1899, %v1826, %v1465
  %v1972 = vsel %vm1899, %v1827, %v1467
  %v1973 = vsel %vm1899, %v1828, %v1469
  %v1974 = vsel %vm1899, %v1829, %v1471
  %v1975 = vsel %vm1899, %v1830, %v1473
  %v1976 = vsel %vm1899, %v1831, %v1475
  %v1977 = vsel %vm1899, %v1832, %v1477
  %v1978 = vsel %vm1899, %v1833, %v1479
  %v1979 = vsel %vm1899, %v1834, %v1481
  %v1980 = vsel %vm1899, %v1835, %v1483
  %v1981 = vsel %vm1899, %v1836, %v1485
  %v1982 = vsel %vm1899, %v1837, %v1487
  %v1983 = vsel %vm1899, %v1838, %v1489
  %v1984 = vsel %vm1899, %v1839, %v1491
  %v1985 = vsel %vm1899, %v1840, %v1493
  %v1986 = vsel %vm1899, %v1841, %v1495
  %v1987 = vsel %vm1899, %v1842, %v1497
  %v1988 = vsel %vm1899, %v1843, %v1499
  %v1989 = vsel %vm1899, %v1844, %v1501
  %v1990 = vsel %vm1899, %v1845, %v1503
  %v1991 = vsel %vm1899, %v1846, %v1505
  %v1992 = vsel %vm1899, %v1847, %v1507
  %v1993 = vsel %vm1899, %v1848, %v1509
  %v1994 = vsel %vm1899, %v1849, %v1511
  %v1995 = vsel %vm1899, %v1850, %v1513
  %v1996 = vsel %vm1899, %v1851, %v1515
  %v1997 = vsel %vm1899, %v1852, %v1517
  %v1998 = vsel %vm1899, %v1853, %v1519
  %v1999 = vsel %vm1899, %v1854, %v1521
  %v2000 = vsel %vm1899, %v1855, %v1523
  %v2001 = vsel %vm1899, %v1856, %v1525
  %v2002 = vsel %vm1899, %v1857, %v1527
  %v2003 = vsel %vm1899, %v1858, %v1529
  %v2004 = vsel %vm1899, %v1859, %v1531
  %v2005 = vsel %vm1899, %v1860, %v1533
  %v2006 = vsel %vm1899, %v1861, %v1535
  %v2007 = vsel %vm1899, %v1862, %v1537
  %v2008 = vsel %vm1899, %v1863, %v1539
  %v2009 = vsel %vm1899, %v1864, %v1541
  %v2010 = vsel %vm1899, %v1865, %v1543
  %v2011 = vsel %vm1899, %v1866, %v1545
  %v2012 = vsel %vm1899, %v1867, %v1547
  %v2013 = vsel %vm1899, %v1868, %v1549
  %v2014 = vsel %vm1899, %v1869, %v1551
  %v2015 = vsel %vm1899, %v1870, %v1553
  %v2016 = vsel %vm1899, %v1871, %v1555
  %v2017 = vsel %vm1899, %v1872, %v1557
  %v2018 = vsel %vm1899, %v1873, %v1559
  %v2019 = vsel %vm1899, %v1874, %v1561
  %v2020 = vsel %vm1899, %v1875, %v1563
  %v2021 = vsel %vm1899, %v1876, %v1565
  %v2022 = vsel %vm1899, %v1877, %v1567
  %v2023 = vsel %vm1899, %v1878, %v1569
  %v2024 = vsel %vm1899, %v1879, %v1571
  %v2025 = vsel %vm1899, %v1880, %v1573
  %v2026 = vsel %vm1899, %v1881, %v1575
  %v2027 = vsel %vm1899, %v1882, %v1577
  %v2028 = vsel %vm1899, %v1883, %v1579
  %v2029 = vsel %vm1899, %v1884, %v1581
  %v2030 = vsel %vm1899, %v1885, %v1583
  %v2031 = vsel %vm1899, %v1886, %v1585
  %v2032 = vsel %vm1899, %v1887, %v1587
  %v2033 = vsel %vm1899, %v1888, %v1589
  %v2034 = vsel %vm1899, %v1889, %v1591
  %v2035 = vsel %vm1899, %v1890, %v1593
  %v2036 = vsel %vm1899, %v1891, %v1595
  %v2037 = vsel %vm1899, %v1892, %v1597
  %v2038 = vsel %vm1899, %v1893, %v1599
  %v2039 = vsel %vm1899, %v1894, %v1601
  %v2040 = vsel %vm1899, %v1895, %v1603
  %v2041 = vsel %vm1899, %v1896, %v1605
  %v2042 = vsel %vm1899, %v1897, %v1607
  %v2043 = vsel %vm1899, %v1898, %v1609
  %2182 = vrot.lane.b32.xlu0 %v1903, 12
  %v2183 = vpop.permute.xlu0 %2182
  %2184 = vrot.lane.b32.xlu0 %v1904, 12
  %v2185 = vpop.permute.xlu0 %2184
  %2186 = vrot.lane.b32.xlu0 %v1905, 12
  %v2187 = vpop.permute.xlu0 %2186
  %2188 = vrot.lane.b32.xlu0 %v1906, 12
  %v2189 = vpop.permute.xlu0 %2188
  %2190 = vrot.lane.b32.xlu0 %v1907, 12
  %v2191 = vpop.permute.xlu0 %2190
  %2192 = vrot.lane.b32.xlu0 %v1908, 12
  %v2193 = vpop.permute.xlu0 %2192
  %2194 = vrot.lane.b32.xlu0 %v1909, 12
  %v2195 = vpop.permute.xlu0 %2194
  %2196 = vrot.lane.b32.xlu0 %v1910, 12
  %v2197 = vpop.permute.xlu0 %2196
  %2198 = vrot.lane.b32.xlu0 %v1911, 12
  %v2199 = vpop.permute.xlu0 %2198
  %2200 = vrot.lane.b32.xlu0 %v1912, 12
  %v2201 = vpop.permute.xlu0 %2200
  %2202 = vrot.lane.b32.xlu0 %v1913, 12
  %v2203 = vpop.permute.xlu0 %2202
  %2204 = vrot.lane.b32.xlu0 %v1914, 12
  %v2205 = vpop.permute.xlu0 %2204
  %2206 = vrot.lane.b32.xlu0 %v1915, 12
  %v2207 = vpop.permute.xlu0 %2206
  %2208 = vrot.lane.b32.xlu0 %v1916, 12
  %v2209 = vpop.permute.xlu0 %2208
  %2210 = vrot.lane.b32.xlu0 %v1917, 12
  %v2211 = vpop.permute.xlu0 %2210
  %2212 = vrot.lane.b32.xlu0 %v1918, 12
  %v2213 = vpop.permute.xlu0 %2212
  %2214 = vrot.lane.b32.xlu0 %v1919, 12
  %v2215 = vpop.permute.xlu0 %2214
  %2216 = vrot.lane.b32.xlu0 %v1920, 12
  %v2217 = vpop.permute.xlu0 %2216
  %2218 = vrot.lane.b32.xlu0 %v1921, 12
  %v2219 = vpop.permute.xlu0 %2218
  %2220 = vrot.lane.b32.xlu0 %v1922, 12
  %v2221 = vpop.permute.xlu0 %2220
  %2222 = vrot.lane.b32.xlu0 %v1923, 12
  %v2223 = vpop.permute.xlu0 %2222
  %2224 = vrot.lane.b32.xlu0 %v1924, 12
  %v2225 = vpop.permute.xlu0 %2224
  %2226 = vrot.lane.b32.xlu0 %v1925, 12
  %v2227 = vpop.permute.xlu0 %2226
  %2228 = vrot.lane.b32.xlu0 %v1926, 12
  %v2229 = vpop.permute.xlu0 %2228
  %2230 = vrot.lane.b32.xlu0 %v1927, 12
  %v2231 = vpop.permute.xlu0 %2230
  %2232 = vrot.lane.b32.xlu0 %v1928, 12
  %v2233 = vpop.permute.xlu0 %2232
  %2234 = vrot.lane.b32.xlu0 %v1929, 12
  %v2235 = vpop.permute.xlu0 %2234
  %2236 = vrot.lane.b32.xlu0 %v1930, 12
  %v2237 = vpop.permute.xlu0 %2236
  %2238 = vrot.lane.b32.xlu0 %v1931, 12
  %v2239 = vpop.permute.xlu0 %2238
  %2240 = vrot.lane.b32.xlu0 %v1932, 12
  %v2241 = vpop.permute.xlu0 %2240
  %2242 = vrot.lane.b32.xlu0 %v1933, 12
  %v2243 = vpop.permute.xlu0 %2242
  %2244 = vrot.lane.b32.xlu0 %v1934, 12
  %v2245 = vpop.permute.xlu0 %2244
  %2246 = vrot.lane.b32.xlu0 %v1935, 12
  %v2247 = vpop.permute.xlu0 %2246
  %2248 = vrot.lane.b32.xlu0 %v1936, 12
  %v2249 = vpop.permute.xlu0 %2248
  %2250 = vrot.lane.b32.xlu0 %v1937, 12
  %v2251 = vpop.permute.xlu0 %2250
  %2252 = vrot.lane.b32.xlu0 %v1938, 12
  %v2253 = vpop.permute.xlu0 %2252
  %2254 = vrot.lane.b32.xlu0 %v1939, 12
  %v2255 = vpop.permute.xlu0 %2254
  %2256 = vrot.lane.b32.xlu0 %v1940, 12
  %v2257 = vpop.permute.xlu0 %2256
  %2258 = vrot.lane.b32.xlu0 %v1941, 12
  %v2259 = vpop.permute.xlu0 %2258
  %2260 = vrot.lane.b32.xlu0 %v1942, 12
  %v2261 = vpop.permute.xlu0 %2260
  %2262 = vrot.lane.b32.xlu0 %v1943, 12
  %v2263 = vpop.permute.xlu0 %2262
  %2264 = vrot.lane.b32.xlu0 %v1944, 12
  %v2265 = vpop.permute.xlu0 %2264
  %2266 = vrot.lane.b32.xlu0 %v1945, 12
  %v2267 = vpop.permute.xlu0 %2266
  %2268 = vrot.lane.b32.xlu0 %v1946, 12
  %v2269 = vpop.permute.xlu0 %2268
  %2270 = vrot.lane.b32.xlu0 %v1947, 12
  %v2271 = vpop.permute.xlu0 %2270
  %2272 = vrot.lane.b32.xlu0 %v1948, 12
  %v2273 = vpop.permute.xlu0 %2272
  %2274 = vrot.lane.b32.xlu0 %v1949, 12
  %v2275 = vpop.permute.xlu0 %2274
  %2276 = vrot.lane.b32.xlu0 %v1950, 12
  %v2277 = vpop.permute.xlu0 %2276
  %2278 = vrot.lane.b32.xlu0 %v1951, 12
  %v2279 = vpop.permute.xlu0 %2278
  %2280 = vrot.lane.b32.xlu0 %v1952, 12
  %v2281 = vpop.permute.xlu0 %2280
  %2282 = vrot.lane.b32.xlu0 %v1953, 12
  %v2283 = vpop.permute.xlu0 %2282
  %2284 = vrot.lane.b32.xlu0 %v1954, 12
  %v2285 = vpop.permute.xlu0 %2284
  %2286 = vrot.lane.b32.xlu0 %v1955, 12
  %v2287 = vpop.permute.xlu0 %2286
  %2288 = vrot.lane.b32.xlu0 %v1956, 12
  %v2289 = vpop.permute.xlu0 %2288
  %2290 = vrot.lane.b32.xlu0 %v1957, 12
  %v2291 = vpop.permute.xlu0 %2290
  %2292 = vrot.lane.b32.xlu0 %v1958, 12
  %v2293 = vpop.permute.xlu0 %2292
  %2294 = vrot.lane.b32.xlu0 %v1959, 12
  %v2295 = vpop.permute.xlu0 %2294
  %2296 = vrot.lane.b32.xlu0 %v1960, 12
  %v2297 = vpop.permute.xlu0 %2296
  %2298 = vrot.lane.b32.xlu0 %v1961, 12
  %v2299 = vpop.permute.xlu0 %2298
  %2300 = vrot.lane.b32.xlu0 %v1962, 12
  %v2301 = vpop.permute.xlu0 %2300
  %2302 = vrot.lane.b32.xlu0 %v1963, 12
  %v2303 = vpop.permute.xlu0 %2302
  %2304 = vrot.lane.b32.xlu0 %v1964, 12
  %v2305 = vpop.permute.xlu0 %2304
  %2306 = vrot.lane.b32.xlu0 %v1965, 12
  %v2307 = vpop.permute.xlu0 %2306
  %2308 = vrot.lane.b32.xlu0 %v1966, 12
  %v2309 = vpop.permute.xlu0 %2308
  %2310 = vrot.lane.b32.xlu0 %v1967, 12
  %v2311 = vpop.permute.xlu0 %2310
  %2312 = vrot.lane.b32.xlu0 %v1968, 12
  %v2313 = vpop.permute.xlu0 %2312
  %2314 = vrot.lane.b32.xlu0 %v1969, 12
  %v2315 = vpop.permute.xlu0 %2314
  %2316 = vrot.lane.b32.xlu0 %v1970, 12
  %v2317 = vpop.permute.xlu0 %2316
  %2318 = vrot.lane.b32.xlu0 %v1971, 12
  %v2319 = vpop.permute.xlu0 %2318
  %2320 = vrot.lane.b32.xlu0 %v1972, 12
  %v2321 = vpop.permute.xlu0 %2320
  %2322 = vrot.lane.b32.xlu0 %v1973, 12
  %v2323 = vpop.permute.xlu0 %2322
  %2324 = vrot.lane.b32.xlu0 %v1974, 12
  %v2325 = vpop.permute.xlu0 %2324
  %2326 = vrot.lane.b32.xlu0 %v1975, 12
  %v2327 = vpop.permute.xlu0 %2326
  %2328 = vrot.lane.b32.xlu0 %v1976, 12
  %v2329 = vpop.permute.xlu0 %2328
  %2330 = vrot.lane.b32.xlu0 %v1977, 12
  %v2331 = vpop.permute.xlu0 %2330
  %2332 = vrot.lane.b32.xlu0 %v1978, 12
  %v2333 = vpop.permute.xlu0 %2332
  %2334 = vrot.lane.b32.xlu0 %v1979, 12
  %v2335 = vpop.permute.xlu0 %2334
  %2336 = vrot.lane.b32.xlu0 %v1980, 12
  %v2337 = vpop.permute.xlu0 %2336
  %2338 = vrot.lane.b32.xlu0 %v1981, 12
  %v2339 = vpop.permute.xlu0 %2338
  %2340 = vrot.lane.b32.xlu0 %v1982, 12
  %v2341 = vpop.permute.xlu0 %2340
  %2342 = vrot.lane.b32.xlu0 %v1983, 12
  %v2343 = vpop.permute.xlu0 %2342
  %2344 = vrot.lane.b32.xlu0 %v1984, 12
  %v2345 = vpop.permute.xlu0 %2344
  %2346 = vrot.lane.b32.xlu0 %v1985, 12
  %v2347 = vpop.permute.xlu0 %2346
  %2348 = vrot.lane.b32.xlu0 %v1986, 12
  %v2349 = vpop.permute.xlu0 %2348
  %2350 = vrot.lane.b32.xlu0 %v1987, 12
  %v2351 = vpop.permute.xlu0 %2350
  %2352 = vrot.lane.b32.xlu0 %v1988, 12
  %v2353 = vpop.permute.xlu0 %2352
  %2354 = vrot.lane.b32.xlu0 %v1989, 12
  %v2355 = vpop.permute.xlu0 %2354
  %2356 = vrot.lane.b32.xlu0 %v1990, 12
  %v2357 = vpop.permute.xlu0 %2356
  %2358 = vrot.lane.b32.xlu0 %v1991, 12
  %v2359 = vpop.permute.xlu0 %2358
  %2360 = vrot.lane.b32.xlu0 %v1992, 12
  %v2361 = vpop.permute.xlu0 %2360
  %2362 = vrot.lane.b32.xlu0 %v1993, 12
  %v2363 = vpop.permute.xlu0 %2362
  %2364 = vrot.lane.b32.xlu0 %v1994, 12
  %v2365 = vpop.permute.xlu0 %2364
  %2366 = vrot.lane.b32.xlu0 %v1995, 12
  %v2367 = vpop.permute.xlu0 %2366
  %2368 = vrot.lane.b32.xlu0 %v1996, 12
  %v2369 = vpop.permute.xlu0 %2368
  %2370 = vrot.lane.b32.xlu0 %v1997, 12
  %v2371 = vpop.permute.xlu0 %2370
  %2372 = vrot.lane.b32.xlu0 %v1998, 12
  %v2373 = vpop.permute.xlu0 %2372
  %2374 = vrot.lane.b32.xlu0 %v1999, 12
  %v2375 = vpop.permute.xlu0 %2374
  %2376 = vrot.lane.b32.xlu0 %v2000, 12
  %v2377 = vpop.permute.xlu0 %2376
  %2378 = vrot.lane.b32.xlu0 %v2001, 12
  %v2379 = vpop.permute.xlu0 %2378
  %2380 = vrot.lane.b32.xlu0 %v2002, 12
  %v2381 = vpop.permute.xlu0 %2380
  %2382 = vrot.lane.b32.xlu0 %v2003, 12
  %v2383 = vpop.permute.xlu0 %2382
  %2384 = vrot.lane.b32.xlu0 %v2004, 12
  %v2385 = vpop.permute.xlu0 %2384
  %2386 = vrot.lane.b32.xlu0 %v2005, 12
  %v2387 = vpop.permute.xlu0 %2386
  %2388 = vrot.lane.b32.xlu0 %v2006, 12
  %v2389 = vpop.permute.xlu0 %2388
  %2390 = vrot.lane.b32.xlu0 %v2007, 12
  %v2391 = vpop.permute.xlu0 %2390
  %2392 = vrot.lane.b32.xlu0 %v2008, 12
  %v2393 = vpop.permute.xlu0 %2392
  %2394 = vrot.lane.b32.xlu0 %v2009, 12
  %v2395 = vpop.permute.xlu0 %2394
  %2396 = vrot.lane.b32.xlu0 %v2010, 12
  %v2397 = vpop.permute.xlu0 %2396
  %2398 = vrot.lane.b32.xlu0 %v2011, 12
  %v2399 = vpop.permute.xlu0 %2398
  %2400 = vrot.lane.b32.xlu0 %v2012, 12
  %v2401 = vpop.permute.xlu0 %2400
  %2402 = vrot.lane.b32.xlu0 %v2013, 12
  %v2403 = vpop.permute.xlu0 %2402
  %2404 = vrot.lane.b32.xlu0 %v2014, 12
  %v2405 = vpop.permute.xlu0 %2404
  %2406 = vrot.lane.b32.xlu0 %v2015, 12
  %v2407 = vpop.permute.xlu0 %2406
  %2408 = vrot.lane.b32.xlu0 %v2016, 12
  %v2409 = vpop.permute.xlu0 %2408
  %2410 = vrot.lane.b32.xlu0 %v2017, 12
  %v2411 = vpop.permute.xlu0 %2410
  %2412 = vrot.lane.b32.xlu0 %v2018, 12
  %v2413 = vpop.permute.xlu0 %2412
  %2414 = vrot.lane.b32.xlu0 %v2019, 12
  %v2415 = vpop.permute.xlu0 %2414
  %2416 = vrot.lane.b32.xlu0 %v2020, 12
  %v2417 = vpop.permute.xlu0 %2416
  %2418 = vrot.lane.b32.xlu0 %v2021, 12
  %v2419 = vpop.permute.xlu0 %2418
  %2420 = vrot.lane.b32.xlu0 %v2022, 12
  %v2421 = vpop.permute.xlu0 %2420
  %2422 = vrot.lane.b32.xlu0 %v2023, 12
  %v2423 = vpop.permute.xlu0 %2422
  %2424 = vrot.lane.b32.xlu0 %v2024, 12
  %v2425 = vpop.permute.xlu0 %2424
  %2426 = vrot.lane.b32.xlu0 %v2025, 12
  %v2427 = vpop.permute.xlu0 %2426
  %2428 = vrot.lane.b32.xlu0 %v2026, 12
  %v2429 = vpop.permute.xlu0 %2428
  %2430 = vrot.lane.b32.xlu0 %v2027, 12
  %v2431 = vpop.permute.xlu0 %2430
  %2432 = vrot.lane.b32.xlu0 %v2028, 12
  %v2433 = vpop.permute.xlu0 %2432
  %2434 = vrot.lane.b32.xlu0 %v2029, 12
  %v2435 = vpop.permute.xlu0 %2434
  %2436 = vrot.lane.b32.xlu0 %v2030, 12
  %v2437 = vpop.permute.xlu0 %2436
  %2438 = vrot.lane.b32.xlu0 %v2031, 12
  %v2439 = vpop.permute.xlu0 %2438
  %2440 = vrot.lane.b32.xlu0 %v2032, 12
  %v2441 = vpop.permute.xlu0 %2440
  %2442 = vrot.lane.b32.xlu0 %v2033, 12
  %v2443 = vpop.permute.xlu0 %2442
  %2444 = vrot.lane.b32.xlu0 %v2034, 12
  %v2445 = vpop.permute.xlu0 %2444
  %2446 = vrot.lane.b32.xlu0 %v2035, 12
  %v2447 = vpop.permute.xlu0 %2446
  %2448 = vrot.lane.b32.xlu0 %v2036, 12
  %v2449 = vpop.permute.xlu0 %2448
  %2450 = vrot.lane.b32.xlu0 %v2037, 12
  %v2451 = vpop.permute.xlu0 %2450
  %2452 = vrot.lane.b32.xlu0 %v2038, 12
  %v2453 = vpop.permute.xlu0 %2452
  %2454 = vrot.lane.b32.xlu0 %v2039, 12
  %v2455 = vpop.permute.xlu0 %2454
  %2456 = vrot.lane.b32.xlu0 %v2040, 12
  %v2457 = vpop.permute.xlu0 %2456
  %2599 = vrot.lane.b32.xlu0 %v1906, 24
  %v2600 = vpop.permute.xlu0 %2599
  %2601 = vrot.lane.b32.xlu0 %v1907, 24
  %v2602 = vpop.permute.xlu0 %2601
  %2603 = vrot.lane.b32.xlu0 %v1908, 24
  %v2604 = vpop.permute.xlu0 %2603
  %2605 = vrot.lane.b32.xlu0 %v1909, 24
  %v2606 = vpop.permute.xlu0 %2605
  %2607 = vrot.lane.b32.xlu0 %v1910, 24
  %v2608 = vpop.permute.xlu0 %2607
  %2609 = vrot.lane.b32.xlu0 %v1911, 24
  %v2610 = vpop.permute.xlu0 %2609
  %2611 = vrot.lane.b32.xlu0 %v1912, 24
  %v2612 = vpop.permute.xlu0 %2611
  %2613 = vrot.lane.b32.xlu0 %v1913, 24
  %v2614 = vpop.permute.xlu0 %2613
  %2615 = vrot.lane.b32.xlu0 %v1914, 24
  %v2616 = vpop.permute.xlu0 %2615
  %2617 = vrot.lane.b32.xlu0 %v1915, 24
  %v2618 = vpop.permute.xlu0 %2617
  %2619 = vrot.lane.b32.xlu0 %v1916, 24
  %v2620 = vpop.permute.xlu0 %2619
  %2621 = vrot.lane.b32.xlu0 %v1917, 24
  %v2622 = vpop.permute.xlu0 %2621
  %2623 = vrot.lane.b32.xlu0 %v1918, 24
  %v2624 = vpop.permute.xlu0 %2623
  %2625 = vrot.lane.b32.xlu0 %v1919, 24
  %v2626 = vpop.permute.xlu0 %2625
  %2627 = vrot.lane.b32.xlu0 %v1920, 24
  %v2628 = vpop.permute.xlu0 %2627
  %2629 = vrot.lane.b32.xlu0 %v1921, 24
  %v2630 = vpop.permute.xlu0 %2629
  %2631 = vrot.lane.b32.xlu0 %v1922, 24
  %v2632 = vpop.permute.xlu0 %2631
  %2633 = vrot.lane.b32.xlu0 %v1923, 24
  %v2634 = vpop.permute.xlu0 %2633
  %2635 = vrot.lane.b32.xlu0 %v1924, 24
  %v2636 = vpop.permute.xlu0 %2635
  %2637 = vrot.lane.b32.xlu0 %v1925, 24
  %v2638 = vpop.permute.xlu0 %2637
  %2639 = vrot.lane.b32.xlu0 %v1926, 24
  %v2640 = vpop.permute.xlu0 %2639
  %2641 = vrot.lane.b32.xlu0 %v1927, 24
  %v2642 = vpop.permute.xlu0 %2641
  %2643 = vrot.lane.b32.xlu0 %v1928, 24
  %v2644 = vpop.permute.xlu0 %2643
  %2645 = vrot.lane.b32.xlu0 %v1929, 24
  %v2646 = vpop.permute.xlu0 %2645
  %2647 = vrot.lane.b32.xlu0 %v1930, 24
  %v2648 = vpop.permute.xlu0 %2647
  %2649 = vrot.lane.b32.xlu0 %v1931, 24
  %v2650 = vpop.permute.xlu0 %2649
  %2651 = vrot.lane.b32.xlu0 %v1932, 24
  %v2652 = vpop.permute.xlu0 %2651
  %2653 = vrot.lane.b32.xlu0 %v1933, 24
  %v2654 = vpop.permute.xlu0 %2653
  %2655 = vrot.lane.b32.xlu0 %v1934, 24
  %v2656 = vpop.permute.xlu0 %2655
  %2657 = vrot.lane.b32.xlu0 %v1935, 24
  %v2658 = vpop.permute.xlu0 %2657
  %2659 = vrot.lane.b32.xlu0 %v1936, 24
  %v2660 = vpop.permute.xlu0 %2659
  %2661 = vrot.lane.b32.xlu0 %v1937, 24
  %v2662 = vpop.permute.xlu0 %2661
  %2663 = vrot.lane.b32.xlu0 %v1938, 24
  %v2664 = vpop.permute.xlu0 %2663
  %2665 = vrot.lane.b32.xlu0 %v1939, 24
  %v2666 = vpop.permute.xlu0 %2665
  %2667 = vrot.lane.b32.xlu0 %v1940, 24
  %v2668 = vpop.permute.xlu0 %2667
  %2669 = vrot.lane.b32.xlu0 %v1941, 24
  %v2670 = vpop.permute.xlu0 %2669
  %2671 = vrot.lane.b32.xlu0 %v1942, 24
  %v2672 = vpop.permute.xlu0 %2671
  %2673 = vrot.lane.b32.xlu0 %v1943, 24
  %v2674 = vpop.permute.xlu0 %2673
  %2675 = vrot.lane.b32.xlu0 %v1944, 24
  %v2676 = vpop.permute.xlu0 %2675
  %2677 = vrot.lane.b32.xlu0 %v1945, 24
  %v2678 = vpop.permute.xlu0 %2677
  %2679 = vrot.lane.b32.xlu0 %v1946, 24
  %v2680 = vpop.permute.xlu0 %2679
  %2681 = vrot.lane.b32.xlu0 %v1947, 24
  %v2682 = vpop.permute.xlu0 %2681
  %2683 = vrot.lane.b32.xlu0 %v1948, 24
  %v2684 = vpop.permute.xlu0 %2683
  %2685 = vrot.lane.b32.xlu0 %v1949, 24
  %v2686 = vpop.permute.xlu0 %2685
  %2687 = vrot.lane.b32.xlu0 %v1950, 24
  %v2688 = vpop.permute.xlu0 %2687
  %2689 = vrot.lane.b32.xlu0 %v1951, 24
  %v2690 = vpop.permute.xlu0 %2689
  %2691 = vrot.lane.b32.xlu0 %v1952, 24
  %v2692 = vpop.permute.xlu0 %2691
  %2693 = vrot.lane.b32.xlu0 %v1953, 24
  %v2694 = vpop.permute.xlu0 %2693
  %2695 = vrot.lane.b32.xlu0 %v1954, 24
  %v2696 = vpop.permute.xlu0 %2695
  %2697 = vrot.lane.b32.xlu0 %v1955, 24
  %v2698 = vpop.permute.xlu0 %2697
  %2699 = vrot.lane.b32.xlu0 %v1956, 24
  %v2700 = vpop.permute.xlu0 %2699
  %2701 = vrot.lane.b32.xlu0 %v1957, 24
  %v2702 = vpop.permute.xlu0 %2701
  %2703 = vrot.lane.b32.xlu0 %v1958, 24
  %v2704 = vpop.permute.xlu0 %2703
  %2705 = vrot.lane.b32.xlu0 %v1959, 24
  %v2706 = vpop.permute.xlu0 %2705
  %2707 = vrot.lane.b32.xlu0 %v1960, 24
  %v2708 = vpop.permute.xlu0 %2707
  %2709 = vrot.lane.b32.xlu0 %v1961, 24
  %v2710 = vpop.permute.xlu0 %2709
  %2711 = vrot.lane.b32.xlu0 %v1962, 24
  %v2712 = vpop.permute.xlu0 %2711
  %2713 = vrot.lane.b32.xlu0 %v1963, 24
  %v2714 = vpop.permute.xlu0 %2713
  %2715 = vrot.lane.b32.xlu0 %v1964, 24
  %v2716 = vpop.permute.xlu0 %2715
  %2717 = vrot.lane.b32.xlu0 %v1965, 24
  %v2718 = vpop.permute.xlu0 %2717
  %2719 = vrot.lane.b32.xlu0 %v1966, 24
  %v2720 = vpop.permute.xlu0 %2719
  %2721 = vrot.lane.b32.xlu0 %v1967, 24
  %v2722 = vpop.permute.xlu0 %2721
  %2723 = vrot.lane.b32.xlu0 %v1968, 24
  %v2724 = vpop.permute.xlu0 %2723
  %2725 = vrot.lane.b32.xlu0 %v1969, 24
  %v2726 = vpop.permute.xlu0 %2725
  %2727 = vrot.lane.b32.xlu0 %v1970, 24
  %v2728 = vpop.permute.xlu0 %2727
  %2729 = vrot.lane.b32.xlu0 %v1971, 24
  %v2730 = vpop.permute.xlu0 %2729
  %2731 = vrot.lane.b32.xlu0 %v1972, 24
  %v2732 = vpop.permute.xlu0 %2731
  %2733 = vrot.lane.b32.xlu0 %v1973, 24
  %v2734 = vpop.permute.xlu0 %2733
  %2735 = vrot.lane.b32.xlu0 %v1974, 24
  %v2736 = vpop.permute.xlu0 %2735
  %2737 = vrot.lane.b32.xlu0 %v1975, 24
  %v2738 = vpop.permute.xlu0 %2737
  %2739 = vrot.lane.b32.xlu0 %v1976, 24
  %v2740 = vpop.permute.xlu0 %2739
  %2741 = vrot.lane.b32.xlu0 %v1977, 24
  %v2742 = vpop.permute.xlu0 %2741
  %2743 = vrot.lane.b32.xlu0 %v1978, 24
  %v2744 = vpop.permute.xlu0 %2743
  %2745 = vrot.lane.b32.xlu0 %v1979, 24
  %v2746 = vpop.permute.xlu0 %2745
  %2747 = vrot.lane.b32.xlu0 %v1980, 24
  %v2748 = vpop.permute.xlu0 %2747
  %2749 = vrot.lane.b32.xlu0 %v1981, 24
  %v2750 = vpop.permute.xlu0 %2749
  %2751 = vrot.lane.b32.xlu0 %v1982, 24
  %v2752 = vpop.permute.xlu0 %2751
  %2753 = vrot.lane.b32.xlu0 %v1983, 24
  %v2754 = vpop.permute.xlu0 %2753
  %2755 = vrot.lane.b32.xlu0 %v1984, 24
  %v2756 = vpop.permute.xlu0 %2755
  %2757 = vrot.lane.b32.xlu0 %v1985, 24
  %v2758 = vpop.permute.xlu0 %2757
  %2759 = vrot.lane.b32.xlu0 %v1986, 24
  %v2760 = vpop.permute.xlu0 %2759
  %2761 = vrot.lane.b32.xlu0 %v1987, 24
  %v2762 = vpop.permute.xlu0 %2761
  %2763 = vrot.lane.b32.xlu0 %v1988, 24
  %v2764 = vpop.permute.xlu0 %2763
  %2765 = vrot.lane.b32.xlu0 %v1989, 24
  %v2766 = vpop.permute.xlu0 %2765
  %2767 = vrot.lane.b32.xlu0 %v1990, 24
  %v2768 = vpop.permute.xlu0 %2767
  %2769 = vrot.lane.b32.xlu0 %v1991, 24
  %v2770 = vpop.permute.xlu0 %2769
  %2771 = vrot.lane.b32.xlu0 %v1992, 24
  %v2772 = vpop.permute.xlu0 %2771
  %2773 = vrot.lane.b32.xlu0 %v1993, 24
  %v2774 = vpop.permute.xlu0 %2773
  %2775 = vrot.lane.b32.xlu0 %v1994, 24
  %v2776 = vpop.permute.xlu0 %2775
  %2777 = vrot.lane.b32.xlu0 %v1995, 24
  %v2778 = vpop.permute.xlu0 %2777
  %2779 = vrot.lane.b32.xlu0 %v1996, 24
  %v2780 = vpop.permute.xlu0 %2779
  %2781 = vrot.lane.b32.xlu0 %v1997, 24
  %v2782 = vpop.permute.xlu0 %2781
  %2783 = vrot.lane.b32.xlu0 %v1998, 24
  %v2784 = vpop.permute.xlu0 %2783
  %2785 = vrot.lane.b32.xlu0 %v1999, 24
  %v2786 = vpop.permute.xlu0 %2785
  %2787 = vrot.lane.b32.xlu0 %v2000, 24
  %v2788 = vpop.permute.xlu0 %2787
  %2789 = vrot.lane.b32.xlu0 %v2001, 24
  %v2790 = vpop.permute.xlu0 %2789
  %2791 = vrot.lane.b32.xlu0 %v2002, 24
  %v2792 = vpop.permute.xlu0 %2791
  %2793 = vrot.lane.b32.xlu0 %v2003, 24
  %v2794 = vpop.permute.xlu0 %2793
  %2795 = vrot.lane.b32.xlu0 %v2004, 24
  %v2796 = vpop.permute.xlu0 %2795
  %2797 = vrot.lane.b32.xlu0 %v2005, 24
  %v2798 = vpop.permute.xlu0 %2797
  %2799 = vrot.lane.b32.xlu0 %v2006, 24
  %v2800 = vpop.permute.xlu0 %2799
  %2801 = vrot.lane.b32.xlu0 %v2007, 24
  %v2802 = vpop.permute.xlu0 %2801
  %2803 = vrot.lane.b32.xlu0 %v2008, 24
  %v2804 = vpop.permute.xlu0 %2803
  %2805 = vrot.lane.b32.xlu0 %v2009, 24
  %v2806 = vpop.permute.xlu0 %2805
  %2807 = vrot.lane.b32.xlu0 %v2010, 24
  %v2808 = vpop.permute.xlu0 %2807
  %2809 = vrot.lane.b32.xlu0 %v2011, 24
  %v2810 = vpop.permute.xlu0 %2809
  %2811 = vrot.lane.b32.xlu0 %v2012, 24
  %v2812 = vpop.permute.xlu0 %2811
  %2813 = vrot.lane.b32.xlu0 %v2013, 24
  %v2814 = vpop.permute.xlu0 %2813
  %2815 = vrot.lane.b32.xlu0 %v2014, 24
  %v2816 = vpop.permute.xlu0 %2815
  %2817 = vrot.lane.b32.xlu0 %v2015, 24
  %v2818 = vpop.permute.xlu0 %2817
  %2819 = vrot.lane.b32.xlu0 %v2016, 24
  %v2820 = vpop.permute.xlu0 %2819
  %2821 = vrot.lane.b32.xlu0 %v2017, 24
  %v2822 = vpop.permute.xlu0 %2821
  %2823 = vrot.lane.b32.xlu0 %v2018, 24
  %v2824 = vpop.permute.xlu0 %2823
  %2825 = vrot.lane.b32.xlu0 %v2019, 24
  %v2826 = vpop.permute.xlu0 %2825
  %2827 = vrot.lane.b32.xlu0 %v2020, 24
  %v2828 = vpop.permute.xlu0 %2827
  %2829 = vrot.lane.b32.xlu0 %v2021, 24
  %v2830 = vpop.permute.xlu0 %2829
  %2831 = vrot.lane.b32.xlu0 %v2022, 24
  %v2832 = vpop.permute.xlu0 %2831
  %2833 = vrot.lane.b32.xlu0 %v2023, 24
  %v2834 = vpop.permute.xlu0 %2833
  %2835 = vrot.lane.b32.xlu0 %v2024, 24
  %v2836 = vpop.permute.xlu0 %2835
  %2837 = vrot.lane.b32.xlu0 %v2025, 24
  %v2838 = vpop.permute.xlu0 %2837
  %2839 = vrot.lane.b32.xlu0 %v2026, 24
  %v2840 = vpop.permute.xlu0 %2839
  %2841 = vrot.lane.b32.xlu0 %v2027, 24
  %v2842 = vpop.permute.xlu0 %2841
  %2843 = vrot.lane.b32.xlu0 %v2028, 24
  %v2844 = vpop.permute.xlu0 %2843
  %2845 = vrot.lane.b32.xlu0 %v2029, 24
  %v2846 = vpop.permute.xlu0 %2845
  %2847 = vrot.lane.b32.xlu0 %v2030, 24
  %v2848 = vpop.permute.xlu0 %2847
  %2849 = vrot.lane.b32.xlu0 %v2031, 24
  %v2850 = vpop.permute.xlu0 %2849
  %2851 = vrot.lane.b32.xlu0 %v2032, 24
  %v2852 = vpop.permute.xlu0 %2851
  %2853 = vrot.lane.b32.xlu0 %v2033, 24
  %v2854 = vpop.permute.xlu0 %2853
  %2855 = vrot.lane.b32.xlu0 %v2034, 24
  %v2856 = vpop.permute.xlu0 %2855
  %2857 = vrot.lane.b32.xlu0 %v2035, 24
  %v2858 = vpop.permute.xlu0 %2857
  %2859 = vrot.lane.b32.xlu0 %v2036, 24
  %v2860 = vpop.permute.xlu0 %2859
  %2861 = vrot.lane.b32.xlu0 %v2037, 24
  %v2862 = vpop.permute.xlu0 %2861
  %2863 = vrot.lane.b32.xlu0 %v2038, 24
  %v2864 = vpop.permute.xlu0 %2863
  %2865 = vrot.lane.b32.xlu0 %v2039, 24
  %v2866 = vpop.permute.xlu0 %2865
  %2867 = vrot.lane.b32.xlu0 %v2040, 24
  %v2868 = vpop.permute.xlu0 %2867
  %2869 = vrot.lane.b32.xlu0 %v2041, 24
  %v2870 = vpop.permute.xlu0 %2869
  %2871 = vrot.lane.b32.xlu0 %v2042, 24
  %v2872 = vpop.permute.xlu0 %2871
  %2873 = vrot.lane.b32.xlu0 %v2043, 24
  %v2874 = vpop.permute.xlu0 %2873
  %vm3013 = vcmask 97280
  %v3014 = vsel %vm3013, %v1900, %v2183
  %v3015 = vsel %vm3013, %v1901, %v2185
  %v3016 = vsel %vm3013, %v1902, %v2187
  %v3017 = vsel %vm3013, %v1903, %v2189
  %v3018 = vsel %vm3013, %v1904, %v2191
  %v3019 = vsel %vm3013, %v1905, %v2193
  %v3020 = vsel %vm3013, %v1906, %v2195
  %v3021 = vsel %vm3013, %v1907, %v2197
  %v3022 = vsel %vm3013, %v1908, %v2199
  %v3023 = vsel %vm3013, %v1909, %v2201
  %v3024 = vsel %vm3013, %v1910, %v2203
  %v3025 = vsel %vm3013, %v1911, %v2205
  %v3026 = vsel %vm3013, %v1912, %v2207
  %v3027 = vsel %vm3013, %v1913, %v2209
  %v3028 = vsel %vm3013, %v1914, %v2211
  %v3029 = vsel %vm3013, %v1915, %v2213
  %v3030 = vsel %vm3013, %v1916, %v2215
  %v3031 = vsel %vm3013, %v1917, %v2217
  %v3032 = vsel %vm3013, %v1918, %v2219
  %v3033 = vsel %vm3013, %v1919, %v2221
  %v3034 = vsel %vm3013, %v1920, %v2223
  %v3035 = vsel %vm3013, %v1921, %v2225
  %v3036 = vsel %vm3013, %v1922, %v2227
  %v3037 = vsel %vm3013, %v1923, %v2229
  %v3038 = vsel %vm3013, %v1924, %v2231
  %v3039 = vsel %vm3013, %v1925, %v2233
  %v3040 = vsel %vm3013, %v1926, %v2235
  %v3041 = vsel %vm3013, %v1927, %v2237
  %v3042 = vsel %vm3013, %v1928, %v2239
  %v3043 = vsel %vm3013, %v1929, %v2241
  %v3044 = vsel %vm3013, %v1930, %v2243
  %v3045 = vsel %vm3013, %v1931, %v2245
  %v3046 = vsel %vm3013, %v1932, %v2247
  %v3047 = vsel %vm3013, %v1933, %v2249
  %v3048 = vsel %vm3013, %v1934, %v2251
  %v3049 = vsel %vm3013, %v1935, %v2253
  %v3050 = vsel %vm3013, %v1936, %v2255
  %v3051 = vsel %vm3013, %v1937, %v2257
  %v3052 = vsel %vm3013, %v1938, %v2259
  %v3053 = vsel %vm3013, %v1939, %v2261
  %v3054 = vsel %vm3013, %v1940, %v2263
  %v3055 = vsel %vm3013, %v1941, %v2265
  %v3056 = vsel %vm3013, %v1942, %v2267
  %v3057 = vsel %vm3013, %v1943, %v2269
  %v3058 = vsel %vm3013, %v1944, %v2271
  %v3059 = vsel %vm3013, %v1945, %v2273
  %v3060 = vsel %vm3013, %v1946, %v2275
  %v3061 = vsel %vm3013, %v1947, %v2277
  %v3062 = vsel %vm3013, %v1948, %v2279
  %v3063 = vsel %vm3013, %v1949, %v2281
  %v3064 = vsel %vm3013, %v1950, %v2283
  %v3065 = vsel %vm3013, %v1951, %v2285
  %v3066 = vsel %vm3013, %v1952, %v2287
  %v3067 = vsel %vm3013, %v1953, %v2289
  %v3068 = vsel %vm3013, %v1954, %v2291
  %v3069 = vsel %vm3013, %v1955, %v2293
  %v3070 = vsel %vm3013, %v1956, %v2295
  %v3071 = vsel %vm3013, %v1957, %v2297
  %v3072 = vsel %vm3013, %v1958, %v2299
  %v3073 = vsel %vm3013, %v1959, %v2301
  %v3074 = vsel %vm3013, %v1960, %v2303
  %v3075 = vsel %vm3013, %v1961, %v2305
  %v3076 = vsel %vm3013, %v1962, %v2307
  %v3077 = vsel %vm3013, %v1963, %v2309
  %v3078 = vsel %vm3013, %v1964, %v2311
  %v3079 = vsel %vm3013, %v1965, %v2313
  %v3080 = vsel %vm3013, %v1966, %v2315
  %v3081 = vsel %vm3013, %v1967, %v2317
  %v3082 = vsel %vm3013, %v1968, %v2319
  %v3083 = vsel %vm3013, %v1969, %v2321
  %v3084 = vsel %vm3013, %v1970, %v2323
  %v3085 = vsel %vm3013, %v1971, %v2325
  %v3086 = vsel %vm3013, %v1972, %v2327
  %v3087 = vsel %vm3013, %v1973, %v2329
  %v3088 = vsel %vm3013, %v1974, %v2331
  %v3089 = vsel %vm3013, %v1975, %v2333
  %v3090 = vsel %vm3013, %v1976, %v2335
  %v3091 = vsel %vm3013, %v1977, %v2337
  %v3092 = vsel %vm3013, %v1978, %v2339
  %v3093 = vsel %vm3013, %v1979, %v2341
  %v3094 = vsel %vm3013, %v1980, %v2343
  %v3095 = vsel %vm3013, %v1981, %v2345
  %v3096 = vsel %vm3013, %v1982, %v2347
  %v3097 = vsel %vm3013, %v1983, %v2349
  %v3098 = vsel %vm3013, %v1984, %v2351
  %v3099 = vsel %vm3013, %v1985, %v2353
  %v3100 = vsel %vm3013, %v1986, %v2355
  %v3101 = vsel %vm3013, %v1987, %v2357
  %v3102 = vsel %vm3013, %v1988, %v2359
  %v3103 = vsel %vm3013, %v1989, %v2361
  %v3104 = vsel %vm3013, %v1990, %v2363
  %v3105 = vsel %vm3013, %v1991, %v2365
  %v3106 = vsel %vm3013, %v1992, %v2367
  %v3107 = vsel %vm3013, %v1993, %v2369
  %v3108 = vsel %vm3013, %v1994, %v2371
  %v3109 = vsel %vm3013, %v1995, %v2373
  %v3110 = vsel %vm3013, %v1996, %v2375
  %v3111 = vsel %vm3013, %v1997, %v2377
  %v3112 = vsel %vm3013, %v1998, %v2379
  %v3113 = vsel %vm3013, %v1999, %v2381
  %v3114 = vsel %vm3013, %v2000, %v2383
  %v3115 = vsel %vm3013, %v2001, %v2385
  %v3116 = vsel %vm3013, %v2002, %v2387
  %v3117 = vsel %vm3013, %v2003, %v2389
  %v3118 = vsel %vm3013, %v2004, %v2391
  %v3119 = vsel %vm3013, %v2005, %v2393
  %v3120 = vsel %vm3013, %v2006, %v2395
  %v3121 = vsel %vm3013, %v2007, %v2397
  %v3122 = vsel %vm3013, %v2008, %v2399
  %v3123 = vsel %vm3013, %v2009, %v2401
  %v3124 = vsel %vm3013, %v2010, %v2403
  %v3125 = vsel %vm3013, %v2011, %v2405
  %v3126 = vsel %vm3013, %v2012, %v2407
  %v3127 = vsel %vm3013, %v2013, %v2409
  %v3128 = vsel %vm3013, %v2014, %v2411
  %v3129 = vsel %vm3013, %v2015, %v2413
  %v3130 = vsel %vm3013, %v2016, %v2415
  %v3131 = vsel %vm3013, %v2017, %v2417
  %v3132 = vsel %vm3013, %v2018, %v2419
  %v3133 = vsel %vm3013, %v2019, %v2421
  %v3134 = vsel %vm3013, %v2020, %v2423
  %v3135 = vsel %vm3013, %v2021, %v2425
  %v3136 = vsel %vm3013, %v2022, %v2427
  %v3137 = vsel %vm3013, %v2023, %v2429
  %v3138 = vsel %vm3013, %v2024, %v2431
  %v3139 = vsel %vm3013, %v2025, %v2433
  %v3140 = vsel %vm3013, %v2026, %v2435
  %v3141 = vsel %vm3013, %v2027, %v2437
  %v3142 = vsel %vm3013, %v2028, %v2439
  %v3143 = vsel %vm3013, %v2029, %v2441
  %v3144 = vsel %vm3013, %v2030, %v2443
  %v3145 = vsel %vm3013, %v2031, %v2445
  %v3146 = vsel %vm3013, %v2032, %v2447
  %v3147 = vsel %vm3013, %v2033, %v2449
  %v3148 = vsel %vm3013, %v2034, %v2451
  %v3149 = vsel %vm3013, %v2035, %v2453
  %v3150 = vsel %vm3013, %v2036, %v2455
  %v3151 = vsel %vm3013, %v2037, %v2457
  %vm3152 = vcmask 195584
  %v3153 = vsel %vm3152, %v3014, %v2600
  %v3154 = vsel %vm3152, %v3015, %v2602
  %v3155 = vsel %vm3152, %v3016, %v2604
  %v3156 = vsel %vm3152, %v3017, %v2606
  %v3157 = vsel %vm3152, %v3018, %v2608
  %v3158 = vsel %vm3152, %v3019, %v2610
  %v3159 = vsel %vm3152, %v3020, %v2612
  %v3160 = vsel %vm3152, %v3021, %v2614
  %v3161 = vsel %vm3152, %v3022, %v2616
  %v3162 = vsel %vm3152, %v3023, %v2618
  %v3163 = vsel %vm3152, %v3024, %v2620
  %v3164 = vsel %vm3152, %v3025, %v2622
  %v3165 = vsel %vm3152, %v3026, %v2624
  %v3166 = vsel %vm3152, %v3027, %v2626
  %v3167 = vsel %vm3152, %v3028, %v2628
  %v3168 = vsel %vm3152, %v3029, %v2630
  %v3169 = vsel %vm3152, %v3030, %v2632
  %v3170 = vsel %vm3152, %v3031, %v2634
  %v3171 = vsel %vm3152, %v3032, %v2636
  %v3172 = vsel %vm3152, %v3033, %v2638
  %v3173 = vsel %vm3152, %v3034, %v2640
  %v3174 = vsel %vm3152, %v3035, %v2642
  %v3175 = vsel %vm3152, %v3036, %v2644
  %v3176 = vsel %vm3152, %v3037, %v2646
  %v3177 = vsel %vm3152, %v3038, %v2648
  %v3178 = vsel %vm3152, %v3039, %v2650
  %v3179 = vsel %vm3152, %v3040, %v2652
  %v3180 = vsel %vm3152, %v3041, %v2654
  %v3181 = vsel %vm3152, %v3042, %v2656
  %v3182 = vsel %vm3152, %v3043, %v2658
  %v3183 = vsel %vm3152, %v3044, %v2660
  %v3184 = vsel %vm3152, %v3045, %v2662
  %v3185 = vsel %vm3152, %v3046, %v2664
  %v3186 = vsel %vm3152, %v3047, %v2666
  %v3187 = vsel %vm3152, %v3048, %v2668
  %v3188 = vsel %vm3152, %v3049, %v2670
  %v3189 = vsel %vm3152, %v3050, %v2672
  %v3190 = vsel %vm3152, %v3051, %v2674
  %v3191 = vsel %vm3152, %v3052, %v2676
  %v3192 = vsel %vm3152, %v3053, %v2678
  %v3193 = vsel %vm3152, %v3054, %v2680
  %v3194 = vsel %vm3152, %v3055, %v2682
  %v3195 = vsel %vm3152, %v3056, %v2684
  %v3196 = vsel %vm3152, %v3057, %v2686
  %v3197 = vsel %vm3152, %v3058, %v2688
  %v3198 = vsel %vm3152, %v3059, %v2690
  %v3199 = vsel %vm3152, %v3060, %v2692
  %v3200 = vsel %vm3152, %v3061, %v2694
  %v3201 = vsel %vm3152, %v3062, %v2696
  %v3202 = vsel %vm3152, %v3063, %v2698
  %v3203 = vsel %vm3152, %v3064, %v2700
  %v3204 = vsel %vm3152, %v3065, %v2702
  %v3205 = vsel %vm3152, %v3066, %v2704
  %v3206 = vsel %vm3152, %v3067, %v2706
  %v3207 = vsel %vm3152, %v3068, %v2708
  %v3208 = vsel %vm3152, %v3069, %v2710
  %v3209 = vsel %vm3152, %v3070, %v2712
  %v3210 = vsel %vm3152, %v3071, %v2714
  %v3211 = vsel %vm3152, %v3072, %v2716
  %v3212 = vsel %vm3152, %v3073, %v2718
  %v3213 = vsel %vm3152, %v3074, %v2720
  %v3214 = vsel %vm3152, %v3075, %v2722
  %v3215 = vsel %vm3152, %v3076, %v2724
  %v3216 = vsel %vm3152, %v3077, %v2726
  %v3217 = vsel %vm3152, %v3078, %v2728
  %v3218 = vsel %vm3152, %v3079, %v2730
  %v3219 = vsel %vm3152, %v3080, %v2732
  %v3220 = vsel %vm3152, %v3081, %v2734
  %v3221 = vsel %vm3152, %v3082, %v2736
  %v3222 = vsel %vm3152, %v3083, %v2738
  %v3223 = vsel %vm3152, %v3084, %v2740
  %v3224 = vsel %vm3152, %v3085, %v2742
  %v3225 = vsel %vm3152, %v3086, %v2744
  %v3226 = vsel %vm3152, %v3087, %v2746
  %v3227 = vsel %vm3152, %v3088, %v2748
  %v3228 = vsel %vm3152, %v3089, %v2750
  %v3229 = vsel %vm3152, %v3090, %v2752
  %v3230 = vsel %vm3152, %v3091, %v2754
  %v3231 = vsel %vm3152, %v3092, %v2756
  %v3232 = vsel %vm3152, %v3093, %v2758
  %v3233 = vsel %vm3152, %v3094, %v2760
  %v3234 = vsel %vm3152, %v3095, %v2762
  %v3235 = vsel %vm3152, %v3096, %v2764
  %v3236 = vsel %vm3152, %v3097, %v2766
  %v3237 = vsel %vm3152, %v3098, %v2768
  %v3238 = vsel %vm3152, %v3099, %v2770
  %v3239 = vsel %vm3152, %v3100, %v2772
  %v3240 = vsel %vm3152, %v3101, %v2774
  %v3241 = vsel %vm3152, %v3102, %v2776
  %v3242 = vsel %vm3152, %v3103, %v2778
  %v3243 = vsel %vm3152, %v3104, %v2780
  %v3244 = vsel %vm3152, %v3105, %v2782
  %v3245 = vsel %vm3152, %v3106, %v2784
  %v3246 = vsel %vm3152, %v3107, %v2786
  %v3247 = vsel %vm3152, %v3108, %v2788
  %v3248 = vsel %vm3152, %v3109, %v2790
  %v3249 = vsel %vm3152, %v3110, %v2792
  %v3250 = vsel %vm3152, %v3111, %v2794
  %v3251 = vsel %vm3152, %v3112, %v2796
  %v3252 = vsel %vm3152, %v3113, %v2798
  %v3253 = vsel %vm3152, %v3114, %v2800
  %v3254 = vsel %vm3152, %v3115, %v2802
  %v3255 = vsel %vm3152, %v3116, %v2804
  %v3256 = vsel %vm3152, %v3117, %v2806
  %v3257 = vsel %vm3152, %v3118, %v2808
  %v3258 = vsel %vm3152, %v3119, %v2810
  %v3259 = vsel %vm3152, %v3120, %v2812
  %v3260 = vsel %vm3152, %v3121, %v2814
  %v3261 = vsel %vm3152, %v3122, %v2816
  %v3262 = vsel %vm3152, %v3123, %v2818
  %v3263 = vsel %vm3152, %v3124, %v2820
  %v3264 = vsel %vm3152, %v3125, %v2822
  %v3265 = vsel %vm3152, %v3126, %v2824
  %v3266 = vsel %vm3152, %v3127, %v2826
  %v3267 = vsel %vm3152, %v3128, %v2828
  %v3268 = vsel %vm3152, %v3129, %v2830
  %v3269 = vsel %vm3152, %v3130, %v2832
  %v3270 = vsel %vm3152, %v3131, %v2834
  %v3271 = vsel %vm3152, %v3132, %v2836
  %v3272 = vsel %vm3152, %v3133, %v2838
  %v3273 = vsel %vm3152, %v3134, %v2840
  %v3274 = vsel %vm3152, %v3135, %v2842
  %v3275 = vsel %vm3152, %v3136, %v2844
  %v3276 = vsel %vm3152, %v3137, %v2846
  %v3277 = vsel %vm3152, %v3138, %v2848
  %v3278 = vsel %vm3152, %v3139, %v2850
  %v3279 = vsel %vm3152, %v3140, %v2852
  %v3280 = vsel %vm3152, %v3141, %v2854
  %v3281 = vsel %vm3152, %v3142, %v2856
  %v3282 = vsel %vm3152, %v3143, %v2858
  %v3283 = vsel %vm3152, %v3144, %v2860
  %v3284 = vsel %vm3152, %v3145, %v2862
  %v3285 = vsel %vm3152, %v3146, %v2864
  %v3286 = vsel %vm3152, %v3147, %v2866
  %v3287 = vsel %vm3152, %v3148, %v2868
  %v3288 = vsel %vm3152, %v3149, %v2870
  %v3289 = vsel %vm3152, %v3150, %v2872
  %v3290 = vsel %vm3152, %v3151, %v2874
  %v3291 = vld [vmem:[%s1] sm:$0xff]
  %v3292 = vld [vmem:[%s1 + $0x8] sm:$0xff]
  %v3293 = vld [vmem:[%s1 + $0x10] sm:$0xff]
  %v3294 = vld [vmem:[%s1 + $0x18] sm:$0xff]
  %v3295 = vld [vmem:[%s1 + $0x20] sm:$0xf]
  %vm3296 = vcmask 293888
  %v3298 = vsel %vm3296, %v3153, 0
  %v3301 = vsel %vm3296, %v3154, 0
  %v3304 = vsel %vm3296, %v3155, 0
  %v3307 = vsel %vm3296, %v3156, 0
  %v3310 = vsel %vm3296, %v3157, 0
  %v3313 = vsel %vm3296, %v3158, 0
  %v3316 = vsel %vm3296, %v3159, 0
  %v3319 = vsel %vm3296, %v3160, 0
  %v3322 = vsel %vm3296, %v3161, 0
  %v3325 = vsel %vm3296, %v3162, 0
  %v3328 = vsel %vm3296, %v3163, 0
  %v3331 = vsel %vm3296, %v3164, 0
  %v3334 = vsel %vm3296, %v3165, 0
  %v3337 = vsel %vm3296, %v3166, 0
  %v3340 = vsel %vm3296, %v3167, 0
  %v3343 = vsel %vm3296, %v3168, 0
  %v3346 = vsel %vm3296, %v3169, 0
  %v3349 = vsel %vm3296, %v3170, 0
  %v3352 = vsel %vm3296, %v3171, 0
  %v3355 = vsel %vm3296, %v3172, 0
  %v3358 = vsel %vm3296, %v3173, 0
  %v3361 = vsel %vm3296, %v3174, 0
  %v3364 = vsel %vm3296, %v3175, 0
  %v3367 = vsel %vm3296, %v3176, 0
  %v3370 = vsel %vm3296, %v3177, 0
  %v3373 = vsel %vm3296, %v3178, 0
  %v3376 = vsel %vm3296, %v3179, 0
  %v3379 = vsel %vm3296, %v3180, 0
  %v3382 = vsel %vm3296, %v3181, 0
  %v3385 = vsel %vm3296, %v3182, 0
  %v3388 = vsel %vm3296, %v3183, 0
  %v3391 = vsel %vm3296, %v3184, 0
  %v3394 = vsel %vm3296, %v3185, 0
  %v3397 = vsel %vm3296, %v3186, 0
  %v3400 = vsel %vm3296, %v3187, 0
  %v3403 = vsel %vm3296, %v3188, 0
  %v3406 = vsel %vm3296, %v3189, 0
  %v3409 = vsel %vm3296, %v3190, 0
  %v3412 = vsel %vm3296, %v3191, 0
  %v3415 = vsel %vm3296, %v3192, 0
  %v3418 = vsel %vm3296, %v3193, 0
  %v3421 = vsel %vm3296, %v3194, 0
  %v3424 = vsel %vm3296, %v3195, 0
  %v3427 = vsel %vm3296, %v3196, 0
  %v3430 = vsel %vm3296, %v3197, 0
  %v3433 = vsel %vm3296, %v3198, 0
  %v3436 = vsel %vm3296, %v3199, 0
  %v3439 = vsel %vm3296, %v3200, 0
  %v3442 = vsel %vm3296, %v3201, 0
  %v3445 = vsel %vm3296, %v3202, 0
  %v3448 = vsel %vm3296, %v3203, 0
  %v3451 = vsel %vm3296, %v3204, 0
  %v3454 = vsel %vm3296, %v3205, 0
  %v3457 = vsel %vm3296, %v3206, 0
  %v3460 = vsel %vm3296, %v3207, 0
  %v3463 = vsel %vm3296, %v3208, 0
  %v3466 = vsel %vm3296, %v3209, 0
  %v3469 = vsel %vm3296, %v3210, 0
  %v3472 = vsel %vm3296, %v3211, 0
  %v3475 = vsel %vm3296, %v3212, 0
  %v3478 = vsel %vm3296, %v3213, 0
  %v3481 = vsel %vm3296, %v3214, 0
  %v3484 = vsel %vm3296, %v3215, 0
  %v3487 = vsel %vm3296, %v3216, 0
  %v3490 = vsel %vm3296, %v3217, 0
  %v3493 = vsel %vm3296, %v3218, 0
  %v3496 = vsel %vm3296, %v3219, 0
  %v3499 = vsel %vm3296, %v3220, 0
  %v3502 = vsel %vm3296, %v3221, 0
  %v3505 = vsel %vm3296, %v3222, 0
  %v3508 = vsel %vm3296, %v3223, 0
  %v3511 = vsel %vm3296, %v3224, 0
  %v3514 = vsel %vm3296, %v3225, 0
  %v3517 = vsel %vm3296, %v3226, 0
  %v3520 = vsel %vm3296, %v3227, 0
  %v3523 = vsel %vm3296, %v3228, 0
  %v3526 = vsel %vm3296, %v3229, 0
  %v3529 = vsel %vm3296, %v3230, 0
  %v3532 = vsel %vm3296, %v3231, 0
  %v3535 = vsel %vm3296, %v3232, 0
  %v3538 = vsel %vm3296, %v3233, 0
  %v3541 = vsel %vm3296, %v3234, 0
  %v3544 = vsel %vm3296, %v3235, 0
  %v3547 = vsel %vm3296, %v3236, 0
  %v3550 = vsel %vm3296, %v3237, 0
  %v3553 = vsel %vm3296, %v3238, 0
  %v3556 = vsel %vm3296, %v3239, 0
  %v3559 = vsel %vm3296, %v3240, 0
  %v3562 = vsel %vm3296, %v3241, 0
  %v3565 = vsel %vm3296, %v3242, 0
  %v3568 = vsel %vm3296, %v3243, 0
  %v3571 = vsel %vm3296, %v3244, 0
  %v3574 = vsel %vm3296, %v3245, 0
  %v3577 = vsel %vm3296, %v3246, 0
  %v3580 = vsel %vm3296, %v3247, 0
  %v3583 = vsel %vm3296, %v3248, 0
  %v3586 = vsel %vm3296, %v3249, 0
  %v3589 = vsel %vm3296, %v3250, 0
  %v3592 = vsel %vm3296, %v3251, 0
  %v3595 = vsel %vm3296, %v3252, 0
  %v3598 = vsel %vm3296, %v3253, 0
  %v3601 = vsel %vm3296, %v3254, 0
  %v3604 = vsel %vm3296, %v3255, 0
  %v3607 = vsel %vm3296, %v3256, 0
  %v3610 = vsel %vm3296, %v3257, 0
  %v3613 = vsel %vm3296, %v3258, 0
  %v3616 = vsel %vm3296, %v3259, 0
  %v3619 = vsel %vm3296, %v3260, 0
  %v3622 = vsel %vm3296, %v3261, 0
  %v3625 = vsel %vm3296, %v3262, 0
  %v3628 = vsel %vm3296, %v3263, 0
  %v3631 = vsel %vm3296, %v3264, 0
  %v3634 = vsel %vm3296, %v3265, 0
  %v3637 = vsel %vm3296, %v3266, 0
  %v3640 = vsel %vm3296, %v3267, 0
  %v3643 = vsel %vm3296, %v3268, 0
  %v3646 = vsel %vm3296, %v3269, 0
  %v3649 = vsel %vm3296, %v3270, 0
  %v3652 = vsel %vm3296, %v3271, 0
  %v3655 = vsel %vm3296, %v3272, 0
  %v3658 = vsel %vm3296, %v3273, 0
  %v3661 = vsel %vm3296, %v3274, 0
  %v3664 = vsel %vm3296, %v3275, 0
  %v3667 = vsel %vm3296, %v3276, 0
  %v3670 = vsel %vm3296, %v3277, 0
  %v3673 = vsel %vm3296, %v3278, 0
  %v3676 = vsel %vm3296, %v3279, 0
  %v3679 = vsel %vm3296, %v3280, 0
  %v3682 = vsel %vm3296, %v3281, 0
  %v3685 = vsel %vm3296, %v3282, 0
  %v3688 = vsel %vm3296, %v3283, 0
  %v3691 = vsel %vm3296, %v3284, 0
  %v3694 = vsel %vm3296, %v3285, 0
  %v3697 = vsel %vm3296, %v3286, 0
  %v3700 = vsel %vm3296, %v3287, 0
  %v3703 = vsel %vm3296, %v3288, 0
  %v3706 = vsel %vm3296, %v3289, 0
  %v3709 = vsel %vm3296, %v3290, 0
  %vm3711 = vcmask 1043456
  %v3713 = vsel %vm3711, %v3295, 0
  %3715 = vmatprep.subr.mxu0 0.0
  %3716 = vmatpush1.msra.mxu0 %v3291
  %3717 = vmatprep.subr.mxu0 0.0
  %3718 = vmatpush1.msra.mxu0 %v3292
  %3719 = vmatprep.subr.mxu0 0.0
  %3720 = vmatpush1.msra.mxu0 %v3293
  %3721 = vmatprep.subr.mxu0 0.0
  %3722 = vmatpush1.msra.mxu0 %v3294
  %3723 = vmatprep.subr.mxu0 0.0
  %3724 = vmatpush1.msra.mxu0 %v3713
  %3725 = vmatprep.subr.mxu0 0.0
  %3726 = vmatpush1.msra.mxu0 0.0
  %3727 = vmatprep.subr.mxu0 0.0
  %3728 = vmatpush1.msra.mxu0 0.0
  %3729 = vmatprep.subr.mxu0 0.0
  %3730 = vmatpush1.msra.mxu0 0.0
  %3731 = vmatprep.subr.mxu0 0.0
  %3732 = vmatpush1.msra.mxu0 0.0
  %3733 = vmatprep.subr.mxu0 0.0
  %3734 = vmatpush1.msra.mxu0 0.0
  %3735 = vmatprep.subr.mxu0 0.0
  %3736 = vmatpush1.msra.mxu0 0.0
  %3737 = vmatprep.subr.mxu0 0.0
  %3738 = vmatpush1.msra.mxu0 0.0
  %3739 = vmatprep.subr.mxu0 0.0
  %3740 = vmatpush1.msra.mxu0 0.0
  %3741 = vmatprep.subr.mxu0 0.0
  %3742 = vmatpush1.msra.mxu0 0.0
  %3743 = vmatprep.subr.mxu0 0.0
  %3744 = vmatpush1.msra.mxu0 0.0
  %3745 = vmatprep.subr.mxu0 0.0
  %3746 = vmatpush1.msra.mxu0 0.0
  %3747 = vmatprep.subr.mxu0 0.0
  %3748 = vmatpush1.msra.mxu0 0.0
  %3749 = vmatprep.subr.mxu0 0.0
  %3750 = vmatpush1.msra.mxu0 0.0
  %3751 = vmatprep.subr.mxu0 0.0
  %3752 = vmatpush1.msra.mxu0 0.0
  %3753 = vmatprep.subr.mxu0 0.0
  %3754 = vmatpush1.msra.mxu0 0.0
  %3755 = vmatprep.subr.mxu0 0.0
  %3756 = vmatpush1.msra.mxu0 0.0
  %3757 = vmatprep.subr.mxu0 0.0
  %3758 = vmatpush1.msra.mxu0 0.0
  %3759 = vmatprep.subr.mxu0 0.0
  %3760 = vmatpush1.msra.mxu0 0.0
  %3761 = vmatprep.subr.mxu0 0.0
  %3762 = vmatpush1.msra.mxu0 0.0
  %3763 = vmatprep.subr.mxu0 0.0
  %3764 = vmatpush1.msra.mxu0 0.0
  %3765 = vmatprep.subr.mxu0 0.0
  %3766 = vmatpush1.msra.mxu0 0.0
  %3767 = vmatprep.subr.mxu0 0.0
  %3768 = vmatpush1.msra.mxu0 0.0
  %3769 = vmatprep.subr.mxu0 0.0
  %3770 = vmatpush1.msra.mxu0 0.0
  %3771 = vmatprep.subr.mxu0 0.0
  %3772 = vmatpush1.msra.mxu0 0.0
  %3773 = vmatprep.subr.mxu0 0.0
  %3774 = vmatpush1.msra.mxu0 0.0
  %3775 = vmatprep.subr.mxu0 0.0
  %3776 = vmatpush1.msra.mxu0 0.0
  %3777 = vmatprep.subr.mxu0 0.0
  %3778 = vmatpush1.msra.mxu0 0.0
  %3779 = vmatprep.mubr.f32.mxu0 0.0
  %3780 = vmatmul.mubr.f32.gmra.mrb[0].mxu0 %v3298
  %v3781 = vpop.f32.mrb[0].mxu0
  %v3782 = vadd.f32 0.0, %v3781
  %v3783 = vpop.f32.mrb[0].mxu0
  %3784 = vmatprep.mubr.f32.mxu0 0.0
  %3785 = vmatmul.mubr.f32.gmra.mrb[0].mxu0 %v3301
  %v3786 = vpop.f32.mrb[0].mxu0
  %v3787 = vadd.f32 0.0, %v3786
  %v3788 = vpop.f32.mrb[0].mxu0
  %3789 = vmatprep.mubr.f32.mxu0 0.0
  %3790 = vmatmul.mubr.f32.gmra.mrb[0].mxu0 %v3304
  %v3791 = vpop.f32.mrb[0].mxu0
  %v3792 = vadd.f32 0.0, %v3791
  %v3793 = vpop.f32.mrb[0].mxu0
  %3794 = vmatprep.mubr.f32.mxu0 0.0
  %3795 = vmatmul.mubr.f32.gmra.mrb[0].mxu0 %v3307
  %v3796 = vpop.f32.mrb[0].mxu0
  %v3797 = vadd.f32 0.0, %v3796
  %v3798 = vpop.f32.mrb[0].mxu0
  %3799 = vmatprep.mubr.f32.mxu0 0.0
  %3800 = vmatmul.mubr.f32.gmra.mrb[0].mxu0 %v3310
  %v3801 = vpop.f32.mrb[0].mxu0
  %v3802 = vadd.f32 0.0, %v3801
  %v3803 = vpop.f32.mrb[0].mxu0
  %3804 = vmatprep.mubr.f32.mxu0 0.0
  %3805 = vmatmul.mubr.f32.gmra.mrb[0].mxu0 %v3313
  %v3806 = vpop.f32.mrb[0].mxu0
  %v3807 = vadd.f32 0.0, %v3806
  %v3808 = vpop.f32.mrb[0].mxu0
  %3809 = vmatprep.mubr.f32.mxu0 0.0
  %3810 = vmatmul.mubr.f32.gmra.mrb[0].mxu0 %v3316
  %v3811 = vpop.f32.mrb[0].mxu0
  %v3812 = vadd.f32 0.0, %v3811
  %v3813 = vpop.f32.mrb[0].mxu0
  %3814 = vmatprep.mubr.f32.mxu0 0.0
  %3815 = vmatmul.mubr.f32.gmra.mrb[0].mxu0 %v3319
  %v3816 = vpop.f32.mrb[0].mxu0
  %v3817 = vadd.f32 0.0, %v3816
  %v3818 = vpop.f32.mrb[0].mxu0
  %3819 = vmatprep.mubr.f32.mxu0 0.0
  %3820 = vmatmul.mubr.f32.gmra.mrb[0].mxu0 %v3322
  %v3821 = vpop.f32.mrb[0].mxu0
  %v3822 = vadd.f32 0.0, %v3821
  %v3823 = vpop.f32.mrb[0].mxu0
  %3824 = vmatprep.mubr.f32.mxu0 0.0
  %3825 = vmatmul.mubr.f32.gmra.mrb[0].mxu0 %v3325
  %v3826 = vpop.f32.mrb[0].mxu0
  %v3827 = vadd.f32 0.0, %v3826
  %v3828 = vpop.f32.mrb[0].mxu0
  %3829 = vmatprep.mubr.f32.mxu0 0.0
  %3830 = vmatmul.mubr.f32.gmra.mrb[0].mxu0 %v3328
  %v3831 = vpop.f32.mrb[0].mxu0
  %v3832 = vadd.f32 0.0, %v3831
  %v3833 = vpop.f32.mrb[0].mxu0
  %3834 = vmatprep.mubr.f32.mxu0 0.0
  %3835 = vmatmul.mubr.f32.gmra.mrb[0].mxu0 %v3331
  %v3836 = vpop.f32.mrb[0].mxu0
  %v3837 = vadd.f32 0.0, %v3836
  %v3838 = vpop.f32.mrb[0].mxu0
  %3839 = vmatprep.mubr.f32.mxu0 0.0
  %3840 = vmatmul.mubr.f32.gmra.mrb[0].mxu0 %v3334
  %v3841 = vpop.f32.mrb[0].mxu0
  %v3842 = vadd.f32 0.0, %v3841
  %v3843 = vpop.f32.mrb[0].mxu0
  %3844 = vmatprep.mubr.f32.mxu0 0.0
  %3845 = vmatmul.mubr.f32.gmra.mrb[0].mxu0 %v3337
  %v3846 = vpop.f32.mrb[0].mxu0
  %v3847 = vadd.f32 0.0, %v3846
  %v3848 = vpop.f32.mrb[0].mxu0
  %3849 = vmatprep.mubr.f32.mxu0 0.0
  %3850 = vmatmul.mubr.f32.gmra.mrb[0].mxu0 %v3340
  %v3851 = vpop.f32.mrb[0].mxu0
  %v3852 = vadd.f32 0.0, %v3851
  %v3853 = vpop.f32.mrb[0].mxu0
  %3854 = vmatprep.mubr.f32.mxu0 0.0
  %3855 = vmatmul.mubr.f32.gmra.mrb[0].mxu0 %v3343
  %v3856 = vpop.f32.mrb[0].mxu0
  %v3857 = vadd.f32 0.0, %v3856
  %v3858 = vpop.f32.mrb[0].mxu0
  %3859 = vmatprep.mubr.f32.mxu0 0.0
  %3860 = vmatmul.mubr.f32.gmra.mrb[0].mxu0 %v3346
  %v3861 = vpop.f32.mrb[0].mxu0
  %v3862 = vadd.f32 0.0, %v3861
  %v3863 = vpop.f32.mrb[0].mxu0
  %3864 = vmatprep.mubr.f32.mxu0 0.0
  %3865 = vmatmul.mubr.f32.gmra.mrb[0].mxu0 %v3349
  %v3866 = vpop.f32.mrb[0].mxu0
  %v3867 = vadd.f32 0.0, %v3866
  %v3868 = vpop.f32.mrb[0].mxu0
  %3869 = vmatprep.mubr.f32.mxu0 0.0
  %3870 = vmatmul.mubr.f32.gmra.mrb[0].mxu0 %v3352
  %v3871 = vpop.f32.mrb[0].mxu0
  %v3872 = vadd.f32 0.0, %v3871
  %v3873 = vpop.f32.mrb[0].mxu0
  %3874 = vmatprep.mubr.f32.mxu0 0.0
  %3875 = vmatmul.mubr.f32.gmra.mrb[0].mxu0 %v3355
  %v3876 = vpop.f32.mrb[0].mxu0
  %v3877 = vadd.f32 0.0, %v3876
  %v3878 = vpop.f32.mrb[0].mxu0
  %3879 = vmatprep.mubr.f32.mxu0 0.0
  %3880 = vmatmul.mubr.f32.gmra.mrb[0].mxu0 %v3358
  %v3881 = vpop.f32.mrb[0].mxu0
  %v3882 = vadd.f32 0.0, %v3881
  %v3883 = vpop.f32.mrb[0].mxu0
  %3884 = vmatprep.mubr.f32.mxu0 0.0
  %3885 = vmatmul.mubr.f32.gmra.mrb[0].mxu0 %v3361
  %v3886 = vpop.f32.mrb[0].mxu0
  %v3887 = vadd.f32 0.0, %v3886
  %v3888 = vpop.f32.mrb[0].mxu0
  %3889 = vmatprep.mubr.f32.mxu0 0.0
  %3890 = vmatmul.mubr.f32.gmra.mrb[0].mxu0 %v3364
  %v3891 = vpop.f32.mrb[0].mxu0
  %v3892 = vadd.f32 0.0, %v3891
  %v3893 = vpop.f32.mrb[0].mxu0
  %3894 = vmatprep.mubr.f32.mxu0 0.0
  %3895 = vmatmul.mubr.f32.gmra.mrb[0].mxu0 %v3367
  %v3896 = vpop.f32.mrb[0].mxu0
  %v3897 = vadd.f32 0.0, %v3896
  %v3898 = vpop.f32.mrb[0].mxu0
  %3899 = vmatprep.mubr.f32.mxu0 0.0
  %3900 = vmatmul.mubr.f32.gmra.mrb[0].mxu0 %v3370
  %v3901 = vpop.f32.mrb[0].mxu0
  %v3902 = vadd.f32 0.0, %v3901
  %v3903 = vpop.f32.mrb[0].mxu0
  %3904 = vmatprep.mubr.f32.mxu0 0.0
  %3905 = vmatmul.mubr.f32.gmra.mrb[0].mxu0 %v3373
  %v3906 = vpop.f32.mrb[0].mxu0
  %v3907 = vadd.f32 0.0, %v3906
  %v3908 = vpop.f32.mrb[0].mxu0
  %3909 = vmatprep.mubr.f32.mxu0 0.0
  %3910 = vmatmul.mubr.f32.gmra.mrb[0].mxu0 %v3376
  %v3911 = vpop.f32.mrb[0].mxu0
  %v3912 = vadd.f32 0.0, %v3911
  %v3913 = vpop.f32.mrb[0].mxu0
  %3914 = vmatprep.mubr.f32.mxu0 0.0
  %3915 = vmatmul.mubr.f32.gmra.mrb[0].mxu0 %v3379
  %v3916 = vpop.f32.mrb[0].mxu0
  %v3917 = vadd.f32 0.0, %v3916
  %v3918 = vpop.f32.mrb[0].mxu0
  %3919 = vmatprep.mubr.f32.mxu0 0.0
  %3920 = vmatmul.mubr.f32.gmra.mrb[0].mxu0 %v3382
  %v3921 = vpop.f32.mrb[0].mxu0
  %v3922 = vadd.f32 0.0, %v3921
  %v3923 = vpop.f32.mrb[0].mxu0
  %3924 = vmatprep.mubr.f32.mxu0 0.0
  %3925 = vmatmul.mubr.f32.gmra.mrb[0].mxu0 %v3385
  %v3926 = vpop.f32.mrb[0].mxu0
  %v3927 = vadd.f32 0.0, %v3926
  %v3928 = vpop.f32.mrb[0].mxu0
  %3929 = vmatprep.mubr.f32.mxu0 0.0
  %3930 = vmatmul.mubr.f32.gmra.mrb[0].mxu0 %v3388
  %v3931 = vpop.f32.mrb[0].mxu0
  %v3932 = vadd.f32 0.0, %v3931
  %v3933 = vpop.f32.mrb[0].mxu0
  %3934 = vmatprep.mubr.f32.mxu0 0.0
  %3935 = vmatmul.mubr.f32.gmra.mrb[0].mxu0 %v3391
  %v3936 = vpop.f32.mrb[0].mxu0
  %v3937 = vadd.f32 0.0, %v3936
  %v3938 = vpop.f32.mrb[0].mxu0
  %3939 = vmatprep.mubr.f32.mxu0 0.0
  %3940 = vmatmul.mubr.f32.gmra.mrb[0].mxu0 %v3394
  %v3941 = vpop.f32.mrb[0].mxu0
  %v3942 = vadd.f32 0.0, %v3941
  %v3943 = vpop.f32.mrb[0].mxu0
  %3944 = vmatprep.mubr.f32.mxu0 0.0
  %3945 = vmatmul.mubr.f32.gmra.mrb[0].mxu0 %v3397
  %v3946 = vpop.f32.mrb[0].mxu0
  %v3947 = vadd.f32 0.0, %v3946
  %v3948 = vpop.f32.mrb[0].mxu0
  %3949 = vmatprep.mubr.f32.mxu0 0.0
  %3950 = vmatmul.mubr.f32.gmra.mrb[0].mxu0 %v3400
  %v3951 = vpop.f32.mrb[0].mxu0
  %v3952 = vadd.f32 0.0, %v3951
  %v3953 = vpop.f32.mrb[0].mxu0
  %3954 = vmatprep.mubr.f32.mxu0 0.0
  %3955 = vmatmul.mubr.f32.gmra.mrb[0].mxu0 %v3403
  %v3956 = vpop.f32.mrb[0].mxu0
  %v3957 = vadd.f32 0.0, %v3956
  %v3958 = vpop.f32.mrb[0].mxu0
  %3959 = vmatprep.mubr.f32.mxu0 0.0
  %3960 = vmatmul.mubr.f32.gmra.mrb[0].mxu0 %v3406
  %v3961 = vpop.f32.mrb[0].mxu0
  %v3962 = vadd.f32 0.0, %v3961
  %v3963 = vpop.f32.mrb[0].mxu0
  %3964 = vmatprep.mubr.f32.mxu0 0.0
  %3965 = vmatmul.mubr.f32.gmra.mrb[0].mxu0 %v3409
  %v3966 = vpop.f32.mrb[0].mxu0
  %v3967 = vadd.f32 0.0, %v3966
  %v3968 = vpop.f32.mrb[0].mxu0
  %3969 = vmatprep.mubr.f32.mxu0 0.0
  %3970 = vmatmul.mubr.f32.gmra.mrb[0].mxu0 %v3412
  %v3971 = vpop.f32.mrb[0].mxu0
  %v3972 = vadd.f32 0.0, %v3971
  %v3973 = vpop.f32.mrb[0].mxu0
  %3974 = vmatprep.mubr.f32.mxu0 0.0
  %3975 = vmatmul.mubr.f32.gmra.mrb[0].mxu0 %v3415
  %v3976 = vpop.f32.mrb[0].mxu0
  %v3977 = vadd.f32 0.0, %v3976
  %v3978 = vpop.f32.mrb[0].mxu0
  %3979 = vmatprep.mubr.f32.mxu0 0.0
  %3980 = vmatmul.mubr.f32.gmra.mrb[0].mxu0 %v3418
  %v3981 = vpop.f32.mrb[0].mxu0
  %v3982 = vadd.f32 0.0, %v3981
  %v3983 = vpop.f32.mrb[0].mxu0
  %3984 = vmatprep.mubr.f32.mxu0 0.0
  %3985 = vmatmul.mubr.f32.gmra.mrb[0].mxu0 %v3421
  %v3986 = vpop.f32.mrb[0].mxu0
  %v3987 = vadd.f32 0.0, %v3986
  %v3988 = vpop.f32.mrb[0].mxu0
  %3989 = vmatprep.mubr.f32.mxu0 0.0
  %3990 = vmatmul.mubr.f32.gmra.mrb[0].mxu0 %v3424
  %v3991 = vpop.f32.mrb[0].mxu0
  %v3992 = vadd.f32 0.0, %v3991
  %v3993 = vpop.f32.mrb[0].mxu0
  %3994 = vmatprep.mubr.f32.mxu0 0.0
  %3995 = vmatmul.mubr.f32.gmra.mrb[0].mxu0 %v3427
  %v3996 = vpop.f32.mrb[0].mxu0
  %v3997 = vadd.f32 0.0, %v3996
  %v3998 = vpop.f32.mrb[0].mxu0
  %3999 = vmatprep.mubr.f32.mxu0 0.0
  %4000 = vmatmul.mubr.f32.gmra.mrb[0].mxu0 %v3430
  %v4001 = vpop.f32.mrb[0].mxu0
  %v4002 = vadd.f32 0.0, %v4001
  %v4003 = vpop.f32.mrb[0].mxu0
  %4004 = vmatprep.mubr.f32.mxu0 0.0
  %4005 = vmatmul.mubr.f32.gmra.mrb[0].mxu0 %v3433
  %v4006 = vpop.f32.mrb[0].mxu0
  %v4007 = vadd.f32 0.0, %v4006
  %v4008 = vpop.f32.mrb[0].mxu0
  %4009 = vmatprep.mubr.f32.mxu0 0.0
  %4010 = vmatmul.mubr.f32.gmra.mrb[0].mxu0 %v3436
  %v4011 = vpop.f32.mrb[0].mxu0
  %v4012 = vadd.f32 0.0, %v4011
  %v4013 = vpop.f32.mrb[0].mxu0
  %4014 = vmatprep.mubr.f32.mxu0 0.0
  %4015 = vmatmul.mubr.f32.gmra.mrb[0].mxu0 %v3439
  %v4016 = vpop.f32.mrb[0].mxu0
  %v4017 = vadd.f32 0.0, %v4016
  %v4018 = vpop.f32.mrb[0].mxu0
  %4019 = vmatprep.mubr.f32.mxu0 0.0
  %4020 = vmatmul.mubr.f32.gmra.mrb[0].mxu0 %v3442
  %v4021 = vpop.f32.mrb[0].mxu0
  %v4022 = vadd.f32 0.0, %v4021
  %v4023 = vpop.f32.mrb[0].mxu0
  %4024 = vmatprep.mubr.f32.mxu0 0.0
  %4025 = vmatmul.mubr.f32.gmra.mrb[0].mxu0 %v3445
  %v4026 = vpop.f32.mrb[0].mxu0
  %v4027 = vadd.f32 0.0, %v4026
  %v4028 = vpop.f32.mrb[0].mxu0
  %4029 = vmatprep.mubr.f32.mxu0 0.0
  %4030 = vmatmul.mubr.f32.gmra.mrb[0].mxu0 %v3448
  %v4031 = vpop.f32.mrb[0].mxu0
  %v4032 = vadd.f32 0.0, %v4031
  %v4033 = vpop.f32.mrb[0].mxu0
  %4034 = vmatprep.mubr.f32.mxu0 0.0
  %4035 = vmatmul.mubr.f32.gmra.mrb[0].mxu0 %v3451
  %v4036 = vpop.f32.mrb[0].mxu0
  %v4037 = vadd.f32 0.0, %v4036
  %v4038 = vpop.f32.mrb[0].mxu0
  %4039 = vmatprep.mubr.f32.mxu0 0.0
  %4040 = vmatmul.mubr.f32.gmra.mrb[0].mxu0 %v3454
  %v4041 = vpop.f32.mrb[0].mxu0
  %v4042 = vadd.f32 0.0, %v4041
  %v4043 = vpop.f32.mrb[0].mxu0
  %4044 = vmatprep.mubr.f32.mxu0 0.0
  %4045 = vmatmul.mubr.f32.gmra.mrb[0].mxu0 %v3457
  %v4046 = vpop.f32.mrb[0].mxu0
  %v4047 = vadd.f32 0.0, %v4046
  %v4048 = vpop.f32.mrb[0].mxu0
  %4049 = vmatprep.mubr.f32.mxu0 0.0
  %4050 = vmatmul.mubr.f32.gmra.mrb[0].mxu0 %v3460
  %v4051 = vpop.f32.mrb[0].mxu0
  %v4052 = vadd.f32 0.0, %v4051
  %v4053 = vpop.f32.mrb[0].mxu0
  %4054 = vmatprep.mubr.f32.mxu0 0.0
  %4055 = vmatmul.mubr.f32.gmra.mrb[0].mxu0 %v3463
  %v4056 = vpop.f32.mrb[0].mxu0
  %v4057 = vadd.f32 0.0, %v4056
  %v4058 = vpop.f32.mrb[0].mxu0
  %4059 = vmatprep.mubr.f32.mxu0 0.0
  %4060 = vmatmul.mubr.f32.gmra.mrb[0].mxu0 %v3466
  %v4061 = vpop.f32.mrb[0].mxu0
  %v4062 = vadd.f32 0.0, %v4061
  %v4063 = vpop.f32.mrb[0].mxu0
  %4064 = vmatprep.mubr.f32.mxu0 0.0
  %4065 = vmatmul.mubr.f32.gmra.mrb[0].mxu0 %v3469
  %v4066 = vpop.f32.mrb[0].mxu0
  %v4067 = vadd.f32 0.0, %v4066
  %v4068 = vpop.f32.mrb[0].mxu0
  %4069 = vmatprep.mubr.f32.mxu0 0.0
  %4070 = vmatmul.mubr.f32.gmra.mrb[0].mxu0 %v3472
  %v4071 = vpop.f32.mrb[0].mxu0
  %v4072 = vadd.f32 0.0, %v4071
  %v4073 = vpop.f32.mrb[0].mxu0
  %4074 = vmatprep.mubr.f32.mxu0 0.0
  %4075 = vmatmul.mubr.f32.gmra.mrb[0].mxu0 %v3475
  %v4076 = vpop.f32.mrb[0].mxu0
  %v4077 = vadd.f32 0.0, %v4076
  %v4078 = vpop.f32.mrb[0].mxu0
  %4079 = vmatprep.mubr.f32.mxu0 0.0
  %4080 = vmatmul.mubr.f32.gmra.mrb[0].mxu0 %v3478
  %v4081 = vpop.f32.mrb[0].mxu0
  %v4082 = vadd.f32 0.0, %v4081
  %v4083 = vpop.f32.mrb[0].mxu0
  %4084 = vmatprep.mubr.f32.mxu0 0.0
  %4085 = vmatmul.mubr.f32.gmra.mrb[0].mxu0 %v3481
  %v4086 = vpop.f32.mrb[0].mxu0
  %v4087 = vadd.f32 0.0, %v4086
  %v4088 = vpop.f32.mrb[0].mxu0
  %4089 = vmatprep.mubr.f32.mxu0 0.0
  %4090 = vmatmul.mubr.f32.gmra.mrb[0].mxu0 %v3484
  %v4091 = vpop.f32.mrb[0].mxu0
  %v4092 = vadd.f32 0.0, %v4091
  %v4093 = vpop.f32.mrb[0].mxu0
  %4094 = vmatprep.mubr.f32.mxu0 0.0
  %4095 = vmatmul.mubr.f32.gmra.mrb[0].mxu0 %v3487
  %v4096 = vpop.f32.mrb[0].mxu0
  %v4097 = vadd.f32 0.0, %v4096
  %v4098 = vpop.f32.mrb[0].mxu0
  %4099 = vmatprep.mubr.f32.mxu0 0.0
  %4100 = vmatmul.mubr.f32.gmra.mrb[0].mxu0 %v3490
  %v4101 = vpop.f32.mrb[0].mxu0
  %v4102 = vadd.f32 0.0, %v4101
  %v4103 = vpop.f32.mrb[0].mxu0
  %4104 = vmatprep.mubr.f32.mxu0 0.0
  %4105 = vmatmul.mubr.f32.gmra.mrb[0].mxu0 %v3493
  %v4106 = vpop.f32.mrb[0].mxu0
  %v4107 = vadd.f32 0.0, %v4106
  %v4108 = vpop.f32.mrb[0].mxu0
  %4109 = vmatprep.mubr.f32.mxu0 0.0
  %4110 = vmatmul.mubr.f32.gmra.mrb[0].mxu0 %v3496
  %v4111 = vpop.f32.mrb[0].mxu0
  %v4112 = vadd.f32 0.0, %v4111
  %v4113 = vpop.f32.mrb[0].mxu0
  %4114 = vmatprep.mubr.f32.mxu0 0.0
  %4115 = vmatmul.mubr.f32.gmra.mrb[0].mxu0 %v3499
  %v4116 = vpop.f32.mrb[0].mxu0
  %v4117 = vadd.f32 0.0, %v4116
  %v4118 = vpop.f32.mrb[0].mxu0
  %4119 = vmatprep.mubr.f32.mxu0 0.0
  %4120 = vmatmul.mubr.f32.gmra.mrb[0].mxu0 %v3502
  %v4121 = vpop.f32.mrb[0].mxu0
  %v4122 = vadd.f32 0.0, %v4121
  %v4123 = vpop.f32.mrb[0].mxu0
  %4124 = vmatprep.mubr.f32.mxu0 0.0
  %4125 = vmatmul.mubr.f32.gmra.mrb[0].mxu0 %v3505
  %v4126 = vpop.f32.mrb[0].mxu0
  %v4127 = vadd.f32 0.0, %v4126
  %v4128 = vpop.f32.mrb[0].mxu0
  %4129 = vmatprep.mubr.f32.mxu0 0.0
  %4130 = vmatmul.mubr.f32.gmra.mrb[0].mxu0 %v3508
  %v4131 = vpop.f32.mrb[0].mxu0
  %v4132 = vadd.f32 0.0, %v4131
  %v4133 = vpop.f32.mrb[0].mxu0
  %4134 = vmatprep.mubr.f32.mxu0 0.0
  %4135 = vmatmul.mubr.f32.gmra.mrb[0].mxu0 %v3511
  %v4136 = vpop.f32.mrb[0].mxu0
  %v4137 = vadd.f32 0.0, %v4136
  %v4138 = vpop.f32.mrb[0].mxu0
  %4139 = vmatprep.mubr.f32.mxu0 0.0
  %4140 = vmatmul.mubr.f32.gmra.mrb[0].mxu0 %v3514
  %v4141 = vpop.f32.mrb[0].mxu0
  %v4142 = vadd.f32 0.0, %v4141
  %v4143 = vpop.f32.mrb[0].mxu0
  %4144 = vmatprep.mubr.f32.mxu0 0.0
  %4145 = vmatmul.mubr.f32.gmra.mrb[0].mxu0 %v3517
  %v4146 = vpop.f32.mrb[0].mxu0
  %v4147 = vadd.f32 0.0, %v4146
  %v4148 = vpop.f32.mrb[0].mxu0
  %4149 = vmatprep.mubr.f32.mxu0 0.0
  %4150 = vmatmul.mubr.f32.gmra.mrb[0].mxu0 %v3520
  %v4151 = vpop.f32.mrb[0].mxu0
  %v4152 = vadd.f32 0.0, %v4151
  %v4153 = vpop.f32.mrb[0].mxu0
  %4154 = vmatprep.mubr.f32.mxu0 0.0
  %4155 = vmatmul.mubr.f32.gmra.mrb[0].mxu0 %v3523
  %v4156 = vpop.f32.mrb[0].mxu0
  %v4157 = vadd.f32 0.0, %v4156
  %v4158 = vpop.f32.mrb[0].mxu0
  %4159 = vmatprep.mubr.f32.mxu0 0.0
  %4160 = vmatmul.mubr.f32.gmra.mrb[0].mxu0 %v3526
  %v4161 = vpop.f32.mrb[0].mxu0
  %v4162 = vadd.f32 0.0, %v4161
  %v4163 = vpop.f32.mrb[0].mxu0
  %4164 = vmatprep.mubr.f32.mxu0 0.0
  %4165 = vmatmul.mubr.f32.gmra.mrb[0].mxu0 %v3529
  %v4166 = vpop.f32.mrb[0].mxu0
  %v4167 = vadd.f32 0.0, %v4166
  %v4168 = vpop.f32.mrb[0].mxu0
  %4169 = vmatprep.mubr.f32.mxu0 0.0
  %4170 = vmatmul.mubr.f32.gmra.mrb[0].mxu0 %v3532
  %v4171 = vpop.f32.mrb[0].mxu0
  %v4172 = vadd.f32 0.0, %v4171
  %v4173 = vpop.f32.mrb[0].mxu0
  %4174 = vmatprep.mubr.f32.mxu0 0.0
  %4175 = vmatmul.mubr.f32.gmra.mrb[0].mxu0 %v3535
  %v4176 = vpop.f32.mrb[0].mxu0
  %v4177 = vadd.f32 0.0, %v4176
  %v4178 = vpop.f32.mrb[0].mxu0
  %4179 = vmatprep.mubr.f32.mxu0 0.0
  %4180 = vmatmul.mubr.f32.gmra.mrb[0].mxu0 %v3538
  %v4181 = vpop.f32.mrb[0].mxu0
  %v4182 = vadd.f32 0.0, %v4181
  %v4183 = vpop.f32.mrb[0].mxu0
  %4184 = vmatprep.mubr.f32.mxu0 0.0
  %4185 = vmatmul.mubr.f32.gmra.mrb[0].mxu0 %v3541
  %v4186 = vpop.f32.mrb[0].mxu0
  %v4187 = vadd.f32 0.0, %v4186
  %v4188 = vpop.f32.mrb[0].mxu0
  %4189 = vmatprep.mubr.f32.mxu0 0.0
  %4190 = vmatmul.mubr.f32.gmra.mrb[0].mxu0 %v3544
  %v4191 = vpop.f32.mrb[0].mxu0
  %v4192 = vadd.f32 0.0, %v4191
  %v4193 = vpop.f32.mrb[0].mxu0
  %4194 = vmatprep.mubr.f32.mxu0 0.0
  %4195 = vmatmul.mubr.f32.gmra.mrb[0].mxu0 %v3547
  %v4196 = vpop.f32.mrb[0].mxu0
  %v4197 = vadd.f32 0.0, %v4196
  %v4198 = vpop.f32.mrb[0].mxu0
  %4199 = vmatprep.mubr.f32.mxu0 0.0
  %4200 = vmatmul.mubr.f32.gmra.mrb[0].mxu0 %v3550
  %v4201 = vpop.f32.mrb[0].mxu0
  %v4202 = vadd.f32 0.0, %v4201
  %v4203 = vpop.f32.mrb[0].mxu0
  %4204 = vmatprep.mubr.f32.mxu0 0.0
  %4205 = vmatmul.mubr.f32.gmra.mrb[0].mxu0 %v3553
  %v4206 = vpop.f32.mrb[0].mxu0
  %v4207 = vadd.f32 0.0, %v4206
  %v4208 = vpop.f32.mrb[0].mxu0
  %4209 = vmatprep.mubr.f32.mxu0 0.0
  %4210 = vmatmul.mubr.f32.gmra.mrb[0].mxu0 %v3556
  %v4211 = vpop.f32.mrb[0].mxu0
  %v4212 = vadd.f32 0.0, %v4211
  %v4213 = vpop.f32.mrb[0].mxu0
  %4214 = vmatprep.mubr.f32.mxu0 0.0
  %4215 = vmatmul.mubr.f32.gmra.mrb[0].mxu0 %v3559
  %v4216 = vpop.f32.mrb[0].mxu0
  %v4217 = vadd.f32 0.0, %v4216
  %v4218 = vpop.f32.mrb[0].mxu0
  %4219 = vmatprep.mubr.f32.mxu0 0.0
  %4220 = vmatmul.mubr.f32.gmra.mrb[0].mxu0 %v3562
  %v4221 = vpop.f32.mrb[0].mxu0
  %v4222 = vadd.f32 0.0, %v4221
  %v4223 = vpop.f32.mrb[0].mxu0
  %4224 = vmatprep.mubr.f32.mxu0 0.0
  %4225 = vmatmul.mubr.f32.gmra.mrb[0].mxu0 %v3565
  %v4226 = vpop.f32.mrb[0].mxu0
  %v4227 = vadd.f32 0.0, %v4226
  %v4228 = vpop.f32.mrb[0].mxu0
  %4229 = vmatprep.mubr.f32.mxu0 0.0
  %4230 = vmatmul.mubr.f32.gmra.mrb[0].mxu0 %v3568
  %v4231 = vpop.f32.mrb[0].mxu0
  %v4232 = vadd.f32 0.0, %v4231
  %v4233 = vpop.f32.mrb[0].mxu0
  %4234 = vmatprep.mubr.f32.mxu0 0.0
  %4235 = vmatmul.mubr.f32.gmra.mrb[0].mxu0 %v3571
  %v4236 = vpop.f32.mrb[0].mxu0
  %v4237 = vadd.f32 0.0, %v4236
  %v4238 = vpop.f32.mrb[0].mxu0
  %4239 = vmatprep.mubr.f32.mxu0 0.0
  %4240 = vmatmul.mubr.f32.gmra.mrb[0].mxu0 %v3574
  %v4241 = vpop.f32.mrb[0].mxu0
  %v4242 = vadd.f32 0.0, %v4241
  %v4243 = vpop.f32.mrb[0].mxu0
  %4244 = vmatprep.mubr.f32.mxu0 0.0
  %4245 = vmatmul.mubr.f32.gmra.mrb[0].mxu0 %v3577
  %v4246 = vpop.f32.mrb[0].mxu0
  %v4247 = vadd.f32 0.0, %v4246
  %v4248 = vpop.f32.mrb[0].mxu0
  %4249 = vmatprep.mubr.f32.mxu0 0.0
  %4250 = vmatmul.mubr.f32.gmra.mrb[0].mxu0 %v3580
  %v4251 = vpop.f32.mrb[0].mxu0
  %v4252 = vadd.f32 0.0, %v4251
  %v4253 = vpop.f32.mrb[0].mxu0
  %4254 = vmatprep.mubr.f32.mxu0 0.0
  %4255 = vmatmul.mubr.f32.gmra.mrb[0].mxu0 %v3583
  %v4256 = vpop.f32.mrb[0].mxu0
  %v4257 = vadd.f32 0.0, %v4256
  %v4258 = vpop.f32.mrb[0].mxu0
  %4259 = vmatprep.mubr.f32.mxu0 0.0
  %4260 = vmatmul.mubr.f32.gmra.mrb[0].mxu0 %v3586
  %v4261 = vpop.f32.mrb[0].mxu0
  %v4262 = vadd.f32 0.0, %v4261
  %v4263 = vpop.f32.mrb[0].mxu0
  %4264 = vmatprep.mubr.f32.mxu0 0.0
  %4265 = vmatmul.mubr.f32.gmra.mrb[0].mxu0 %v3589
  %v4266 = vpop.f32.mrb[0].mxu0
  %v4267 = vadd.f32 0.0, %v4266
  %v4268 = vpop.f32.mrb[0].mxu0
  %4269 = vmatprep.mubr.f32.mxu0 0.0
  %4270 = vmatmul.mubr.f32.gmra.mrb[0].mxu0 %v3592
  %v4271 = vpop.f32.mrb[0].mxu0
  %v4272 = vadd.f32 0.0, %v4271
  %v4273 = vpop.f32.mrb[0].mxu0
  %4274 = vmatprep.mubr.f32.mxu0 0.0
  %4275 = vmatmul.mubr.f32.gmra.mrb[0].mxu0 %v3595
  %v4276 = vpop.f32.mrb[0].mxu0
  %v4277 = vadd.f32 0.0, %v4276
  %v4278 = vpop.f32.mrb[0].mxu0
  %4279 = vmatprep.mubr.f32.mxu0 0.0
  %4280 = vmatmul.mubr.f32.gmra.mrb[0].mxu0 %v3598
  %v4281 = vpop.f32.mrb[0].mxu0
  %v4282 = vadd.f32 0.0, %v4281
  %v4283 = vpop.f32.mrb[0].mxu0
  %4284 = vmatprep.mubr.f32.mxu0 0.0
  %4285 = vmatmul.mubr.f32.gmra.mrb[0].mxu0 %v3601
  %v4286 = vpop.f32.mrb[0].mxu0
  %v4287 = vadd.f32 0.0, %v4286
  %v4288 = vpop.f32.mrb[0].mxu0
  %4289 = vmatprep.mubr.f32.mxu0 0.0
  %4290 = vmatmul.mubr.f32.gmra.mrb[0].mxu0 %v3604
  %v4291 = vpop.f32.mrb[0].mxu0
  %v4292 = vadd.f32 0.0, %v4291
  %v4293 = vpop.f32.mrb[0].mxu0
  %4294 = vmatprep.mubr.f32.mxu0 0.0
  %4295 = vmatmul.mubr.f32.gmra.mrb[0].mxu0 %v3607
  %v4296 = vpop.f32.mrb[0].mxu0
  %v4297 = vadd.f32 0.0, %v4296
  %v4298 = vpop.f32.mrb[0].mxu0
  %4299 = vmatprep.mubr.f32.mxu0 0.0
  %4300 = vmatmul.mubr.f32.gmra.mrb[0].mxu0 %v3610
  %v4301 = vpop.f32.mrb[0].mxu0
  %v4302 = vadd.f32 0.0, %v4301
  %v4303 = vpop.f32.mrb[0].mxu0
  %4304 = vmatprep.mubr.f32.mxu0 0.0
  %4305 = vmatmul.mubr.f32.gmra.mrb[0].mxu0 %v3613
  %v4306 = vpop.f32.mrb[0].mxu0
  %v4307 = vadd.f32 0.0, %v4306
  %v4308 = vpop.f32.mrb[0].mxu0
  %4309 = vmatprep.mubr.f32.mxu0 0.0
  %4310 = vmatmul.mubr.f32.gmra.mrb[0].mxu0 %v3616
  %v4311 = vpop.f32.mrb[0].mxu0
  %v4312 = vadd.f32 0.0, %v4311
  %v4313 = vpop.f32.mrb[0].mxu0
  %4314 = vmatprep.mubr.f32.mxu0 0.0
  %4315 = vmatmul.mubr.f32.gmra.mrb[0].mxu0 %v3619
  %v4316 = vpop.f32.mrb[0].mxu0
  %v4317 = vadd.f32 0.0, %v4316
  %v4318 = vpop.f32.mrb[0].mxu0
  %4319 = vmatprep.mubr.f32.mxu0 0.0
  %4320 = vmatmul.mubr.f32.gmra.mrb[0].mxu0 %v3622
  %v4321 = vpop.f32.mrb[0].mxu0
  %v4322 = vadd.f32 0.0, %v4321
  %v4323 = vpop.f32.mrb[0].mxu0
  %4324 = vmatprep.mubr.f32.mxu0 0.0
  %4325 = vmatmul.mubr.f32.gmra.mrb[0].mxu0 %v3625
  %v4326 = vpop.f32.mrb[0].mxu0
  %v4327 = vadd.f32 0.0, %v4326
  %v4328 = vpop.f32.mrb[0].mxu0
  %4329 = vmatprep.mubr.f32.mxu0 0.0
  %4330 = vmatmul.mubr.f32.gmra.mrb[0].mxu0 %v3628
  %v4331 = vpop.f32.mrb[0].mxu0
  %v4332 = vadd.f32 0.0, %v4331
  %v4333 = vpop.f32.mrb[0].mxu0
  %4334 = vmatprep.mubr.f32.mxu0 0.0
  %4335 = vmatmul.mubr.f32.gmra.mrb[0].mxu0 %v3631
  %v4336 = vpop.f32.mrb[0].mxu0
  %v4337 = vadd.f32 0.0, %v4336
  %v4338 = vpop.f32.mrb[0].mxu0
  %4339 = vmatprep.mubr.f32.mxu0 0.0
  %4340 = vmatmul.mubr.f32.gmra.mrb[0].mxu0 %v3634
  %v4341 = vpop.f32.mrb[0].mxu0
  %v4342 = vadd.f32 0.0, %v4341
  %v4343 = vpop.f32.mrb[0].mxu0
  %4344 = vmatprep.mubr.f32.mxu0 0.0
  %4345 = vmatmul.mubr.f32.gmra.mrb[0].mxu0 %v3637
  %v4346 = vpop.f32.mrb[0].mxu0
  %v4347 = vadd.f32 0.0, %v4346
  %v4348 = vpop.f32.mrb[0].mxu0
  %4349 = vmatprep.mubr.f32.mxu0 0.0
  %4350 = vmatmul.mubr.f32.gmra.mrb[0].mxu0 %v3640
  %v4351 = vpop.f32.mrb[0].mxu0
  %v4352 = vadd.f32 0.0, %v4351
  %v4353 = vpop.f32.mrb[0].mxu0
  %4354 = vmatprep.mubr.f32.mxu0 0.0
  %4355 = vmatmul.mubr.f32.gmra.mrb[0].mxu0 %v3643
  %v4356 = vpop.f32.mrb[0].mxu0
  %v4357 = vadd.f32 0.0, %v4356
  %v4358 = vpop.f32.mrb[0].mxu0
  %4359 = vmatprep.mubr.f32.mxu0 0.0
  %4360 = vmatmul.mubr.f32.gmra.mrb[0].mxu0 %v3646
  %v4361 = vpop.f32.mrb[0].mxu0
  %v4362 = vadd.f32 0.0, %v4361
  %v4363 = vpop.f32.mrb[0].mxu0
  %4364 = vmatprep.mubr.f32.mxu0 0.0
  %4365 = vmatmul.mubr.f32.gmra.mrb[0].mxu0 %v3649
  %v4366 = vpop.f32.mrb[0].mxu0
  %v4367 = vadd.f32 0.0, %v4366
  %v4368 = vpop.f32.mrb[0].mxu0
  %4369 = vmatprep.mubr.f32.mxu0 0.0
  %4370 = vmatmul.mubr.f32.gmra.mrb[0].mxu0 %v3652
  %v4371 = vpop.f32.mrb[0].mxu0
  %v4372 = vadd.f32 0.0, %v4371
  %v4373 = vpop.f32.mrb[0].mxu0
  %4374 = vmatprep.mubr.f32.mxu0 0.0
  %4375 = vmatmul.mubr.f32.gmra.mrb[0].mxu0 %v3655
  %v4376 = vpop.f32.mrb[0].mxu0
  %v4377 = vadd.f32 0.0, %v4376
  %v4378 = vpop.f32.mrb[0].mxu0
  %4379 = vmatprep.mubr.f32.mxu0 0.0
  %4380 = vmatmul.mubr.f32.gmra.mrb[0].mxu0 %v3658
  %v4381 = vpop.f32.mrb[0].mxu0
  %v4382 = vadd.f32 0.0, %v4381
  %v4383 = vpop.f32.mrb[0].mxu0
  %4384 = vmatprep.mubr.f32.mxu0 0.0
  %4385 = vmatmul.mubr.f32.gmra.mrb[0].mxu0 %v3661
  %v4386 = vpop.f32.mrb[0].mxu0
  %v4387 = vadd.f32 0.0, %v4386
  %v4388 = vpop.f32.mrb[0].mxu0
  %4389 = vmatprep.mubr.f32.mxu0 0.0
  %4390 = vmatmul.mubr.f32.gmra.mrb[0].mxu0 %v3664
  %v4391 = vpop.f32.mrb[0].mxu0
  %v4392 = vadd.f32 0.0, %v4391
  %v4393 = vpop.f32.mrb[0].mxu0
  %4394 = vmatprep.mubr.f32.mxu0 0.0
  %4395 = vmatmul.mubr.f32.gmra.mrb[0].mxu0 %v3667
  %v4396 = vpop.f32.mrb[0].mxu0
  %v4397 = vadd.f32 0.0, %v4396
  %v4398 = vpop.f32.mrb[0].mxu0
  %4399 = vmatprep.mubr.f32.mxu0 0.0
  %4400 = vmatmul.mubr.f32.gmra.mrb[0].mxu0 %v3670
  %v4401 = vpop.f32.mrb[0].mxu0
  %v4402 = vadd.f32 0.0, %v4401
  %v4403 = vpop.f32.mrb[0].mxu0
  %4404 = vmatprep.mubr.f32.mxu0 0.0
  %4405 = vmatmul.mubr.f32.gmra.mrb[0].mxu0 %v3673
  %v4406 = vpop.f32.mrb[0].mxu0
  %v4407 = vadd.f32 0.0, %v4406
  %v4408 = vpop.f32.mrb[0].mxu0
  %4409 = vmatprep.mubr.f32.mxu0 0.0
  %4410 = vmatmul.mubr.f32.gmra.mrb[0].mxu0 %v3676
  %v4411 = vpop.f32.mrb[0].mxu0
  %v4412 = vadd.f32 0.0, %v4411
  %v4413 = vpop.f32.mrb[0].mxu0
  %4414 = vmatprep.mubr.f32.mxu0 0.0
  %4415 = vmatmul.mubr.f32.gmra.mrb[0].mxu0 %v3679
  %v4416 = vpop.f32.mrb[0].mxu0
  %v4417 = vadd.f32 0.0, %v4416
  %v4418 = vpop.f32.mrb[0].mxu0
  %4419 = vmatprep.mubr.f32.mxu0 0.0
  %4420 = vmatmul.mubr.f32.gmra.mrb[0].mxu0 %v3682
  %v4421 = vpop.f32.mrb[0].mxu0
  %v4422 = vadd.f32 0.0, %v4421
  %v4423 = vpop.f32.mrb[0].mxu0
  %4424 = vmatprep.mubr.f32.mxu0 0.0
  %4425 = vmatmul.mubr.f32.gmra.mrb[0].mxu0 %v3685
  %v4426 = vpop.f32.mrb[0].mxu0
  %v4427 = vadd.f32 0.0, %v4426
  %v4428 = vpop.f32.mrb[0].mxu0
  %4429 = vmatprep.mubr.f32.mxu0 0.0
  %4430 = vmatmul.mubr.f32.gmra.mrb[0].mxu0 %v3688
  %v4431 = vpop.f32.mrb[0].mxu0
  %v4432 = vadd.f32 0.0, %v4431
  %v4433 = vpop.f32.mrb[0].mxu0
  %4434 = vmatprep.mubr.f32.mxu0 0.0
  %4435 = vmatmul.mubr.f32.gmra.mrb[0].mxu0 %v3691
  %v4436 = vpop.f32.mrb[0].mxu0
  %v4437 = vadd.f32 0.0, %v4436
  %v4438 = vpop.f32.mrb[0].mxu0
  %4439 = vmatprep.mubr.f32.mxu0 0.0
  %4440 = vmatmul.mubr.f32.gmra.mrb[0].mxu0 %v3694
  %v4441 = vpop.f32.mrb[0].mxu0
  %v4442 = vadd.f32 0.0, %v4441
  %v4443 = vpop.f32.mrb[0].mxu0
  %4444 = vmatprep.mubr.f32.mxu0 0.0
  %4445 = vmatmul.mubr.f32.gmra.mrb[0].mxu0 %v3697
  %v4446 = vpop.f32.mrb[0].mxu0
  %v4447 = vadd.f32 0.0, %v4446
  %v4448 = vpop.f32.mrb[0].mxu0
  %4449 = vmatprep.mubr.f32.mxu0 0.0
  %4450 = vmatmul.mubr.f32.gmra.mrb[0].mxu0 %v3700
  %v4451 = vpop.f32.mrb[0].mxu0
  %v4452 = vadd.f32 0.0, %v4451
  %v4453 = vpop.f32.mrb[0].mxu0
  %4454 = vmatprep.mubr.f32.mxu0 0.0
  %4455 = vmatmul.mubr.f32.gmra.mrb[0].mxu0 %v3703
  %v4456 = vpop.f32.mrb[0].mxu0
  %v4457 = vadd.f32 0.0, %v4456
  %v4458 = vpop.f32.mrb[0].mxu0
  %4459 = vmatprep.mubr.f32.mxu0 0.0
  %4460 = vmatmul.mubr.f32.gmra.mrb[0].mxu0 %v3706
  %v4461 = vpop.f32.mrb[0].mxu0
  %v4462 = vadd.f32 0.0, %v4461
  %v4463 = vpop.f32.mrb[0].mxu0
  %4464 = vmatprep.mubr.f32.mxu0 0.0
  %4465 = vmatmul.mubr.f32.gmra.mrb[0].mxu0 %v3709
  %v4466 = vpop.f32.mrb[0].mxu0
  %v4467 = vadd.f32 0.0, %v4466
  %v4468 = vpop.f32.mrb[0].mxu0
  %4469 = vdwg.mxu0
  %v4470 = vld [vmem:[%s3] sm:$0xff]
  %v4471 = vld [vmem:[%s3 + $0x8] sm:$0xff]
  %v4472 = vld [vmem:[%s3 + $0x10] sm:$0xff]
  %v4473 = vld [vmem:[%s3 + $0x18] sm:$0xff]
  %v4474 = vld [vmem:[%s3 + $0x20] sm:$0xff]
  %v4475 = vld [vmem:[%s3 + $0x28] sm:$0xff]
  %v4476 = vld [vmem:[%s3 + $0x30] sm:$0xff]
  %v4477 = vld [vmem:[%s3 + $0x38] sm:$0xff]
  %v4478 = vld [vmem:[%s3 + $0x40] sm:$0xff]
  %v4479 = vld [vmem:[%s3 + $0x48] sm:$0xff]
  %v4480 = vld [vmem:[%s3 + $0x50] sm:$0xff]
  %v4481 = vld [vmem:[%s3 + $0x58] sm:$0xff]
  %v4482 = vld [vmem:[%s3 + $0x60] sm:$0xff]
  %v4483 = vld [vmem:[%s3 + $0x68] sm:$0xff]
  %v4484 = vld [vmem:[%s3 + $0x70] sm:$0xff]
  %v4485 = vld [vmem:[%s3 + $0x78] sm:$0xff]
  %v4486 = vld [vmem:[%s3 + $0x80] sm:$0xff]
  %v4487 = vld [vmem:[%s3 + $0x88] sm:$0xff]
  %v4488 = vld [vmem:[%s3 + $0x90] sm:$0xff]
  %v4489 = vld [vmem:[%s3 + $0x98] sm:$0xff]
  %v4490 = vld [vmem:[%s3 + $0xa0] sm:$0xff]
  %v4491 = vld [vmem:[%s3 + $0xa8] sm:$0xff]
  %v4492 = vld [vmem:[%s3 + $0xb0] sm:$0xff]
  %v4493 = vld [vmem:[%s3 + $0xb8] sm:$0xff]
  %v4494 = vld [vmem:[%s3 + $0xc0] sm:$0xff]
  %v4495 = vld [vmem:[%s3 + $0xc8] sm:$0xff]
  %v4496 = vld [vmem:[%s3 + $0xd0] sm:$0xff]
  %v4497 = vld [vmem:[%s3 + $0xd8] sm:$0xff]
  %v4498 = vld [vmem:[%s3 + $0xe0] sm:$0xff]
  %v4499 = vld [vmem:[%s3 + $0xe8] sm:$0xff]
  %v4500 = vld [vmem:[%s3 + $0xf0] sm:$0xff]
  %v4501 = vld [vmem:[%s3 + $0xf8] sm:$0xff]
  %v4502 = vld [vmem:[%s3 + $0x100] sm:$0xff]
  %v4503 = vld [vmem:[%s3 + $0x108] sm:$0xff]
  %v4504 = vld [vmem:[%s3 + $0x110] sm:$0xff]
  %v4505 = vld [vmem:[%s3 + $0x118] sm:$0xff]
  %v4506 = vld [vmem:[%s3 + $0x120] sm:$0xff]
  %v4507 = vld [vmem:[%s3 + $0x128] sm:$0xff]
  %v4508 = vld [vmem:[%s3 + $0x130] sm:$0xff]
  %v4509 = vld [vmem:[%s3 + $0x138] sm:$0xff]
  %v4510 = vld [vmem:[%s3 + $0x140] sm:$0xff]
  %v4511 = vld [vmem:[%s3 + $0x148] sm:$0xff]
  %v4512 = vld [vmem:[%s3 + $0x150] sm:$0xff]
  %v4513 = vld [vmem:[%s3 + $0x158] sm:$0xff]
  %v4514 = vld [vmem:[%s3 + $0x160] sm:$0xff]
  %v4515 = vld [vmem:[%s3 + $0x168] sm:$0xff]
  %v4516 = vld [vmem:[%s3 + $0x170] sm:$0xff]
  %v4517 = vld [vmem:[%s3 + $0x178] sm:$0xff]
  %v4518 = vld [vmem:[%s3 + $0x180] sm:$0xff]
  %v4519 = vld [vmem:[%s3 + $0x188] sm:$0xff]
  %v4520 = vld [vmem:[%s3 + $0x190] sm:$0xff]
  %v4521 = vld [vmem:[%s3 + $0x198] sm:$0xff]
  %v4522 = vld [vmem:[%s3 + $0x1a0] sm:$0xff]
  %v4523 = vld [vmem:[%s3 + $0x1a8] sm:$0xff]
  %v4524 = vld [vmem:[%s3 + $0x1b0] sm:$0xff]
  %v4525 = vld [vmem:[%s3 + $0x1b8] sm:$0xff]
  %v4526 = vld [vmem:[%s3 + $0x1c0] sm:$0xff]
  %v4527 = vld [vmem:[%s3 + $0x1c8] sm:$0xff]
  %v4528 = vld [vmem:[%s3 + $0x1d0] sm:$0xff]
  %v4529 = vld [vmem:[%s3 + $0x1d8] sm:$0xff]
  %v4530 = vld [vmem:[%s3 + $0x1e0] sm:$0xff]
  %v4531 = vld [vmem:[%s3 + $0x1e8] sm:$0xff]
  %v4532 = vld [vmem:[%s3 + $0x1f0] sm:$0xff]
  %v4533 = vld [vmem:[%s3 + $0x1f8] sm:$0xff]
  %v4534 = vld [vmem:[%s3 + $0x200] sm:$0xff]
  %v4535 = vld [vmem:[%s3 + $0x208] sm:$0xff]
  %v4536 = vld [vmem:[%s3 + $0x210] sm:$0xff]
  %v4537 = vld [vmem:[%s3 + $0x218] sm:$0xff]
  %v4538 = vld [vmem:[%s3 + $0x220] sm:$0xff]
  %v4539 = vld [vmem:[%s3 + $0x228] sm:$0xff]
  %v4540 = vld [vmem:[%s3 + $0x230] sm:$0xff]
  %v4541 = vld [vmem:[%s3 + $0x238] sm:$0xff]
  %v4542 = vld [vmem:[%s3 + $0x240] sm:$0xff]
  %v4543 = vld [vmem:[%s3 + $0x248] sm:$0xff]
  %v4544 = vld [vmem:[%s3 + $0x250] sm:$0xff]
  %v4545 = vld [vmem:[%s3 + $0x258] sm:$0xff]
  %v4546 = vld [vmem:[%s3 + $0x260] sm:$0xff]
  %v4547 = vld [vmem:[%s3 + $0x268] sm:$0xff]
  %v4548 = vld [vmem:[%s3 + $0x270] sm:$0xff]
  %v4549 = vld [vmem:[%s3 + $0x278] sm:$0xff]
  %v4550 = vld [vmem:[%s3 + $0x280] sm:$0xff]
  %v4551 = vld [vmem:[%s3 + $0x288] sm:$0xff]
  %v4552 = vld [vmem:[%s3 + $0x290] sm:$0xff]
  %v4553 = vld [vmem:[%s3 + $0x298] sm:$0xff]
  %v4554 = vld [vmem:[%s3 + $0x2a0] sm:$0xff]
  %v4555 = vld [vmem:[%s3 + $0x2a8] sm:$0xff]
  %v4556 = vld [vmem:[%s3 + $0x2b0] sm:$0xff]
  %v4557 = vld [vmem:[%s3 + $0x2b8] sm:$0xff]
  %v4558 = vld [vmem:[%s3 + $0x2c0] sm:$0xff]
  %v4559 = vld [vmem:[%s3 + $0x2c8] sm:$0xff]
  %v4560 = vld [vmem:[%s3 + $0x2d0] sm:$0xff]
  %v4561 = vld [vmem:[%s3 + $0x2d8] sm:$0xff]
  %v4562 = vld [vmem:[%s3 + $0x2e0] sm:$0xff]
  %v4563 = vld [vmem:[%s3 + $0x2e8] sm:$0xff]
  %v4564 = vld [vmem:[%s3 + $0x2f0] sm:$0xff]
  %v4565 = vld [vmem:[%s3 + $0x2f8] sm:$0xff]
  %v4566 = vld [vmem:[%s3 + $0x300] sm:$0xff]
  %v4567 = vld [vmem:[%s3 + $0x308] sm:$0xff]
  %v4568 = vld [vmem:[%s3 + $0x310] sm:$0xff]
  %v4569 = vld [vmem:[%s3 + $0x318] sm:$0xff]
  %v4570 = vld [vmem:[%s3 + $0x320] sm:$0xff]
  %v4571 = vld [vmem:[%s3 + $0x328] sm:$0xff]
  %v4572 = vld [vmem:[%s3 + $0x330] sm:$0xff]
  %v4573 = vld [vmem:[%s3 + $0x338] sm:$0xff]
  %v4574 = vld [vmem:[%s3 + $0x340] sm:$0xff]
  %v4575 = vld [vmem:[%s3 + $0x348] sm:$0xff]
  %v4576 = vld [vmem:[%s3 + $0x350] sm:$0xff]
  %v4577 = vld [vmem:[%s3 + $0x358] sm:$0xff]
  %v4578 = vld [vmem:[%s3 + $0x360] sm:$0xff]
  %v4579 = vld [vmem:[%s3 + $0x368] sm:$0xff]
  %v4580 = vld [vmem:[%s3 + $0x370] sm:$0xff]
  %v4581 = vld [vmem:[%s3 + $0x378] sm:$0xff]
  %v4582 = vld [vmem:[%s3 + $0x380] sm:$0xff]
  %v4583 = vld [vmem:[%s3 + $0x388] sm:$0xff]
  %v4584 = vld [vmem:[%s3 + $0x390] sm:$0xff]
  %v4585 = vld [vmem:[%s3 + $0x398] sm:$0xff]
  %v4586 = vld [vmem:[%s3 + $0x3a0] sm:$0xff]
  %v4587 = vld [vmem:[%s3 + $0x3a8] sm:$0xff]
  %v4588 = vld [vmem:[%s3 + $0x3b0] sm:$0xff]
  %v4589 = vld [vmem:[%s3 + $0x3b8] sm:$0xff]
  %v4590 = vld [vmem:[%s3 + $0x3c0] sm:$0xff]
  %v4591 = vld [vmem:[%s3 + $0x3c8] sm:$0xff]
  %v4592 = vld [vmem:[%s3 + $0x3d0] sm:$0xff]
  %v4593 = vld [vmem:[%s3 + $0x3d8] sm:$0xff]
  %v4594 = vld [vmem:[%s3 + $0x3e0] sm:$0xff]
  %v4595 = vld [vmem:[%s3 + $0x3e8] sm:$0xff]
  %v4596 = vld [vmem:[%s3 + $0x3f0] sm:$0xff]
  %v4597 = vld [vmem:[%s3 + $0x3f8] sm:$0xff]
  %v4598 = vld [vmem:[%s3 + $0x400] sm:$0xff]
  %v4599 = vld [vmem:[%s3 + $0x408] sm:$0xff]
  %v4600 = vld [vmem:[%s3 + $0x410] sm:$0xff]
  %v4601 = vld [vmem:[%s3 + $0x418] sm:$0xff]
  %v4602 = vld [vmem:[%s3 + $0x420] sm:$0xff]
  %v4603 = vld [vmem:[%s3 + $0x428] sm:$0xff]
  %v4604 = vld [vmem:[%s3 + $0x430] sm:$0xff]
  %v4605 = vld [vmem:[%s3 + $0x438] sm:$0xff]
  %v4606 = vld [vmem:[%s3 + $0x440] sm:$0xff]
  %v4607 = vld [vmem:[%s3 + $0x448] sm:$0x3f]
  %v4608 = vmul.f32 %v3782, %v4470
  %v4609 = vmul.f32 %v3787, %v4471
  %v4610 = vmul.f32 %v3792, %v4472
  %v4611 = vmul.f32 %v3797, %v4473
  %v4612 = vmul.f32 %v3802, %v4474
  %v4613 = vmul.f32 %v3807, %v4475
  %v4614 = vmul.f32 %v3812, %v4476
  %v4615 = vmul.f32 %v3817, %v4477
  %v4616 = vmul.f32 %v3822, %v4478
  %v4617 = vmul.f32 %v3827, %v4479
  %v4618 = vmul.f32 %v3832, %v4480
  %v4619 = vmul.f32 %v3837, %v4481
  %v4620 = vmul.f32 %v3842, %v4482
  %v4621 = vmul.f32 %v3847, %v4483
  %v4622 = vmul.f32 %v3852, %v4484
  %v4623 = vmul.f32 %v3857, %v4485
  %v4624 = vmul.f32 %v3862, %v4486
  %v4625 = vmul.f32 %v3867, %v4487
  %v4626 = vmul.f32 %v3872, %v4488
  %v4627 = vmul.f32 %v3877, %v4489
  %v4628 = vmul.f32 %v3882, %v4490
  %v4629 = vmul.f32 %v3887, %v4491
  %v4630 = vmul.f32 %v3892, %v4492
  %v4631 = vmul.f32 %v3897, %v4493
  %v4632 = vmul.f32 %v3902, %v4494
  %v4633 = vmul.f32 %v3907, %v4495
  %v4634 = vmul.f32 %v3912, %v4496
  %v4635 = vmul.f32 %v3917, %v4497
  %v4636 = vmul.f32 %v3922, %v4498
  %v4637 = vmul.f32 %v3927, %v4499
  %v4638 = vmul.f32 %v3932, %v4500
  %v4639 = vmul.f32 %v3937, %v4501
  %v4640 = vmul.f32 %v3942, %v4502
  %v4641 = vmul.f32 %v3947, %v4503
  %v4642 = vmul.f32 %v3952, %v4504
  %v4643 = vmul.f32 %v3957, %v4505
  %v4644 = vmul.f32 %v3962, %v4506
  %v4645 = vmul.f32 %v3967, %v4507
  %v4646 = vmul.f32 %v3972, %v4508
  %v4647 = vmul.f32 %v3977, %v4509
  %v4648 = vmul.f32 %v3982, %v4510
  %v4649 = vmul.f32 %v3987, %v4511
  %v4650 = vmul.f32 %v3992, %v4512
  %v4651 = vmul.f32 %v3997, %v4513
  %v4652 = vmul.f32 %v4002, %v4514
  %v4653 = vmul.f32 %v4007, %v4515
  %v4654 = vmul.f32 %v4012, %v4516
  %v4655 = vmul.f32 %v4017, %v4517
  %v4656 = vmul.f32 %v4022, %v4518
  %v4657 = vmul.f32 %v4027, %v4519
  %v4658 = vmul.f32 %v4032, %v4520
  %v4659 = vmul.f32 %v4037, %v4521
  %v4660 = vmul.f32 %v4042, %v4522
  %v4661 = vmul.f32 %v4047, %v4523
  %v4662 = vmul.f32 %v4052, %v4524
  %v4663 = vmul.f32 %v4057, %v4525
  %v4664 = vmul.f32 %v4062, %v4526
  %v4665 = vmul.f32 %v4067, %v4527
  %v4666 = vmul.f32 %v4072, %v4528
  %v4667 = vmul.f32 %v4077, %v4529
  %v4668 = vmul.f32 %v4082, %v4530
  %v4669 = vmul.f32 %v4087, %v4531
  %v4670 = vmul.f32 %v4092, %v4532
  %v4671 = vmul.f32 %v4097, %v4533
  %v4672 = vmul.f32 %v4102, %v4534
  %v4673 = vmul.f32 %v4107, %v4535
  %v4674 = vmul.f32 %v4112, %v4536
  %v4675 = vmul.f32 %v4117, %v4537
  %v4676 = vmul.f32 %v4122, %v4538
  %v4677 = vmul.f32 %v4127, %v4539
  %v4678 = vmul.f32 %v4132, %v4540
  %v4679 = vmul.f32 %v4137, %v4541
  %v4680 = vmul.f32 %v4142, %v4542
  %v4681 = vmul.f32 %v4147, %v4543
  %v4682 = vmul.f32 %v4152, %v4544
  %v4683 = vmul.f32 %v4157, %v4545
  %v4684 = vmul.f32 %v4162, %v4546
  %v4685 = vmul.f32 %v4167, %v4547
  %v4686 = vmul.f32 %v4172, %v4548
  %v4687 = vmul.f32 %v4177, %v4549
  %v4688 = vmul.f32 %v4182, %v4550
  %v4689 = vmul.f32 %v4187, %v4551
  %v4690 = vmul.f32 %v4192, %v4552
  %v4691 = vmul.f32 %v4197, %v4553
  %v4692 = vmul.f32 %v4202, %v4554
  %v4693 = vmul.f32 %v4207, %v4555
  %v4694 = vmul.f32 %v4212, %v4556
  %v4695 = vmul.f32 %v4217, %v4557
  %v4696 = vmul.f32 %v4222, %v4558
  %v4697 = vmul.f32 %v4227, %v4559
  %v4698 = vmul.f32 %v4232, %v4560
  %v4699 = vmul.f32 %v4237, %v4561
  %v4700 = vmul.f32 %v4242, %v4562
  %v4701 = vmul.f32 %v4247, %v4563
  %v4702 = vmul.f32 %v4252, %v4564
  %v4703 = vmul.f32 %v4257, %v4565
  %v4704 = vmul.f32 %v4262, %v4566
  %v4705 = vmul.f32 %v4267, %v4567
  %v4706 = vmul.f32 %v4272, %v4568
  %v4707 = vmul.f32 %v4277, %v4569
  %v4708 = vmul.f32 %v4282, %v4570
  %v4709 = vmul.f32 %v4287, %v4571
  %v4710 = vmul.f32 %v4292, %v4572
  %v4711 = vmul.f32 %v4297, %v4573
  %v4712 = vmul.f32 %v4302, %v4574
  %v4713 = vmul.f32 %v4307, %v4575
  %v4714 = vmul.f32 %v4312, %v4576
  %v4715 = vmul.f32 %v4317, %v4577
  %v4716 = vmul.f32 %v4322, %v4578
  %v4717 = vmul.f32 %v4327, %v4579
  %v4718 = vmul.f32 %v4332, %v4580
  %v4719 = vmul.f32 %v4337, %v4581
  %v4720 = vmul.f32 %v4342, %v4582
  %v4721 = vmul.f32 %v4347, %v4583
  %v4722 = vmul.f32 %v4352, %v4584
  %v4723 = vmul.f32 %v4357, %v4585
  %v4724 = vmul.f32 %v4362, %v4586
  %v4725 = vmul.f32 %v4367, %v4587
  %v4726 = vmul.f32 %v4372, %v4588
  %v4727 = vmul.f32 %v4377, %v4589
  %v4728 = vmul.f32 %v4382, %v4590
  %v4729 = vmul.f32 %v4387, %v4591
  %v4730 = vmul.f32 %v4392, %v4592
  %v4731 = vmul.f32 %v4397, %v4593
  %v4732 = vmul.f32 %v4402, %v4594
  %v4733 = vmul.f32 %v4407, %v4595
  %v4734 = vmul.f32 %v4412, %v4596
  %v4735 = vmul.f32 %v4417, %v4597
  %v4736 = vmul.f32 %v4422, %v4598
  %v4737 = vmul.f32 %v4427, %v4599
  %v4738 = vmul.f32 %v4432, %v4600
  %v4739 = vmul.f32 %v4437, %v4601
  %v4740 = vmul.f32 %v4442, %v4602
  %v4741 = vmul.f32 %v4447, %v4603
  %v4742 = vmul.f32 %v4452, %v4604
  %v4743 = vmul.f32 %v4457, %v4605
  %v4744 = vmul.f32 %v4462, %v4606
  %v4745 = vmul.f32 %v4467, %v4607
  %4884 = vrot.lane.b32.xlu0 %v4608, 120
  %v4885 = vpop.permute.xlu0 %4884
  %4886 = vrot.lane.b32.xlu0 %v4609, 120
  %v4887 = vpop.permute.xlu0 %4886
  %4888 = vrot.lane.b32.xlu0 %v4610, 120
  %v4889 = vpop.permute.xlu0 %4888
  %4890 = vrot.lane.b32.xlu0 %v4611, 120
  %v4891 = vpop.permute.xlu0 %4890
  %4892 = vrot.lane.b32.xlu0 %v4612, 120
  %v4893 = vpop.permute.xlu0 %4892
  %4894 = vrot.lane.b32.xlu0 %v4613, 120
  %v4895 = vpop.permute.xlu0 %4894
  %4896 = vrot.lane.b32.xlu0 %v4614, 120
  %v4897 = vpop.permute.xlu0 %4896
  %4898 = vrot.lane.b32.xlu0 %v4615, 120
  %v4899 = vpop.permute.xlu0 %4898
  %4900 = vrot.lane.b32.xlu0 %v4616, 120
  %v4901 = vpop.permute.xlu0 %4900
  %4902 = vrot.lane.b32.xlu0 %v4617, 120
  %v4903 = vpop.permute.xlu0 %4902
  %4904 = vrot.lane.b32.xlu0 %v4618, 120
  %v4905 = vpop.permute.xlu0 %4904
  %4906 = vrot.lane.b32.xlu0 %v4619, 120
  %v4907 = vpop.permute.xlu0 %4906
  %4908 = vrot.lane.b32.xlu0 %v4620, 120
  %v4909 = vpop.permute.xlu0 %4908
  %4910 = vrot.lane.b32.xlu0 %v4621, 120
  %v4911 = vpop.permute.xlu0 %4910
  %4912 = vrot.lane.b32.xlu0 %v4622, 120
  %v4913 = vpop.permute.xlu0 %4912
  %4914 = vrot.lane.b32.xlu0 %v4623, 120
  %v4915 = vpop.permute.xlu0 %4914
  %4916 = vrot.lane.b32.xlu0 %v4624, 120
  %v4917 = vpop.permute.xlu0 %4916
  %4918 = vrot.lane.b32.xlu0 %v4625, 120
  %v4919 = vpop.permute.xlu0 %4918
  %4920 = vrot.lane.b32.xlu0 %v4626, 120
  %v4921 = vpop.permute.xlu0 %4920
  %4922 = vrot.lane.b32.xlu0 %v4627, 120
  %v4923 = vpop.permute.xlu0 %4922
  %4924 = vrot.lane.b32.xlu0 %v4628, 120
  %v4925 = vpop.permute.xlu0 %4924
  %4926 = vrot.lane.b32.xlu0 %v4629, 120
  %v4927 = vpop.permute.xlu0 %4926
  %4928 = vrot.lane.b32.xlu0 %v4630, 120
  %v4929 = vpop.permute.xlu0 %4928
  %4930 = vrot.lane.b32.xlu0 %v4631, 120
  %v4931 = vpop.permute.xlu0 %4930
  %4932 = vrot.lane.b32.xlu0 %v4632, 120
  %v4933 = vpop.permute.xlu0 %4932
  %4934 = vrot.lane.b32.xlu0 %v4633, 120
  %v4935 = vpop.permute.xlu0 %4934
  %4936 = vrot.lane.b32.xlu0 %v4634, 120
  %v4937 = vpop.permute.xlu0 %4936
  %4938 = vrot.lane.b32.xlu0 %v4635, 120
  %v4939 = vpop.permute.xlu0 %4938
  %4940 = vrot.lane.b32.xlu0 %v4636, 120
  %v4941 = vpop.permute.xlu0 %4940
  %4942 = vrot.lane.b32.xlu0 %v4637, 120
  %v4943 = vpop.permute.xlu0 %4942
  %4944 = vrot.lane.b32.xlu0 %v4638, 120
  %v4945 = vpop.permute.xlu0 %4944
  %4946 = vrot.lane.b32.xlu0 %v4639, 120
  %v4947 = vpop.permute.xlu0 %4946
  %4948 = vrot.lane.b32.xlu0 %v4640, 120
  %v4949 = vpop.permute.xlu0 %4948
  %4950 = vrot.lane.b32.xlu0 %v4641, 120
  %v4951 = vpop.permute.xlu0 %4950
  %4952 = vrot.lane.b32.xlu0 %v4642, 120
  %v4953 = vpop.permute.xlu0 %4952
  %4954 = vrot.lane.b32.xlu0 %v4643, 120
  %v4955 = vpop.permute.xlu0 %4954
  %4956 = vrot.lane.b32.xlu0 %v4644, 120
  %v4957 = vpop.permute.xlu0 %4956
  %4958 = vrot.lane.b32.xlu0 %v4645, 120
  %v4959 = vpop.permute.xlu0 %4958
  %4960 = vrot.lane.b32.xlu0 %v4646, 120
  %v4961 = vpop.permute.xlu0 %4960
  %4962 = vrot.lane.b32.xlu0 %v4647, 120
  %v4963 = vpop.permute.xlu0 %4962
  %4964 = vrot.lane.b32.xlu0 %v4648, 120
  %v4965 = vpop.permute.xlu0 %4964
  %4966 = vrot.lane.b32.xlu0 %v4649, 120
  %v4967 = vpop.permute.xlu0 %4966
  %4968 = vrot.lane.b32.xlu0 %v4650, 120
  %v4969 = vpop.permute.xlu0 %4968
  %4970 = vrot.lane.b32.xlu0 %v4651, 120
  %v4971 = vpop.permute.xlu0 %4970
  %4972 = vrot.lane.b32.xlu0 %v4652, 120
  %v4973 = vpop.permute.xlu0 %4972
  %4974 = vrot.lane.b32.xlu0 %v4653, 120
  %v4975 = vpop.permute.xlu0 %4974
  %4976 = vrot.lane.b32.xlu0 %v4654, 120
  %v4977 = vpop.permute.xlu0 %4976
  %4978 = vrot.lane.b32.xlu0 %v4655, 120
  %v4979 = vpop.permute.xlu0 %4978
  %4980 = vrot.lane.b32.xlu0 %v4656, 120
  %v4981 = vpop.permute.xlu0 %4980
  %4982 = vrot.lane.b32.xlu0 %v4657, 120
  %v4983 = vpop.permute.xlu0 %4982
  %4984 = vrot.lane.b32.xlu0 %v4658, 120
  %v4985 = vpop.permute.xlu0 %4984
  %4986 = vrot.lane.b32.xlu0 %v4659, 120
  %v4987 = vpop.permute.xlu0 %4986
  %4988 = vrot.lane.b32.xlu0 %v4660, 120
  %v4989 = vpop.permute.xlu0 %4988
  %4990 = vrot.lane.b32.xlu0 %v4661, 120
  %v4991 = vpop.permute.xlu0 %4990
  %4992 = vrot.lane.b32.xlu0 %v4662, 120
  %v4993 = vpop.permute.xlu0 %4992
  %4994 = vrot.lane.b32.xlu0 %v4663, 120
  %v4995 = vpop.permute.xlu0 %4994
  %4996 = vrot.lane.b32.xlu0 %v4664, 120
  %v4997 = vpop.permute.xlu0 %4996
  %4998 = vrot.lane.b32.xlu0 %v4665, 120
  %v4999 = vpop.permute.xlu0 %4998
  %5000 = vrot.lane.b32.xlu0 %v4666, 120
  %v5001 = vpop.permute.xlu0 %5000
  %5002 = vrot.lane.b32.xlu0 %v4667, 120
  %v5003 = vpop.permute.xlu0 %5002
  %5004 = vrot.lane.b32.xlu0 %v4668, 120
  %v5005 = vpop.permute.xlu0 %5004
  %5006 = vrot.lane.b32.xlu0 %v4669, 120
  %v5007 = vpop.permute.xlu0 %5006
  %5008 = vrot.lane.b32.xlu0 %v4670, 120
  %v5009 = vpop.permute.xlu0 %5008
  %5010 = vrot.lane.b32.xlu0 %v4671, 120
  %v5011 = vpop.permute.xlu0 %5010
  %5012 = vrot.lane.b32.xlu0 %v4672, 120
  %v5013 = vpop.permute.xlu0 %5012
  %5014 = vrot.lane.b32.xlu0 %v4673, 120
  %v5015 = vpop.permute.xlu0 %5014
  %5016 = vrot.lane.b32.xlu0 %v4674, 120
  %v5017 = vpop.permute.xlu0 %5016
  %5018 = vrot.lane.b32.xlu0 %v4675, 120
  %v5019 = vpop.permute.xlu0 %5018
  %5020 = vrot.lane.b32.xlu0 %v4676, 120
  %v5021 = vpop.permute.xlu0 %5020
  %5022 = vrot.lane.b32.xlu0 %v4677, 120
  %v5023 = vpop.permute.xlu0 %5022
  %5024 = vrot.lane.b32.xlu0 %v4678, 120
  %v5025 = vpop.permute.xlu0 %5024
  %5026 = vrot.lane.b32.xlu0 %v4679, 120
  %v5027 = vpop.permute.xlu0 %5026
  %5028 = vrot.lane.b32.xlu0 %v4680, 120
  %v5029 = vpop.permute.xlu0 %5028
  %5030 = vrot.lane.b32.xlu0 %v4681, 120
  %v5031 = vpop.permute.xlu0 %5030
  %5032 = vrot.lane.b32.xlu0 %v4682, 120
  %v5033 = vpop.permute.xlu0 %5032
  %5034 = vrot.lane.b32.xlu0 %v4683, 120
  %v5035 = vpop.permute.xlu0 %5034
  %5036 = vrot.lane.b32.xlu0 %v4684, 120
  %v5037 = vpop.permute.xlu0 %5036
  %5038 = vrot.lane.b32.xlu0 %v4685, 120
  %v5039 = vpop.permute.xlu0 %5038
  %5040 = vrot.lane.b32.xlu0 %v4686, 120
  %v5041 = vpop.permute.xlu0 %5040
  %5042 = vrot.lane.b32.xlu0 %v4687, 120
  %v5043 = vpop.permute.xlu0 %5042
  %5044 = vrot.lane.b32.xlu0 %v4688, 120
  %v5045 = vpop.permute.xlu0 %5044
  %5046 = vrot.lane.b32.xlu0 %v4689, 120
  %v5047 = vpop.permute.xlu0 %5046
  %5048 = vrot.lane.b32.xlu0 %v4690, 120
  %v5049 = vpop.permute.xlu0 %5048
  %5050 = vrot.lane.b32.xlu0 %v4691, 120
  %v5051 = vpop.permute.xlu0 %5050
  %5052 = vrot.lane.b32.xlu0 %v4692, 120
  %v5053 = vpop.permute.xlu0 %5052
  %5054 = vrot.lane.b32.xlu0 %v4693, 120
  %v5055 = vpop.permute.xlu0 %5054
  %5056 = vrot.lane.b32.xlu0 %v4694, 120
  %v5057 = vpop.permute.xlu0 %5056
  %5058 = vrot.lane.b32.xlu0 %v4695, 120
  %v5059 = vpop.permute.xlu0 %5058
  %5060 = vrot.lane.b32.xlu0 %v4696, 120
  %v5061 = vpop.permute.xlu0 %5060
  %5062 = vrot.lane.b32.xlu0 %v4697, 120
  %v5063 = vpop.permute.xlu0 %5062
  %5064 = vrot.lane.b32.xlu0 %v4698, 120
  %v5065 = vpop.permute.xlu0 %5064
  %5066 = vrot.lane.b32.xlu0 %v4699, 120
  %v5067 = vpop.permute.xlu0 %5066
  %5068 = vrot.lane.b32.xlu0 %v4700, 120
  %v5069 = vpop.permute.xlu0 %5068
  %5070 = vrot.lane.b32.xlu0 %v4701, 120
  %v5071 = vpop.permute.xlu0 %5070
  %5072 = vrot.lane.b32.xlu0 %v4702, 120
  %v5073 = vpop.permute.xlu0 %5072
  %5074 = vrot.lane.b32.xlu0 %v4703, 120
  %v5075 = vpop.permute.xlu0 %5074
  %5076 = vrot.lane.b32.xlu0 %v4704, 120
  %v5077 = vpop.permute.xlu0 %5076
  %5078 = vrot.lane.b32.xlu0 %v4705, 120
  %v5079 = vpop.permute.xlu0 %5078
  %5080 = vrot.lane.b32.xlu0 %v4706, 120
  %v5081 = vpop.permute.xlu0 %5080
  %5082 = vrot.lane.b32.xlu0 %v4707, 120
  %v5083 = vpop.permute.xlu0 %5082
  %5084 = vrot.lane.b32.xlu0 %v4708, 120
  %v5085 = vpop.permute.xlu0 %5084
  %5086 = vrot.lane.b32.xlu0 %v4709, 120
  %v5087 = vpop.permute.xlu0 %5086
  %5088 = vrot.lane.b32.xlu0 %v4710, 120
  %v5089 = vpop.permute.xlu0 %5088
  %5090 = vrot.lane.b32.xlu0 %v4711, 120
  %v5091 = vpop.permute.xlu0 %5090
  %5092 = vrot.lane.b32.xlu0 %v4712, 120
  %v5093 = vpop.permute.xlu0 %5092
  %5094 = vrot.lane.b32.xlu0 %v4713, 120
  %v5095 = vpop.permute.xlu0 %5094
  %5096 = vrot.lane.b32.xlu0 %v4714, 120
  %v5097 = vpop.permute.xlu0 %5096
  %5098 = vrot.lane.b32.xlu0 %v4715, 120
  %v5099 = vpop.permute.xlu0 %5098
  %5100 = vrot.lane.b32.xlu0 %v4716, 120
  %v5101 = vpop.permute.xlu0 %5100
  %5102 = vrot.lane.b32.xlu0 %v4717, 120
  %v5103 = vpop.permute.xlu0 %5102
  %5104 = vrot.lane.b32.xlu0 %v4718, 120
  %v5105 = vpop.permute.xlu0 %5104
  %5106 = vrot.lane.b32.xlu0 %v4719, 120
  %v5107 = vpop.permute.xlu0 %5106
  %5108 = vrot.lane.b32.xlu0 %v4720, 120
  %v5109 = vpop.permute.xlu0 %5108
  %5110 = vrot.lane.b32.xlu0 %v4721, 120
  %v5111 = vpop.permute.xlu0 %5110
  %5112 = vrot.lane.b32.xlu0 %v4722, 120
  %v5113 = vpop.permute.xlu0 %5112
  %5114 = vrot.lane.b32.xlu0 %v4723, 120
  %v5115 = vpop.permute.xlu0 %5114
  %5116 = vrot.lane.b32.xlu0 %v4724, 120
  %v5117 = vpop.permute.xlu0 %5116
  %5118 = vrot.lane.b32.xlu0 %v4725, 120
  %v5119 = vpop.permute.xlu0 %5118
  %5120 = vrot.lane.b32.xlu0 %v4726, 120
  %v5121 = vpop.permute.xlu0 %5120
  %5122 = vrot.lane.b32.xlu0 %v4727, 120
  %v5123 = vpop.permute.xlu0 %5122
  %5124 = vrot.lane.b32.xlu0 %v4728, 120
  %v5125 = vpop.permute.xlu0 %5124
  %5126 = vrot.lane.b32.xlu0 %v4729, 120
  %v5127 = vpop.permute.xlu0 %5126
  %5128 = vrot.lane.b32.xlu0 %v4730, 120
  %v5129 = vpop.permute.xlu0 %5128
  %5130 = vrot.lane.b32.xlu0 %v4731, 120
  %v5131 = vpop.permute.xlu0 %5130
  %5132 = vrot.lane.b32.xlu0 %v4732, 120
  %v5133 = vpop.permute.xlu0 %5132
  %5134 = vrot.lane.b32.xlu0 %v4733, 120
  %v5135 = vpop.permute.xlu0 %5134
  %5136 = vrot.lane.b32.xlu0 %v4734, 120
  %v5137 = vpop.permute.xlu0 %5136
  %5138 = vrot.lane.b32.xlu0 %v4735, 120
  %v5139 = vpop.permute.xlu0 %5138
  %5140 = vrot.lane.b32.xlu0 %v4736, 120
  %v5141 = vpop.permute.xlu0 %5140
  %5142 = vrot.lane.b32.xlu0 %v4737, 120
  %v5143 = vpop.permute.xlu0 %5142
  %5144 = vrot.lane.b32.xlu0 %v4738, 120
  %v5145 = vpop.permute.xlu0 %5144
  %5146 = vrot.lane.b32.xlu0 %v4739, 120
  %v5147 = vpop.permute.xlu0 %5146
  %5148 = vrot.lane.b32.xlu0 %v4740, 120
  %v5149 = vpop.permute.xlu0 %5148
  %5150 = vrot.lane.b32.xlu0 %v4741, 120
  %v5151 = vpop.permute.xlu0 %5150
  %5152 = vrot.lane.b32.xlu0 %v4742, 120
  %v5153 = vpop.permute.xlu0 %5152
  %5154 = vrot.lane.b32.xlu0 %v4743, 120
  %v5155 = vpop.permute.xlu0 %5154
  %5156 = vrot.lane.b32.xlu0 %v4744, 120
  %v5157 = vpop.permute.xlu0 %5156
  %5158 = vrot.lane.b32.xlu0 %v4745, 120
  %v5159 = vpop.permute.xlu0 %5158
  %v5298 = vadd.f32 %v4608, %v4885
  %v5299 = vadd.f32 %v4609, %v4887
  %v5300 = vadd.f32 %v4610, %v4889
  %v5301 = vadd.f32 %v4611, %v4891
  %v5302 = vadd.f32 %v4612, %v4893
  %v5303 = vadd.f32 %v4613, %v4895
  %v5304 = vadd.f32 %v4614, %v4897
  %v5305 = vadd.f32 %v4615, %v4899
  %v5306 = vadd.f32 %v4616, %v4901
  %v5307 = vadd.f32 %v4617, %v4903
  %v5308 = vadd.f32 %v4618, %v4905
  %v5309 = vadd.f32 %v4619, %v4907
  %v5310 = vadd.f32 %v4620, %v4909
  %v5311 = vadd.f32 %v4621, %v4911
  %v5312 = vadd.f32 %v4622, %v4913
  %v5313 = vadd.f32 %v4623, %v4915
  %v5314 = vadd.f32 %v4624, %v4917
  %v5315 = vadd.f32 %v4625, %v4919
  %v5316 = vadd.f32 %v4626, %v4921
  %v5317 = vadd.f32 %v4627, %v4923
  %v5318 = vadd.f32 %v4628, %v4925
  %v5319 = vadd.f32 %v4629, %v4927
  %v5320 = vadd.f32 %v4630, %v4929
  %v5321 = vadd.f32 %v4631, %v4931
  %v5322 = vadd.f32 %v4632, %v4933
  %v5323 = vadd.f32 %v4633, %v4935
  %v5324 = vadd.f32 %v4634, %v4937
  %v5325 = vadd.f32 %v4635, %v4939
  %v5326 = vadd.f32 %v4636, %v4941
  %v5327 = vadd.f32 %v4637, %v4943
  %v5328 = vadd.f32 %v4638, %v4945
  %v5329 = vadd.f32 %v4639, %v4947
  %v5330 = vadd.f32 %v4640, %v4949
  %v5331 = vadd.f32 %v4641, %v4951
  %v5332 = vadd.f32 %v4642, %v4953
  %v5333 = vadd.f32 %v4643, %v4955
  %v5334 = vadd.f32 %v4644, %v4957
  %v5335 = vadd.f32 %v4645, %v4959
  %v5336 = vadd.f32 %v4646, %v4961
  %v5337 = vadd.f32 %v4647, %v4963
  %v5338 = vadd.f32 %v4648, %v4965
  %v5339 = vadd.f32 %v4649, %v4967
  %v5340 = vadd.f32 %v4650, %v4969
  %v5341 = vadd.f32 %v4651, %v4971
  %v5342 = vadd.f32 %v4652, %v4973
  %v5343 = vadd.f32 %v4653, %v4975
  %v5344 = vadd.f32 %v4654, %v4977
  %v5345 = vadd.f32 %v4655, %v4979
  %v5346 = vadd.f32 %v4656, %v4981
  %v5347 = vadd.f32 %v4657, %v4983
  %v5348 = vadd.f32 %v4658, %v4985
  %v5349 = vadd.f32 %v4659, %v4987
  %v5350 = vadd.f32 %v4660, %v4989
  %v5351 = vadd.f32 %v4661, %v4991
  %v5352 = vadd.f32 %v4662, %v4993
  %v5353 = vadd.f32 %v4663, %v4995
  %v5354 = vadd.f32 %v4664, %v4997
  %v5355 = vadd.f32 %v4665, %v4999
  %v5356 = vadd.f32 %v4666, %v5001
  %v5357 = vadd.f32 %v4667, %v5003
  %v5358 = vadd.f32 %v4668, %v5005
  %v5359 = vadd.f32 %v4669, %v5007
  %v5360 = vadd.f32 %v4670, %v5009
  %v5361 = vadd.f32 %v4671, %v5011
  %v5362 = vadd.f32 %v4672, %v5013
  %v5363 = vadd.f32 %v4673, %v5015
  %v5364 = vadd.f32 %v4674, %v5017
  %v5365 = vadd.f32 %v4675, %v5019
  %v5366 = vadd.f32 %v4676, %v5021
  %v5367 = vadd.f32 %v4677, %v5023
  %v5368 = vadd.f32 %v4678, %v5025
  %v5369 = vadd.f32 %v4679, %v5027
  %v5370 = vadd.f32 %v4680, %v5029
  %v5371 = vadd.f32 %v4681, %v5031
  %v5372 = vadd.f32 %v4682, %v5033
  %v5373 = vadd.f32 %v4683, %v5035
  %v5374 = vadd.f32 %v4684, %v5037
  %v5375 = vadd.f32 %v4685, %v5039
  %v5376 = vadd.f32 %v4686, %v5041
  %v5377 = vadd.f32 %v4687, %v5043
  %v5378 = vadd.f32 %v4688, %v5045
  %v5379 = vadd.f32 %v4689, %v5047
  %v5380 = vadd.f32 %v4690, %v5049
  %v5381 = vadd.f32 %v4691, %v5051
  %v5382 = vadd.f32 %v4692, %v5053
  %v5383 = vadd.f32 %v4693, %v5055
  %v5384 = vadd.f32 %v4694, %v5057
  %v5385 = vadd.f32 %v4695, %v5059
  %v5386 = vadd.f32 %v4696, %v5061
  %v5387 = vadd.f32 %v4697, %v5063
  %v5388 = vadd.f32 %v4698, %v5065
  %v5389 = vadd.f32 %v4699, %v5067
  %v5390 = vadd.f32 %v4700, %v5069
  %v5391 = vadd.f32 %v4701, %v5071
  %v5392 = vadd.f32 %v4702, %v5073
  %v5393 = vadd.f32 %v4703, %v5075
  %v5394 = vadd.f32 %v4704, %v5077
  %v5395 = vadd.f32 %v4705, %v5079
  %v5396 = vadd.f32 %v4706, %v5081
  %v5397 = vadd.f32 %v4707, %v5083
  %v5398 = vadd.f32 %v4708, %v5085
  %v5399 = vadd.f32 %v4709, %v5087
  %v5400 = vadd.f32 %v4710, %v5089
  %v5401 = vadd.f32 %v4711, %v5091
  %v5402 = vadd.f32 %v4712, %v5093
  %v5403 = vadd.f32 %v4713, %v5095
  %v5404 = vadd.f32 %v4714, %v5097
  %v5405 = vadd.f32 %v4715, %v5099
  %v5406 = vadd.f32 %v4716, %v5101
  %v5407 = vadd.f32 %v4717, %v5103
  %v5408 = vadd.f32 %v4718, %v5105
  %v5409 = vadd.f32 %v4719, %v5107
  %v5410 = vadd.f32 %v4720, %v5109
  %v5411 = vadd.f32 %v4721, %v5111
  %v5412 = vadd.f32 %v4722, %v5113
  %v5413 = vadd.f32 %v4723, %v5115
  %v5414 = vadd.f32 %v4724, %v5117
  %v5415 = vadd.f32 %v4725, %v5119
  %v5416 = vadd.f32 %v4726, %v5121
  %v5417 = vadd.f32 %v4727, %v5123
  %v5418 = vadd.f32 %v4728, %v5125
  %v5419 = vadd.f32 %v4729, %v5127
  %v5420 = vadd.f32 %v4730, %v5129
  %v5421 = vadd.f32 %v4731, %v5131
  %v5422 = vadd.f32 %v4732, %v5133
  %v5423 = vadd.f32 %v4733, %v5135
  %v5424 = vadd.f32 %v4734, %v5137
  %v5425 = vadd.f32 %v4735, %v5139
  %v5426 = vadd.f32 %v4736, %v5141
  %v5427 = vadd.f32 %v4737, %v5143
  %v5428 = vadd.f32 %v4738, %v5145
  %v5429 = vadd.f32 %v4739, %v5147
  %v5430 = vadd.f32 %v4740, %v5149
  %v5431 = vadd.f32 %v4741, %v5151
  %v5432 = vadd.f32 %v4742, %v5153
  %v5433 = vadd.f32 %v4743, %v5155
  %v5434 = vadd.f32 %v4744, %v5157
  %v5435 = vadd.f32 %v4745, %v5159
  %v5436 = vld [vmem:[%s2] sm:$0x1]
  %v5438 = vlaneseq
  %v5439 = vshrl.u32 %v5438, 7
  %v5440 = vsub.s32 0, %v5439
  %v5441 = vrot.slane %v5436, %v5440
  %v5443 = vadd.f32 %v5298, %v5441
  %v5444 = vadd.f32 %v5299, %v5441
  %v5445 = vadd.f32 %v5300, %v5441
  %v5446 = vadd.f32 %v5301, %v5441
  %v5447 = vadd.f32 %v5302, %v5441
  %v5448 = vadd.f32 %v5303, %v5441
  %v5449 = vadd.f32 %v5304, %v5441
  %v5450 = vadd.f32 %v5305, %v5441
  %v5451 = vadd.f32 %v5306, %v5441
  %v5452 = vadd.f32 %v5307, %v5441
  %v5453 = vadd.f32 %v5308, %v5441
  %v5454 = vadd.f32 %v5309, %v5441
  %v5455 = vadd.f32 %v5310, %v5441
  %v5456 = vadd.f32 %v5311, %v5441
  %v5457 = vadd.f32 %v5312, %v5441
  %v5458 = vadd.f32 %v5313, %v5441
  %v5459 = vadd.f32 %v5314, %v5441
  %v5460 = vadd.f32 %v5315, %v5441
  %v5461 = vadd.f32 %v5316, %v5441
  %v5462 = vadd.f32 %v5317, %v5441
  %v5463 = vadd.f32 %v5318, %v5441
  %v5464 = vadd.f32 %v5319, %v5441
  %v5465 = vadd.f32 %v5320, %v5441
  %v5466 = vadd.f32 %v5321, %v5441
  %v5467 = vadd.f32 %v5322, %v5441
  %v5468 = vadd.f32 %v5323, %v5441
  %v5469 = vadd.f32 %v5324, %v5441
  %v5470 = vadd.f32 %v5325, %v5441
  %v5471 = vadd.f32 %v5326, %v5441
  %v5472 = vadd.f32 %v5327, %v5441
  %v5473 = vadd.f32 %v5328, %v5441
  %v5474 = vadd.f32 %v5329, %v5441
  %v5475 = vadd.f32 %v5330, %v5441
  %v5476 = vadd.f32 %v5331, %v5441
  %v5477 = vadd.f32 %v5332, %v5441
  %v5478 = vadd.f32 %v5333, %v5441
  %v5479 = vadd.f32 %v5334, %v5441
  %v5480 = vadd.f32 %v5335, %v5441
  %v5481 = vadd.f32 %v5336, %v5441
  %v5482 = vadd.f32 %v5337, %v5441
  %v5483 = vadd.f32 %v5338, %v5441
  %v5484 = vadd.f32 %v5339, %v5441
  %v5485 = vadd.f32 %v5340, %v5441
  %v5486 = vadd.f32 %v5341, %v5441
  %v5487 = vadd.f32 %v5342, %v5441
  %v5488 = vadd.f32 %v5343, %v5441
  %v5489 = vadd.f32 %v5344, %v5441
  %v5490 = vadd.f32 %v5345, %v5441
  %v5491 = vadd.f32 %v5346, %v5441
  %v5492 = vadd.f32 %v5347, %v5441
  %v5493 = vadd.f32 %v5348, %v5441
  %v5494 = vadd.f32 %v5349, %v5441
  %v5495 = vadd.f32 %v5350, %v5441
  %v5496 = vadd.f32 %v5351, %v5441
  %v5497 = vadd.f32 %v5352, %v5441
  %v5498 = vadd.f32 %v5353, %v5441
  %v5499 = vadd.f32 %v5354, %v5441
  %v5500 = vadd.f32 %v5355, %v5441
  %v5501 = vadd.f32 %v5356, %v5441
  %v5502 = vadd.f32 %v5357, %v5441
  %v5503 = vadd.f32 %v5358, %v5441
  %v5504 = vadd.f32 %v5359, %v5441
  %v5505 = vadd.f32 %v5360, %v5441
  %v5506 = vadd.f32 %v5361, %v5441
  %v5507 = vadd.f32 %v5362, %v5441
  %v5508 = vadd.f32 %v5363, %v5441
  %v5509 = vadd.f32 %v5364, %v5441
  %v5510 = vadd.f32 %v5365, %v5441
  %v5511 = vadd.f32 %v5366, %v5441
  %v5512 = vadd.f32 %v5367, %v5441
  %v5513 = vadd.f32 %v5368, %v5441
  %v5514 = vadd.f32 %v5369, %v5441
  %v5515 = vadd.f32 %v5370, %v5441
  %v5516 = vadd.f32 %v5371, %v5441
  %v5517 = vadd.f32 %v5372, %v5441
  %v5518 = vadd.f32 %v5373, %v5441
  %v5519 = vadd.f32 %v5374, %v5441
  %v5520 = vadd.f32 %v5375, %v5441
  %v5521 = vadd.f32 %v5376, %v5441
  %v5522 = vadd.f32 %v5377, %v5441
  %v5523 = vadd.f32 %v5378, %v5441
  %v5524 = vadd.f32 %v5379, %v5441
  %v5525 = vadd.f32 %v5380, %v5441
  %v5526 = vadd.f32 %v5381, %v5441
  %v5527 = vadd.f32 %v5382, %v5441
  %v5528 = vadd.f32 %v5383, %v5441
  %v5529 = vadd.f32 %v5384, %v5441
  %v5530 = vadd.f32 %v5385, %v5441
  %v5531 = vadd.f32 %v5386, %v5441
  %v5532 = vadd.f32 %v5387, %v5441
  %v5533 = vadd.f32 %v5388, %v5441
  %v5534 = vadd.f32 %v5389, %v5441
  %v5535 = vadd.f32 %v5390, %v5441
  %v5536 = vadd.f32 %v5391, %v5441
  %v5537 = vadd.f32 %v5392, %v5441
  %v5538 = vadd.f32 %v5393, %v5441
  %v5539 = vadd.f32 %v5394, %v5441
  %v5540 = vadd.f32 %v5395, %v5441
  %v5541 = vadd.f32 %v5396, %v5441
  %v5542 = vadd.f32 %v5397, %v5441
  %v5543 = vadd.f32 %v5398, %v5441
  %v5544 = vadd.f32 %v5399, %v5441
  %v5545 = vadd.f32 %v5400, %v5441
  %v5546 = vadd.f32 %v5401, %v5441
  %v5547 = vadd.f32 %v5402, %v5441
  %v5548 = vadd.f32 %v5403, %v5441
  %v5549 = vadd.f32 %v5404, %v5441
  %v5550 = vadd.f32 %v5405, %v5441
  %v5551 = vadd.f32 %v5406, %v5441
  %v5552 = vadd.f32 %v5407, %v5441
  %v5553 = vadd.f32 %v5408, %v5441
  %v5554 = vadd.f32 %v5409, %v5441
  %v5555 = vadd.f32 %v5410, %v5441
  %v5556 = vadd.f32 %v5411, %v5441
  %v5557 = vadd.f32 %v5412, %v5441
  %v5558 = vadd.f32 %v5413, %v5441
  %v5559 = vadd.f32 %v5414, %v5441
  %v5560 = vadd.f32 %v5415, %v5441
  %v5561 = vadd.f32 %v5416, %v5441
  %v5562 = vadd.f32 %v5417, %v5441
  %v5563 = vadd.f32 %v5418, %v5441
  %v5564 = vadd.f32 %v5419, %v5441
  %v5565 = vadd.f32 %v5420, %v5441
  %v5566 = vadd.f32 %v5421, %v5441
  %v5567 = vadd.f32 %v5422, %v5441
  %v5568 = vadd.f32 %v5423, %v5441
  %v5569 = vadd.f32 %v5424, %v5441
  %v5570 = vadd.f32 %v5425, %v5441
  %v5571 = vadd.f32 %v5426, %v5441
  %v5572 = vadd.f32 %v5427, %v5441
  %v5573 = vadd.f32 %v5428, %v5441
  %v5574 = vadd.f32 %v5429, %v5441
  %v5575 = vadd.f32 %v5430, %v5441
  %v5576 = vadd.f32 %v5431, %v5441
  %v5577 = vadd.f32 %v5432, %v5441
  %v5578 = vadd.f32 %v5433, %v5441
  %v5579 = vadd.f32 %v5434, %v5441
  %v5580 = vadd.f32 %v5435, %v5441
  %v5581 = vmax.f32 %v5443, 0.0
  %v5582 = vmax.f32 %v5444, 0.0
  %v5583 = vmax.f32 %v5445, 0.0
  %v5584 = vmax.f32 %v5446, 0.0
  %v5585 = vmax.f32 %v5447, 0.0
  %v5586 = vmax.f32 %v5448, 0.0
  %v5587 = vmax.f32 %v5449, 0.0
  %v5588 = vmax.f32 %v5450, 0.0
  %v5589 = vmax.f32 %v5451, 0.0
  %v5590 = vmax.f32 %v5452, 0.0
  %v5591 = vmax.f32 %v5453, 0.0
  %v5592 = vmax.f32 %v5454, 0.0
  %v5593 = vmax.f32 %v5455, 0.0
  %v5594 = vmax.f32 %v5456, 0.0
  %v5595 = vmax.f32 %v5457, 0.0
  %v5596 = vmax.f32 %v5458, 0.0
  %v5597 = vmax.f32 %v5459, 0.0
  %v5598 = vmax.f32 %v5460, 0.0
  %v5599 = vmax.f32 %v5461, 0.0
  %v5600 = vmax.f32 %v5462, 0.0
  %v5601 = vmax.f32 %v5463, 0.0
  %v5602 = vmax.f32 %v5464, 0.0
  %v5603 = vmax.f32 %v5465, 0.0
  %v5604 = vmax.f32 %v5466, 0.0
  %v5605 = vmax.f32 %v5467, 0.0
  %v5606 = vmax.f32 %v5468, 0.0
  %v5607 = vmax.f32 %v5469, 0.0
  %v5608 = vmax.f32 %v5470, 0.0
  %v5609 = vmax.f32 %v5471, 0.0
  %v5610 = vmax.f32 %v5472, 0.0
  %v5611 = vmax.f32 %v5473, 0.0
  %v5612 = vmax.f32 %v5474, 0.0
  %v5613 = vmax.f32 %v5475, 0.0
  %v5614 = vmax.f32 %v5476, 0.0
  %v5615 = vmax.f32 %v5477, 0.0
  %v5616 = vmax.f32 %v5478, 0.0
  %v5617 = vmax.f32 %v5479, 0.0
  %v5618 = vmax.f32 %v5480, 0.0
  %v5619 = vmax.f32 %v5481, 0.0
  %v5620 = vmax.f32 %v5482, 0.0
  %v5621 = vmax.f32 %v5483, 0.0
  %v5622 = vmax.f32 %v5484, 0.0
  %v5623 = vmax.f32 %v5485, 0.0
  %v5624 = vmax.f32 %v5486, 0.0
  %v5625 = vmax.f32 %v5487, 0.0
  %v5626 = vmax.f32 %v5488, 0.0
  %v5627 = vmax.f32 %v5489, 0.0
  %v5628 = vmax.f32 %v5490, 0.0
  %v5629 = vmax.f32 %v5491, 0.0
  %v5630 = vmax.f32 %v5492, 0.0
  %v5631 = vmax.f32 %v5493, 0.0
  %v5632 = vmax.f32 %v5494, 0.0
  %v5633 = vmax.f32 %v5495, 0.0
  %v5634 = vmax.f32 %v5496, 0.0
  %v5635 = vmax.f32 %v5497, 0.0
  %v5636 = vmax.f32 %v5498, 0.0
  %v5637 = vmax.f32 %v5499, 0.0
  %v5638 = vmax.f32 %v5500, 0.0
  %v5639 = vmax.f32 %v5501, 0.0
  %v5640 = vmax.f32 %v5502, 0.0
  %v5641 = vmax.f32 %v5503, 0.0
  %v5642 = vmax.f32 %v5504, 0.0
  %v5643 = vmax.f32 %v5505, 0.0
  %v5644 = vmax.f32 %v5506, 0.0
  %v5645 = vmax.f32 %v5507, 0.0
  %v5646 = vmax.f32 %v5508, 0.0
  %v5647 = vmax.f32 %v5509, 0.0
  %v5648 = vmax.f32 %v5510, 0.0
  %v5649 = vmax.f32 %v5511, 0.0
  %v5650 = vmax.f32 %v5512, 0.0
  %v5651 = vmax.f32 %v5513, 0.0
  %v5652 = vmax.f32 %v5514, 0.0
  %v5653 = vmax.f32 %v5515, 0.0
  %v5654 = vmax.f32 %v5516, 0.0
  %v5655 = vmax.f32 %v5517, 0.0
  %v5656 = vmax.f32 %v5518, 0.0
  %v5657 = vmax.f32 %v5519, 0.0
  %v5658 = vmax.f32 %v5520, 0.0
  %v5659 = vmax.f32 %v5521, 0.0
  %v5660 = vmax.f32 %v5522, 0.0
  %v5661 = vmax.f32 %v5523, 0.0
  %v5662 = vmax.f32 %v5524, 0.0
  %v5663 = vmax.f32 %v5525, 0.0
  %v5664 = vmax.f32 %v5526, 0.0
  %v5665 = vmax.f32 %v5527, 0.0
  %v5666 = vmax.f32 %v5528, 0.0
  %v5667 = vmax.f32 %v5529, 0.0
  %v5668 = vmax.f32 %v5530, 0.0
  %v5669 = vmax.f32 %v5531, 0.0
  %v5670 = vmax.f32 %v5532, 0.0
  %v5671 = vmax.f32 %v5533, 0.0
  %v5672 = vmax.f32 %v5534, 0.0
  %v5673 = vmax.f32 %v5535, 0.0
  %v5674 = vmax.f32 %v5536, 0.0
  %v5675 = vmax.f32 %v5537, 0.0
  %v5676 = vmax.f32 %v5538, 0.0
  %v5677 = vmax.f32 %v5539, 0.0
  %v5678 = vmax.f32 %v5540, 0.0
  %v5679 = vmax.f32 %v5541, 0.0
  %v5680 = vmax.f32 %v5542, 0.0
  %v5681 = vmax.f32 %v5543, 0.0
  %v5682 = vmax.f32 %v5544, 0.0
  %v5683 = vmax.f32 %v5545, 0.0
  %v5684 = vmax.f32 %v5546, 0.0
  %v5685 = vmax.f32 %v5547, 0.0
  %v5686 = vmax.f32 %v5548, 0.0
  %v5687 = vmax.f32 %v5549, 0.0
  %v5688 = vmax.f32 %v5550, 0.0
  %v5689 = vmax.f32 %v5551, 0.0
  %v5690 = vmax.f32 %v5552, 0.0
  %v5691 = vmax.f32 %v5553, 0.0
  %v5692 = vmax.f32 %v5554, 0.0
  %v5693 = vmax.f32 %v5555, 0.0
  %v5694 = vmax.f32 %v5556, 0.0
  %v5695 = vmax.f32 %v5557, 0.0
  %v5696 = vmax.f32 %v5558, 0.0
  %v5697 = vmax.f32 %v5559, 0.0
  %v5698 = vmax.f32 %v5560, 0.0
  %v5699 = vmax.f32 %v5561, 0.0
  %v5700 = vmax.f32 %v5562, 0.0
  %v5701 = vmax.f32 %v5563, 0.0
  %v5702 = vmax.f32 %v5564, 0.0
  %v5703 = vmax.f32 %v5565, 0.0
  %v5704 = vmax.f32 %v5566, 0.0
  %v5705 = vmax.f32 %v5567, 0.0
  %v5706 = vmax.f32 %v5568, 0.0
  %v5707 = vmax.f32 %v5569, 0.0
  %v5708 = vmax.f32 %v5570, 0.0
  %v5709 = vmax.f32 %v5571, 0.0
  %v5710 = vmax.f32 %v5572, 0.0
  %v5711 = vmax.f32 %v5573, 0.0
  %v5712 = vmax.f32 %v5574, 0.0
  %v5713 = vmax.f32 %v5575, 0.0
  %v5714 = vmax.f32 %v5576, 0.0
  %v5715 = vmax.f32 %v5577, 0.0
  %v5716 = vmax.f32 %v5578, 0.0
  %v5717 = vmax.f32 %v5579, 0.0
  %v5718 = vmax.f32 %v5580, 0.0
  %5857 = vrot.lane.b32.xlu0 %v4470, 120
  %v5858 = vpop.permute.xlu0 %5857
  %5859 = vrot.lane.b32.xlu0 %v4471, 120
  %v5860 = vpop.permute.xlu0 %5859
  %5861 = vrot.lane.b32.xlu0 %v4472, 120
  %v5862 = vpop.permute.xlu0 %5861
  %5863 = vrot.lane.b32.xlu0 %v4473, 120
  %v5864 = vpop.permute.xlu0 %5863
  %5865 = vrot.lane.b32.xlu0 %v4474, 120
  %v5866 = vpop.permute.xlu0 %5865
  %5867 = vrot.lane.b32.xlu0 %v4475, 120
  %v5868 = vpop.permute.xlu0 %5867
  %5869 = vrot.lane.b32.xlu0 %v4476, 120
  %v5870 = vpop.permute.xlu0 %5869
  %5871 = vrot.lane.b32.xlu0 %v4477, 120
  %v5872 = vpop.permute.xlu0 %5871
  %5873 = vrot.lane.b32.xlu0 %v4478, 120
  %v5874 = vpop.permute.xlu0 %5873
  %5875 = vrot.lane.b32.xlu0 %v4479, 120
  %v5876 = vpop.permute.xlu0 %5875
  %5877 = vrot.lane.b32.xlu0 %v4480, 120
  %v5878 = vpop.permute.xlu0 %5877
  %5879 = vrot.lane.b32.xlu0 %v4481, 120
  %v5880 = vpop.permute.xlu0 %5879
  %5881 = vrot.lane.b32.xlu0 %v4482, 120
  %v5882 = vpop.permute.xlu0 %5881
  %5883 = vrot.lane.b32.xlu0 %v4483, 120
  %v5884 = vpop.permute.xlu0 %5883
  %5885 = vrot.lane.b32.xlu0 %v4484, 120
  %v5886 = vpop.permute.xlu0 %5885
  %5887 = vrot.lane.b32.xlu0 %v4485, 120
  %v5888 = vpop.permute.xlu0 %5887
  %5889 = vrot.lane.b32.xlu0 %v4486, 120
  %v5890 = vpop.permute.xlu0 %5889
  %5891 = vrot.lane.b32.xlu0 %v4487, 120
  %v5892 = vpop.permute.xlu0 %5891
  %5893 = vrot.lane.b32.xlu0 %v4488, 120
  %v5894 = vpop.permute.xlu0 %5893
  %5895 = vrot.lane.b32.xlu0 %v4489, 120
  %v5896 = vpop.permute.xlu0 %5895
  %5897 = vrot.lane.b32.xlu0 %v4490, 120
  %v5898 = vpop.permute.xlu0 %5897
  %5899 = vrot.lane.b32.xlu0 %v4491, 120
  %v5900 = vpop.permute.xlu0 %5899
  %5901 = vrot.lane.b32.xlu0 %v4492, 120
  %v5902 = vpop.permute.xlu0 %5901
  %5903 = vrot.lane.b32.xlu0 %v4493, 120
  %v5904 = vpop.permute.xlu0 %5903
  %5905 = vrot.lane.b32.xlu0 %v4494, 120
  %v5906 = vpop.permute.xlu0 %5905
  %5907 = vrot.lane.b32.xlu0 %v4495, 120
  %v5908 = vpop.permute.xlu0 %5907
  %5909 = vrot.lane.b32.xlu0 %v4496, 120
  %v5910 = vpop.permute.xlu0 %5909
  %5911 = vrot.lane.b32.xlu0 %v4497, 120
  %v5912 = vpop.permute.xlu0 %5911
  %5913 = vrot.lane.b32.xlu0 %v4498, 120
  %v5914 = vpop.permute.xlu0 %5913
  %5915 = vrot.lane.b32.xlu0 %v4499, 120
  %v5916 = vpop.permute.xlu0 %5915
  %5917 = vrot.lane.b32.xlu0 %v4500, 120
  %v5918 = vpop.permute.xlu0 %5917
  %5919 = vrot.lane.b32.xlu0 %v4501, 120
  %v5920 = vpop.permute.xlu0 %5919
  %5921 = vrot.lane.b32.xlu0 %v4502, 120
  %v5922 = vpop.permute.xlu0 %5921
  %5923 = vrot.lane.b32.xlu0 %v4503, 120
  %v5924 = vpop.permute.xlu0 %5923
  %5925 = vrot.lane.b32.xlu0 %v4504, 120
  %v5926 = vpop.permute.xlu0 %5925
  %5927 = vrot.lane.b32.xlu0 %v4505, 120
  %v5928 = vpop.permute.xlu0 %5927
  %5929 = vrot.lane.b32.xlu0 %v4506, 120
  %v5930 = vpop.permute.xlu0 %5929
  %5931 = vrot.lane.b32.xlu0 %v4507, 120
  %v5932 = vpop.permute.xlu0 %5931
  %5933 = vrot.lane.b32.xlu0 %v4508, 120
  %v5934 = vpop.permute.xlu0 %5933
  %5935 = vrot.lane.b32.xlu0 %v4509, 120
  %v5936 = vpop.permute.xlu0 %5935
  %5937 = vrot.lane.b32.xlu0 %v4510, 120
  %v5938 = vpop.permute.xlu0 %5937
  %5939 = vrot.lane.b32.xlu0 %v4511, 120
  %v5940 = vpop.permute.xlu0 %5939
  %5941 = vrot.lane.b32.xlu0 %v4512, 120
  %v5942 = vpop.permute.xlu0 %5941
  %5943 = vrot.lane.b32.xlu0 %v4513, 120
  %v5944 = vpop.permute.xlu0 %5943
  %5945 = vrot.lane.b32.xlu0 %v4514, 120
  %v5946 = vpop.permute.xlu0 %5945
  %5947 = vrot.lane.b32.xlu0 %v4515, 120
  %v5948 = vpop.permute.xlu0 %5947
  %5949 = vrot.lane.b32.xlu0 %v4516, 120
  %v5950 = vpop.permute.xlu0 %5949
  %5951 = vrot.lane.b32.xlu0 %v4517, 120
  %v5952 = vpop.permute.xlu0 %5951
  %5953 = vrot.lane.b32.xlu0 %v4518, 120
  %v5954 = vpop.permute.xlu0 %5953
  %5955 = vrot.lane.b32.xlu0 %v4519, 120
  %v5956 = vpop.permute.xlu0 %5955
  %5957 = vrot.lane.b32.xlu0 %v4520, 120
  %v5958 = vpop.permute.xlu0 %5957
  %5959 = vrot.lane.b32.xlu0 %v4521, 120
  %v5960 = vpop.permute.xlu0 %5959
  %5961 = vrot.lane.b32.xlu0 %v4522, 120
  %v5962 = vpop.permute.xlu0 %5961
  %5963 = vrot.lane.b32.xlu0 %v4523, 120
  %v5964 = vpop.permute.xlu0 %5963
  %5965 = vrot.lane.b32.xlu0 %v4524, 120
  %v5966 = vpop.permute.xlu0 %5965
  %5967 = vrot.lane.b32.xlu0 %v4525, 120
  %v5968 = vpop.permute.xlu0 %5967
  %5969 = vrot.lane.b32.xlu0 %v4526, 120
  %v5970 = vpop.permute.xlu0 %5969
  %5971 = vrot.lane.b32.xlu0 %v4527, 120
  %v5972 = vpop.permute.xlu0 %5971
  %5973 = vrot.lane.b32.xlu0 %v4528, 120
  %v5974 = vpop.permute.xlu0 %5973
  %5975 = vrot.lane.b32.xlu0 %v4529, 120
  %v5976 = vpop.permute.xlu0 %5975
  %5977 = vrot.lane.b32.xlu0 %v4530, 120
  %v5978 = vpop.permute.xlu0 %5977
  %5979 = vrot.lane.b32.xlu0 %v4531, 120
  %v5980 = vpop.permute.xlu0 %5979
  %5981 = vrot.lane.b32.xlu0 %v4532, 120
  %v5982 = vpop.permute.xlu0 %5981
  %5983 = vrot.lane.b32.xlu0 %v4533, 120
  %v5984 = vpop.permute.xlu0 %5983
  %5985 = vrot.lane.b32.xlu0 %v4534, 120
  %v5986 = vpop.permute.xlu0 %5985
  %5987 = vrot.lane.b32.xlu0 %v4535, 120
  %v5988 = vpop.permute.xlu0 %5987
  %5989 = vrot.lane.b32.xlu0 %v4536, 120
  %v5990 = vpop.permute.xlu0 %5989
  %5991 = vrot.lane.b32.xlu0 %v4537, 120
  %v5992 = vpop.permute.xlu0 %5991
  %5993 = vrot.lane.b32.xlu0 %v4538, 120
  %v5994 = vpop.permute.xlu0 %5993
  %5995 = vrot.lane.b32.xlu0 %v4539, 120
  %v5996 = vpop.permute.xlu0 %5995
  %5997 = vrot.lane.b32.xlu0 %v4540, 120
  %v5998 = vpop.permute.xlu0 %5997
  %5999 = vrot.lane.b32.xlu0 %v4541, 120
  %v6000 = vpop.permute.xlu0 %5999
  %6001 = vrot.lane.b32.xlu0 %v4542, 120
  %v6002 = vpop.permute.xlu0 %6001
  %6003 = vrot.lane.b32.xlu0 %v4543, 120
  %v6004 = vpop.permute.xlu0 %6003
  %6005 = vrot.lane.b32.xlu0 %v4544, 120
  %v6006 = vpop.permute.xlu0 %6005
  %6007 = vrot.lane.b32.xlu0 %v4545, 120
  %v6008 = vpop.permute.xlu0 %6007
  %6009 = vrot.lane.b32.xlu0 %v4546, 120
  %v6010 = vpop.permute.xlu0 %6009
  %6011 = vrot.lane.b32.xlu0 %v4547, 120
  %v6012 = vpop.permute.xlu0 %6011
  %6013 = vrot.lane.b32.xlu0 %v4548, 120
  %v6014 = vpop.permute.xlu0 %6013
  %6015 = vrot.lane.b32.xlu0 %v4549, 120
  %v6016 = vpop.permute.xlu0 %6015
  %6017 = vrot.lane.b32.xlu0 %v4550, 120
  %v6018 = vpop.permute.xlu0 %6017
  %6019 = vrot.lane.b32.xlu0 %v4551, 120
  %v6020 = vpop.permute.xlu0 %6019
  %6021 = vrot.lane.b32.xlu0 %v4552, 120
  %v6022 = vpop.permute.xlu0 %6021
  %6023 = vrot.lane.b32.xlu0 %v4553, 120
  %v6024 = vpop.permute.xlu0 %6023
  %6025 = vrot.lane.b32.xlu0 %v4554, 120
  %v6026 = vpop.permute.xlu0 %6025
  %6027 = vrot.lane.b32.xlu0 %v4555, 120
  %v6028 = vpop.permute.xlu0 %6027
  %6029 = vrot.lane.b32.xlu0 %v4556, 120
  %v6030 = vpop.permute.xlu0 %6029
  %6031 = vrot.lane.b32.xlu0 %v4557, 120
  %v6032 = vpop.permute.xlu0 %6031
  %6033 = vrot.lane.b32.xlu0 %v4558, 120
  %v6034 = vpop.permute.xlu0 %6033
  %6035 = vrot.lane.b32.xlu0 %v4559, 120
  %v6036 = vpop.permute.xlu0 %6035
  %6037 = vrot.lane.b32.xlu0 %v4560, 120
  %v6038 = vpop.permute.xlu0 %6037
  %6039 = vrot.lane.b32.xlu0 %v4561, 120
  %v6040 = vpop.permute.xlu0 %6039
  %6041 = vrot.lane.b32.xlu0 %v4562, 120
  %v6042 = vpop.permute.xlu0 %6041
  %6043 = vrot.lane.b32.xlu0 %v4563, 120
  %v6044 = vpop.permute.xlu0 %6043
  %6045 = vrot.lane.b32.xlu0 %v4564, 120
  %v6046 = vpop.permute.xlu0 %6045
  %6047 = vrot.lane.b32.xlu0 %v4565, 120
  %v6048 = vpop.permute.xlu0 %6047
  %6049 = vrot.lane.b32.xlu0 %v4566, 120
  %v6050 = vpop.permute.xlu0 %6049
  %6051 = vrot.lane.b32.xlu0 %v4567, 120
  %v6052 = vpop.permute.xlu0 %6051
  %6053 = vrot.lane.b32.xlu0 %v4568, 120
  %v6054 = vpop.permute.xlu0 %6053
  %6055 = vrot.lane.b32.xlu0 %v4569, 120
  %v6056 = vpop.permute.xlu0 %6055
  %6057 = vrot.lane.b32.xlu0 %v4570, 120
  %v6058 = vpop.permute.xlu0 %6057
  %6059 = vrot.lane.b32.xlu0 %v4571, 120
  %v6060 = vpop.permute.xlu0 %6059
  %6061 = vrot.lane.b32.xlu0 %v4572, 120
  %v6062 = vpop.permute.xlu0 %6061
  %6063 = vrot.lane.b32.xlu0 %v4573, 120
  %v6064 = vpop.permute.xlu0 %6063
  %6065 = vrot.lane.b32.xlu0 %v4574, 120
  %v6066 = vpop.permute.xlu0 %6065
  %6067 = vrot.lane.b32.xlu0 %v4575, 120
  %v6068 = vpop.permute.xlu0 %6067
  %6069 = vrot.lane.b32.xlu0 %v4576, 120
  %v6070 = vpop.permute.xlu0 %6069
  %6071 = vrot.lane.b32.xlu0 %v4577, 120
  %v6072 = vpop.permute.xlu0 %6071
  %6073 = vrot.lane.b32.xlu0 %v4578, 120
  %v6074 = vpop.permute.xlu0 %6073
  %6075 = vrot.lane.b32.xlu0 %v4579, 120
  %v6076 = vpop.permute.xlu0 %6075
  %6077 = vrot.lane.b32.xlu0 %v4580, 120
  %v6078 = vpop.permute.xlu0 %6077
  %6079 = vrot.lane.b32.xlu0 %v4581, 120
  %v6080 = vpop.permute.xlu0 %6079
  %6081 = vrot.lane.b32.xlu0 %v4582, 120
  %v6082 = vpop.permute.xlu0 %6081
  %6083 = vrot.lane.b32.xlu0 %v4583, 120
  %v6084 = vpop.permute.xlu0 %6083
  %6085 = vrot.lane.b32.xlu0 %v4584, 120
  %v6086 = vpop.permute.xlu0 %6085
  %6087 = vrot.lane.b32.xlu0 %v4585, 120
  %v6088 = vpop.permute.xlu0 %6087
  %6089 = vrot.lane.b32.xlu0 %v4586, 120
  %v6090 = vpop.permute.xlu0 %6089
  %6091 = vrot.lane.b32.xlu0 %v4587, 120
  %v6092 = vpop.permute.xlu0 %6091
  %6093 = vrot.lane.b32.xlu0 %v4588, 120
  %v6094 = vpop.permute.xlu0 %6093
  %6095 = vrot.lane.b32.xlu0 %v4589, 120
  %v6096 = vpop.permute.xlu0 %6095
  %6097 = vrot.lane.b32.xlu0 %v4590, 120
  %v6098 = vpop.permute.xlu0 %6097
  %6099 = vrot.lane.b32.xlu0 %v4591, 120
  %v6100 = vpop.permute.xlu0 %6099
  %6101 = vrot.lane.b32.xlu0 %v4592, 120
  %v6102 = vpop.permute.xlu0 %6101
  %6103 = vrot.lane.b32.xlu0 %v4593, 120
  %v6104 = vpop.permute.xlu0 %6103
  %6105 = vrot.lane.b32.xlu0 %v4594, 120
  %v6106 = vpop.permute.xlu0 %6105
  %6107 = vrot.lane.b32.xlu0 %v4595, 120
  %v6108 = vpop.permute.xlu0 %6107
  %6109 = vrot.lane.b32.xlu0 %v4596, 120
  %v6110 = vpop.permute.xlu0 %6109
  %6111 = vrot.lane.b32.xlu0 %v4597, 120
  %v6112 = vpop.permute.xlu0 %6111
  %6113 = vrot.lane.b32.xlu0 %v4598, 120
  %v6114 = vpop.permute.xlu0 %6113
  %6115 = vrot.lane.b32.xlu0 %v4599, 120
  %v6116 = vpop.permute.xlu0 %6115
  %6117 = vrot.lane.b32.xlu0 %v4600, 120
  %v6118 = vpop.permute.xlu0 %6117
  %6119 = vrot.lane.b32.xlu0 %v4601, 120
  %v6120 = vpop.permute.xlu0 %6119
  %6121 = vrot.lane.b32.xlu0 %v4602, 120
  %v6122 = vpop.permute.xlu0 %6121
  %6123 = vrot.lane.b32.xlu0 %v4603, 120
  %v6124 = vpop.permute.xlu0 %6123
  %6125 = vrot.lane.b32.xlu0 %v4604, 120
  %v6126 = vpop.permute.xlu0 %6125
  %6127 = vrot.lane.b32.xlu0 %v4605, 120
  %v6128 = vpop.permute.xlu0 %6127
  %6129 = vrot.lane.b32.xlu0 %v4606, 120
  %v6130 = vpop.permute.xlu0 %6129
  %6131 = vrot.lane.b32.xlu0 %v4607, 120
  %v6132 = vpop.permute.xlu0 %6131
  %v6271 = vadd.f32 %v4470, %v5858
  %v6272 = vadd.f32 %v4471, %v5860
  %v6273 = vadd.f32 %v4472, %v5862
  %v6274 = vadd.f32 %v4473, %v5864
  %v6275 = vadd.f32 %v4474, %v5866
  %v6276 = vadd.f32 %v4475, %v5868
  %v6277 = vadd.f32 %v4476, %v5870
  %v6278 = vadd.f32 %v4477, %v5872
  %v6279 = vadd.f32 %v4478, %v5874
  %v6280 = vadd.f32 %v4479, %v5876
  %v6281 = vadd.f32 %v4480, %v5878
  %v6282 = vadd.f32 %v4481, %v5880
  %v6283 = vadd.f32 %v4482, %v5882
  %v6284 = vadd.f32 %v4483, %v5884
  %v6285 = vadd.f32 %v4484, %v5886
  %v6286 = vadd.f32 %v4485, %v5888
  %v6287 = vadd.f32 %v4486, %v5890
  %v6288 = vadd.f32 %v4487, %v5892
  %v6289 = vadd.f32 %v4488, %v5894
  %v6290 = vadd.f32 %v4489, %v5896
  %v6291 = vadd.f32 %v4490, %v5898
  %v6292 = vadd.f32 %v4491, %v5900
  %v6293 = vadd.f32 %v4492, %v5902
  %v6294 = vadd.f32 %v4493, %v5904
  %v6295 = vadd.f32 %v4494, %v5906
  %v6296 = vadd.f32 %v4495, %v5908
  %v6297 = vadd.f32 %v4496, %v5910
  %v6298 = vadd.f32 %v4497, %v5912
  %v6299 = vadd.f32 %v4498, %v5914
  %v6300 = vadd.f32 %v4499, %v5916
  %v6301 = vadd.f32 %v4500, %v5918
  %v6302 = vadd.f32 %v4501, %v5920
  %v6303 = vadd.f32 %v4502, %v5922
  %v6304 = vadd.f32 %v4503, %v5924
  %v6305 = vadd.f32 %v4504, %v5926
  %v6306 = vadd.f32 %v4505, %v5928
  %v6307 = vadd.f32 %v4506, %v5930
  %v6308 = vadd.f32 %v4507, %v5932
  %v6309 = vadd.f32 %v4508, %v5934
  %v6310 = vadd.f32 %v4509, %v5936
  %v6311 = vadd.f32 %v4510, %v5938
  %v6312 = vadd.f32 %v4511, %v5940
  %v6313 = vadd.f32 %v4512, %v5942
  %v6314 = vadd.f32 %v4513, %v5944
  %v6315 = vadd.f32 %v4514, %v5946
  %v6316 = vadd.f32 %v4515, %v5948
  %v6317 = vadd.f32 %v4516, %v5950
  %v6318 = vadd.f32 %v4517, %v5952
  %v6319 = vadd.f32 %v4518, %v5954
  %v6320 = vadd.f32 %v4519, %v5956
  %v6321 = vadd.f32 %v4520, %v5958
  %v6322 = vadd.f32 %v4521, %v5960
  %v6323 = vadd.f32 %v4522, %v5962
  %v6324 = vadd.f32 %v4523, %v5964
  %v6325 = vadd.f32 %v4524, %v5966
  %v6326 = vadd.f32 %v4525, %v5968
  %v6327 = vadd.f32 %v4526, %v5970
  %v6328 = vadd.f32 %v4527, %v5972
  %v6329 = vadd.f32 %v4528, %v5974
  %v6330 = vadd.f32 %v4529, %v5976
  %v6331 = vadd.f32 %v4530, %v5978
  %v6332 = vadd.f32 %v4531, %v5980
  %v6333 = vadd.f32 %v4532, %v5982
  %v6334 = vadd.f32 %v4533, %v5984
  %v6335 = vadd.f32 %v4534, %v5986
  %v6336 = vadd.f32 %v4535, %v5988
  %v6337 = vadd.f32 %v4536, %v5990
  %v6338 = vadd.f32 %v4537, %v5992
  %v6339 = vadd.f32 %v4538, %v5994
  %v6340 = vadd.f32 %v4539, %v5996
  %v6341 = vadd.f32 %v4540, %v5998
  %v6342 = vadd.f32 %v4541, %v6000
  %v6343 = vadd.f32 %v4542, %v6002
  %v6344 = vadd.f32 %v4543, %v6004
  %v6345 = vadd.f32 %v4544, %v6006
  %v6346 = vadd.f32 %v4545, %v6008
  %v6347 = vadd.f32 %v4546, %v6010
  %v6348 = vadd.f32 %v4547, %v6012
  %v6349 = vadd.f32 %v4548, %v6014
  %v6350 = vadd.f32 %v4549, %v6016
  %v6351 = vadd.f32 %v4550, %v6018
  %v6352 = vadd.f32 %v4551, %v6020
  %v6353 = vadd.f32 %v4552, %v6022
  %v6354 = vadd.f32 %v4553, %v6024
  %v6355 = vadd.f32 %v4554, %v6026
  %v6356 = vadd.f32 %v4555, %v6028
  %v6357 = vadd.f32 %v4556, %v6030
  %v6358 = vadd.f32 %v4557, %v6032
  %v6359 = vadd.f32 %v4558, %v6034
  %v6360 = vadd.f32 %v4559, %v6036
  %v6361 = vadd.f32 %v4560, %v6038
  %v6362 = vadd.f32 %v4561, %v6040
  %v6363 = vadd.f32 %v4562, %v6042
  %v6364 = vadd.f32 %v4563, %v6044
  %v6365 = vadd.f32 %v4564, %v6046
  %v6366 = vadd.f32 %v4565, %v6048
  %v6367 = vadd.f32 %v4566, %v6050
  %v6368 = vadd.f32 %v4567, %v6052
  %v6369 = vadd.f32 %v4568, %v6054
  %v6370 = vadd.f32 %v4569, %v6056
  %v6371 = vadd.f32 %v4570, %v6058
  %v6372 = vadd.f32 %v4571, %v6060
  %v6373 = vadd.f32 %v4572, %v6062
  %v6374 = vadd.f32 %v4573, %v6064
  %v6375 = vadd.f32 %v4574, %v6066
  %v6376 = vadd.f32 %v4575, %v6068
  %v6377 = vadd.f32 %v4576, %v6070
  %v6378 = vadd.f32 %v4577, %v6072
  %v6379 = vadd.f32 %v4578, %v6074
  %v6380 = vadd.f32 %v4579, %v6076
  %v6381 = vadd.f32 %v4580, %v6078
  %v6382 = vadd.f32 %v4581, %v6080
  %v6383 = vadd.f32 %v4582, %v6082
  %v6384 = vadd.f32 %v4583, %v6084
  %v6385 = vadd.f32 %v4584, %v6086
  %v6386 = vadd.f32 %v4585, %v6088
  %v6387 = vadd.f32 %v4586, %v6090
  %v6388 = vadd.f32 %v4587, %v6092
  %v6389 = vadd.f32 %v4588, %v6094
  %v6390 = vadd.f32 %v4589, %v6096
  %v6391 = vadd.f32 %v4590, %v6098
  %v6392 = vadd.f32 %v4591, %v6100
  %v6393 = vadd.f32 %v4592, %v6102
  %v6394 = vadd.f32 %v4593, %v6104
  %v6395 = vadd.f32 %v4594, %v6106
  %v6396 = vadd.f32 %v4595, %v6108
  %v6397 = vadd.f32 %v4596, %v6110
  %v6398 = vadd.f32 %v4597, %v6112
  %v6399 = vadd.f32 %v4598, %v6114
  %v6400 = vadd.f32 %v4599, %v6116
  %v6401 = vadd.f32 %v4600, %v6118
  %v6402 = vadd.f32 %v4601, %v6120
  %v6403 = vadd.f32 %v4602, %v6122
  %v6404 = vadd.f32 %v4603, %v6124
  %v6405 = vadd.f32 %v4604, %v6126
  %v6406 = vadd.f32 %v4605, %v6128
  %v6407 = vadd.f32 %v4606, %v6130
  %v6408 = vadd.f32 %v4607, %v6132
  %v6409 = vmul.f32 %v5581, %v6271
  %v6410 = vmul.f32 %v5582, %v6272
  %v6411 = vmul.f32 %v5583, %v6273
  %v6412 = vmul.f32 %v5584, %v6274
  %v6413 = vmul.f32 %v5585, %v6275
  %v6414 = vmul.f32 %v5586, %v6276
  %v6415 = vmul.f32 %v5587, %v6277
  %v6416 = vmul.f32 %v5588, %v6278
  %v6417 = vmul.f32 %v5589, %v6279
  %v6418 = vmul.f32 %v5590, %v6280
  %v6419 = vmul.f32 %v5591, %v6281
  %v6420 = vmul.f32 %v5592, %v6282
  %v6421 = vmul.f32 %v5593, %v6283
  %v6422 = vmul.f32 %v5594, %v6284
  %v6423 = vmul.f32 %v5595, %v6285
  %v6424 = vmul.f32 %v5596, %v6286
  %v6425 = vmul.f32 %v5597, %v6287
  %v6426 = vmul.f32 %v5598, %v6288
  %v6427 = vmul.f32 %v5599, %v6289
  %v6428 = vmul.f32 %v5600, %v6290
  %v6429 = vmul.f32 %v5601, %v6291
  %v6430 = vmul.f32 %v5602, %v6292
  %v6431 = vmul.f32 %v5603, %v6293
  %v6432 = vmul.f32 %v5604, %v6294
  %v6433 = vmul.f32 %v5605, %v6295
  %v6434 = vmul.f32 %v5606, %v6296
  %v6435 = vmul.f32 %v5607, %v6297
  %v6436 = vmul.f32 %v5608, %v6298
  %v6437 = vmul.f32 %v5609, %v6299
  %v6438 = vmul.f32 %v5610, %v6300
  %v6439 = vmul.f32 %v5611, %v6301
  %v6440 = vmul.f32 %v5612, %v6302
  %v6441 = vmul.f32 %v5613, %v6303
  %v6442 = vmul.f32 %v5614, %v6304
  %v6443 = vmul.f32 %v5615, %v6305
  %v6444 = vmul.f32 %v5616, %v6306
  %v6445 = vmul.f32 %v5617, %v6307
  %v6446 = vmul.f32 %v5618, %v6308
  %v6447 = vmul.f32 %v5619, %v6309
  %v6448 = vmul.f32 %v5620, %v6310
  %v6449 = vmul.f32 %v5621, %v6311
  %v6450 = vmul.f32 %v5622, %v6312
  %v6451 = vmul.f32 %v5623, %v6313
  %v6452 = vmul.f32 %v5624, %v6314
  %v6453 = vmul.f32 %v5625, %v6315
  %v6454 = vmul.f32 %v5626, %v6316
  %v6455 = vmul.f32 %v5627, %v6317
  %v6456 = vmul.f32 %v5628, %v6318
  %v6457 = vmul.f32 %v5629, %v6319
  %v6458 = vmul.f32 %v5630, %v6320
  %v6459 = vmul.f32 %v5631, %v6321
  %v6460 = vmul.f32 %v5632, %v6322
  %v6461 = vmul.f32 %v5633, %v6323
  %v6462 = vmul.f32 %v5634, %v6324
  %v6463 = vmul.f32 %v5635, %v6325
  %v6464 = vmul.f32 %v5636, %v6326
  %v6465 = vmul.f32 %v5637, %v6327
  %v6466 = vmul.f32 %v5638, %v6328
  %v6467 = vmul.f32 %v5639, %v6329
  %v6468 = vmul.f32 %v5640, %v6330
  %v6469 = vmul.f32 %v5641, %v6331
  %v6470 = vmul.f32 %v5642, %v6332
  %v6471 = vmul.f32 %v5643, %v6333
  %v6472 = vmul.f32 %v5644, %v6334
  %v6473 = vmul.f32 %v5645, %v6335
  %v6474 = vmul.f32 %v5646, %v6336
  %v6475 = vmul.f32 %v5647, %v6337
  %v6476 = vmul.f32 %v5648, %v6338
  %v6477 = vmul.f32 %v5649, %v6339
  %v6478 = vmul.f32 %v5650, %v6340
  %v6479 = vmul.f32 %v5651, %v6341
  %v6480 = vmul.f32 %v5652, %v6342
  %v6481 = vmul.f32 %v5653, %v6343
  %v6482 = vmul.f32 %v5654, %v6344
  %v6483 = vmul.f32 %v5655, %v6345
  %v6484 = vmul.f32 %v5656, %v6346
  %v6485 = vmul.f32 %v5657, %v6347
  %v6486 = vmul.f32 %v5658, %v6348
  %v6487 = vmul.f32 %v5659, %v6349
  %v6488 = vmul.f32 %v5660, %v6350
  %v6489 = vmul.f32 %v5661, %v6351
  %v6490 = vmul.f32 %v5662, %v6352
  %v6491 = vmul.f32 %v5663, %v6353
  %v6492 = vmul.f32 %v5664, %v6354
  %v6493 = vmul.f32 %v5665, %v6355
  %v6494 = vmul.f32 %v5666, %v6356
  %v6495 = vmul.f32 %v5667, %v6357
  %v6496 = vmul.f32 %v5668, %v6358
  %v6497 = vmul.f32 %v5669, %v6359
  %v6498 = vmul.f32 %v5670, %v6360
  %v6499 = vmul.f32 %v5671, %v6361
  %v6500 = vmul.f32 %v5672, %v6362
  %v6501 = vmul.f32 %v5673, %v6363
  %v6502 = vmul.f32 %v5674, %v6364
  %v6503 = vmul.f32 %v5675, %v6365
  %v6504 = vmul.f32 %v5676, %v6366
  %v6505 = vmul.f32 %v5677, %v6367
  %v6506 = vmul.f32 %v5678, %v6368
  %v6507 = vmul.f32 %v5679, %v6369
  %v6508 = vmul.f32 %v5680, %v6370
  %v6509 = vmul.f32 %v5681, %v6371
  %v6510 = vmul.f32 %v5682, %v6372
  %v6511 = vmul.f32 %v5683, %v6373
  %v6512 = vmul.f32 %v5684, %v6374
  %v6513 = vmul.f32 %v5685, %v6375
  %v6514 = vmul.f32 %v5686, %v6376
  %v6515 = vmul.f32 %v5687, %v6377
  %v6516 = vmul.f32 %v5688, %v6378
  %v6517 = vmul.f32 %v5689, %v6379
  %v6518 = vmul.f32 %v5690, %v6380
  %v6519 = vmul.f32 %v5691, %v6381
  %v6520 = vmul.f32 %v5692, %v6382
  %v6521 = vmul.f32 %v5693, %v6383
  %v6522 = vmul.f32 %v5694, %v6384
  %v6523 = vmul.f32 %v5695, %v6385
  %v6524 = vmul.f32 %v5696, %v6386
  %v6525 = vmul.f32 %v5697, %v6387
  %v6526 = vmul.f32 %v5698, %v6388
  %v6527 = vmul.f32 %v5699, %v6389
  %v6528 = vmul.f32 %v5700, %v6390
  %v6529 = vmul.f32 %v5701, %v6391
  %v6530 = vmul.f32 %v5702, %v6392
  %v6531 = vmul.f32 %v5703, %v6393
  %v6532 = vmul.f32 %v5704, %v6394
  %v6533 = vmul.f32 %v5705, %v6395
  %v6534 = vmul.f32 %v5706, %v6396
  %v6535 = vmul.f32 %v5707, %v6397
  %v6536 = vmul.f32 %v5708, %v6398
  %v6537 = vmul.f32 %v5709, %v6399
  %v6538 = vmul.f32 %v5710, %v6400
  %v6539 = vmul.f32 %v5711, %v6401
  %v6540 = vmul.f32 %v5712, %v6402
  %v6541 = vmul.f32 %v5713, %v6403
  %v6542 = vmul.f32 %v5714, %v6404
  %v6543 = vmul.f32 %v5715, %v6405
  %v6544 = vmul.f32 %v5716, %v6406
  %v6545 = vmul.f32 %v5717, %v6407
  %v6546 = vmul.f32 %v5718, %v6408
  %v6685 = vrot.slane %v6409, 1
  %v6686 = vrot.slane %v6410, 1
  %v6687 = vsel %vm314, %v6685, %v6686
  %v6688 = vrot.slane %v6411, 1
  %v6689 = vsel %vm314, %v6686, %v6688
  %v6690 = vrot.slane %v6412, 1
  %v6691 = vsel %vm314, %v6688, %v6690
  %v6692 = vrot.slane %v6413, 1
  %v6693 = vsel %vm314, %v6690, %v6692
  %v6694 = vrot.slane %v6414, 1
  %v6695 = vsel %vm314, %v6692, %v6694
  %v6696 = vrot.slane %v6415, 1
  %v6697 = vsel %vm314, %v6694, %v6696
  %v6698 = vrot.slane %v6416, 1
  %v6699 = vsel %vm314, %v6696, %v6698
  %v6700 = vrot.slane %v6417, 1
  %v6701 = vsel %vm314, %v6698, %v6700
  %v6702 = vrot.slane %v6418, 1
  %v6703 = vsel %vm314, %v6700, %v6702
  %v6704 = vrot.slane %v6419, 1
  %v6705 = vsel %vm314, %v6702, %v6704
  %v6706 = vrot.slane %v6420, 1
  %v6707 = vsel %vm314, %v6704, %v6706
  %v6708 = vrot.slane %v6421, 1
  %v6709 = vsel %vm314, %v6706, %v6708
  %v6710 = vrot.slane %v6422, 1
  %v6711 = vsel %vm314, %v6708, %v6710
  %v6712 = vrot.slane %v6423, 1
  %v6713 = vsel %vm314, %v6710, %v6712
  %v6714 = vrot.slane %v6424, 1
  %v6715 = vsel %vm314, %v6712, %v6714
  %v6716 = vrot.slane %v6425, 1
  %v6717 = vsel %vm314, %v6714, %v6716
  %v6718 = vrot.slane %v6426, 1
  %v6719 = vsel %vm314, %v6716, %v6718
  %v6720 = vrot.slane %v6427, 1
  %v6721 = vsel %vm314, %v6718, %v6720
  %v6722 = vrot.slane %v6428, 1
  %v6723 = vsel %vm314, %v6720, %v6722
  %v6724 = vrot.slane %v6429, 1
  %v6725 = vsel %vm314, %v6722, %v6724
  %v6726 = vrot.slane %v6430, 1
  %v6727 = vsel %vm314, %v6724, %v6726
  %v6728 = vrot.slane %v6431, 1
  %v6729 = vsel %vm314, %v6726, %v6728
  %v6730 = vrot.slane %v6432, 1
  %v6731 = vsel %vm314, %v6728, %v6730
  %v6732 = vrot.slane %v6433, 1
  %v6733 = vsel %vm314, %v6730, %v6732
  %v6734 = vrot.slane %v6434, 1
  %v6735 = vsel %vm314, %v6732, %v6734
  %v6736 = vrot.slane %v6435, 1
  %v6737 = vsel %vm314, %v6734, %v6736
  %v6738 = vrot.slane %v6436, 1
  %v6739 = vsel %vm314, %v6736, %v6738
  %v6740 = vrot.slane %v6437, 1
  %v6741 = vsel %vm314, %v6738, %v6740
  %v6742 = vrot.slane %v6438, 1
  %v6743 = vsel %vm314, %v6740, %v6742
  %v6744 = vrot.slane %v6439, 1
  %v6745 = vsel %vm314, %v6742, %v6744
  %v6746 = vrot.slane %v6440, 1
  %v6747 = vsel %vm314, %v6744, %v6746
  %v6748 = vrot.slane %v6441, 1
  %v6749 = vsel %vm314, %v6746, %v6748
  %v6750 = vrot.slane %v6442, 1
  %v6751 = vsel %vm314, %v6748, %v6750
  %v6752 = vrot.slane %v6443, 1
  %v6753 = vsel %vm314, %v6750, %v6752
  %v6754 = vrot.slane %v6444, 1
  %v6755 = vsel %vm314, %v6752, %v6754
  %v6756 = vrot.slane %v6445, 1
  %v6757 = vsel %vm314, %v6754, %v6756
  %v6758 = vrot.slane %v6446, 1
  %v6759 = vsel %vm314, %v6756, %v6758
  %v6760 = vrot.slane %v6447, 1
  %v6761 = vsel %vm314, %v6758, %v6760
  %v6762 = vrot.slane %v6448, 1
  %v6763 = vsel %vm314, %v6760, %v6762
  %v6764 = vrot.slane %v6449, 1
  %v6765 = vsel %vm314, %v6762, %v6764
  %v6766 = vrot.slane %v6450, 1
  %v6767 = vsel %vm314, %v6764, %v6766
  %v6768 = vrot.slane %v6451, 1
  %v6769 = vsel %vm314, %v6766, %v6768
  %v6770 = vrot.slane %v6452, 1
  %v6771 = vsel %vm314, %v6768, %v6770
  %v6772 = vrot.slane %v6453, 1
  %v6773 = vsel %vm314, %v6770, %v6772
  %v6774 = vrot.slane %v6454, 1
  %v6775 = vsel %vm314, %v6772, %v6774
  %v6776 = vrot.slane %v6455, 1
  %v6777 = vsel %vm314, %v6774, %v6776
  %v6778 = vrot.slane %v6456, 1
  %v6779 = vsel %vm314, %v6776, %v6778
  %v6780 = vrot.slane %v6457, 1
  %v6781 = vsel %vm314, %v6778, %v6780
  %v6782 = vrot.slane %v6458, 1
  %v6783 = vsel %vm314, %v6780, %v6782
  %v6784 = vrot.slane %v6459, 1
  %v6785 = vsel %vm314, %v6782, %v6784
  %v6786 = vrot.slane %v6460, 1
  %v6787 = vsel %vm314, %v6784, %v6786
  %v6788 = vrot.slane %v6461, 1
  %v6789 = vsel %vm314, %v6786, %v6788
  %v6790 = vrot.slane %v6462, 1
  %v6791 = vsel %vm314, %v6788, %v6790
  %v6792 = vrot.slane %v6463, 1
  %v6793 = vsel %vm314, %v6790, %v6792
  %v6794 = vrot.slane %v6464, 1
  %v6795 = vsel %vm314, %v6792, %v6794
  %v6796 = vrot.slane %v6465, 1
  %v6797 = vsel %vm314, %v6794, %v6796
  %v6798 = vrot.slane %v6466, 1
  %v6799 = vsel %vm314, %v6796, %v6798
  %v6800 = vrot.slane %v6467, 1
  %v6801 = vsel %vm314, %v6798, %v6800
  %v6802 = vrot.slane %v6468, 1
  %v6803 = vsel %vm314, %v6800, %v6802
  %v6804 = vrot.slane %v6469, 1
  %v6805 = vsel %vm314, %v6802, %v6804
  %v6806 = vrot.slane %v6470, 1
  %v6807 = vsel %vm314, %v6804, %v6806
  %v6808 = vrot.slane %v6471, 1
  %v6809 = vsel %vm314, %v6806, %v6808
  %v6810 = vrot.slane %v6472, 1
  %v6811 = vsel %vm314, %v6808, %v6810
  %v6812 = vrot.slane %v6473, 1
  %v6813 = vsel %vm314, %v6810, %v6812
  %v6814 = vrot.slane %v6474, 1
  %v6815 = vsel %vm314, %v6812, %v6814
  %v6816 = vrot.slane %v6475, 1
  %v6817 = vsel %vm314, %v6814, %v6816
  %v6818 = vrot.slane %v6476, 1
  %v6819 = vsel %vm314, %v6816, %v6818
  %v6820 = vrot.slane %v6477, 1
  %v6821 = vsel %vm314, %v6818, %v6820
  %v6822 = vrot.slane %v6478, 1
  %v6823 = vsel %vm314, %v6820, %v6822
  %v6824 = vrot.slane %v6479, 1
  %v6825 = vsel %vm314, %v6822, %v6824
  %v6826 = vrot.slane %v6480, 1
  %v6827 = vsel %vm314, %v6824, %v6826
  %v6828 = vrot.slane %v6481, 1
  %v6829 = vsel %vm314, %v6826, %v6828
  %v6830 = vrot.slane %v6482, 1
  %v6831 = vsel %vm314, %v6828, %v6830
  %v6832 = vrot.slane %v6483, 1
  %v6833 = vsel %vm314, %v6830, %v6832
  %v6834 = vrot.slane %v6484, 1
  %v6835 = vsel %vm314, %v6832, %v6834
  %v6836 = vrot.slane %v6485, 1
  %v6837 = vsel %vm314, %v6834, %v6836
  %v6838 = vrot.slane %v6486, 1
  %v6839 = vsel %vm314, %v6836, %v6838
  %v6840 = vrot.slane %v6487, 1
  %v6841 = vsel %vm314, %v6838, %v6840
  %v6842 = vrot.slane %v6488, 1
  %v6843 = vsel %vm314, %v6840, %v6842
  %v6844 = vrot.slane %v6489, 1
  %v6845 = vsel %vm314, %v6842, %v6844
  %v6846 = vrot.slane %v6490, 1
  %v6847 = vsel %vm314, %v6844, %v6846
  %v6848 = vrot.slane %v6491, 1
  %v6849 = vsel %vm314, %v6846, %v6848
  %v6850 = vrot.slane %v6492, 1
  %v6851 = vsel %vm314, %v6848, %v6850
  %v6852 = vrot.slane %v6493, 1
  %v6853 = vsel %vm314, %v6850, %v6852
  %v6854 = vrot.slane %v6494, 1
  %v6855 = vsel %vm314, %v6852, %v6854
  %v6856 = vrot.slane %v6495, 1
  %v6857 = vsel %vm314, %v6854, %v6856
  %v6858 = vrot.slane %v6496, 1
  %v6859 = vsel %vm314, %v6856, %v6858
  %v6860 = vrot.slane %v6497, 1
  %v6861 = vsel %vm314, %v6858, %v6860
  %v6862 = vrot.slane %v6498, 1
  %v6863 = vsel %vm314, %v6860, %v6862
  %v6864 = vrot.slane %v6499, 1
  %v6865 = vsel %vm314, %v6862, %v6864
  %v6866 = vrot.slane %v6500, 1
  %v6867 = vsel %vm314, %v6864, %v6866
  %v6868 = vrot.slane %v6501, 1
  %v6869 = vsel %vm314, %v6866, %v6868
  %v6870 = vrot.slane %v6502, 1
  %v6871 = vsel %vm314, %v6868, %v6870
  %v6872 = vrot.slane %v6503, 1
  %v6873 = vsel %vm314, %v6870, %v6872
  %v6874 = vrot.slane %v6504, 1
  %v6875 = vsel %vm314, %v6872, %v6874
  %v6876 = vrot.slane %v6505, 1
  %v6877 = vsel %vm314, %v6874, %v6876
  %v6878 = vrot.slane %v6506, 1
  %v6879 = vsel %vm314, %v6876, %v6878
  %v6880 = vrot.slane %v6507, 1
  %v6881 = vsel %vm314, %v6878, %v6880
  %v6882 = vrot.slane %v6508, 1
  %v6883 = vsel %vm314, %v6880, %v6882
  %v6884 = vrot.slane %v6509, 1
  %v6885 = vsel %vm314, %v6882, %v6884
  %v6886 = vrot.slane %v6510, 1
  %v6887 = vsel %vm314, %v6884, %v6886
  %v6888 = vrot.slane %v6511, 1
  %v6889 = vsel %vm314, %v6886, %v6888
  %v6890 = vrot.slane %v6512, 1
  %v6891 = vsel %vm314, %v6888, %v6890
  %v6892 = vrot.slane %v6513, 1
  %v6893 = vsel %vm314, %v6890, %v6892
  %v6894 = vrot.slane %v6514, 1
  %v6895 = vsel %vm314, %v6892, %v6894
  %v6896 = vrot.slane %v6515, 1
  %v6897 = vsel %vm314, %v6894, %v6896
  %v6898 = vrot.slane %v6516, 1
  %v6899 = vsel %vm314, %v6896, %v6898
  %v6900 = vrot.slane %v6517, 1
  %v6901 = vsel %vm314, %v6898, %v6900
  %v6902 = vrot.slane %v6518, 1
  %v6903 = vsel %vm314, %v6900, %v6902
  %v6904 = vrot.slane %v6519, 1
  %v6905 = vsel %vm314, %v6902, %v6904
  %v6906 = vrot.slane %v6520, 1
  %v6907 = vsel %vm314, %v6904, %v6906
  %v6908 = vrot.slane %v6521, 1
  %v6909 = vsel %vm314, %v6906, %v6908
  %v6910 = vrot.slane %v6522, 1
  %v6911 = vsel %vm314, %v6908, %v6910
  %v6912 = vrot.slane %v6523, 1
  %v6913 = vsel %vm314, %v6910, %v6912
  %v6914 = vrot.slane %v6524, 1
  %v6915 = vsel %vm314, %v6912, %v6914
  %v6916 = vrot.slane %v6525, 1
  %v6917 = vsel %vm314, %v6914, %v6916
  %v6918 = vrot.slane %v6526, 1
  %v6919 = vsel %vm314, %v6916, %v6918
  %v6920 = vrot.slane %v6527, 1
  %v6921 = vsel %vm314, %v6918, %v6920
  %v6922 = vrot.slane %v6528, 1
  %v6923 = vsel %vm314, %v6920, %v6922
  %v6924 = vrot.slane %v6529, 1
  %v6925 = vsel %vm314, %v6922, %v6924
  %v6926 = vrot.slane %v6530, 1
  %v6927 = vsel %vm314, %v6924, %v6926
  %v6928 = vrot.slane %v6531, 1
  %v6929 = vsel %vm314, %v6926, %v6928
  %v6930 = vrot.slane %v6532, 1
  %v6931 = vsel %vm314, %v6928, %v6930
  %v6932 = vrot.slane %v6533, 1
  %v6933 = vsel %vm314, %v6930, %v6932
  %v6934 = vrot.slane %v6534, 1
  %v6935 = vsel %vm314, %v6932, %v6934
  %v6936 = vrot.slane %v6535, 1
  %v6937 = vsel %vm314, %v6934, %v6936
  %v6938 = vrot.slane %v6536, 1
  %v6939 = vsel %vm314, %v6936, %v6938
  %v6940 = vrot.slane %v6537, 1
  %v6941 = vsel %vm314, %v6938, %v6940
  %v6942 = vrot.slane %v6538, 1
  %v6943 = vsel %vm314, %v6940, %v6942
  %v6944 = vrot.slane %v6539, 1
  %v6945 = vsel %vm314, %v6942, %v6944
  %v6946 = vrot.slane %v6540, 1
  %v6947 = vsel %vm314, %v6944, %v6946
  %v6948 = vrot.slane %v6541, 1
  %v6949 = vsel %vm314, %v6946, %v6948
  %v6950 = vrot.slane %v6542, 1
  %v6951 = vsel %vm314, %v6948, %v6950
  %v6952 = vrot.slane %v6543, 1
  %v6953 = vsel %vm314, %v6950, %v6952
  %v6954 = vrot.slane %v6544, 1
  %v6955 = vsel %vm314, %v6952, %v6954
  %v6956 = vrot.slane %v6545, 1
  %v6957 = vsel %vm314, %v6954, %v6956
  %v6958 = vrot.slane %v6546, 1
  %v6959 = vsel %vm314, %v6956, %v6958
  %6960 = vrot.lane.b32.xlu0 %v6687, 8
  %v6961 = vpop.permute.xlu0 %6960
  %6962 = vrot.lane.b32.xlu0 %v6689, 8
  %v6963 = vpop.permute.xlu0 %6962
  %6964 = vrot.lane.b32.xlu0 %v6691, 8
  %v6965 = vpop.permute.xlu0 %6964
  %6966 = vrot.lane.b32.xlu0 %v6693, 8
  %v6967 = vpop.permute.xlu0 %6966
  %6968 = vrot.lane.b32.xlu0 %v6695, 8
  %v6969 = vpop.permute.xlu0 %6968
  %6970 = vrot.lane.b32.xlu0 %v6697, 8
  %v6971 = vpop.permute.xlu0 %6970
  %6972 = vrot.lane.b32.xlu0 %v6699, 8
  %v6973 = vpop.permute.xlu0 %6972
  %6974 = vrot.lane.b32.xlu0 %v6701, 8
  %v6975 = vpop.permute.xlu0 %6974
  %6976 = vrot.lane.b32.xlu0 %v6703, 8
  %v6977 = vpop.permute.xlu0 %6976
  %6978 = vrot.lane.b32.xlu0 %v6705, 8
  %v6979 = vpop.permute.xlu0 %6978
  %6980 = vrot.lane.b32.xlu0 %v6707, 8
  %v6981 = vpop.permute.xlu0 %6980
  %6982 = vrot.lane.b32.xlu0 %v6709, 8
  %v6983 = vpop.permute.xlu0 %6982
  %6984 = vrot.lane.b32.xlu0 %v6711, 8
  %v6985 = vpop.permute.xlu0 %6984
  %6986 = vrot.lane.b32.xlu0 %v6713, 8
  %v6987 = vpop.permute.xlu0 %6986
  %6988 = vrot.lane.b32.xlu0 %v6715, 8
  %v6989 = vpop.permute.xlu0 %6988
  %6990 = vrot.lane.b32.xlu0 %v6717, 8
  %v6991 = vpop.permute.xlu0 %6990
  %6992 = vrot.lane.b32.xlu0 %v6719, 8
  %v6993 = vpop.permute.xlu0 %6992
  %6994 = vrot.lane.b32.xlu0 %v6721, 8
  %v6995 = vpop.permute.xlu0 %6994
  %6996 = vrot.lane.b32.xlu0 %v6723, 8
  %v6997 = vpop.permute.xlu0 %6996
  %6998 = vrot.lane.b32.xlu0 %v6725, 8
  %v6999 = vpop.permute.xlu0 %6998
  %7000 = vrot.lane.b32.xlu0 %v6727, 8
  %v7001 = vpop.permute.xlu0 %7000
  %7002 = vrot.lane.b32.xlu0 %v6729, 8
  %v7003 = vpop.permute.xlu0 %7002
  %7004 = vrot.lane.b32.xlu0 %v6731, 8
  %v7005 = vpop.permute.xlu0 %7004
  %7006 = vrot.lane.b32.xlu0 %v6733, 8
  %v7007 = vpop.permute.xlu0 %7006
  %7008 = vrot.lane.b32.xlu0 %v6735, 8
  %v7009 = vpop.permute.xlu0 %7008
  %7010 = vrot.lane.b32.xlu0 %v6737, 8
  %v7011 = vpop.permute.xlu0 %7010
  %7012 = vrot.lane.b32.xlu0 %v6739, 8
  %v7013 = vpop.permute.xlu0 %7012
  %7014 = vrot.lane.b32.xlu0 %v6741, 8
  %v7015 = vpop.permute.xlu0 %7014
  %7016 = vrot.lane.b32.xlu0 %v6743, 8
  %v7017 = vpop.permute.xlu0 %7016
  %7018 = vrot.lane.b32.xlu0 %v6745, 8
  %v7019 = vpop.permute.xlu0 %7018
  %7020 = vrot.lane.b32.xlu0 %v6747, 8
  %v7021 = vpop.permute.xlu0 %7020
  %7022 = vrot.lane.b32.xlu0 %v6749, 8
  %v7023 = vpop.permute.xlu0 %7022
  %7024 = vrot.lane.b32.xlu0 %v6751, 8
  %v7025 = vpop.permute.xlu0 %7024
  %7026 = vrot.lane.b32.xlu0 %v6753, 8
  %v7027 = vpop.permute.xlu0 %7026
  %7028 = vrot.lane.b32.xlu0 %v6755, 8
  %v7029 = vpop.permute.xlu0 %7028
  %7030 = vrot.lane.b32.xlu0 %v6757, 8
  %v7031 = vpop.permute.xlu0 %7030
  %7032 = vrot.lane.b32.xlu0 %v6759, 8
  %v7033 = vpop.permute.xlu0 %7032
  %7034 = vrot.lane.b32.xlu0 %v6761, 8
  %v7035 = vpop.permute.xlu0 %7034
  %7036 = vrot.lane.b32.xlu0 %v6763, 8
  %v7037 = vpop.permute.xlu0 %7036
  %7038 = vrot.lane.b32.xlu0 %v6765, 8
  %v7039 = vpop.permute.xlu0 %7038
  %7040 = vrot.lane.b32.xlu0 %v6767, 8
  %v7041 = vpop.permute.xlu0 %7040
  %7042 = vrot.lane.b32.xlu0 %v6769, 8
  %v7043 = vpop.permute.xlu0 %7042
  %7044 = vrot.lane.b32.xlu0 %v6771, 8
  %v7045 = vpop.permute.xlu0 %7044
  %7046 = vrot.lane.b32.xlu0 %v6773, 8
  %v7047 = vpop.permute.xlu0 %7046
  %7048 = vrot.lane.b32.xlu0 %v6775, 8
  %v7049 = vpop.permute.xlu0 %7048
  %7050 = vrot.lane.b32.xlu0 %v6777, 8
  %v7051 = vpop.permute.xlu0 %7050
  %7052 = vrot.lane.b32.xlu0 %v6779, 8
  %v7053 = vpop.permute.xlu0 %7052
  %7054 = vrot.lane.b32.xlu0 %v6781, 8
  %v7055 = vpop.permute.xlu0 %7054
  %7056 = vrot.lane.b32.xlu0 %v6783, 8
  %v7057 = vpop.permute.xlu0 %7056
  %7058 = vrot.lane.b32.xlu0 %v6785, 8
  %v7059 = vpop.permute.xlu0 %7058
  %7060 = vrot.lane.b32.xlu0 %v6787, 8
  %v7061 = vpop.permute.xlu0 %7060
  %7062 = vrot.lane.b32.xlu0 %v6789, 8
  %v7063 = vpop.permute.xlu0 %7062
  %7064 = vrot.lane.b32.xlu0 %v6791, 8
  %v7065 = vpop.permute.xlu0 %7064
  %7066 = vrot.lane.b32.xlu0 %v6793, 8
  %v7067 = vpop.permute.xlu0 %7066
  %7068 = vrot.lane.b32.xlu0 %v6795, 8
  %v7069 = vpop.permute.xlu0 %7068
  %7070 = vrot.lane.b32.xlu0 %v6797, 8
  %v7071 = vpop.permute.xlu0 %7070
  %7072 = vrot.lane.b32.xlu0 %v6799, 8
  %v7073 = vpop.permute.xlu0 %7072
  %7074 = vrot.lane.b32.xlu0 %v6801, 8
  %v7075 = vpop.permute.xlu0 %7074
  %7076 = vrot.lane.b32.xlu0 %v6803, 8
  %v7077 = vpop.permute.xlu0 %7076
  %7078 = vrot.lane.b32.xlu0 %v6805, 8
  %v7079 = vpop.permute.xlu0 %7078
  %7080 = vrot.lane.b32.xlu0 %v6807, 8
  %v7081 = vpop.permute.xlu0 %7080
  %7082 = vrot.lane.b32.xlu0 %v6809, 8
  %v7083 = vpop.permute.xlu0 %7082
  %7084 = vrot.lane.b32.xlu0 %v6811, 8
  %v7085 = vpop.permute.xlu0 %7084
  %7086 = vrot.lane.b32.xlu0 %v6813, 8
  %v7087 = vpop.permute.xlu0 %7086
  %7088 = vrot.lane.b32.xlu0 %v6815, 8
  %v7089 = vpop.permute.xlu0 %7088
  %7090 = vrot.lane.b32.xlu0 %v6817, 8
  %v7091 = vpop.permute.xlu0 %7090
  %7092 = vrot.lane.b32.xlu0 %v6819, 8
  %v7093 = vpop.permute.xlu0 %7092
  %7094 = vrot.lane.b32.xlu0 %v6821, 8
  %v7095 = vpop.permute.xlu0 %7094
  %7096 = vrot.lane.b32.xlu0 %v6823, 8
  %v7097 = vpop.permute.xlu0 %7096
  %7098 = vrot.lane.b32.xlu0 %v6825, 8
  %v7099 = vpop.permute.xlu0 %7098
  %7100 = vrot.lane.b32.xlu0 %v6827, 8
  %v7101 = vpop.permute.xlu0 %7100
  %7102 = vrot.lane.b32.xlu0 %v6829, 8
  %v7103 = vpop.permute.xlu0 %7102
  %7104 = vrot.lane.b32.xlu0 %v6831, 8
  %v7105 = vpop.permute.xlu0 %7104
  %7106 = vrot.lane.b32.xlu0 %v6833, 8
  %v7107 = vpop.permute.xlu0 %7106
  %7108 = vrot.lane.b32.xlu0 %v6835, 8
  %v7109 = vpop.permute.xlu0 %7108
  %7110 = vrot.lane.b32.xlu0 %v6837, 8
  %v7111 = vpop.permute.xlu0 %7110
  %7112 = vrot.lane.b32.xlu0 %v6839, 8
  %v7113 = vpop.permute.xlu0 %7112
  %7114 = vrot.lane.b32.xlu0 %v6841, 8
  %v7115 = vpop.permute.xlu0 %7114
  %7116 = vrot.lane.b32.xlu0 %v6843, 8
  %v7117 = vpop.permute.xlu0 %7116
  %7118 = vrot.lane.b32.xlu0 %v6845, 8
  %v7119 = vpop.permute.xlu0 %7118
  %7120 = vrot.lane.b32.xlu0 %v6847, 8
  %v7121 = vpop.permute.xlu0 %7120
  %7122 = vrot.lane.b32.xlu0 %v6849, 8
  %v7123 = vpop.permute.xlu0 %7122
  %7124 = vrot.lane.b32.xlu0 %v6851, 8
  %v7125 = vpop.permute.xlu0 %7124
  %7126 = vrot.lane.b32.xlu0 %v6853, 8
  %v7127 = vpop.permute.xlu0 %7126
  %7128 = vrot.lane.b32.xlu0 %v6855, 8
  %v7129 = vpop.permute.xlu0 %7128
  %7130 = vrot.lane.b32.xlu0 %v6857, 8
  %v7131 = vpop.permute.xlu0 %7130
  %7132 = vrot.lane.b32.xlu0 %v6859, 8
  %v7133 = vpop.permute.xlu0 %7132
  %7134 = vrot.lane.b32.xlu0 %v6861, 8
  %v7135 = vpop.permute.xlu0 %7134
  %7136 = vrot.lane.b32.xlu0 %v6863, 8
  %v7137 = vpop.permute.xlu0 %7136
  %7138 = vrot.lane.b32.xlu0 %v6865, 8
  %v7139 = vpop.permute.xlu0 %7138
  %7140 = vrot.lane.b32.xlu0 %v6867, 8
  %v7141 = vpop.permute.xlu0 %7140
  %7142 = vrot.lane.b32.xlu0 %v6869, 8
  %v7143 = vpop.permute.xlu0 %7142
  %7144 = vrot.lane.b32.xlu0 %v6871, 8
  %v7145 = vpop.permute.xlu0 %7144
  %7146 = vrot.lane.b32.xlu0 %v6873, 8
  %v7147 = vpop.permute.xlu0 %7146
  %7148 = vrot.lane.b32.xlu0 %v6875, 8
  %v7149 = vpop.permute.xlu0 %7148
  %7150 = vrot.lane.b32.xlu0 %v6877, 8
  %v7151 = vpop.permute.xlu0 %7150
  %7152 = vrot.lane.b32.xlu0 %v6879, 8
  %v7153 = vpop.permute.xlu0 %7152
  %7154 = vrot.lane.b32.xlu0 %v6881, 8
  %v7155 = vpop.permute.xlu0 %7154
  %7156 = vrot.lane.b32.xlu0 %v6883, 8
  %v7157 = vpop.permute.xlu0 %7156
  %7158 = vrot.lane.b32.xlu0 %v6885, 8
  %v7159 = vpop.permute.xlu0 %7158
  %7160 = vrot.lane.b32.xlu0 %v6887, 8
  %v7161 = vpop.permute.xlu0 %7160
  %7162 = vrot.lane.b32.xlu0 %v6889, 8
  %v7163 = vpop.permute.xlu0 %7162
  %7164 = vrot.lane.b32.xlu0 %v6891, 8
  %v7165 = vpop.permute.xlu0 %7164
  %7166 = vrot.lane.b32.xlu0 %v6893, 8
  %v7167 = vpop.permute.xlu0 %7166
  %7168 = vrot.lane.b32.xlu0 %v6895, 8
  %v7169 = vpop.permute.xlu0 %7168
  %7170 = vrot.lane.b32.xlu0 %v6897, 8
  %v7171 = vpop.permute.xlu0 %7170
  %7172 = vrot.lane.b32.xlu0 %v6899, 8
  %v7173 = vpop.permute.xlu0 %7172
  %7174 = vrot.lane.b32.xlu0 %v6901, 8
  %v7175 = vpop.permute.xlu0 %7174
  %7176 = vrot.lane.b32.xlu0 %v6903, 8
  %v7177 = vpop.permute.xlu0 %7176
  %7178 = vrot.lane.b32.xlu0 %v6905, 8
  %v7179 = vpop.permute.xlu0 %7178
  %7180 = vrot.lane.b32.xlu0 %v6907, 8
  %v7181 = vpop.permute.xlu0 %7180
  %7182 = vrot.lane.b32.xlu0 %v6909, 8
  %v7183 = vpop.permute.xlu0 %7182
  %7184 = vrot.lane.b32.xlu0 %v6911, 8
  %v7185 = vpop.permute.xlu0 %7184
  %7186 = vrot.lane.b32.xlu0 %v6913, 8
  %v7187 = vpop.permute.xlu0 %7186
  %7188 = vrot.lane.b32.xlu0 %v6915, 8
  %v7189 = vpop.permute.xlu0 %7188
  %7190 = vrot.lane.b32.xlu0 %v6917, 8
  %v7191 = vpop.permute.xlu0 %7190
  %7192 = vrot.lane.b32.xlu0 %v6919, 8
  %v7193 = vpop.permute.xlu0 %7192
  %7194 = vrot.lane.b32.xlu0 %v6921, 8
  %v7195 = vpop.permute.xlu0 %7194
  %7196 = vrot.lane.b32.xlu0 %v6923, 8
  %v7197 = vpop.permute.xlu0 %7196
  %7198 = vrot.lane.b32.xlu0 %v6925, 8
  %v7199 = vpop.permute.xlu0 %7198
  %7200 = vrot.lane.b32.xlu0 %v6927, 8
  %v7201 = vpop.permute.xlu0 %7200
  %7202 = vrot.lane.b32.xlu0 %v6929, 8
  %v7203 = vpop.permute.xlu0 %7202
  %7204 = vrot.lane.b32.xlu0 %v6931, 8
  %v7205 = vpop.permute.xlu0 %7204
  %7206 = vrot.lane.b32.xlu0 %v6933, 8
  %v7207 = vpop.permute.xlu0 %7206
  %7208 = vrot.lane.b32.xlu0 %v6935, 8
  %v7209 = vpop.permute.xlu0 %7208
  %7210 = vrot.lane.b32.xlu0 %v6937, 8
  %v7211 = vpop.permute.xlu0 %7210
  %7212 = vrot.lane.b32.xlu0 %v6939, 8
  %v7213 = vpop.permute.xlu0 %7212
  %7214 = vrot.lane.b32.xlu0 %v6941, 8
  %v7215 = vpop.permute.xlu0 %7214
  %7216 = vrot.lane.b32.xlu0 %v6943, 8
  %v7217 = vpop.permute.xlu0 %7216
  %7218 = vrot.lane.b32.xlu0 %v6945, 8
  %v7219 = vpop.permute.xlu0 %7218
  %7220 = vrot.lane.b32.xlu0 %v6947, 8
  %v7221 = vpop.permute.xlu0 %7220
  %7222 = vrot.lane.b32.xlu0 %v6949, 8
  %v7223 = vpop.permute.xlu0 %7222
  %7224 = vrot.lane.b32.xlu0 %v6951, 8
  %v7225 = vpop.permute.xlu0 %7224
  %7226 = vrot.lane.b32.xlu0 %v6953, 8
  %v7227 = vpop.permute.xlu0 %7226
  %7228 = vrot.lane.b32.xlu0 %v6955, 8
  %v7229 = vpop.permute.xlu0 %7228
  %7230 = vrot.lane.b32.xlu0 %v6957, 8
  %v7231 = vpop.permute.xlu0 %7230
  %7232 = vrot.lane.b32.xlu0 %v6959, 8
  %v7233 = vpop.permute.xlu0 %7232
  %7234 = vrot.lane.b32.xlu0 %v6958, 8
  %v7235 = vpop.permute.xlu0 %7234
  %v7374 = vrot.slane %v6409, 2
  %v7375 = vrot.slane %v6410, 2
  %v7376 = vsel %vm1034, %v7374, %v7375
  %v7377 = vrot.slane %v6411, 2
  %v7378 = vsel %vm1034, %v7375, %v7377
  %v7379 = vrot.slane %v6412, 2
  %v7380 = vsel %vm1034, %v7377, %v7379
  %v7381 = vrot.slane %v6413, 2
  %v7382 = vsel %vm1034, %v7379, %v7381
  %v7383 = vrot.slane %v6414, 2
  %v7384 = vsel %vm1034, %v7381, %v7383
  %v7385 = vrot.slane %v6415, 2
  %v7386 = vsel %vm1034, %v7383, %v7385
  %v7387 = vrot.slane %v6416, 2
  %v7388 = vsel %vm1034, %v7385, %v7387
  %v7389 = vrot.slane %v6417, 2
  %v7390 = vsel %vm1034, %v7387, %v7389
  %v7391 = vrot.slane %v6418, 2
  %v7392 = vsel %vm1034, %v7389, %v7391
  %v7393 = vrot.slane %v6419, 2
  %v7394 = vsel %vm1034, %v7391, %v7393
  %v7395 = vrot.slane %v6420, 2
  %v7396 = vsel %vm1034, %v7393, %v7395
  %v7397 = vrot.slane %v6421, 2
  %v7398 = vsel %vm1034, %v7395, %v7397
  %v7399 = vrot.slane %v6422, 2
  %v7400 = vsel %vm1034, %v7397, %v7399
  %v7401 = vrot.slane %v6423, 2
  %v7402 = vsel %vm1034, %v7399, %v7401
  %v7403 = vrot.slane %v6424, 2
  %v7404 = vsel %vm1034, %v7401, %v7403
  %v7405 = vrot.slane %v6425, 2
  %v7406 = vsel %vm1034, %v7403, %v7405
  %v7407 = vrot.slane %v6426, 2
  %v7408 = vsel %vm1034, %v7405, %v7407
  %v7409 = vrot.slane %v6427, 2
  %v7410 = vsel %vm1034, %v7407, %v7409
  %v7411 = vrot.slane %v6428, 2
  %v7412 = vsel %vm1034, %v7409, %v7411
  %v7413 = vrot.slane %v6429, 2
  %v7414 = vsel %vm1034, %v7411, %v7413
  %v7415 = vrot.slane %v6430, 2
  %v7416 = vsel %vm1034, %v7413, %v7415
  %v7417 = vrot.slane %v6431, 2
  %v7418 = vsel %vm1034, %v7415, %v7417
  %v7419 = vrot.slane %v6432, 2
  %v7420 = vsel %vm1034, %v7417, %v7419
  %v7421 = vrot.slane %v6433, 2
  %v7422 = vsel %vm1034, %v7419, %v7421
  %v7423 = vrot.slane %v6434, 2
  %v7424 = vsel %vm1034, %v7421, %v7423
  %v7425 = vrot.slane %v6435, 2
  %v7426 = vsel %vm1034, %v7423, %v7425
  %v7427 = vrot.slane %v6436, 2
  %v7428 = vsel %vm1034, %v7425, %v7427
  %v7429 = vrot.slane %v6437, 2
  %v7430 = vsel %vm1034, %v7427, %v7429
  %v7431 = vrot.slane %v6438, 2
  %v7432 = vsel %vm1034, %v7429, %v7431
  %v7433 = vrot.slane %v6439, 2
  %v7434 = vsel %vm1034, %v7431, %v7433
  %v7435 = vrot.slane %v6440, 2
  %v7436 = vsel %vm1034, %v7433, %v7435
  %v7437 = vrot.slane %v6441, 2
  %v7438 = vsel %vm1034, %v7435, %v7437
  %v7439 = vrot.slane %v6442, 2
  %v7440 = vsel %vm1034, %v7437, %v7439
  %v7441 = vrot.slane %v6443, 2
  %v7442 = vsel %vm1034, %v7439, %v7441
  %v7443 = vrot.slane %v6444, 2
  %v7444 = vsel %vm1034, %v7441, %v7443
  %v7445 = vrot.slane %v6445, 2
  %v7446 = vsel %vm1034, %v7443, %v7445
  %v7447 = vrot.slane %v6446, 2
  %v7448 = vsel %vm1034, %v7445, %v7447
  %v7449 = vrot.slane %v6447, 2
  %v7450 = vsel %vm1034, %v7447, %v7449
  %v7451 = vrot.slane %v6448, 2
  %v7452 = vsel %vm1034, %v7449, %v7451
  %v7453 = vrot.slane %v6449, 2
  %v7454 = vsel %vm1034, %v7451, %v7453
  %v7455 = vrot.slane %v6450, 2
  %v7456 = vsel %vm1034, %v7453, %v7455
  %v7457 = vrot.slane %v6451, 2
  %v7458 = vsel %vm1034, %v7455, %v7457
  %v7459 = vrot.slane %v6452, 2
  %v7460 = vsel %vm1034, %v7457, %v7459
  %v7461 = vrot.slane %v6453, 2
  %v7462 = vsel %vm1034, %v7459, %v7461
  %v7463 = vrot.slane %v6454, 2
  %v7464 = vsel %vm1034, %v7461, %v7463
  %v7465 = vrot.slane %v6455, 2
  %v7466 = vsel %vm1034, %v7463, %v7465
  %v7467 = vrot.slane %v6456, 2
  %v7468 = vsel %vm1034, %v7465, %v7467
  %v7469 = vrot.slane %v6457, 2
  %v7470 = vsel %vm1034, %v7467, %v7469
  %v7471 = vrot.slane %v6458, 2
  %v7472 = vsel %vm1034, %v7469, %v7471
  %v7473 = vrot.slane %v6459, 2
  %v7474 = vsel %vm1034, %v7471, %v7473
  %v7475 = vrot.slane %v6460, 2
  %v7476 = vsel %vm1034, %v7473, %v7475
  %v7477 = vrot.slane %v6461, 2
  %v7478 = vsel %vm1034, %v7475, %v7477
  %v7479 = vrot.slane %v6462, 2
  %v7480 = vsel %vm1034, %v7477, %v7479
  %v7481 = vrot.slane %v6463, 2
  %v7482 = vsel %vm1034, %v7479, %v7481
  %v7483 = vrot.slane %v6464, 2
  %v7484 = vsel %vm1034, %v7481, %v7483
  %v7485 = vrot.slane %v6465, 2
  %v7486 = vsel %vm1034, %v7483, %v7485
  %v7487 = vrot.slane %v6466, 2
  %v7488 = vsel %vm1034, %v7485, %v7487
  %v7489 = vrot.slane %v6467, 2
  %v7490 = vsel %vm1034, %v7487, %v7489
  %v7491 = vrot.slane %v6468, 2
  %v7492 = vsel %vm1034, %v7489, %v7491
  %v7493 = vrot.slane %v6469, 2
  %v7494 = vsel %vm1034, %v7491, %v7493
  %v7495 = vrot.slane %v6470, 2
  %v7496 = vsel %vm1034, %v7493, %v7495
  %v7497 = vrot.slane %v6471, 2
  %v7498 = vsel %vm1034, %v7495, %v7497
  %v7499 = vrot.slane %v6472, 2
  %v7500 = vsel %vm1034, %v7497, %v7499
  %v7501 = vrot.slane %v6473, 2
  %v7502 = vsel %vm1034, %v7499, %v7501
  %v7503 = vrot.slane %v6474, 2
  %v7504 = vsel %vm1034, %v7501, %v7503
  %v7505 = vrot.slane %v6475, 2
  %v7506 = vsel %vm1034, %v7503, %v7505
  %v7507 = vrot.slane %v6476, 2
  %v7508 = vsel %vm1034, %v7505, %v7507
  %v7509 = vrot.slane %v6477, 2
  %v7510 = vsel %vm1034, %v7507, %v7509
  %v7511 = vrot.slane %v6478, 2
  %v7512 = vsel %vm1034, %v7509, %v7511
  %v7513 = vrot.slane %v6479, 2
  %v7514 = vsel %vm1034, %v7511, %v7513
  %v7515 = vrot.slane %v6480, 2
  %v7516 = vsel %vm1034, %v7513, %v7515
  %v7517 = vrot.slane %v6481, 2
  %v7518 = vsel %vm1034, %v7515, %v7517
  %v7519 = vrot.slane %v6482, 2
  %v7520 = vsel %vm1034, %v7517, %v7519
  %v7521 = vrot.slane %v6483, 2
  %v7522 = vsel %vm1034, %v7519, %v7521
  %v7523 = vrot.slane %v6484, 2
  %v7524 = vsel %vm1034, %v7521, %v7523
  %v7525 = vrot.slane %v6485, 2
  %v7526 = vsel %vm1034, %v7523, %v7525
  %v7527 = vrot.slane %v6486, 2
  %v7528 = vsel %vm1034, %v7525, %v7527
  %v7529 = vrot.slane %v6487, 2
  %v7530 = vsel %vm1034, %v7527, %v7529
  %v7531 = vrot.slane %v6488, 2
  %v7532 = vsel %vm1034, %v7529, %v7531
  %v7533 = vrot.slane %v6489, 2
  %v7534 = vsel %vm1034, %v7531, %v7533
  %v7535 = vrot.slane %v6490, 2
  %v7536 = vsel %vm1034, %v7533, %v7535
  %v7537 = vrot.slane %v6491, 2
  %v7538 = vsel %vm1034, %v7535, %v7537
  %v7539 = vrot.slane %v6492, 2
  %v7540 = vsel %vm1034, %v7537, %v7539
  %v7541 = vrot.slane %v6493, 2
  %v7542 = vsel %vm1034, %v7539, %v7541
  %v7543 = vrot.slane %v6494, 2
  %v7544 = vsel %vm1034, %v7541, %v7543
  %v7545 = vrot.slane %v6495, 2
  %v7546 = vsel %vm1034, %v7543, %v7545
  %v7547 = vrot.slane %v6496, 2
  %v7548 = vsel %vm1034, %v7545, %v7547
  %v7549 = vrot.slane %v6497, 2
  %v7550 = vsel %vm1034, %v7547, %v7549
  %v7551 = vrot.slane %v6498, 2
  %v7552 = vsel %vm1034, %v7549, %v7551
  %v7553 = vrot.slane %v6499, 2
  %v7554 = vsel %vm1034, %v7551, %v7553
  %v7555 = vrot.slane %v6500, 2
  %v7556 = vsel %vm1034, %v7553, %v7555
  %v7557 = vrot.slane %v6501, 2
  %v7558 = vsel %vm1034, %v7555, %v7557
  %v7559 = vrot.slane %v6502, 2
  %v7560 = vsel %vm1034, %v7557, %v7559
  %v7561 = vrot.slane %v6503, 2
  %v7562 = vsel %vm1034, %v7559, %v7561
  %v7563 = vrot.slane %v6504, 2
  %v7564 = vsel %vm1034, %v7561, %v7563
  %v7565 = vrot.slane %v6505, 2
  %v7566 = vsel %vm1034, %v7563, %v7565
  %v7567 = vrot.slane %v6506, 2
  %v7568 = vsel %vm1034, %v7565, %v7567
  %v7569 = vrot.slane %v6507, 2
  %v7570 = vsel %vm1034, %v7567, %v7569
  %v7571 = vrot.slane %v6508, 2
  %v7572 = vsel %vm1034, %v7569, %v7571
  %v7573 = vrot.slane %v6509, 2
  %v7574 = vsel %vm1034, %v7571, %v7573
  %v7575 = vrot.slane %v6510, 2
  %v7576 = vsel %vm1034, %v7573, %v7575
  %v7577 = vrot.slane %v6511, 2
  %v7578 = vsel %vm1034, %v7575, %v7577
  %v7579 = vrot.slane %v6512, 2
  %v7580 = vsel %vm1034, %v7577, %v7579
  %v7581 = vrot.slane %v6513, 2
  %v7582 = vsel %vm1034, %v7579, %v7581
  %v7583 = vrot.slane %v6514, 2
  %v7584 = vsel %vm1034, %v7581, %v7583
  %v7585 = vrot.slane %v6515, 2
  %v7586 = vsel %vm1034, %v7583, %v7585
  %v7587 = vrot.slane %v6516, 2
  %v7588 = vsel %vm1034, %v7585, %v7587
  %v7589 = vrot.slane %v6517, 2
  %v7590 = vsel %vm1034, %v7587, %v7589
  %v7591 = vrot.slane %v6518, 2
  %v7592 = vsel %vm1034, %v7589, %v7591
  %v7593 = vrot.slane %v6519, 2
  %v7594 = vsel %vm1034, %v7591, %v7593
  %v7595 = vrot.slane %v6520, 2
  %v7596 = vsel %vm1034, %v7593, %v7595
  %v7597 = vrot.slane %v6521, 2
  %v7598 = vsel %vm1034, %v7595, %v7597
  %v7599 = vrot.slane %v6522, 2
  %v7600 = vsel %vm1034, %v7597, %v7599
  %v7601 = vrot.slane %v6523, 2
  %v7602 = vsel %vm1034, %v7599, %v7601
  %v7603 = vrot.slane %v6524, 2
  %v7604 = vsel %vm1034, %v7601, %v7603
  %v7605 = vrot.slane %v6525, 2
  %v7606 = vsel %vm1034, %v7603, %v7605
  %v7607 = vrot.slane %v6526, 2
  %v7608 = vsel %vm1034, %v7605, %v7607
  %v7609 = vrot.slane %v6527, 2
  %v7610 = vsel %vm1034, %v7607, %v7609
  %v7611 = vrot.slane %v6528, 2
  %v7612 = vsel %vm1034, %v7609, %v7611
  %v7613 = vrot.slane %v6529, 2
  %v7614 = vsel %vm1034, %v7611, %v7613
  %v7615 = vrot.slane %v6530, 2
  %v7616 = vsel %vm1034, %v7613, %v7615
  %v7617 = vrot.slane %v6531, 2
  %v7618 = vsel %vm1034, %v7615, %v7617
  %v7619 = vrot.slane %v6532, 2
  %v7620 = vsel %vm1034, %v7617, %v7619
  %v7621 = vrot.slane %v6533, 2
  %v7622 = vsel %vm1034, %v7619, %v7621
  %v7623 = vrot.slane %v6534, 2
  %v7624 = vsel %vm1034, %v7621, %v7623
  %v7625 = vrot.slane %v6535, 2
  %v7626 = vsel %vm1034, %v7623, %v7625
  %v7627 = vrot.slane %v6536, 2
  %v7628 = vsel %vm1034, %v7625, %v7627
  %v7629 = vrot.slane %v6537, 2
  %v7630 = vsel %vm1034, %v7627, %v7629
  %v7631 = vrot.slane %v6538, 2
  %v7632 = vsel %vm1034, %v7629, %v7631
  %v7633 = vrot.slane %v6539, 2
  %v7634 = vsel %vm1034, %v7631, %v7633
  %v7635 = vrot.slane %v6540, 2
  %v7636 = vsel %vm1034, %v7633, %v7635
  %v7637 = vrot.slane %v6541, 2
  %v7638 = vsel %vm1034, %v7635, %v7637
  %v7639 = vrot.slane %v6542, 2
  %v7640 = vsel %vm1034, %v7637, %v7639
  %v7641 = vrot.slane %v6543, 2
  %v7642 = vsel %vm1034, %v7639, %v7641
  %v7643 = vrot.slane %v6544, 2
  %v7644 = vsel %vm1034, %v7641, %v7643
  %v7645 = vrot.slane %v6545, 2
  %v7646 = vsel %vm1034, %v7643, %v7645
  %v7647 = vrot.slane %v6546, 2
  %v7648 = vsel %vm1034, %v7645, %v7647
  %7649 = vrot.lane.b32.xlu0 %v7376, 16
  %v7650 = vpop.permute.xlu0 %7649
  %7651 = vrot.lane.b32.xlu0 %v7378, 16
  %v7652 = vpop.permute.xlu0 %7651
  %7653 = vrot.lane.b32.xlu0 %v7380, 16
  %v7654 = vpop.permute.xlu0 %7653
  %7655 = vrot.lane.b32.xlu0 %v7382, 16
  %v7656 = vpop.permute.xlu0 %7655
  %7657 = vrot.lane.b32.xlu0 %v7384, 16
  %v7658 = vpop.permute.xlu0 %7657
  %7659 = vrot.lane.b32.xlu0 %v7386, 16
  %v7660 = vpop.permute.xlu0 %7659
  %7661 = vrot.lane.b32.xlu0 %v7388, 16
  %v7662 = vpop.permute.xlu0 %7661
  %7663 = vrot.lane.b32.xlu0 %v7390, 16
  %v7664 = vpop.permute.xlu0 %7663
  %7665 = vrot.lane.b32.xlu0 %v7392, 16
  %v7666 = vpop.permute.xlu0 %7665
  %7667 = vrot.lane.b32.xlu0 %v7394, 16
  %v7668 = vpop.permute.xlu0 %7667
  %7669 = vrot.lane.b32.xlu0 %v7396, 16
  %v7670 = vpop.permute.xlu0 %7669
  %7671 = vrot.lane.b32.xlu0 %v7398, 16
  %v7672 = vpop.permute.xlu0 %7671
  %7673 = vrot.lane.b32.xlu0 %v7400, 16
  %v7674 = vpop.permute.xlu0 %7673
  %7675 = vrot.lane.b32.xlu0 %v7402, 16
  %v7676 = vpop.permute.xlu0 %7675
  %7677 = vrot.lane.b32.xlu0 %v7404, 16
  %v7678 = vpop.permute.xlu0 %7677
  %7679 = vrot.lane.b32.xlu0 %v7406, 16
  %v7680 = vpop.permute.xlu0 %7679
  %7681 = vrot.lane.b32.xlu0 %v7408, 16
  %v7682 = vpop.permute.xlu0 %7681
  %7683 = vrot.lane.b32.xlu0 %v7410, 16
  %v7684 = vpop.permute.xlu0 %7683
  %7685 = vrot.lane.b32.xlu0 %v7412, 16
  %v7686 = vpop.permute.xlu0 %7685
  %7687 = vrot.lane.b32.xlu0 %v7414, 16
  %v7688 = vpop.permute.xlu0 %7687
  %7689 = vrot.lane.b32.xlu0 %v7416, 16
  %v7690 = vpop.permute.xlu0 %7689
  %7691 = vrot.lane.b32.xlu0 %v7418, 16
  %v7692 = vpop.permute.xlu0 %7691
  %7693 = vrot.lane.b32.xlu0 %v7420, 16
  %v7694 = vpop.permute.xlu0 %7693
  %7695 = vrot.lane.b32.xlu0 %v7422, 16
  %v7696 = vpop.permute.xlu0 %7695
  %7697 = vrot.lane.b32.xlu0 %v7424, 16
  %v7698 = vpop.permute.xlu0 %7697
  %7699 = vrot.lane.b32.xlu0 %v7426, 16
  %v7700 = vpop.permute.xlu0 %7699
  %7701 = vrot.lane.b32.xlu0 %v7428, 16
  %v7702 = vpop.permute.xlu0 %7701
  %7703 = vrot.lane.b32.xlu0 %v7430, 16
  %v7704 = vpop.permute.xlu0 %7703
  %7705 = vrot.lane.b32.xlu0 %v7432, 16
  %v7706 = vpop.permute.xlu0 %7705
  %7707 = vrot.lane.b32.xlu0 %v7434, 16
  %v7708 = vpop.permute.xlu0 %7707
  %7709 = vrot.lane.b32.xlu0 %v7436, 16
  %v7710 = vpop.permute.xlu0 %7709
  %7711 = vrot.lane.b32.xlu0 %v7438, 16
  %v7712 = vpop.permute.xlu0 %7711
  %7713 = vrot.lane.b32.xlu0 %v7440, 16
  %v7714 = vpop.permute.xlu0 %7713
  %7715 = vrot.lane.b32.xlu0 %v7442, 16
  %v7716 = vpop.permute.xlu0 %7715
  %7717 = vrot.lane.b32.xlu0 %v7444, 16
  %v7718 = vpop.permute.xlu0 %7717
  %7719 = vrot.lane.b32.xlu0 %v7446, 16
  %v7720 = vpop.permute.xlu0 %7719
  %7721 = vrot.lane.b32.xlu0 %v7448, 16
  %v7722 = vpop.permute.xlu0 %7721
  %7723 = vrot.lane.b32.xlu0 %v7450, 16
  %v7724 = vpop.permute.xlu0 %7723
  %7725 = vrot.lane.b32.xlu0 %v7452, 16
  %v7726 = vpop.permute.xlu0 %7725
  %7727 = vrot.lane.b32.xlu0 %v7454, 16
  %v7728 = vpop.permute.xlu0 %7727
  %7729 = vrot.lane.b32.xlu0 %v7456, 16
  %v7730 = vpop.permute.xlu0 %7729
  %7731 = vrot.lane.b32.xlu0 %v7458, 16
  %v7732 = vpop.permute.xlu0 %7731
  %7733 = vrot.lane.b32.xlu0 %v7460, 16
  %v7734 = vpop.permute.xlu0 %7733
  %7735 = vrot.lane.b32.xlu0 %v7462, 16
  %v7736 = vpop.permute.xlu0 %7735
  %7737 = vrot.lane.b32.xlu0 %v7464, 16
  %v7738 = vpop.permute.xlu0 %7737
  %7739 = vrot.lane.b32.xlu0 %v7466, 16
  %v7740 = vpop.permute.xlu0 %7739
  %7741 = vrot.lane.b32.xlu0 %v7468, 16
  %v7742 = vpop.permute.xlu0 %7741
  %7743 = vrot.lane.b32.xlu0 %v7470, 16
  %v7744 = vpop.permute.xlu0 %7743
  %7745 = vrot.lane.b32.xlu0 %v7472, 16
  %v7746 = vpop.permute.xlu0 %7745
  %7747 = vrot.lane.b32.xlu0 %v7474, 16
  %v7748 = vpop.permute.xlu0 %7747
  %7749 = vrot.lane.b32.xlu0 %v7476, 16
  %v7750 = vpop.permute.xlu0 %7749
  %7751 = vrot.lane.b32.xlu0 %v7478, 16
  %v7752 = vpop.permute.xlu0 %7751
  %7753 = vrot.lane.b32.xlu0 %v7480, 16
  %v7754 = vpop.permute.xlu0 %7753
  %7755 = vrot.lane.b32.xlu0 %v7482, 16
  %v7756 = vpop.permute.xlu0 %7755
  %7757 = vrot.lane.b32.xlu0 %v7484, 16
  %v7758 = vpop.permute.xlu0 %7757
  %7759 = vrot.lane.b32.xlu0 %v7486, 16
  %v7760 = vpop.permute.xlu0 %7759
  %7761 = vrot.lane.b32.xlu0 %v7488, 16
  %v7762 = vpop.permute.xlu0 %7761
  %7763 = vrot.lane.b32.xlu0 %v7490, 16
  %v7764 = vpop.permute.xlu0 %7763
  %7765 = vrot.lane.b32.xlu0 %v7492, 16
  %v7766 = vpop.permute.xlu0 %7765
  %7767 = vrot.lane.b32.xlu0 %v7494, 16
  %v7768 = vpop.permute.xlu0 %7767
  %7769 = vrot.lane.b32.xlu0 %v7496, 16
  %v7770 = vpop.permute.xlu0 %7769
  %7771 = vrot.lane.b32.xlu0 %v7498, 16
  %v7772 = vpop.permute.xlu0 %7771
  %7773 = vrot.lane.b32.xlu0 %v7500, 16
  %v7774 = vpop.permute.xlu0 %7773
  %7775 = vrot.lane.b32.xlu0 %v7502, 16
  %v7776 = vpop.permute.xlu0 %7775
  %7777 = vrot.lane.b32.xlu0 %v7504, 16
  %v7778 = vpop.permute.xlu0 %7777
  %7779 = vrot.lane.b32.xlu0 %v7506, 16
  %v7780 = vpop.permute.xlu0 %7779
  %7781 = vrot.lane.b32.xlu0 %v7508, 16
  %v7782 = vpop.permute.xlu0 %7781
  %7783 = vrot.lane.b32.xlu0 %v7510, 16
  %v7784 = vpop.permute.xlu0 %7783
  %7785 = vrot.lane.b32.xlu0 %v7512, 16
  %v7786 = vpop.permute.xlu0 %7785
  %7787 = vrot.lane.b32.xlu0 %v7514, 16
  %v7788 = vpop.permute.xlu0 %7787
  %7789 = vrot.lane.b32.xlu0 %v7516, 16
  %v7790 = vpop.permute.xlu0 %7789
  %7791 = vrot.lane.b32.xlu0 %v7518, 16
  %v7792 = vpop.permute.xlu0 %7791
  %7793 = vrot.lane.b32.xlu0 %v7520, 16
  %v7794 = vpop.permute.xlu0 %7793
  %7795 = vrot.lane.b32.xlu0 %v7522, 16
  %v7796 = vpop.permute.xlu0 %7795
  %7797 = vrot.lane.b32.xlu0 %v7524, 16
  %v7798 = vpop.permute.xlu0 %7797
  %7799 = vrot.lane.b32.xlu0 %v7526, 16
  %v7800 = vpop.permute.xlu0 %7799
  %7801 = vrot.lane.b32.xlu0 %v7528, 16
  %v7802 = vpop.permute.xlu0 %7801
  %7803 = vrot.lane.b32.xlu0 %v7530, 16
  %v7804 = vpop.permute.xlu0 %7803
  %7805 = vrot.lane.b32.xlu0 %v7532, 16
  %v7806 = vpop.permute.xlu0 %7805
  %7807 = vrot.lane.b32.xlu0 %v7534, 16
  %v7808 = vpop.permute.xlu0 %7807
  %7809 = vrot.lane.b32.xlu0 %v7536, 16
  %v7810 = vpop.permute.xlu0 %7809
  %7811 = vrot.lane.b32.xlu0 %v7538, 16
  %v7812 = vpop.permute.xlu0 %7811
  %7813 = vrot.lane.b32.xlu0 %v7540, 16
  %v7814 = vpop.permute.xlu0 %7813
  %7815 = vrot.lane.b32.xlu0 %v7542, 16
  %v7816 = vpop.permute.xlu0 %7815
  %7817 = vrot.lane.b32.xlu0 %v7544, 16
  %v7818 = vpop.permute.xlu0 %7817
  %7819 = vrot.lane.b32.xlu0 %v7546, 16
  %v7820 = vpop.permute.xlu0 %7819
  %7821 = vrot.lane.b32.xlu0 %v7548, 16
  %v7822 = vpop.permute.xlu0 %7821
  %7823 = vrot.lane.b32.xlu0 %v7550, 16
  %v7824 = vpop.permute.xlu0 %7823
  %7825 = vrot.lane.b32.xlu0 %v7552, 16
  %v7826 = vpop.permute.xlu0 %7825
  %7827 = vrot.lane.b32.xlu0 %v7554, 16
  %v7828 = vpop.permute.xlu0 %7827
  %7829 = vrot.lane.b32.xlu0 %v7556, 16
  %v7830 = vpop.permute.xlu0 %7829
  %7831 = vrot.lane.b32.xlu0 %v7558, 16
  %v7832 = vpop.permute.xlu0 %7831
  %7833 = vrot.lane.b32.xlu0 %v7560, 16
  %v7834 = vpop.permute.xlu0 %7833
  %7835 = vrot.lane.b32.xlu0 %v7562, 16
  %v7836 = vpop.permute.xlu0 %7835
  %7837 = vrot.lane.b32.xlu0 %v7564, 16
  %v7838 = vpop.permute.xlu0 %7837
  %7839 = vrot.lane.b32.xlu0 %v7566, 16
  %v7840 = vpop.permute.xlu0 %7839
  %7841 = vrot.lane.b32.xlu0 %v7568, 16
  %v7842 = vpop.permute.xlu0 %7841
  %7843 = vrot.lane.b32.xlu0 %v7570, 16
  %v7844 = vpop.permute.xlu0 %7843
  %7845 = vrot.lane.b32.xlu0 %v7572, 16
  %v7846 = vpop.permute.xlu0 %7845
  %7847 = vrot.lane.b32.xlu0 %v7574, 16
  %v7848 = vpop.permute.xlu0 %7847
  %7849 = vrot.lane.b32.xlu0 %v7576, 16
  %v7850 = vpop.permute.xlu0 %7849
  %7851 = vrot.lane.b32.xlu0 %v7578, 16
  %v7852 = vpop.permute.xlu0 %7851
  %7853 = vrot.lane.b32.xlu0 %v7580, 16
  %v7854 = vpop.permute.xlu0 %7853
  %7855 = vrot.lane.b32.xlu0 %v7582, 16
  %v7856 = vpop.permute.xlu0 %7855
  %7857 = vrot.lane.b32.xlu0 %v7584, 16
  %v7858 = vpop.permute.xlu0 %7857
  %7859 = vrot.lane.b32.xlu0 %v7586, 16
  %v7860 = vpop.permute.xlu0 %7859
  %7861 = vrot.lane.b32.xlu0 %v7588, 16
  %v7862 = vpop.permute.xlu0 %7861
  %7863 = vrot.lane.b32.xlu0 %v7590, 16
  %v7864 = vpop.permute.xlu0 %7863
  %7865 = vrot.lane.b32.xlu0 %v7592, 16
  %v7866 = vpop.permute.xlu0 %7865
  %7867 = vrot.lane.b32.xlu0 %v7594, 16
  %v7868 = vpop.permute.xlu0 %7867
  %7869 = vrot.lane.b32.xlu0 %v7596, 16
  %v7870 = vpop.permute.xlu0 %7869
  %7871 = vrot.lane.b32.xlu0 %v7598, 16
  %v7872 = vpop.permute.xlu0 %7871
  %7873 = vrot.lane.b32.xlu0 %v7600, 16
  %v7874 = vpop.permute.xlu0 %7873
  %7875 = vrot.lane.b32.xlu0 %v7602, 16
  %v7876 = vpop.permute.xlu0 %7875
  %7877 = vrot.lane.b32.xlu0 %v7604, 16
  %v7878 = vpop.permute.xlu0 %7877
  %7879 = vrot.lane.b32.xlu0 %v7606, 16
  %v7880 = vpop.permute.xlu0 %7879
  %7881 = vrot.lane.b32.xlu0 %v7608, 16
  %v7882 = vpop.permute.xlu0 %7881
  %7883 = vrot.lane.b32.xlu0 %v7610, 16
  %v7884 = vpop.permute.xlu0 %7883
  %7885 = vrot.lane.b32.xlu0 %v7612, 16
  %v7886 = vpop.permute.xlu0 %7885
  %7887 = vrot.lane.b32.xlu0 %v7614, 16
  %v7888 = vpop.permute.xlu0 %7887
  %7889 = vrot.lane.b32.xlu0 %v7616, 16
  %v7890 = vpop.permute.xlu0 %7889
  %7891 = vrot.lane.b32.xlu0 %v7618, 16
  %v7892 = vpop.permute.xlu0 %7891
  %7893 = vrot.lane.b32.xlu0 %v7620, 16
  %v7894 = vpop.permute.xlu0 %7893
  %7895 = vrot.lane.b32.xlu0 %v7622, 16
  %v7896 = vpop.permute.xlu0 %7895
  %7897 = vrot.lane.b32.xlu0 %v7624, 16
  %v7898 = vpop.permute.xlu0 %7897
  %7899 = vrot.lane.b32.xlu0 %v7626, 16
  %v7900 = vpop.permute.xlu0 %7899
  %7901 = vrot.lane.b32.xlu0 %v7628, 16
  %v7902 = vpop.permute.xlu0 %7901
  %7903 = vrot.lane.b32.xlu0 %v7630, 16
  %v7904 = vpop.permute.xlu0 %7903
  %7905 = vrot.lane.b32.xlu0 %v7632, 16
  %v7906 = vpop.permute.xlu0 %7905
  %7907 = vrot.lane.b32.xlu0 %v7634, 16
  %v7908 = vpop.permute.xlu0 %7907
  %7909 = vrot.lane.b32.xlu0 %v7636, 16
  %v7910 = vpop.permute.xlu0 %7909
  %7911 = vrot.lane.b32.xlu0 %v7638, 16
  %v7912 = vpop.permute.xlu0 %7911
  %7913 = vrot.lane.b32.xlu0 %v7640, 16
  %v7914 = vpop.permute.xlu0 %7913
  %7915 = vrot.lane.b32.xlu0 %v7642, 16
  %v7916 = vpop.permute.xlu0 %7915
  %7917 = vrot.lane.b32.xlu0 %v7644, 16
  %v7918 = vpop.permute.xlu0 %7917
  %7919 = vrot.lane.b32.xlu0 %v7646, 16
  %v7920 = vpop.permute.xlu0 %7919
  %7921 = vrot.lane.b32.xlu0 %v7648, 16
  %v7922 = vpop.permute.xlu0 %7921
  %7923 = vrot.lane.b32.xlu0 %v7647, 16
  %v7924 = vpop.permute.xlu0 %7923
  %v8063 = vsel %vm1899, %v6409, %v6961
  %v8064 = vsel %vm1899, %v6410, %v6963
  %v8065 = vsel %vm1899, %v6411, %v6965
  %v8066 = vsel %vm1899, %v6412, %v6967
  %v8067 = vsel %vm1899, %v6413, %v6969
  %v8068 = vsel %vm1899, %v6414, %v6971
  %v8069 = vsel %vm1899, %v6415, %v6973
  %v8070 = vsel %vm1899, %v6416, %v6975
  %v8071 = vsel %vm1899, %v6417, %v6977
  %v8072 = vsel %vm1899, %v6418, %v6979
  %v8073 = vsel %vm1899, %v6419, %v6981
  %v8074 = vsel %vm1899, %v6420, %v6983
  %v8075 = vsel %vm1899, %v6421, %v6985
  %v8076 = vsel %vm1899, %v6422, %v6987
  %v8077 = vsel %vm1899, %v6423, %v6989
  %v8078 = vsel %vm1899, %v6424, %v6991
  %v8079 = vsel %vm1899, %v6425, %v6993
  %v8080 = vsel %vm1899, %v6426, %v6995
  %v8081 = vsel %vm1899, %v6427, %v6997
  %v8082 = vsel %vm1899, %v6428, %v6999
  %v8083 = vsel %vm1899, %v6429, %v7001
  %v8084 = vsel %vm1899, %v6430, %v7003
  %v8085 = vsel %vm1899, %v6431, %v7005
  %v8086 = vsel %vm1899, %v6432, %v7007
  %v8087 = vsel %vm1899, %v6433, %v7009
  %v8088 = vsel %vm1899, %v6434, %v7011
  %v8089 = vsel %vm1899, %v6435, %v7013
  %v8090 = vsel %vm1899, %v6436, %v7015
  %v8091 = vsel %vm1899, %v6437, %v7017
  %v8092 = vsel %vm1899, %v6438, %v7019
  %v8093 = vsel %vm1899, %v6439, %v7021
  %v8094 = vsel %vm1899, %v6440, %v7023
  %v8095 = vsel %vm1899, %v6441, %v7025
  %v8096 = vsel %vm1899, %v6442, %v7027
  %v8097 = vsel %vm1899, %v6443, %v7029
  %v8098 = vsel %vm1899, %v6444, %v7031
  %v8099 = vsel %vm1899, %v6445, %v7033
  %v8100 = vsel %vm1899, %v6446, %v7035
  %v8101 = vsel %vm1899, %v6447, %v7037
  %v8102 = vsel %vm1899, %v6448, %v7039
  %v8103 = vsel %vm1899, %v6449, %v7041
  %v8104 = vsel %vm1899, %v6450, %v7043
  %v8105 = vsel %vm1899, %v6451, %v7045
  %v8106 = vsel %vm1899, %v6452, %v7047
  %v8107 = vsel %vm1899, %v6453, %v7049
  %v8108 = vsel %vm1899, %v6454, %v7051
  %v8109 = vsel %vm1899, %v6455, %v7053
  %v8110 = vsel %vm1899, %v6456, %v7055
  %v8111 = vsel %vm1899, %v6457, %v7057
  %v8112 = vsel %vm1899, %v6458, %v7059
  %v8113 = vsel %vm1899, %v6459, %v7061
  %v8114 = vsel %vm1899, %v6460, %v7063
  %v8115 = vsel %vm1899, %v6461, %v7065
  %v8116 = vsel %vm1899, %v6462, %v7067
  %v8117 = vsel %vm1899, %v6463, %v7069
  %v8118 = vsel %vm1899, %v6464, %v7071
  %v8119 = vsel %vm1899, %v6465, %v7073
  %v8120 = vsel %vm1899, %v6466, %v7075
  %v8121 = vsel %vm1899, %v6467, %v7077
  %v8122 = vsel %vm1899, %v6468, %v7079
  %v8123 = vsel %vm1899, %v6469, %v7081
  %v8124 = vsel %vm1899, %v6470, %v7083
  %v8125 = vsel %vm1899, %v6471, %v7085
  %v8126 = vsel %vm1899, %v6472, %v7087
  %v8127 = vsel %vm1899, %v6473, %v7089
  %v8128 = vsel %vm1899, %v6474, %v7091
  %v8129 = vsel %vm1899, %v6475, %v7093
  %v8130 = vsel %vm1899, %v6476, %v7095
  %v8131 = vsel %vm1899, %v6477, %v7097
  %v8132 = vsel %vm1899, %v6478, %v7099
  %v8133 = vsel %vm1899, %v6479, %v7101
  %v8134 = vsel %vm1899, %v6480, %v7103
  %v8135 = vsel %vm1899, %v6481, %v7105
  %v8136 = vsel %vm1899, %v6482, %v7107
  %v8137 = vsel %vm1899, %v6483, %v7109
  %v8138 = vsel %vm1899, %v6484, %v7111
  %v8139 = vsel %vm1899, %v6485, %v7113
  %v8140 = vsel %vm1899, %v6486, %v7115
  %v8141 = vsel %vm1899, %v6487, %v7117
  %v8142 = vsel %vm1899, %v6488, %v7119
  %v8143 = vsel %vm1899, %v6489, %v7121
  %v8144 = vsel %vm1899, %v6490, %v7123
  %v8145 = vsel %vm1899, %v6491, %v7125
  %v8146 = vsel %vm1899, %v6492, %v7127
  %v8147 = vsel %vm1899, %v6493, %v7129
  %v8148 = vsel %vm1899, %v6494, %v7131
  %v8149 = vsel %vm1899, %v6495, %v7133
  %v8150 = vsel %vm1899, %v6496, %v7135
  %v8151 = vsel %vm1899, %v6497, %v7137
  %v8152 = vsel %vm1899, %v6498, %v7139
  %v8153 = vsel %vm1899, %v6499, %v7141
  %v8154 = vsel %vm1899, %v6500, %v7143
  %v8155 = vsel %vm1899, %v6501, %v7145
  %v8156 = vsel %vm1899, %v6502, %v7147
  %v8157 = vsel %vm1899, %v6503, %v7149
  %v8158 = vsel %vm1899, %v6504, %v7151
  %v8159 = vsel %vm1899, %v6505, %v7153
  %v8160 = vsel %vm1899, %v6506, %v7155
  %v8161 = vsel %vm1899, %v6507, %v7157
  %v8162 = vsel %vm1899, %v6508, %v7159
  %v8163 = vsel %vm1899, %v6509, %v7161
  %v8164 = vsel %vm1899, %v6510, %v7163
  %v8165 = vsel %vm1899, %v6511, %v7165
  %v8166 = vsel %vm1899, %v6512, %v7167
  %v8167 = vsel %vm1899, %v6513, %v7169
  %v8168 = vsel %vm1899, %v6514, %v7171
  %v8169 = vsel %vm1899, %v6515, %v7173
  %v8170 = vsel %vm1899, %v6516, %v7175
  %v8171 = vsel %vm1899, %v6517, %v7177
  %v8172 = vsel %vm1899, %v6518, %v7179
  %v8173 = vsel %vm1899, %v6519, %v7181
  %v8174 = vsel %vm1899, %v6520, %v7183
  %v8175 = vsel %vm1899, %v6521, %v7185
  %v8176 = vsel %vm1899, %v6522, %v7187
  %v8177 = vsel %vm1899, %v6523, %v7189
  %v8178 = vsel %vm1899, %v6524, %v7191
  %v8179 = vsel %vm1899, %v6525, %v7193
  %v8180 = vsel %vm1899, %v6526, %v7195
  %v8181 = vsel %vm1899, %v6527, %v7197
  %v8182 = vsel %vm1899, %v6528, %v7199
  %v8183 = vsel %vm1899, %v6529, %v7201
  %v8184 = vsel %vm1899, %v6530, %v7203
  %v8185 = vsel %vm1899, %v6531, %v7205
  %v8186 = vsel %vm1899, %v6532, %v7207
  %v8187 = vsel %vm1899, %v6533, %v7209
  %v8188 = vsel %vm1899, %v6534, %v7211
  %v8189 = vsel %vm1899, %v6535, %v7213
  %v8190 = vsel %vm1899, %v6536, %v7215
  %v8191 = vsel %vm1899, %v6537, %v7217
  %v8192 = vsel %vm1899, %v6538, %v7219
  %v8193 = vsel %vm1899, %v6539, %v7221
  %v8194 = vsel %vm1899, %v6540, %v7223
  %v8195 = vsel %vm1899, %v6541, %v7225
  %v8196 = vsel %vm1899, %v6542, %v7227
  %v8197 = vsel %vm1899, %v6543, %v7229
  %v8198 = vsel %vm1899, %v6544, %v7231
  %v8199 = vsel %vm1899, %v6545, %v7233
  %v8200 = vsel %vm1899, %v6546, %v7235
  %vm8201 = vcmask 130048
  %v8202 = vsel %vm8201, %v8063, %v7650
  %v8203 = vsel %vm8201, %v8064, %v7652
  %v8204 = vsel %vm8201, %v8065, %v7654
  %v8205 = vsel %vm8201, %v8066, %v7656
  %v8206 = vsel %vm8201, %v8067, %v7658
  %v8207 = vsel %vm8201, %v8068, %v7660
  %v8208 = vsel %vm8201, %v8069, %v7662
  %v8209 = vsel %vm8201, %v8070, %v7664
  %v8210 = vsel %vm8201, %v8071, %v7666
  %v8211 = vsel %vm8201, %v8072, %v7668
  %v8212 = vsel %vm8201, %v8073, %v7670
  %v8213 = vsel %vm8201, %v8074, %v7672
  %v8214 = vsel %vm8201, %v8075, %v7674
  %v8215 = vsel %vm8201, %v8076, %v7676
  %v8216 = vsel %vm8201, %v8077, %v7678
  %v8217 = vsel %vm8201, %v8078, %v7680
  %v8218 = vsel %vm8201, %v8079, %v7682
  %v8219 = vsel %vm8201, %v8080, %v7684
  %v8220 = vsel %vm8201, %v8081, %v7686
  %v8221 = vsel %vm8201, %v8082, %v7688
  %v8222 = vsel %vm8201, %v8083, %v7690
  %v8223 = vsel %vm8201, %v8084, %v7692
  %v8224 = vsel %vm8201, %v8085, %v7694
  %v8225 = vsel %vm8201, %v8086, %v7696
  %v8226 = vsel %vm8201, %v8087, %v7698
  %v8227 = vsel %vm8201, %v8088, %v7700
  %v8228 = vsel %vm8201, %v8089, %v7702
  %v8229 = vsel %vm8201, %v8090, %v7704
  %v8230 = vsel %vm8201, %v8091, %v7706
  %v8231 = vsel %vm8201, %v8092, %v7708
  %v8232 = vsel %vm8201, %v8093, %v7710
  %v8233 = vsel %vm8201, %v8094, %v7712
  %v8234 = vsel %vm8201, %v8095, %v7714
  %v8235 = vsel %vm8201, %v8096, %v7716
  %v8236 = vsel %vm8201, %v8097, %v7718
  %v8237 = vsel %vm8201, %v8098, %v7720
  %v8238 = vsel %vm8201, %v8099, %v7722
  %v8239 = vsel %vm8201, %v8100, %v7724
  %v8240 = vsel %vm8201, %v8101, %v7726
  %v8241 = vsel %vm8201, %v8102, %v7728
  %v8242 = vsel %vm8201, %v8103, %v7730
  %v8243 = vsel %vm8201, %v8104, %v7732
  %v8244 = vsel %vm8201, %v8105, %v7734
  %v8245 = vsel %vm8201, %v8106, %v7736
  %v8246 = vsel %vm8201, %v8107, %v7738
  %v8247 = vsel %vm8201, %v8108, %v7740
  %v8248 = vsel %vm8201, %v8109, %v7742
  %v8249 = vsel %vm8201, %v8110, %v7744
  %v8250 = vsel %vm8201, %v8111, %v7746
  %v8251 = vsel %vm8201, %v8112, %v7748
  %v8252 = vsel %vm8201, %v8113, %v7750
  %v8253 = vsel %vm8201, %v8114, %v7752
  %v8254 = vsel %vm8201, %v8115, %v7754
  %v8255 = vsel %vm8201, %v8116, %v7756
  %v8256 = vsel %vm8201, %v8117, %v7758
  %v8257 = vsel %vm8201, %v8118, %v7760
  %v8258 = vsel %vm8201, %v8119, %v7762
  %v8259 = vsel %vm8201, %v8120, %v7764
  %v8260 = vsel %vm8201, %v8121, %v7766
  %v8261 = vsel %vm8201, %v8122, %v7768
  %v8262 = vsel %vm8201, %v8123, %v7770
  %v8263 = vsel %vm8201, %v8124, %v7772
  %v8264 = vsel %vm8201, %v8125, %v7774
  %v8265 = vsel %vm8201, %v8126, %v7776
  %v8266 = vsel %vm8201, %v8127, %v7778
  %v8267 = vsel %vm8201, %v8128, %v7780
  %v8268 = vsel %vm8201, %v8129, %v7782
  %v8269 = vsel %vm8201, %v8130, %v7784
  %v8270 = vsel %vm8201, %v8131, %v7786
  %v8271 = vsel %vm8201, %v8132, %v7788
  %v8272 = vsel %vm8201, %v8133, %v7790
  %v8273 = vsel %vm8201, %v8134, %v7792
  %v8274 = vsel %vm8201, %v8135, %v7794
  %v8275 = vsel %vm8201, %v8136, %v7796
  %v8276 = vsel %vm8201, %v8137, %v7798
  %v8277 = vsel %vm8201, %v8138, %v7800
  %v8278 = vsel %vm8201, %v8139, %v7802
  %v8279 = vsel %vm8201, %v8140, %v7804
  %v8280 = vsel %vm8201, %v8141, %v7806
  %v8281 = vsel %vm8201, %v8142, %v7808
  %v8282 = vsel %vm8201, %v8143, %v7810
  %v8283 = vsel %vm8201, %v8144, %v7812
  %v8284 = vsel %vm8201, %v8145, %v7814
  %v8285 = vsel %vm8201, %v8146, %v7816
  %v8286 = vsel %vm8201, %v8147, %v7818
  %v8287 = vsel %vm8201, %v8148, %v7820
  %v8288 = vsel %vm8201, %v8149, %v7822
  %v8289 = vsel %vm8201, %v8150, %v7824
  %v8290 = vsel %vm8201, %v8151, %v7826
  %v8291 = vsel %vm8201, %v8152, %v7828
  %v8292 = vsel %vm8201, %v8153, %v7830
  %v8293 = vsel %vm8201, %v8154, %v7832
  %v8294 = vsel %vm8201, %v8155, %v7834
  %v8295 = vsel %vm8201, %v8156, %v7836
  %v8296 = vsel %vm8201, %v8157, %v7838
  %v8297 = vsel %vm8201, %v8158, %v7840
  %v8298 = vsel %vm8201, %v8159, %v7842
  %v8299 = vsel %vm8201, %v8160, %v7844
  %v8300 = vsel %vm8201, %v8161, %v7846
  %v8301 = vsel %vm8201, %v8162, %v7848
  %v8302 = vsel %vm8201, %v8163, %v7850
  %v8303 = vsel %vm8201, %v8164, %v7852
  %v8304 = vsel %vm8201, %v8165, %v7854
  %v8305 = vsel %vm8201, %v8166, %v7856
  %v8306 = vsel %vm8201, %v8167, %v7858
  %v8307 = vsel %vm8201, %v8168, %v7860
  %v8308 = vsel %vm8201, %v8169, %v7862
  %v8309 = vsel %vm8201, %v8170, %v7864
  %v8310 = vsel %vm8201, %v8171, %v7866
  %v8311 = vsel %vm8201, %v8172, %v7868
  %v8312 = vsel %vm8201, %v8173, %v7870
  %v8313 = vsel %vm8201, %v8174, %v7872
  %v8314 = vsel %vm8201, %v8175, %v7874
  %v8315 = vsel %vm8201, %v8176, %v7876
  %v8316 = vsel %vm8201, %v8177, %v7878
  %v8317 = vsel %vm8201, %v8178, %v7880
  %v8318 = vsel %vm8201, %v8179, %v7882
  %v8319 = vsel %vm8201, %v8180, %v7884
  %v8320 = vsel %vm8201, %v8181, %v7886
  %v8321 = vsel %vm8201, %v8182, %v7888
  %v8322 = vsel %vm8201, %v8183, %v7890
  %v8323 = vsel %vm8201, %v8184, %v7892
  %v8324 = vsel %vm8201, %v8185, %v7894
  %v8325 = vsel %vm8201, %v8186, %v7896
  %v8326 = vsel %vm8201, %v8187, %v7898
  %v8327 = vsel %vm8201, %v8188, %v7900
  %v8328 = vsel %vm8201, %v8189, %v7902
  %v8329 = vsel %vm8201, %v8190, %v7904
  %v8330 = vsel %vm8201, %v8191, %v7906
  %v8331 = vsel %vm8201, %v8192, %v7908
  %v8332 = vsel %vm8201, %v8193, %v7910
  %v8333 = vsel %vm8201, %v8194, %v7912
  %v8334 = vsel %vm8201, %v8195, %v7914
  %v8335 = vsel %vm8201, %v8196, %v7916
  %v8336 = vsel %vm8201, %v8197, %v7918
  %v8337 = vsel %vm8201, %v8198, %v7920
  %v8338 = vsel %vm8201, %v8199, %v7922
  %v8339 = vsel %vm8201, %v8200, %v7924
  %8472 = vrot.lane.b32.xlu0 %v8205, 24
  %v8473 = vpop.permute.xlu0 %8472
  %8474 = vrot.lane.b32.xlu0 %v8206, 24
  %v8475 = vpop.permute.xlu0 %8474
  %8476 = vrot.lane.b32.xlu0 %v8207, 24
  %v8477 = vpop.permute.xlu0 %8476
  %8478 = vrot.lane.b32.xlu0 %v8208, 24
  %v8479 = vpop.permute.xlu0 %8478
  %8480 = vrot.lane.b32.xlu0 %v8209, 24
  %v8481 = vpop.permute.xlu0 %8480
  %8482 = vrot.lane.b32.xlu0 %v8210, 24
  %v8483 = vpop.permute.xlu0 %8482
  %8484 = vrot.lane.b32.xlu0 %v8211, 24
  %v8485 = vpop.permute.xlu0 %8484
  %8486 = vrot.lane.b32.xlu0 %v8212, 24
  %v8487 = vpop.permute.xlu0 %8486
  %8488 = vrot.lane.b32.xlu0 %v8213, 24
  %v8489 = vpop.permute.xlu0 %8488
  %8490 = vrot.lane.b32.xlu0 %v8214, 24
  %v8491 = vpop.permute.xlu0 %8490
  %8492 = vrot.lane.b32.xlu0 %v8215, 24
  %v8493 = vpop.permute.xlu0 %8492
  %8494 = vrot.lane.b32.xlu0 %v8216, 24
  %v8495 = vpop.permute.xlu0 %8494
  %8496 = vrot.lane.b32.xlu0 %v8217, 24
  %v8497 = vpop.permute.xlu0 %8496
  %8498 = vrot.lane.b32.xlu0 %v8218, 24
  %v8499 = vpop.permute.xlu0 %8498
  %8500 = vrot.lane.b32.xlu0 %v8219, 24
  %v8501 = vpop.permute.xlu0 %8500
  %8502 = vrot.lane.b32.xlu0 %v8220, 24
  %v8503 = vpop.permute.xlu0 %8502
  %8504 = vrot.lane.b32.xlu0 %v8221, 24
  %v8505 = vpop.permute.xlu0 %8504
  %8506 = vrot.lane.b32.xlu0 %v8222, 24
  %v8507 = vpop.permute.xlu0 %8506
  %8508 = vrot.lane.b32.xlu0 %v8223, 24
  %v8509 = vpop.permute.xlu0 %8508
  %8510 = vrot.lane.b32.xlu0 %v8224, 24
  %v8511 = vpop.permute.xlu0 %8510
  %8512 = vrot.lane.b32.xlu0 %v8225, 24
  %v8513 = vpop.permute.xlu0 %8512
  %8514 = vrot.lane.b32.xlu0 %v8226, 24
  %v8515 = vpop.permute.xlu0 %8514
  %8516 = vrot.lane.b32.xlu0 %v8227, 24
  %v8517 = vpop.permute.xlu0 %8516
  %8518 = vrot.lane.b32.xlu0 %v8228, 24
  %v8519 = vpop.permute.xlu0 %8518
  %8520 = vrot.lane.b32.xlu0 %v8229, 24
  %v8521 = vpop.permute.xlu0 %8520
  %8522 = vrot.lane.b32.xlu0 %v8230, 24
  %v8523 = vpop.permute.xlu0 %8522
  %8524 = vrot.lane.b32.xlu0 %v8231, 24
  %v8525 = vpop.permute.xlu0 %8524
  %8526 = vrot.lane.b32.xlu0 %v8232, 24
  %v8527 = vpop.permute.xlu0 %8526
  %8528 = vrot.lane.b32.xlu0 %v8233, 24
  %v8529 = vpop.permute.xlu0 %8528
  %8530 = vrot.lane.b32.xlu0 %v8234, 24
  %v8531 = vpop.permute.xlu0 %8530
  %8532 = vrot.lane.b32.xlu0 %v8235, 24
  %v8533 = vpop.permute.xlu0 %8532
  %8534 = vrot.lane.b32.xlu0 %v8236, 24
  %v8535 = vpop.permute.xlu0 %8534
  %8536 = vrot.lane.b32.xlu0 %v8237, 24
  %v8537 = vpop.permute.xlu0 %8536
  %8538 = vrot.lane.b32.xlu0 %v8238, 24
  %v8539 = vpop.permute.xlu0 %8538
  %8540 = vrot.lane.b32.xlu0 %v8239, 24
  %v8541 = vpop.permute.xlu0 %8540
  %8542 = vrot.lane.b32.xlu0 %v8240, 24
  %v8543 = vpop.permute.xlu0 %8542
  %8544 = vrot.lane.b32.xlu0 %v8241, 24
  %v8545 = vpop.permute.xlu0 %8544
  %8546 = vrot.lane.b32.xlu0 %v8242, 24
  %v8547 = vpop.permute.xlu0 %8546
  %8548 = vrot.lane.b32.xlu0 %v8243, 24
  %v8549 = vpop.permute.xlu0 %8548
  %8550 = vrot.lane.b32.xlu0 %v8244, 24
  %v8551 = vpop.permute.xlu0 %8550
  %8552 = vrot.lane.b32.xlu0 %v8245, 24
  %v8553 = vpop.permute.xlu0 %8552
  %8554 = vrot.lane.b32.xlu0 %v8246, 24
  %v8555 = vpop.permute.xlu0 %8554
  %8556 = vrot.lane.b32.xlu0 %v8247, 24
  %v8557 = vpop.permute.xlu0 %8556
  %8558 = vrot.lane.b32.xlu0 %v8248, 24
  %v8559 = vpop.permute.xlu0 %8558
  %8560 = vrot.lane.b32.xlu0 %v8249, 24
  %v8561 = vpop.permute.xlu0 %8560
  %8562 = vrot.lane.b32.xlu0 %v8250, 24
  %v8563 = vpop.permute.xlu0 %8562
  %8564 = vrot.lane.b32.xlu0 %v8251, 24
  %v8565 = vpop.permute.xlu0 %8564
  %8566 = vrot.lane.b32.xlu0 %v8252, 24
  %v8567 = vpop.permute.xlu0 %8566
  %8568 = vrot.lane.b32.xlu0 %v8253, 24
  %v8569 = vpop.permute.xlu0 %8568
  %8570 = vrot.lane.b32.xlu0 %v8254, 24
  %v8571 = vpop.permute.xlu0 %8570
  %8572 = vrot.lane.b32.xlu0 %v8255, 24
  %v8573 = vpop.permute.xlu0 %8572
  %8574 = vrot.lane.b32.xlu0 %v8256, 24
  %v8575 = vpop.permute.xlu0 %8574
  %8576 = vrot.lane.b32.xlu0 %v8257, 24
  %v8577 = vpop.permute.xlu0 %8576
  %8578 = vrot.lane.b32.xlu0 %v8258, 24
  %v8579 = vpop.permute.xlu0 %8578
  %8580 = vrot.lane.b32.xlu0 %v8259, 24
  %v8581 = vpop.permute.xlu0 %8580
  %8582 = vrot.lane.b32.xlu0 %v8260, 24
  %v8583 = vpop.permute.xlu0 %8582
  %8584 = vrot.lane.b32.xlu0 %v8261, 24
  %v8585 = vpop.permute.xlu0 %8584
  %8586 = vrot.lane.b32.xlu0 %v8262, 24
  %v8587 = vpop.permute.xlu0 %8586
  %8588 = vrot.lane.b32.xlu0 %v8263, 24
  %v8589 = vpop.permute.xlu0 %8588
  %8590 = vrot.lane.b32.xlu0 %v8264, 24
  %v8591 = vpop.permute.xlu0 %8590
  %8592 = vrot.lane.b32.xlu0 %v8265, 24
  %v8593 = vpop.permute.xlu0 %8592
  %8594 = vrot.lane.b32.xlu0 %v8266, 24
  %v8595 = vpop.permute.xlu0 %8594
  %8596 = vrot.lane.b32.xlu0 %v8267, 24
  %v8597 = vpop.permute.xlu0 %8596
  %8598 = vrot.lane.b32.xlu0 %v8268, 24
  %v8599 = vpop.permute.xlu0 %8598
  %8600 = vrot.lane.b32.xlu0 %v8269, 24
  %v8601 = vpop.permute.xlu0 %8600
  %8602 = vrot.lane.b32.xlu0 %v8270, 24
  %v8603 = vpop.permute.xlu0 %8602
  %8604 = vrot.lane.b32.xlu0 %v8271, 24
  %v8605 = vpop.permute.xlu0 %8604
  %8606 = vrot.lane.b32.xlu0 %v8272, 24
  %v8607 = vpop.permute.xlu0 %8606
  %8608 = vrot.lane.b32.xlu0 %v8273, 24
  %v8609 = vpop.permute.xlu0 %8608
  %8610 = vrot.lane.b32.xlu0 %v8274, 24
  %v8611 = vpop.permute.xlu0 %8610
  %8612 = vrot.lane.b32.xlu0 %v8275, 24
  %v8613 = vpop.permute.xlu0 %8612
  %8614 = vrot.lane.b32.xlu0 %v8276, 24
  %v8615 = vpop.permute.xlu0 %8614
  %8616 = vrot.lane.b32.xlu0 %v8277, 24
  %v8617 = vpop.permute.xlu0 %8616
  %8618 = vrot.lane.b32.xlu0 %v8278, 24
  %v8619 = vpop.permute.xlu0 %8618
  %8620 = vrot.lane.b32.xlu0 %v8279, 24
  %v8621 = vpop.permute.xlu0 %8620
  %8622 = vrot.lane.b32.xlu0 %v8280, 24
  %v8623 = vpop.permute.xlu0 %8622
  %8624 = vrot.lane.b32.xlu0 %v8281, 24
  %v8625 = vpop.permute.xlu0 %8624
  %8626 = vrot.lane.b32.xlu0 %v8282, 24
  %v8627 = vpop.permute.xlu0 %8626
  %8628 = vrot.lane.b32.xlu0 %v8283, 24
  %v8629 = vpop.permute.xlu0 %8628
  %8630 = vrot.lane.b32.xlu0 %v8284, 24
  %v8631 = vpop.permute.xlu0 %8630
  %8632 = vrot.lane.b32.xlu0 %v8285, 24
  %v8633 = vpop.permute.xlu0 %8632
  %8634 = vrot.lane.b32.xlu0 %v8286, 24
  %v8635 = vpop.permute.xlu0 %8634
  %8636 = vrot.lane.b32.xlu0 %v8287, 24
  %v8637 = vpop.permute.xlu0 %8636
  %8638 = vrot.lane.b32.xlu0 %v8288, 24
  %v8639 = vpop.permute.xlu0 %8638
  %8640 = vrot.lane.b32.xlu0 %v8289, 24
  %v8641 = vpop.permute.xlu0 %8640
  %8642 = vrot.lane.b32.xlu0 %v8290, 24
  %v8643 = vpop.permute.xlu0 %8642
  %8644 = vrot.lane.b32.xlu0 %v8291, 24
  %v8645 = vpop.permute.xlu0 %8644
  %8646 = vrot.lane.b32.xlu0 %v8292, 24
  %v8647 = vpop.permute.xlu0 %8646
  %8648 = vrot.lane.b32.xlu0 %v8293, 24
  %v8649 = vpop.permute.xlu0 %8648
  %8650 = vrot.lane.b32.xlu0 %v8294, 24
  %v8651 = vpop.permute.xlu0 %8650
  %8652 = vrot.lane.b32.xlu0 %v8295, 24
  %v8653 = vpop.permute.xlu0 %8652
  %8654 = vrot.lane.b32.xlu0 %v8296, 24
  %v8655 = vpop.permute.xlu0 %8654
  %8656 = vrot.lane.b32.xlu0 %v8297, 24
  %v8657 = vpop.permute.xlu0 %8656
  %8658 = vrot.lane.b32.xlu0 %v8298, 24
  %v8659 = vpop.permute.xlu0 %8658
  %8660 = vrot.lane.b32.xlu0 %v8299, 24
  %v8661 = vpop.permute.xlu0 %8660
  %8662 = vrot.lane.b32.xlu0 %v8300, 24
  %v8663 = vpop.permute.xlu0 %8662
  %8664 = vrot.lane.b32.xlu0 %v8301, 24
  %v8665 = vpop.permute.xlu0 %8664
  %8666 = vrot.lane.b32.xlu0 %v8302, 24
  %v8667 = vpop.permute.xlu0 %8666
  %8668 = vrot.lane.b32.xlu0 %v8303, 24
  %v8669 = vpop.permute.xlu0 %8668
  %8670 = vrot.lane.b32.xlu0 %v8304, 24
  %v8671 = vpop.permute.xlu0 %8670
  %8672 = vrot.lane.b32.xlu0 %v8305, 24
  %v8673 = vpop.permute.xlu0 %8672
  %8674 = vrot.lane.b32.xlu0 %v8306, 24
  %v8675 = vpop.permute.xlu0 %8674
  %8676 = vrot.lane.b32.xlu0 %v8307, 24
  %v8677 = vpop.permute.xlu0 %8676
  %8678 = vrot.lane.b32.xlu0 %v8308, 24
  %v8679 = vpop.permute.xlu0 %8678
  %8680 = vrot.lane.b32.xlu0 %v8309, 24
  %v8681 = vpop.permute.xlu0 %8680
  %8682 = vrot.lane.b32.xlu0 %v8310, 24
  %v8683 = vpop.permute.xlu0 %8682
  %8684 = vrot.lane.b32.xlu0 %v8311, 24
  %v8685 = vpop.permute.xlu0 %8684
  %8686 = vrot.lane.b32.xlu0 %v8312, 24
  %v8687 = vpop.permute.xlu0 %8686
  %8688 = vrot.lane.b32.xlu0 %v8313, 24
  %v8689 = vpop.permute.xlu0 %8688
  %8690 = vrot.lane.b32.xlu0 %v8314, 24
  %v8691 = vpop.permute.xlu0 %8690
  %8692 = vrot.lane.b32.xlu0 %v8315, 24
  %v8693 = vpop.permute.xlu0 %8692
  %8694 = vrot.lane.b32.xlu0 %v8316, 24
  %v8695 = vpop.permute.xlu0 %8694
  %8696 = vrot.lane.b32.xlu0 %v8317, 24
  %v8697 = vpop.permute.xlu0 %8696
  %8698 = vrot.lane.b32.xlu0 %v8318, 24
  %v8699 = vpop.permute.xlu0 %8698
  %8700 = vrot.lane.b32.xlu0 %v8319, 24
  %v8701 = vpop.permute.xlu0 %8700
  %8702 = vrot.lane.b32.xlu0 %v8320, 24
  %v8703 = vpop.permute.xlu0 %8702
  %8704 = vrot.lane.b32.xlu0 %v8321, 24
  %v8705 = vpop.permute.xlu0 %8704
  %8706 = vrot.lane.b32.xlu0 %v8322, 24
  %v8707 = vpop.permute.xlu0 %8706
  %8708 = vrot.lane.b32.xlu0 %v8323, 24
  %v8709 = vpop.permute.xlu0 %8708
  %8710 = vrot.lane.b32.xlu0 %v8324, 24
  %v8711 = vpop.permute.xlu0 %8710
  %8712 = vrot.lane.b32.xlu0 %v8325, 24
  %v8713 = vpop.permute.xlu0 %8712
  %8714 = vrot.lane.b32.xlu0 %v8326, 24
  %v8715 = vpop.permute.xlu0 %8714
  %8716 = vrot.lane.b32.xlu0 %v8327, 24
  %v8717 = vpop.permute.xlu0 %8716
  %8718 = vrot.lane.b32.xlu0 %v8328, 24
  %v8719 = vpop.permute.xlu0 %8718
  %8720 = vrot.lane.b32.xlu0 %v8329, 24
  %v8721 = vpop.permute.xlu0 %8720
  %8722 = vrot.lane.b32.xlu0 %v8330, 24
  %v8723 = vpop.permute.xlu0 %8722
  %8724 = vrot.lane.b32.xlu0 %v8331, 24
  %v8725 = vpop.permute.xlu0 %8724
  %8726 = vrot.lane.b32.xlu0 %v8332, 24
  %v8727 = vpop.permute.xlu0 %8726
  %8728 = vrot.lane.b32.xlu0 %v8333, 24
  %v8729 = vpop.permute.xlu0 %8728
  %8730 = vrot.lane.b32.xlu0 %v8334, 24
  %v8731 = vpop.permute.xlu0 %8730
  %8732 = vrot.lane.b32.xlu0 %v8335, 24
  %v8733 = vpop.permute.xlu0 %8732
  %8734 = vrot.lane.b32.xlu0 %v8336, 24
  %v8735 = vpop.permute.xlu0 %8734
  %8871 = vrot.lane.b32.xlu0 %v8208, 48
  %v8872 = vpop.permute.xlu0 %8871
  %8873 = vrot.lane.b32.xlu0 %v8209, 48
  %v8874 = vpop.permute.xlu0 %8873
  %8875 = vrot.lane.b32.xlu0 %v8210, 48
  %v8876 = vpop.permute.xlu0 %8875
  %8877 = vrot.lane.b32.xlu0 %v8211, 48
  %v8878 = vpop.permute.xlu0 %8877
  %8879 = vrot.lane.b32.xlu0 %v8212, 48
  %v8880 = vpop.permute.xlu0 %8879
  %8881 = vrot.lane.b32.xlu0 %v8213, 48
  %v8882 = vpop.permute.xlu0 %8881
  %8883 = vrot.lane.b32.xlu0 %v8214, 48
  %v8884 = vpop.permute.xlu0 %8883
  %8885 = vrot.lane.b32.xlu0 %v8215, 48
  %v8886 = vpop.permute.xlu0 %8885
  %8887 = vrot.lane.b32.xlu0 %v8216, 48
  %v8888 = vpop.permute.xlu0 %8887
  %8889 = vrot.lane.b32.xlu0 %v8217, 48
  %v8890 = vpop.permute.xlu0 %8889
  %8891 = vrot.lane.b32.xlu0 %v8218, 48
  %v8892 = vpop.permute.xlu0 %8891
  %8893 = vrot.lane.b32.xlu0 %v8219, 48
  %v8894 = vpop.permute.xlu0 %8893
  %8895 = vrot.lane.b32.xlu0 %v8220, 48
  %v8896 = vpop.permute.xlu0 %8895
  %8897 = vrot.lane.b32.xlu0 %v8221, 48
  %v8898 = vpop.permute.xlu0 %8897
  %8899 = vrot.lane.b32.xlu0 %v8222, 48
  %v8900 = vpop.permute.xlu0 %8899
  %8901 = vrot.lane.b32.xlu0 %v8223, 48
  %v8902 = vpop.permute.xlu0 %8901
  %8903 = vrot.lane.b32.xlu0 %v8224, 48
  %v8904 = vpop.permute.xlu0 %8903
  %8905 = vrot.lane.b32.xlu0 %v8225, 48
  %v8906 = vpop.permute.xlu0 %8905
  %8907 = vrot.lane.b32.xlu0 %v8226, 48
  %v8908 = vpop.permute.xlu0 %8907
  %8909 = vrot.lane.b32.xlu0 %v8227, 48
  %v8910 = vpop.permute.xlu0 %8909
  %8911 = vrot.lane.b32.xlu0 %v8228, 48
  %v8912 = vpop.permute.xlu0 %8911
  %8913 = vrot.lane.b32.xlu0 %v8229, 48
  %v8914 = vpop.permute.xlu0 %8913
  %8915 = vrot.lane.b32.xlu0 %v8230, 48
  %v8916 = vpop.permute.xlu0 %8915
  %8917 = vrot.lane.b32.xlu0 %v8231, 48
  %v8918 = vpop.permute.xlu0 %8917
  %8919 = vrot.lane.b32.xlu0 %v8232, 48
  %v8920 = vpop.permute.xlu0 %8919
  %8921 = vrot.lane.b32.xlu0 %v8233, 48
  %v8922 = vpop.permute.xlu0 %8921
  %8923 = vrot.lane.b32.xlu0 %v8234, 48
  %v8924 = vpop.permute.xlu0 %8923
  %8925 = vrot.lane.b32.xlu0 %v8235, 48
  %v8926 = vpop.permute.xlu0 %8925
  %8927 = vrot.lane.b32.xlu0 %v8236, 48
  %v8928 = vpop.permute.xlu0 %8927
  %8929 = vrot.lane.b32.xlu0 %v8237, 48
  %v8930 = vpop.permute.xlu0 %8929
  %8931 = vrot.lane.b32.xlu0 %v8238, 48
  %v8932 = vpop.permute.xlu0 %8931
  %8933 = vrot.lane.b32.xlu0 %v8239, 48
  %v8934 = vpop.permute.xlu0 %8933
  %8935 = vrot.lane.b32.xlu0 %v8240, 48
  %v8936 = vpop.permute.xlu0 %8935
  %8937 = vrot.lane.b32.xlu0 %v8241, 48
  %v8938 = vpop.permute.xlu0 %8937
  %8939 = vrot.lane.b32.xlu0 %v8242, 48
  %v8940 = vpop.permute.xlu0 %8939
  %8941 = vrot.lane.b32.xlu0 %v8243, 48
  %v8942 = vpop.permute.xlu0 %8941
  %8943 = vrot.lane.b32.xlu0 %v8244, 48
  %v8944 = vpop.permute.xlu0 %8943
  %8945 = vrot.lane.b32.xlu0 %v8245, 48
  %v8946 = vpop.permute.xlu0 %8945
  %8947 = vrot.lane.b32.xlu0 %v8246, 48
  %v8948 = vpop.permute.xlu0 %8947
  %8949 = vrot.lane.b32.xlu0 %v8247, 48
  %v8950 = vpop.permute.xlu0 %8949
  %8951 = vrot.lane.b32.xlu0 %v8248, 48
  %v8952 = vpop.permute.xlu0 %8951
  %8953 = vrot.lane.b32.xlu0 %v8249, 48
  %v8954 = vpop.permute.xlu0 %8953
  %8955 = vrot.lane.b32.xlu0 %v8250, 48
  %v8956 = vpop.permute.xlu0 %8955
  %8957 = vrot.lane.b32.xlu0 %v8251, 48
  %v8958 = vpop.permute.xlu0 %8957
  %8959 = vrot.lane.b32.xlu0 %v8252, 48
  %v8960 = vpop.permute.xlu0 %8959
  %8961 = vrot.lane.b32.xlu0 %v8253, 48
  %v8962 = vpop.permute.xlu0 %8961
  %8963 = vrot.lane.b32.xlu0 %v8254, 48
  %v8964 = vpop.permute.xlu0 %8963
  %8965 = vrot.lane.b32.xlu0 %v8255, 48
  %v8966 = vpop.permute.xlu0 %8965
  %8967 = vrot.lane.b32.xlu0 %v8256, 48
  %v8968 = vpop.permute.xlu0 %8967
  %8969 = vrot.lane.b32.xlu0 %v8257, 48
  %v8970 = vpop.permute.xlu0 %8969
  %8971 = vrot.lane.b32.xlu0 %v8258, 48
  %v8972 = vpop.permute.xlu0 %8971
  %8973 = vrot.lane.b32.xlu0 %v8259, 48
  %v8974 = vpop.permute.xlu0 %8973
  %8975 = vrot.lane.b32.xlu0 %v8260, 48
  %v8976 = vpop.permute.xlu0 %8975
  %8977 = vrot.lane.b32.xlu0 %v8261, 48
  %v8978 = vpop.permute.xlu0 %8977
  %8979 = vrot.lane.b32.xlu0 %v8262, 48
  %v8980 = vpop.permute.xlu0 %8979
  %8981 = vrot.lane.b32.xlu0 %v8263, 48
  %v8982 = vpop.permute.xlu0 %8981
  %8983 = vrot.lane.b32.xlu0 %v8264, 48
  %v8984 = vpop.permute.xlu0 %8983
  %8985 = vrot.lane.b32.xlu0 %v8265, 48
  %v8986 = vpop.permute.xlu0 %8985
  %8987 = vrot.lane.b32.xlu0 %v8266, 48
  %v8988 = vpop.permute.xlu0 %8987
  %8989 = vrot.lane.b32.xlu0 %v8267, 48
  %v8990 = vpop.permute.xlu0 %8989
  %8991 = vrot.lane.b32.xlu0 %v8268, 48
  %v8992 = vpop.permute.xlu0 %8991
  %8993 = vrot.lane.b32.xlu0 %v8269, 48
  %v8994 = vpop.permute.xlu0 %8993
  %8995 = vrot.lane.b32.xlu0 %v8270, 48
  %v8996 = vpop.permute.xlu0 %8995
  %8997 = vrot.lane.b32.xlu0 %v8271, 48
  %v8998 = vpop.permute.xlu0 %8997
  %8999 = vrot.lane.b32.xlu0 %v8272, 48
  %v9000 = vpop.permute.xlu0 %8999
  %9001 = vrot.lane.b32.xlu0 %v8273, 48
  %v9002 = vpop.permute.xlu0 %9001
  %9003 = vrot.lane.b32.xlu0 %v8274, 48
  %v9004 = vpop.permute.xlu0 %9003
  %9005 = vrot.lane.b32.xlu0 %v8275, 48
  %v9006 = vpop.permute.xlu0 %9005
  %9007 = vrot.lane.b32.xlu0 %v8276, 48
  %v9008 = vpop.permute.xlu0 %9007
  %9009 = vrot.lane.b32.xlu0 %v8277, 48
  %v9010 = vpop.permute.xlu0 %9009
  %9011 = vrot.lane.b32.xlu0 %v8278, 48
  %v9012 = vpop.permute.xlu0 %9011
  %9013 = vrot.lane.b32.xlu0 %v8279, 48
  %v9014 = vpop.permute.xlu0 %9013
  %9015 = vrot.lane.b32.xlu0 %v8280, 48
  %v9016 = vpop.permute.xlu0 %9015
  %9017 = vrot.lane.b32.xlu0 %v8281, 48
  %v9018 = vpop.permute.xlu0 %9017
  %9019 = vrot.lane.b32.xlu0 %v8282, 48
  %v9020 = vpop.permute.xlu0 %9019
  %9021 = vrot.lane.b32.xlu0 %v8283, 48
  %v9022 = vpop.permute.xlu0 %9021
  %9023 = vrot.lane.b32.xlu0 %v8284, 48
  %v9024 = vpop.permute.xlu0 %9023
  %9025 = vrot.lane.b32.xlu0 %v8285, 48
  %v9026 = vpop.permute.xlu0 %9025
  %9027 = vrot.lane.b32.xlu0 %v8286, 48
  %v9028 = vpop.permute.xlu0 %9027
  %9029 = vrot.lane.b32.xlu0 %v8287, 48
  %v9030 = vpop.permute.xlu0 %9029
  %9031 = vrot.lane.b32.xlu0 %v8288, 48
  %v9032 = vpop.permute.xlu0 %9031
  %9033 = vrot.lane.b32.xlu0 %v8289, 48
  %v9034 = vpop.permute.xlu0 %9033
  %9035 = vrot.lane.b32.xlu0 %v8290, 48
  %v9036 = vpop.permute.xlu0 %9035
  %9037 = vrot.lane.b32.xlu0 %v8291, 48
  %v9038 = vpop.permute.xlu0 %9037
  %9039 = vrot.lane.b32.xlu0 %v8292, 48
  %v9040 = vpop.permute.xlu0 %9039
  %9041 = vrot.lane.b32.xlu0 %v8293, 48
  %v9042 = vpop.permute.xlu0 %9041
  %9043 = vrot.lane.b32.xlu0 %v8294, 48
  %v9044 = vpop.permute.xlu0 %9043
  %9045 = vrot.lane.b32.xlu0 %v8295, 48
  %v9046 = vpop.permute.xlu0 %9045
  %9047 = vrot.lane.b32.xlu0 %v8296, 48
  %v9048 = vpop.permute.xlu0 %9047
  %9049 = vrot.lane.b32.xlu0 %v8297, 48
  %v9050 = vpop.permute.xlu0 %9049
  %9051 = vrot.lane.b32.xlu0 %v8298, 48
  %v9052 = vpop.permute.xlu0 %9051
  %9053 = vrot.lane.b32.xlu0 %v8299, 48
  %v9054 = vpop.permute.xlu0 %9053
  %9055 = vrot.lane.b32.xlu0 %v8300, 48
  %v9056 = vpop.permute.xlu0 %9055
  %9057 = vrot.lane.b32.xlu0 %v8301, 48
  %v9058 = vpop.permute.xlu0 %9057
  %9059 = vrot.lane.b32.xlu0 %v8302, 48
  %v9060 = vpop.permute.xlu0 %9059
  %9061 = vrot.lane.b32.xlu0 %v8303, 48
  %v9062 = vpop.permute.xlu0 %9061
  %9063 = vrot.lane.b32.xlu0 %v8304, 48
  %v9064 = vpop.permute.xlu0 %9063
  %9065 = vrot.lane.b32.xlu0 %v8305, 48
  %v9066 = vpop.permute.xlu0 %9065
  %9067 = vrot.lane.b32.xlu0 %v8306, 48
  %v9068 = vpop.permute.xlu0 %9067
  %9069 = vrot.lane.b32.xlu0 %v8307, 48
  %v9070 = vpop.permute.xlu0 %9069
  %9071 = vrot.lane.b32.xlu0 %v8308, 48
  %v9072 = vpop.permute.xlu0 %9071
  %9073 = vrot.lane.b32.xlu0 %v8309, 48
  %v9074 = vpop.permute.xlu0 %9073
  %9075 = vrot.lane.b32.xlu0 %v8310, 48
  %v9076 = vpop.permute.xlu0 %9075
  %9077 = vrot.lane.b32.xlu0 %v8311, 48
  %v9078 = vpop.permute.xlu0 %9077
  %9079 = vrot.lane.b32.xlu0 %v8312, 48
  %v9080 = vpop.permute.xlu0 %9079
  %9081 = vrot.lane.b32.xlu0 %v8313, 48
  %v9082 = vpop.permute.xlu0 %9081
  %9083 = vrot.lane.b32.xlu0 %v8314, 48
  %v9084 = vpop.permute.xlu0 %9083
  %9085 = vrot.lane.b32.xlu0 %v8315, 48
  %v9086 = vpop.permute.xlu0 %9085
  %9087 = vrot.lane.b32.xlu0 %v8316, 48
  %v9088 = vpop.permute.xlu0 %9087
  %9089 = vrot.lane.b32.xlu0 %v8317, 48
  %v9090 = vpop.permute.xlu0 %9089
  %9091 = vrot.lane.b32.xlu0 %v8318, 48
  %v9092 = vpop.permute.xlu0 %9091
  %9093 = vrot.lane.b32.xlu0 %v8319, 48
  %v9094 = vpop.permute.xlu0 %9093
  %9095 = vrot.lane.b32.xlu0 %v8320, 48
  %v9096 = vpop.permute.xlu0 %9095
  %9097 = vrot.lane.b32.xlu0 %v8321, 48
  %v9098 = vpop.permute.xlu0 %9097
  %9099 = vrot.lane.b32.xlu0 %v8322, 48
  %v9100 = vpop.permute.xlu0 %9099
  %9101 = vrot.lane.b32.xlu0 %v8323, 48
  %v9102 = vpop.permute.xlu0 %9101
  %9103 = vrot.lane.b32.xlu0 %v8324, 48
  %v9104 = vpop.permute.xlu0 %9103
  %9105 = vrot.lane.b32.xlu0 %v8325, 48
  %v9106 = vpop.permute.xlu0 %9105
  %9107 = vrot.lane.b32.xlu0 %v8326, 48
  %v9108 = vpop.permute.xlu0 %9107
  %9109 = vrot.lane.b32.xlu0 %v8327, 48
  %v9110 = vpop.permute.xlu0 %9109
  %9111 = vrot.lane.b32.xlu0 %v8328, 48
  %v9112 = vpop.permute.xlu0 %9111
  %9113 = vrot.lane.b32.xlu0 %v8329, 48
  %v9114 = vpop.permute.xlu0 %9113
  %9115 = vrot.lane.b32.xlu0 %v8330, 48
  %v9116 = vpop.permute.xlu0 %9115
  %9117 = vrot.lane.b32.xlu0 %v8331, 48
  %v9118 = vpop.permute.xlu0 %9117
  %9119 = vrot.lane.b32.xlu0 %v8332, 48
  %v9120 = vpop.permute.xlu0 %9119
  %9121 = vrot.lane.b32.xlu0 %v8333, 48
  %v9122 = vpop.permute.xlu0 %9121
  %9123 = vrot.lane.b32.xlu0 %v8334, 48
  %v9124 = vpop.permute.xlu0 %9123
  %9125 = vrot.lane.b32.xlu0 %v8335, 48
  %v9126 = vpop.permute.xlu0 %9125
  %9127 = vrot.lane.b32.xlu0 %v8336, 48
  %v9128 = vpop.permute.xlu0 %9127
  %9129 = vrot.lane.b32.xlu0 %v8337, 48
  %v9130 = vpop.permute.xlu0 %9129
  %9131 = vrot.lane.b32.xlu0 %v8338, 48
  %v9132 = vpop.permute.xlu0 %9131
  %9133 = vrot.lane.b32.xlu0 %v8339, 48
  %v9134 = vpop.permute.xlu0 %9133
  %v9267 = vsel %vm3152, %v8202, %v8473
  %v9268 = vsel %vm3152, %v8203, %v8475
  %v9269 = vsel %vm3152, %v8204, %v8477
  %v9270 = vsel %vm3152, %v8205, %v8479
  %v9271 = vsel %vm3152, %v8206, %v8481
  %v9272 = vsel %vm3152, %v8207, %v8483
  %v9273 = vsel %vm3152, %v8208, %v8485
  %v9274 = vsel %vm3152, %v8209, %v8487
  %v9275 = vsel %vm3152, %v8210, %v8489
  %v9276 = vsel %vm3152, %v8211, %v8491
  %v9277 = vsel %vm3152, %v8212, %v8493
  %v9278 = vsel %vm3152, %v8213, %v8495
  %v9279 = vsel %vm3152, %v8214, %v8497
  %v9280 = vsel %vm3152, %v8215, %v8499
  %v9281 = vsel %vm3152, %v8216, %v8501
  %v9282 = vsel %vm3152, %v8217, %v8503
  %v9283 = vsel %vm3152, %v8218, %v8505
  %v9284 = vsel %vm3152, %v8219, %v8507
  %v9285 = vsel %vm3152, %v8220, %v8509
  %v9286 = vsel %vm3152, %v8221, %v8511
  %v9287 = vsel %vm3152, %v8222, %v8513
  %v9288 = vsel %vm3152, %v8223, %v8515
  %v9289 = vsel %vm3152, %v8224, %v8517
  %v9290 = vsel %vm3152, %v8225, %v8519
  %v9291 = vsel %vm3152, %v8226, %v8521
  %v9292 = vsel %vm3152, %v8227, %v8523
  %v9293 = vsel %vm3152, %v8228, %v8525
  %v9294 = vsel %vm3152, %v8229, %v8527
  %v9295 = vsel %vm3152, %v8230, %v8529
  %v9296 = vsel %vm3152, %v8231, %v8531
  %v9297 = vsel %vm3152, %v8232, %v8533
  %v9298 = vsel %vm3152, %v8233, %v8535
  %v9299 = vsel %vm3152, %v8234, %v8537
  %v9300 = vsel %vm3152, %v8235, %v8539
  %v9301 = vsel %vm3152, %v8236, %v8541
  %v9302 = vsel %vm3152, %v8237, %v8543
  %v9303 = vsel %vm3152, %v8238, %v8545
  %v9304 = vsel %vm3152, %v8239, %v8547
  %v9305 = vsel %vm3152, %v8240, %v8549
  %v9306 = vsel %vm3152, %v8241, %v8551
  %v9307 = vsel %vm3152, %v8242, %v8553
  %v9308 = vsel %vm3152, %v8243, %v8555
  %v9309 = vsel %vm3152, %v8244, %v8557
  %v9310 = vsel %vm3152, %v8245, %v8559
  %v9311 = vsel %vm3152, %v8246, %v8561
  %v9312 = vsel %vm3152, %v8247, %v8563
  %v9313 = vsel %vm3152, %v8248, %v8565
  %v9314 = vsel %vm3152, %v8249, %v8567
  %v9315 = vsel %vm3152, %v8250, %v8569
  %v9316 = vsel %vm3152, %v8251, %v8571
  %v9317 = vsel %vm3152, %v8252, %v8573
  %v9318 = vsel %vm3152, %v8253, %v8575
  %v9319 = vsel %vm3152, %v8254, %v8577
  %v9320 = vsel %vm3152, %v8255, %v8579
  %v9321 = vsel %vm3152, %v8256, %v8581
  %v9322 = vsel %vm3152, %v8257, %v8583
  %v9323 = vsel %vm3152, %v8258, %v8585
  %v9324 = vsel %vm3152, %v8259, %v8587
  %v9325 = vsel %vm3152, %v8260, %v8589
  %v9326 = vsel %vm3152, %v8261, %v8591
  %v9327 = vsel %vm3152, %v8262, %v8593
  %v9328 = vsel %vm3152, %v8263, %v8595
  %v9329 = vsel %vm3152, %v8264, %v8597
  %v9330 = vsel %vm3152, %v8265, %v8599
  %v9331 = vsel %vm3152, %v8266, %v8601
  %v9332 = vsel %vm3152, %v8267, %v8603
  %v9333 = vsel %vm3152, %v8268, %v8605
  %v9334 = vsel %vm3152, %v8269, %v8607
  %v9335 = vsel %vm3152, %v8270, %v8609
  %v9336 = vsel %vm3152, %v8271, %v8611
  %v9337 = vsel %vm3152, %v8272, %v8613
  %v9338 = vsel %vm3152, %v8273, %v8615
  %v9339 = vsel %vm3152, %v8274, %v8617
  %v9340 = vsel %vm3152, %v8275, %v8619
  %v9341 = vsel %vm3152, %v8276, %v8621
  %v9342 = vsel %vm3152, %v8277, %v8623
  %v9343 = vsel %vm3152, %v8278, %v8625
  %v9344 = vsel %vm3152, %v8279, %v8627
  %v9345 = vsel %vm3152, %v8280, %v8629
  %v9346 = vsel %vm3152, %v8281, %v8631
  %v9347 = vsel %vm3152, %v8282, %v8633
  %v9348 = vsel %vm3152, %v8283, %v8635
  %v9349 = vsel %vm3152, %v8284, %v8637
  %v9350 = vsel %vm3152, %v8285, %v8639
  %v9351 = vsel %vm3152, %v8286, %v8641
  %v9352 = vsel %vm3152, %v8287, %v8643
  %v9353 = vsel %vm3152, %v8288, %v8645
  %v9354 = vsel %vm3152, %v8289, %v8647
  %v9355 = vsel %vm3152, %v8290, %v8649
  %v9356 = vsel %vm3152, %v8291, %v8651
  %v9357 = vsel %vm3152, %v8292, %v8653
  %v9358 = vsel %vm3152, %v8293, %v8655
  %v9359 = vsel %vm3152, %v8294, %v8657
  %v9360 = vsel %vm3152, %v8295, %v8659
  %v9361 = vsel %vm3152, %v8296, %v8661
  %v9362 = vsel %vm3152, %v8297, %v8663
  %v9363 = vsel %vm3152, %v8298, %v8665
  %v9364 = vsel %vm3152, %v8299, %v8667
  %v9365 = vsel %vm3152, %v8300, %v8669
  %v9366 = vsel %vm3152, %v8301, %v8671
  %v9367 = vsel %vm3152, %v8302, %v8673
  %v9368 = vsel %vm3152, %v8303, %v8675
  %v9369 = vsel %vm3152, %v8304, %v8677
  %v9370 = vsel %vm3152, %v8305, %v8679
  %v9371 = vsel %vm3152, %v8306, %v8681
  %v9372 = vsel %vm3152, %v8307, %v8683
  %v9373 = vsel %vm3152, %v8308, %v8685
  %v9374 = vsel %vm3152, %v8309, %v8687
  %v9375 = vsel %vm3152, %v8310, %v8689
  %v9376 = vsel %vm3152, %v8311, %v8691
  %v9377 = vsel %vm3152, %v8312, %v8693
  %v9378 = vsel %vm3152, %v8313, %v8695
  %v9379 = vsel %vm3152, %v8314, %v8697
  %v9380 = vsel %vm3152, %v8315, %v8699
  %v9381 = vsel %vm3152, %v8316, %v8701
  %v9382 = vsel %vm3152, %v8317, %v8703
  %v9383 = vsel %vm3152, %v8318, %v8705
  %v9384 = vsel %vm3152, %v8319, %v8707
  %v9385 = vsel %vm3152, %v8320, %v8709
  %v9386 = vsel %vm3152, %v8321, %v8711
  %v9387 = vsel %vm3152, %v8322, %v8713
  %v9388 = vsel %vm3152, %v8323, %v8715
  %v9389 = vsel %vm3152, %v8324, %v8717
  %v9390 = vsel %vm3152, %v8325, %v8719
  %v9391 = vsel %vm3152, %v8326, %v8721
  %v9392 = vsel %vm3152, %v8327, %v8723
  %v9393 = vsel %vm3152, %v8328, %v8725
  %v9394 = vsel %vm3152, %v8329, %v8727
  %v9395 = vsel %vm3152, %v8330, %v8729
  %v9396 = vsel %vm3152, %v8331, %v8731
  %v9397 = vsel %vm3152, %v8332, %v8733
  %v9398 = vsel %vm3152, %v8333, %v8735
  %vm9399 = vcmask 392192
  %v9400 = vsel %vm9399, %v9267, %v8872
  %v9401 = vsel %vm9399, %v9268, %v8874
  %v9402 = vsel %vm9399, %v9269, %v8876
  %v9403 = vsel %vm9399, %v9270, %v8878
  %v9404 = vsel %vm9399, %v9271, %v8880
  %v9405 = vsel %vm9399, %v9272, %v8882
  %v9406 = vsel %vm9399, %v9273, %v8884
  %v9407 = vsel %vm9399, %v9274, %v8886
  %v9408 = vsel %vm9399, %v9275, %v8888
  %v9409 = vsel %vm9399, %v9276, %v8890
  %v9410 = vsel %vm9399, %v9277, %v8892
  %v9411 = vsel %vm9399, %v9278, %v8894
  %v9412 = vsel %vm9399, %v9279, %v8896
  %v9413 = vsel %vm9399, %v9280, %v8898
  %v9414 = vsel %vm9399, %v9281, %v8900
  %v9415 = vsel %vm9399, %v9282, %v8902
  %v9416 = vsel %vm9399, %v9283, %v8904
  %v9417 = vsel %vm9399, %v9284, %v8906
  %v9418 = vsel %vm9399, %v9285, %v8908
  %v9419 = vsel %vm9399, %v9286, %v8910
  %v9420 = vsel %vm9399, %v9287, %v8912
  %v9421 = vsel %vm9399, %v9288, %v8914
  %v9422 = vsel %vm9399, %v9289, %v8916
  %v9423 = vsel %vm9399, %v9290, %v8918
  %v9424 = vsel %vm9399, %v9291, %v8920
  %v9425 = vsel %vm9399, %v9292, %v8922
  %v9426 = vsel %vm9399, %v9293, %v8924
  %v9427 = vsel %vm9399, %v9294, %v8926
  %v9428 = vsel %vm9399, %v9295, %v8928
  %v9429 = vsel %vm9399, %v9296, %v8930
  %v9430 = vsel %vm9399, %v9297, %v8932
  %v9431 = vsel %vm9399, %v9298, %v8934
  %v9432 = vsel %vm9399, %v9299, %v8936
  %v9433 = vsel %vm9399, %v9300, %v8938
  %v9434 = vsel %vm9399, %v9301, %v8940
  %v9435 = vsel %vm9399, %v9302, %v8942
  %v9436 = vsel %vm9399, %v9303, %v8944
  %v9437 = vsel %vm9399, %v9304, %v8946
  %v9438 = vsel %vm9399, %v9305, %v8948
  %v9439 = vsel %vm9399, %v9306, %v8950
  %v9440 = vsel %vm9399, %v9307, %v8952
  %v9441 = vsel %vm9399, %v9308, %v8954
  %v9442 = vsel %vm9399, %v9309, %v8956
  %v9443 = vsel %vm9399, %v9310, %v8958
  %v9444 = vsel %vm9399, %v9311, %v8960
  %v9445 = vsel %vm9399, %v9312, %v8962
  %v9446 = vsel %vm9399, %v9313, %v8964
  %v9447 = vsel %vm9399, %v9314, %v8966
  %v9448 = vsel %vm9399, %v9315, %v8968
  %v9449 = vsel %vm9399, %v9316, %v8970
  %v9450 = vsel %vm9399, %v9317, %v8972
  %v9451 = vsel %vm9399, %v9318, %v8974
  %v9452 = vsel %vm9399, %v9319, %v8976
  %v9453 = vsel %vm9399, %v9320, %v8978
  %v9454 = vsel %vm9399, %v9321, %v8980
  %v9455 = vsel %vm9399, %v9322, %v8982
  %v9456 = vsel %vm9399, %v9323, %v8984
  %v9457 = vsel %vm9399, %v9324, %v8986
  %v9458 = vsel %vm9399, %v9325, %v8988
  %v9459 = vsel %vm9399, %v9326, %v8990
  %v9460 = vsel %vm9399, %v9327, %v8992
  %v9461 = vsel %vm9399, %v9328, %v8994
  %v9462 = vsel %vm9399, %v9329, %v8996
  %v9463 = vsel %vm9399, %v9330, %v8998
  %v9464 = vsel %vm9399, %v9331, %v9000
  %v9465 = vsel %vm9399, %v9332, %v9002
  %v9466 = vsel %vm9399, %v9333, %v9004
  %v9467 = vsel %vm9399, %v9334, %v9006
  %v9468 = vsel %vm9399, %v9335, %v9008
  %v9469 = vsel %vm9399, %v9336, %v9010
  %v9470 = vsel %vm9399, %v9337, %v9012
  %v9471 = vsel %vm9399, %v9338, %v9014
  %v9472 = vsel %vm9399, %v9339, %v9016
  %v9473 = vsel %vm9399, %v9340, %v9018
  %v9474 = vsel %vm9399, %v9341, %v9020
  %v9475 = vsel %vm9399, %v9342, %v9022
  %v9476 = vsel %vm9399, %v9343, %v9024
  %v9477 = vsel %vm9399, %v9344, %v9026
  %v9478 = vsel %vm9399, %v9345, %v9028
  %v9479 = vsel %vm9399, %v9346, %v9030
  %v9480 = vsel %vm9399, %v9347, %v9032
  %v9481 = vsel %vm9399, %v9348, %v9034
  %v9482 = vsel %vm9399, %v9349, %v9036
  %v9483 = vsel %vm9399, %v9350, %v9038
  %v9484 = vsel %vm9399, %v9351, %v9040
  %v9485 = vsel %vm9399, %v9352, %v9042
  %v9486 = vsel %vm9399, %v9353, %v9044
  %v9487 = vsel %vm9399, %v9354, %v9046
  %v9488 = vsel %vm9399, %v9355, %v9048
  %v9489 = vsel %vm9399, %v9356, %v9050
  %v9490 = vsel %vm9399, %v9357, %v9052
  %v9491 = vsel %vm9399, %v9358, %v9054
  %v9492 = vsel %vm9399, %v9359, %v9056
  %v9493 = vsel %vm9399, %v9360, %v9058
  %v9494 = vsel %vm9399, %v9361, %v9060
  %v9495 = vsel %vm9399, %v9362, %v9062
  %v9496 = vsel %vm9399, %v9363, %v9064
  %v9497 = vsel %vm9399, %v9364, %v9066
  %v9498 = vsel %vm9399, %v9365, %v9068
  %v9499 = vsel %vm9399, %v9366, %v9070
  %v9500 = vsel %vm9399, %v9367, %v9072
  %v9501 = vsel %vm9399, %v9368, %v9074
  %v9502 = vsel %vm9399, %v9369, %v9076
  %v9503 = vsel %vm9399, %v9370, %v9078
  %v9504 = vsel %vm9399, %v9371, %v9080
  %v9505 = vsel %vm9399, %v9372, %v9082
  %v9506 = vsel %vm9399, %v9373, %v9084
  %v9507 = vsel %vm9399, %v9374, %v9086
  %v9508 = vsel %vm9399, %v9375, %v9088
  %v9509 = vsel %vm9399, %v9376, %v9090
  %v9510 = vsel %vm9399, %v9377, %v9092
  %v9511 = vsel %vm9399, %v9378, %v9094
  %v9512 = vsel %vm9399, %v9379, %v9096
  %v9513 = vsel %vm9399, %v9380, %v9098
  %v9514 = vsel %vm9399, %v9381, %v9100
  %v9515 = vsel %vm9399, %v9382, %v9102
  %v9516 = vsel %vm9399, %v9383, %v9104
  %v9517 = vsel %vm9399, %v9384, %v9106
  %v9518 = vsel %vm9399, %v9385, %v9108
  %v9519 = vsel %vm9399, %v9386, %v9110
  %v9520 = vsel %vm9399, %v9387, %v9112
  %v9521 = vsel %vm9399, %v9388, %v9114
  %v9522 = vsel %vm9399, %v9389, %v9116
  %v9523 = vsel %vm9399, %v9390, %v9118
  %v9524 = vsel %vm9399, %v9391, %v9120
  %v9525 = vsel %vm9399, %v9392, %v9122
  %v9526 = vsel %vm9399, %v9393, %v9124
  %v9527 = vsel %vm9399, %v9394, %v9126
  %v9528 = vsel %vm9399, %v9395, %v9128
  %v9529 = vsel %vm9399, %v9396, %v9130
  %v9530 = vsel %vm9399, %v9397, %v9132
  %v9531 = vsel %vm9399, %v9398, %v9134
  %v9532 = vld [vmem:[%s4] sm:$0xff]
  %v9533 = vld [vmem:[%s4 + $0x8] sm:$0xff]
  %v9534 = vld [vmem:[%s4 + $0x10] sm:$0xff]
  %v9535 = vld [vmem:[%s4 + $0x18] sm:$0xff]
  %v9536 = vld [vmem:[%s4 + $0x20] sm:$0xff]
  %v9537 = vld [vmem:[%s4 + $0x28] sm:$0xff]
  %v9538 = vld [vmem:[%s4 + $0x30] sm:$0xff]
  %v9539 = vld [vmem:[%s4 + $0x38] sm:$0xff]
  %v9540 = vld [vmem:[%s4 + $0x40] sm:$0xff]
  %vm9541 = vcmask 588800
  %v9543 = vsel %vm9541, %v9400, 0
  %v9546 = vsel %vm9541, %v9401, 0
  %v9549 = vsel %vm9541, %v9402, 0
  %v9552 = vsel %vm9541, %v9403, 0
  %v9555 = vsel %vm9541, %v9404, 0
  %v9558 = vsel %vm9541, %v9405, 0
  %v9561 = vsel %vm9541, %v9406, 0
  %v9564 = vsel %vm9541, %v9407, 0
  %v9567 = vsel %vm9541, %v9408, 0
  %v9570 = vsel %vm9541, %v9409, 0
  %v9573 = vsel %vm9541, %v9410, 0
  %v9576 = vsel %vm9541, %v9411, 0
  %v9579 = vsel %vm9541, %v9412, 0
  %v9582 = vsel %vm9541, %v9413, 0
  %v9585 = vsel %vm9541, %v9414, 0
  %v9588 = vsel %vm9541, %v9415, 0
  %v9591 = vsel %vm9541, %v9416, 0
  %v9594 = vsel %vm9541, %v9417, 0
  %v9597 = vsel %vm9541, %v9418, 0
  %v9600 = vsel %vm9541, %v9419, 0
  %v9603 = vsel %vm9541, %v9420, 0
  %v9606 = vsel %vm9541, %v9421, 0
  %v9609 = vsel %vm9541, %v9422, 0
  %v9612 = vsel %vm9541, %v9423, 0
  %v9615 = vsel %vm9541, %v9424, 0
  %v9618 = vsel %vm9541, %v9425, 0
  %v9621 = vsel %vm9541, %v9426, 0
  %v9624 = vsel %vm9541, %v9427, 0
  %v9627 = vsel %vm9541, %v9428, 0
  %v9630 = vsel %vm9541, %v9429, 0
  %v9633 = vsel %vm9541, %v9430, 0
  %v9636 = vsel %vm9541, %v9431, 0
  %v9639 = vsel %vm9541, %v9432, 0
  %v9642 = vsel %vm9541, %v9433, 0
  %v9645 = vsel %vm9541, %v9434, 0
  %v9648 = vsel %vm9541, %v9435, 0
  %v9651 = vsel %vm9541, %v9436, 0
  %v9654 = vsel %vm9541, %v9437, 0
  %v9657 = vsel %vm9541, %v9438, 0
  %v9660 = vsel %vm9541, %v9439, 0
  %v9663 = vsel %vm9541, %v9440, 0
  %v9666 = vsel %vm9541, %v9441, 0
  %v9669 = vsel %vm9541, %v9442, 0
  %v9672 = vsel %vm9541, %v9443, 0
  %v9675 = vsel %vm9541, %v9444, 0
  %v9678 = vsel %vm9541, %v9445, 0
  %v9681 = vsel %vm9541, %v9446, 0
  %v9684 = vsel %vm9541, %v9447, 0
  %v9687 = vsel %vm9541, %v9448, 0
  %v9690 = vsel %vm9541, %v9449, 0
  %v9693 = vsel %vm9541, %v9450, 0
  %v9696 = vsel %vm9541, %v9451, 0
  %v9699 = vsel %vm9541, %v9452, 0
  %v9702 = vsel %vm9541, %v9453, 0
  %v9705 = vsel %vm9541, %v9454, 0
  %v9708 = vsel %vm9541, %v9455, 0
  %v9711 = vsel %vm9541, %v9456, 0
  %v9714 = vsel %vm9541, %v9457, 0
  %v9717 = vsel %vm9541, %v9458, 0
  %v9720 = vsel %vm9541, %v9459, 0
  %v9723 = vsel %vm9541, %v9460, 0
  %v9726 = vsel %vm9541, %v9461, 0
  %v9729 = vsel %vm9541, %v9462, 0
  %v9732 = vsel %vm9541, %v9463, 0
  %v9735 = vsel %vm9541, %v9464, 0
  %v9738 = vsel %vm9541, %v9465, 0
  %v9741 = vsel %vm9541, %v9466, 0
  %v9744 = vsel %vm9541, %v9467, 0
  %v9747 = vsel %vm9541, %v9468, 0
  %v9750 = vsel %vm9541, %v9469, 0
  %v9753 = vsel %vm9541, %v9470, 0
  %v9756 = vsel %vm9541, %v9471, 0
  %v9759 = vsel %vm9541, %v9472, 0
  %v9762 = vsel %vm9541, %v9473, 0
  %v9765 = vsel %vm9541, %v9474, 0
  %v9768 = vsel %vm9541, %v9475, 0
  %v9771 = vsel %vm9541, %v9476, 0
  %v9774 = vsel %vm9541, %v9477, 0
  %v9777 = vsel %vm9541, %v9478, 0
  %v9780 = vsel %vm9541, %v9479, 0
  %v9783 = vsel %vm9541, %v9480, 0
  %v9786 = vsel %vm9541, %v9481, 0
  %v9789 = vsel %vm9541, %v9482, 0
  %v9792 = vsel %vm9541, %v9483, 0
  %v9795 = vsel %vm9541, %v9484, 0
  %v9798 = vsel %vm9541, %v9485, 0
  %v9801 = vsel %vm9541, %v9486, 0
  %v9804 = vsel %vm9541, %v9487, 0
  %v9807 = vsel %vm9541, %v9488, 0
  %v9810 = vsel %vm9541, %v9489, 0
  %v9813 = vsel %vm9541, %v9490, 0
  %v9816 = vsel %vm9541, %v9491, 0
  %v9819 = vsel %vm9541, %v9492, 0
  %v9822 = vsel %vm9541, %v9493, 0
  %v9825 = vsel %vm9541, %v9494, 0
  %v9828 = vsel %vm9541, %v9495, 0
  %v9831 = vsel %vm9541, %v9496, 0
  %v9834 = vsel %vm9541, %v9497, 0
  %v9837 = vsel %vm9541, %v9498, 0
  %v9840 = vsel %vm9541, %v9499, 0
  %v9843 = vsel %vm9541, %v9500, 0
  %v9846 = vsel %vm9541, %v9501, 0
  %v9849 = vsel %vm9541, %v9502, 0
  %v9852 = vsel %vm9541, %v9503, 0
  %v9855 = vsel %vm9541, %v9504, 0
  %v9858 = vsel %vm9541, %v9505, 0
  %v9861 = vsel %vm9541, %v9506, 0
  %v9864 = vsel %vm9541, %v9507, 0
  %v9867 = vsel %vm9541, %v9508, 0
  %v9870 = vsel %vm9541, %v9509, 0
  %v9873 = vsel %vm9541, %v9510, 0
  %v9876 = vsel %vm9541, %v9511, 0
  %v9879 = vsel %vm9541, %v9512, 0
  %v9882 = vsel %vm9541, %v9513, 0
  %v9885 = vsel %vm9541, %v9514, 0
  %v9888 = vsel %vm9541, %v9515, 0
  %v9891 = vsel %vm9541, %v9516, 0
  %v9894 = vsel %vm9541, %v9517, 0
  %v9897 = vsel %vm9541, %v9518, 0
  %v9900 = vsel %vm9541, %v9519, 0
  %v9903 = vsel %vm9541, %v9520, 0
  %v9906 = vsel %vm9541, %v9521, 0
  %v9909 = vsel %vm9541, %v9522, 0
  %v9912 = vsel %vm9541, %v9523, 0
  %v9915 = vsel %vm9541, %v9524, 0
  %v9918 = vsel %vm9541, %v9525, 0
  %v9921 = vsel %vm9541, %v9526, 0
  %v9924 = vsel %vm9541, %v9527, 0
  %v9927 = vsel %vm9541, %v9528, 0
  %v9930 = vsel %vm9541, %v9529, 0
  %v9933 = vsel %vm9541, %v9530, 0
  %v9936 = vsel %vm9541, %v9531, 0
  %9938 = vmatprep.subr.mxu0 0.0
  %9939 = vmatpush1.msra.mxu0 %v9532
  %9940 = vmatprep.subr.mxu0 0.0
  %9941 = vmatpush1.msra.mxu0 %v9533
  %9942 = vmatprep.subr.mxu0 0.0
  %9943 = vmatpush1.msra.mxu0 %v9534
  %9944 = vmatprep.subr.mxu0 0.0
  %9945 = vmatpush1.msra.mxu0 %v9535
  %9946 = vmatprep.subr.mxu0 0.0
  %9947 = vmatpush1.msra.mxu0 %v9536
  %9948 = vmatprep.subr.mxu0 0.0
  %9949 = vmatpush1.msra.mxu0 %v9537
  %9950 = vmatprep.subr.mxu0 0.0
  %9951 = vmatpush1.msra.mxu0 %v9538
  %9952 = vmatprep.subr.mxu0 0.0
  %9953 = vmatpush1.msra.mxu0 %v9539
  %9954 = vmatprep.subr.mxu0 0.0
  %9955 = vmatpush1.msra.mxu0 %v9540
  %9956 = vmatprep.subr.mxu0 0.0
  %9957 = vmatpush1.msra.mxu0 0.0
  %9958 = vmatprep.subr.mxu0 0.0
  %9959 = vmatpush1.msra.mxu0 0.0
  %9960 = vmatprep.subr.mxu0 0.0
  %9961 = vmatpush1.msra.mxu0 0.0
  %9962 = vmatprep.subr.mxu0 0.0
  %9963 = vmatpush1.msra.mxu0 0.0
  %9964 = vmatprep.subr.mxu0 0.0
  %9965 = vmatpush1.msra.mxu0 0.0
  %9966 = vmatprep.subr.mxu0 0.0
  %9967 = vmatpush1.msra.mxu0 0.0
  %9968 = vmatprep.subr.mxu0 0.0
  %9969 = vmatpush1.msra.mxu0 0.0
  %9970 = vmatprep.subr.mxu0 0.0
  %9971 = vmatpush1.msra.mxu0 0.0
  %9972 = vmatprep.subr.mxu0 0.0
  %9973 = vmatpush1.msra.mxu0 0.0
  %9974 = vmatprep.subr.mxu0 0.0
  %9975 = vmatpush1.msra.mxu0 0.0
  %9976 = vmatprep.subr.mxu0 0.0
  %9977 = vmatpush1.msra.mxu0 0.0
  %9978 = vmatprep.subr.mxu0 0.0
  %9979 = vmatpush1.msra.mxu0 0.0
  %9980 = vmatprep.subr.mxu0 0.0
  %9981 = vmatpush1.msra.mxu0 0.0
  %9982 = vmatprep.subr.mxu0 0.0
  %9983 = vmatpush1.msra.mxu0 0.0
  %9984 = vmatprep.subr.mxu0 0.0
  %9985 = vmatpush1.msra.mxu0 0.0
  %9986 = vmatprep.subr.mxu0 0.0
  %9987 = vmatpush1.msra.mxu0 0.0
  %9988 = vmatprep.subr.mxu0 0.0
  %9989 = vmatpush1.msra.mxu0 0.0
  %9990 = vmatprep.subr.mxu0 0.0
  %9991 = vmatpush1.msra.mxu0 0.0
  %9992 = vmatprep.subr.mxu0 0.0
  %9993 = vmatpush1.msra.mxu0 0.0
  %9994 = vmatprep.subr.mxu0 0.0
  %9995 = vmatpush1.msra.mxu0 0.0
  %9996 = vmatprep.subr.mxu0 0.0
  %9997 = vmatpush1.msra.mxu0 0.0
  %9998 = vmatprep.subr.mxu0 0.0
  %9999 = vmatpush1.msra.mxu0 0.0
  %10000 = vmatprep.subr.mxu0 0.0
  %10001 = vmatpush1.msra.mxu0 0.0
  %10002 = vmatprep.mubr.f32.mxu0 0.0
  %10003 = vmatmul.mubr.f32.gmra.mrb[0].mxu0 %v9543
  %v10004 = vpop.f32.mrb[0].mxu0
  %v10005 = vadd.f32 0.0, %v10004
  %v10006 = vpop.f32.mrb[0].mxu0
  %10007 = vmatprep.mubr.f32.mxu0 0.0
  %10008 = vmatmul.mubr.f32.gmra.mrb[0].mxu0 %v9546
  %v10009 = vpop.f32.mrb[0].mxu0
  %v10010 = vadd.f32 0.0, %v10009
  %v10011 = vpop.f32.mrb[0].mxu0
  %10012 = vmatprep.mubr.f32.mxu0 0.0
  %10013 = vmatmul.mubr.f32.gmra.mrb[0].mxu0 %v9549
  %v10014 = vpop.f32.mrb[0].mxu0
  %v10015 = vadd.f32 0.0, %v10014
  %v10016 = vpop.f32.mrb[0].mxu0
  %10017 = vmatprep.mubr.f32.mxu0 0.0
  %10018 = vmatmul.mubr.f32.gmra.mrb[0].mxu0 %v9552
  %v10019 = vpop.f32.mrb[0].mxu0
  %v10020 = vadd.f32 0.0, %v10019
  %v10021 = vpop.f32.mrb[0].mxu0
  %10022 = vmatprep.mubr.f32.mxu0 0.0
  %10023 = vmatmul.mubr.f32.gmra.mrb[0].mxu0 %v9555
  %v10024 = vpop.f32.mrb[0].mxu0
  %v10025 = vadd.f32 0.0, %v10024
  %v10026 = vpop.f32.mrb[0].mxu0
  %10027 = vmatprep.mubr.f32.mxu0 0.0
  %10028 = vmatmul.mubr.f32.gmra.mrb[0].mxu0 %v9558
  %v10029 = vpop.f32.mrb[0].mxu0
  %v10030 = vadd.f32 0.0, %v10029
  %v10031 = vpop.f32.mrb[0].mxu0
  %10032 = vmatprep.mubr.f32.mxu0 0.0
  %10033 = vmatmul.mubr.f32.gmra.mrb[0].mxu0 %v9561
  %v10034 = vpop.f32.mrb[0].mxu0
  %v10035 = vadd.f32 0.0, %v10034
  %v10036 = vpop.f32.mrb[0].mxu0
  %10037 = vmatprep.mubr.f32.mxu0 0.0
  %10038 = vmatmul.mubr.f32.gmra.mrb[0].mxu0 %v9564
  %v10039 = vpop.f32.mrb[0].mxu0
  %v10040 = vadd.f32 0.0, %v10039
  %v10041 = vpop.f32.mrb[0].mxu0
  %10042 = vmatprep.mubr.f32.mxu0 0.0
  %10043 = vmatmul.mubr.f32.gmra.mrb[0].mxu0 %v9567
  %v10044 = vpop.f32.mrb[0].mxu0
  %v10045 = vadd.f32 0.0, %v10044
  %v10046 = vpop.f32.mrb[0].mxu0
  %10047 = vmatprep.mubr.f32.mxu0 0.0
  %10048 = vmatmul.mubr.f32.gmra.mrb[0].mxu0 %v9570
  %v10049 = vpop.f32.mrb[0].mxu0
  %v10050 = vadd.f32 0.0, %v10049
  %v10051 = vpop.f32.mrb[0].mxu0
  %10052 = vmatprep.mubr.f32.mxu0 0.0
  %10053 = vmatmul.mubr.f32.gmra.mrb[0].mxu0 %v9573
  %v10054 = vpop.f32.mrb[0].mxu0
  %v10055 = vadd.f32 0.0, %v10054
  %v10056 = vpop.f32.mrb[0].mxu0
  %10057 = vmatprep.mubr.f32.mxu0 0.0
  %10058 = vmatmul.mubr.f32.gmra.mrb[0].mxu0 %v9576
  %v10059 = vpop.f32.mrb[0].mxu0
  %v10060 = vadd.f32 0.0, %v10059
  %v10061 = vpop.f32.mrb[0].mxu0
  %10062 = vmatprep.mubr.f32.mxu0 0.0
  %10063 = vmatmul.mubr.f32.gmra.mrb[0].mxu0 %v9579
  %v10064 = vpop.f32.mrb[0].mxu0
  %v10065 = vadd.f32 0.0, %v10064
  %v10066 = vpop.f32.mrb[0].mxu0
  %10067 = vmatprep.mubr.f32.mxu0 0.0
  %10068 = vmatmul.mubr.f32.gmra.mrb[0].mxu0 %v9582
  %v10069 = vpop.f32.mrb[0].mxu0
  %v10070 = vadd.f32 0.0, %v10069
  %v10071 = vpop.f32.mrb[0].mxu0
  %10072 = vmatprep.mubr.f32.mxu0 0.0
  %10073 = vmatmul.mubr.f32.gmra.mrb[0].mxu0 %v9585
  %v10074 = vpop.f32.mrb[0].mxu0
  %v10075 = vadd.f32 0.0, %v10074
  %v10076 = vpop.f32.mrb[0].mxu0
  %10077 = vmatprep.mubr.f32.mxu0 0.0
  %10078 = vmatmul.mubr.f32.gmra.mrb[0].mxu0 %v9588
  %v10079 = vpop.f32.mrb[0].mxu0
  %v10080 = vadd.f32 0.0, %v10079
  %v10081 = vpop.f32.mrb[0].mxu0
  %10082 = vmatprep.mubr.f32.mxu0 0.0
  %10083 = vmatmul.mubr.f32.gmra.mrb[0].mxu0 %v9591
  %v10084 = vpop.f32.mrb[0].mxu0
  %v10085 = vadd.f32 0.0, %v10084
  %v10086 = vpop.f32.mrb[0].mxu0
  %10087 = vmatprep.mubr.f32.mxu0 0.0
  %10088 = vmatmul.mubr.f32.gmra.mrb[0].mxu0 %v9594
  %v10089 = vpop.f32.mrb[0].mxu0
  %v10090 = vadd.f32 0.0, %v10089
  %v10091 = vpop.f32.mrb[0].mxu0
  %10092 = vmatprep.mubr.f32.mxu0 0.0
  %10093 = vmatmul.mubr.f32.gmra.mrb[0].mxu0 %v9597
  %v10094 = vpop.f32.mrb[0].mxu0
  %v10095 = vadd.f32 0.0, %v10094
  %v10096 = vpop.f32.mrb[0].mxu0
  %10097 = vmatprep.mubr.f32.mxu0 0.0
  %10098 = vmatmul.mubr.f32.gmra.mrb[0].mxu0 %v9600
  %v10099 = vpop.f32.mrb[0].mxu0
  %v10100 = vadd.f32 0.0, %v10099
  %v10101 = vpop.f32.mrb[0].mxu0
  %10102 = vmatprep.mubr.f32.mxu0 0.0
  %10103 = vmatmul.mubr.f32.gmra.mrb[0].mxu0 %v9603
  %v10104 = vpop.f32.mrb[0].mxu0
  %v10105 = vadd.f32 0.0, %v10104
  %v10106 = vpop.f32.mrb[0].mxu0
  %10107 = vmatprep.mubr.f32.mxu0 0.0
  %10108 = vmatmul.mubr.f32.gmra.mrb[0].mxu0 %v9606
  %v10109 = vpop.f32.mrb[0].mxu0
  %v10110 = vadd.f32 0.0, %v10109
  %v10111 = vpop.f32.mrb[0].mxu0
  %10112 = vmatprep.mubr.f32.mxu0 0.0
  %10113 = vmatmul.mubr.f32.gmra.mrb[0].mxu0 %v9609
  %v10114 = vpop.f32.mrb[0].mxu0
  %v10115 = vadd.f32 0.0, %v10114
  %v10116 = vpop.f32.mrb[0].mxu0
  %10117 = vmatprep.mubr.f32.mxu0 0.0
  %10118 = vmatmul.mubr.f32.gmra.mrb[0].mxu0 %v9612
  %v10119 = vpop.f32.mrb[0].mxu0
  %v10120 = vadd.f32 0.0, %v10119
  %v10121 = vpop.f32.mrb[0].mxu0
  %10122 = vmatprep.mubr.f32.mxu0 0.0
  %10123 = vmatmul.mubr.f32.gmra.mrb[0].mxu0 %v9615
  %v10124 = vpop.f32.mrb[0].mxu0
  %v10125 = vadd.f32 0.0, %v10124
  %v10126 = vpop.f32.mrb[0].mxu0
  %10127 = vmatprep.mubr.f32.mxu0 0.0
  %10128 = vmatmul.mubr.f32.gmra.mrb[0].mxu0 %v9618
  %v10129 = vpop.f32.mrb[0].mxu0
  %v10130 = vadd.f32 0.0, %v10129
  %v10131 = vpop.f32.mrb[0].mxu0
  %10132 = vmatprep.mubr.f32.mxu0 0.0
  %10133 = vmatmul.mubr.f32.gmra.mrb[0].mxu0 %v9621
  %v10134 = vpop.f32.mrb[0].mxu0
  %v10135 = vadd.f32 0.0, %v10134
  %v10136 = vpop.f32.mrb[0].mxu0
  %10137 = vmatprep.mubr.f32.mxu0 0.0
  %10138 = vmatmul.mubr.f32.gmra.mrb[0].mxu0 %v9624
  %v10139 = vpop.f32.mrb[0].mxu0
  %v10140 = vadd.f32 0.0, %v10139
  %v10141 = vpop.f32.mrb[0].mxu0
  %10142 = vmatprep.mubr.f32.mxu0 0.0
  %10143 = vmatmul.mubr.f32.gmra.mrb[0].mxu0 %v9627
  %v10144 = vpop.f32.mrb[0].mxu0
  %v10145 = vadd.f32 0.0, %v10144
  %v10146 = vpop.f32.mrb[0].mxu0
  %10147 = vmatprep.mubr.f32.mxu0 0.0
  %10148 = vmatmul.mubr.f32.gmra.mrb[0].mxu0 %v9630
  %v10149 = vpop.f32.mrb[0].mxu0
  %v10150 = vadd.f32 0.0, %v10149
  %v10151 = vpop.f32.mrb[0].mxu0
  %10152 = vmatprep.mubr.f32.mxu0 0.0
  %10153 = vmatmul.mubr.f32.gmra.mrb[0].mxu0 %v9633
  %v10154 = vpop.f32.mrb[0].mxu0
  %v10155 = vadd.f32 0.0, %v10154
  %v10156 = vpop.f32.mrb[0].mxu0
  %10157 = vmatprep.mubr.f32.mxu0 0.0
  %10158 = vmatmul.mubr.f32.gmra.mrb[0].mxu0 %v9636
  %v10159 = vpop.f32.mrb[0].mxu0
  %v10160 = vadd.f32 0.0, %v10159
  %v10161 = vpop.f32.mrb[0].mxu0
  %10162 = vmatprep.mubr.f32.mxu0 0.0
  %10163 = vmatmul.mubr.f32.gmra.mrb[0].mxu0 %v9639
  %v10164 = vpop.f32.mrb[0].mxu0
  %v10165 = vadd.f32 0.0, %v10164
  %v10166 = vpop.f32.mrb[0].mxu0
  %10167 = vmatprep.mubr.f32.mxu0 0.0
  %10168 = vmatmul.mubr.f32.gmra.mrb[0].mxu0 %v9642
  %v10169 = vpop.f32.mrb[0].mxu0
  %v10170 = vadd.f32 0.0, %v10169
  %v10171 = vpop.f32.mrb[0].mxu0
  %10172 = vmatprep.mubr.f32.mxu0 0.0
  %10173 = vmatmul.mubr.f32.gmra.mrb[0].mxu0 %v9645
  %v10174 = vpop.f32.mrb[0].mxu0
  %v10175 = vadd.f32 0.0, %v10174
  %v10176 = vpop.f32.mrb[0].mxu0
  %10177 = vmatprep.mubr.f32.mxu0 0.0
  %10178 = vmatmul.mubr.f32.gmra.mrb[0].mxu0 %v9648
  %v10179 = vpop.f32.mrb[0].mxu0
  %v10180 = vadd.f32 0.0, %v10179
  %v10181 = vpop.f32.mrb[0].mxu0
  %10182 = vmatprep.mubr.f32.mxu0 0.0
  %10183 = vmatmul.mubr.f32.gmra.mrb[0].mxu0 %v9651
  %v10184 = vpop.f32.mrb[0].mxu0
  %v10185 = vadd.f32 0.0, %v10184
  %v10186 = vpop.f32.mrb[0].mxu0
  %10187 = vmatprep.mubr.f32.mxu0 0.0
  %10188 = vmatmul.mubr.f32.gmra.mrb[0].mxu0 %v9654
  %v10189 = vpop.f32.mrb[0].mxu0
  %v10190 = vadd.f32 0.0, %v10189
  %v10191 = vpop.f32.mrb[0].mxu0
  %10192 = vmatprep.mubr.f32.mxu0 0.0
  %10193 = vmatmul.mubr.f32.gmra.mrb[0].mxu0 %v9657
  %v10194 = vpop.f32.mrb[0].mxu0
  %v10195 = vadd.f32 0.0, %v10194
  %v10196 = vpop.f32.mrb[0].mxu0
  %10197 = vmatprep.mubr.f32.mxu0 0.0
  %10198 = vmatmul.mubr.f32.gmra.mrb[0].mxu0 %v9660
  %v10199 = vpop.f32.mrb[0].mxu0
  %v10200 = vadd.f32 0.0, %v10199
  %v10201 = vpop.f32.mrb[0].mxu0
  %10202 = vmatprep.mubr.f32.mxu0 0.0
  %10203 = vmatmul.mubr.f32.gmra.mrb[0].mxu0 %v9663
  %v10204 = vpop.f32.mrb[0].mxu0
  %v10205 = vadd.f32 0.0, %v10204
  %v10206 = vpop.f32.mrb[0].mxu0
  %10207 = vmatprep.mubr.f32.mxu0 0.0
  %10208 = vmatmul.mubr.f32.gmra.mrb[0].mxu0 %v9666
  %v10209 = vpop.f32.mrb[0].mxu0
  %v10210 = vadd.f32 0.0, %v10209
  %v10211 = vpop.f32.mrb[0].mxu0
  %10212 = vmatprep.mubr.f32.mxu0 0.0
  %10213 = vmatmul.mubr.f32.gmra.mrb[0].mxu0 %v9669
  %v10214 = vpop.f32.mrb[0].mxu0
  %v10215 = vadd.f32 0.0, %v10214
  %v10216 = vpop.f32.mrb[0].mxu0
  %10217 = vmatprep.mubr.f32.mxu0 0.0
  %10218 = vmatmul.mubr.f32.gmra.mrb[0].mxu0 %v9672
  %v10219 = vpop.f32.mrb[0].mxu0
  %v10220 = vadd.f32 0.0, %v10219
  %v10221 = vpop.f32.mrb[0].mxu0
  %10222 = vmatprep.mubr.f32.mxu0 0.0
  %10223 = vmatmul.mubr.f32.gmra.mrb[0].mxu0 %v9675
  %v10224 = vpop.f32.mrb[0].mxu0
  %v10225 = vadd.f32 0.0, %v10224
  %v10226 = vpop.f32.mrb[0].mxu0
  %10227 = vmatprep.mubr.f32.mxu0 0.0
  %10228 = vmatmul.mubr.f32.gmra.mrb[0].mxu0 %v9678
  %v10229 = vpop.f32.mrb[0].mxu0
  %v10230 = vadd.f32 0.0, %v10229
  %v10231 = vpop.f32.mrb[0].mxu0
  %10232 = vmatprep.mubr.f32.mxu0 0.0
  %10233 = vmatmul.mubr.f32.gmra.mrb[0].mxu0 %v9681
  %v10234 = vpop.f32.mrb[0].mxu0
  %v10235 = vadd.f32 0.0, %v10234
  %v10236 = vpop.f32.mrb[0].mxu0
  %10237 = vmatprep.mubr.f32.mxu0 0.0
  %10238 = vmatmul.mubr.f32.gmra.mrb[0].mxu0 %v9684
  %v10239 = vpop.f32.mrb[0].mxu0
  %v10240 = vadd.f32 0.0, %v10239
  %v10241 = vpop.f32.mrb[0].mxu0
  %10242 = vmatprep.mubr.f32.mxu0 0.0
  %10243 = vmatmul.mubr.f32.gmra.mrb[0].mxu0 %v9687
  %v10244 = vpop.f32.mrb[0].mxu0
  %v10245 = vadd.f32 0.0, %v10244
  %v10246 = vpop.f32.mrb[0].mxu0
  %10247 = vmatprep.mubr.f32.mxu0 0.0
  %10248 = vmatmul.mubr.f32.gmra.mrb[0].mxu0 %v9690
  %v10249 = vpop.f32.mrb[0].mxu0
  %v10250 = vadd.f32 0.0, %v10249
  %v10251 = vpop.f32.mrb[0].mxu0
  %10252 = vmatprep.mubr.f32.mxu0 0.0
  %10253 = vmatmul.mubr.f32.gmra.mrb[0].mxu0 %v9693
  %v10254 = vpop.f32.mrb[0].mxu0
  %v10255 = vadd.f32 0.0, %v10254
  %v10256 = vpop.f32.mrb[0].mxu0
  %10257 = vmatprep.mubr.f32.mxu0 0.0
  %10258 = vmatmul.mubr.f32.gmra.mrb[0].mxu0 %v9696
  %v10259 = vpop.f32.mrb[0].mxu0
  %v10260 = vadd.f32 0.0, %v10259
  %v10261 = vpop.f32.mrb[0].mxu0
  %10262 = vmatprep.mubr.f32.mxu0 0.0
  %10263 = vmatmul.mubr.f32.gmra.mrb[0].mxu0 %v9699
  %v10264 = vpop.f32.mrb[0].mxu0
  %v10265 = vadd.f32 0.0, %v10264
  %v10266 = vpop.f32.mrb[0].mxu0
  %10267 = vmatprep.mubr.f32.mxu0 0.0
  %10268 = vmatmul.mubr.f32.gmra.mrb[0].mxu0 %v9702
  %v10269 = vpop.f32.mrb[0].mxu0
  %v10270 = vadd.f32 0.0, %v10269
  %v10271 = vpop.f32.mrb[0].mxu0
  %10272 = vmatprep.mubr.f32.mxu0 0.0
  %10273 = vmatmul.mubr.f32.gmra.mrb[0].mxu0 %v9705
  %v10274 = vpop.f32.mrb[0].mxu0
  %v10275 = vadd.f32 0.0, %v10274
  %v10276 = vpop.f32.mrb[0].mxu0
  %10277 = vmatprep.mubr.f32.mxu0 0.0
  %10278 = vmatmul.mubr.f32.gmra.mrb[0].mxu0 %v9708
  %v10279 = vpop.f32.mrb[0].mxu0
  %v10280 = vadd.f32 0.0, %v10279
  %v10281 = vpop.f32.mrb[0].mxu0
  %10282 = vmatprep.mubr.f32.mxu0 0.0
  %10283 = vmatmul.mubr.f32.gmra.mrb[0].mxu0 %v9711
  %v10284 = vpop.f32.mrb[0].mxu0
  %v10285 = vadd.f32 0.0, %v10284
  %v10286 = vpop.f32.mrb[0].mxu0
  %10287 = vmatprep.mubr.f32.mxu0 0.0
  %10288 = vmatmul.mubr.f32.gmra.mrb[0].mxu0 %v9714
  %v10289 = vpop.f32.mrb[0].mxu0
  %v10290 = vadd.f32 0.0, %v10289
  %v10291 = vpop.f32.mrb[0].mxu0
  %10292 = vmatprep.mubr.f32.mxu0 0.0
  %10293 = vmatmul.mubr.f32.gmra.mrb[0].mxu0 %v9717
  %v10294 = vpop.f32.mrb[0].mxu0
  %v10295 = vadd.f32 0.0, %v10294
  %v10296 = vpop.f32.mrb[0].mxu0
  %10297 = vmatprep.mubr.f32.mxu0 0.0
  %10298 = vmatmul.mubr.f32.gmra.mrb[0].mxu0 %v9720
  %v10299 = vpop.f32.mrb[0].mxu0
  %v10300 = vadd.f32 0.0, %v10299
  %v10301 = vpop.f32.mrb[0].mxu0
  %10302 = vmatprep.mubr.f32.mxu0 0.0
  %10303 = vmatmul.mubr.f32.gmra.mrb[0].mxu0 %v9723
  %v10304 = vpop.f32.mrb[0].mxu0
  %v10305 = vadd.f32 0.0, %v10304
  %v10306 = vpop.f32.mrb[0].mxu0
  %10307 = vmatprep.mubr.f32.mxu0 0.0
  %10308 = vmatmul.mubr.f32.gmra.mrb[0].mxu0 %v9726
  %v10309 = vpop.f32.mrb[0].mxu0
  %v10310 = vadd.f32 0.0, %v10309
  %v10311 = vpop.f32.mrb[0].mxu0
  %10312 = vmatprep.mubr.f32.mxu0 0.0
  %10313 = vmatmul.mubr.f32.gmra.mrb[0].mxu0 %v9729
  %v10314 = vpop.f32.mrb[0].mxu0
  %v10315 = vadd.f32 0.0, %v10314
  %v10316 = vpop.f32.mrb[0].mxu0
  %10317 = vmatprep.mubr.f32.mxu0 0.0
  %10318 = vmatmul.mubr.f32.gmra.mrb[0].mxu0 %v9732
  %v10319 = vpop.f32.mrb[0].mxu0
  %v10320 = vadd.f32 0.0, %v10319
  %v10321 = vpop.f32.mrb[0].mxu0
  %10322 = vmatprep.mubr.f32.mxu0 0.0
  %10323 = vmatmul.mubr.f32.gmra.mrb[0].mxu0 %v9735
  %v10324 = vpop.f32.mrb[0].mxu0
  %v10325 = vadd.f32 0.0, %v10324
  %v10326 = vpop.f32.mrb[0].mxu0
  %10327 = vmatprep.mubr.f32.mxu0 0.0
  %10328 = vmatmul.mubr.f32.gmra.mrb[0].mxu0 %v9738
  %v10329 = vpop.f32.mrb[0].mxu0
  %v10330 = vadd.f32 0.0, %v10329
  %v10331 = vpop.f32.mrb[0].mxu0
  %10332 = vmatprep.mubr.f32.mxu0 0.0
  %10333 = vmatmul.mubr.f32.gmra.mrb[0].mxu0 %v9741
  %v10334 = vpop.f32.mrb[0].mxu0
  %v10335 = vadd.f32 0.0, %v10334
  %v10336 = vpop.f32.mrb[0].mxu0
  %10337 = vmatprep.mubr.f32.mxu0 0.0
  %10338 = vmatmul.mubr.f32.gmra.mrb[0].mxu0 %v9744
  %v10339 = vpop.f32.mrb[0].mxu0
  %v10340 = vadd.f32 0.0, %v10339
  %v10341 = vpop.f32.mrb[0].mxu0
  %10342 = vmatprep.mubr.f32.mxu0 0.0
  %10343 = vmatmul.mubr.f32.gmra.mrb[0].mxu0 %v9747
  %v10344 = vpop.f32.mrb[0].mxu0
  %v10345 = vadd.f32 0.0, %v10344
  %v10346 = vpop.f32.mrb[0].mxu0
  %10347 = vmatprep.mubr.f32.mxu0 0.0
  %10348 = vmatmul.mubr.f32.gmra.mrb[0].mxu0 %v9750
  %v10349 = vpop.f32.mrb[0].mxu0
  %v10350 = vadd.f32 0.0, %v10349
  %v10351 = vpop.f32.mrb[0].mxu0
  %10352 = vmatprep.mubr.f32.mxu0 0.0
  %10353 = vmatmul.mubr.f32.gmra.mrb[0].mxu0 %v9753
  %v10354 = vpop.f32.mrb[0].mxu0
  %v10355 = vadd.f32 0.0, %v10354
  %v10356 = vpop.f32.mrb[0].mxu0
  %10357 = vmatprep.mubr.f32.mxu0 0.0
  %10358 = vmatmul.mubr.f32.gmra.mrb[0].mxu0 %v9756
  %v10359 = vpop.f32.mrb[0].mxu0
  %v10360 = vadd.f32 0.0, %v10359
  %v10361 = vpop.f32.mrb[0].mxu0
  %10362 = vmatprep.mubr.f32.mxu0 0.0
  %10363 = vmatmul.mubr.f32.gmra.mrb[0].mxu0 %v9759
  %v10364 = vpop.f32.mrb[0].mxu0
  %v10365 = vadd.f32 0.0, %v10364
  %v10366 = vpop.f32.mrb[0].mxu0
  %10367 = vmatprep.mubr.f32.mxu0 0.0
  %10368 = vmatmul.mubr.f32.gmra.mrb[0].mxu0 %v9762
  %v10369 = vpop.f32.mrb[0].mxu0
  %v10370 = vadd.f32 0.0, %v10369
  %v10371 = vpop.f32.mrb[0].mxu0
  %10372 = vmatprep.mubr.f32.mxu0 0.0
  %10373 = vmatmul.mubr.f32.gmra.mrb[0].mxu0 %v9765
  %v10374 = vpop.f32.mrb[0].mxu0
  %v10375 = vadd.f32 0.0, %v10374
  %v10376 = vpop.f32.mrb[0].mxu0
  %10377 = vmatprep.mubr.f32.mxu0 0.0
  %10378 = vmatmul.mubr.f32.gmra.mrb[0].mxu0 %v9768
  %v10379 = vpop.f32.mrb[0].mxu0
  %v10380 = vadd.f32 0.0, %v10379
  %v10381 = vpop.f32.mrb[0].mxu0
  %10382 = vmatprep.mubr.f32.mxu0 0.0
  %10383 = vmatmul.mubr.f32.gmra.mrb[0].mxu0 %v9771
  %v10384 = vpop.f32.mrb[0].mxu0
  %v10385 = vadd.f32 0.0, %v10384
  %v10386 = vpop.f32.mrb[0].mxu0
  %10387 = vmatprep.mubr.f32.mxu0 0.0
  %10388 = vmatmul.mubr.f32.gmra.mrb[0].mxu0 %v9774
  %v10389 = vpop.f32.mrb[0].mxu0
  %v10390 = vadd.f32 0.0, %v10389
  %v10391 = vpop.f32.mrb[0].mxu0
  %10392 = vmatprep.mubr.f32.mxu0 0.0
  %10393 = vmatmul.mubr.f32.gmra.mrb[0].mxu0 %v9777
  %v10394 = vpop.f32.mrb[0].mxu0
  %v10395 = vadd.f32 0.0, %v10394
  %v10396 = vpop.f32.mrb[0].mxu0
  %10397 = vmatprep.mubr.f32.mxu0 0.0
  %10398 = vmatmul.mubr.f32.gmra.mrb[0].mxu0 %v9780
  %v10399 = vpop.f32.mrb[0].mxu0
  %v10400 = vadd.f32 0.0, %v10399
  %v10401 = vpop.f32.mrb[0].mxu0
  %10402 = vmatprep.mubr.f32.mxu0 0.0
  %10403 = vmatmul.mubr.f32.gmra.mrb[0].mxu0 %v9783
  %v10404 = vpop.f32.mrb[0].mxu0
  %v10405 = vadd.f32 0.0, %v10404
  %v10406 = vpop.f32.mrb[0].mxu0
  %10407 = vmatprep.mubr.f32.mxu0 0.0
  %10408 = vmatmul.mubr.f32.gmra.mrb[0].mxu0 %v9786
  %v10409 = vpop.f32.mrb[0].mxu0
  %v10410 = vadd.f32 0.0, %v10409
  %v10411 = vpop.f32.mrb[0].mxu0
  %10412 = vmatprep.mubr.f32.mxu0 0.0
  %10413 = vmatmul.mubr.f32.gmra.mrb[0].mxu0 %v9789
  %v10414 = vpop.f32.mrb[0].mxu0
  %v10415 = vadd.f32 0.0, %v10414
  %v10416 = vpop.f32.mrb[0].mxu0
  %10417 = vmatprep.mubr.f32.mxu0 0.0
  %10418 = vmatmul.mubr.f32.gmra.mrb[0].mxu0 %v9792
  %v10419 = vpop.f32.mrb[0].mxu0
  %v10420 = vadd.f32 0.0, %v10419
  %v10421 = vpop.f32.mrb[0].mxu0
  %10422 = vmatprep.mubr.f32.mxu0 0.0
  %10423 = vmatmul.mubr.f32.gmra.mrb[0].mxu0 %v9795
  %v10424 = vpop.f32.mrb[0].mxu0
  %v10425 = vadd.f32 0.0, %v10424
  %v10426 = vpop.f32.mrb[0].mxu0
  %10427 = vmatprep.mubr.f32.mxu0 0.0
  %10428 = vmatmul.mubr.f32.gmra.mrb[0].mxu0 %v9798
  %v10429 = vpop.f32.mrb[0].mxu0
  %v10430 = vadd.f32 0.0, %v10429
  %v10431 = vpop.f32.mrb[0].mxu0
  %10432 = vmatprep.mubr.f32.mxu0 0.0
  %10433 = vmatmul.mubr.f32.gmra.mrb[0].mxu0 %v9801
  %v10434 = vpop.f32.mrb[0].mxu0
  %v10435 = vadd.f32 0.0, %v10434
  %v10436 = vpop.f32.mrb[0].mxu0
  %10437 = vmatprep.mubr.f32.mxu0 0.0
  %10438 = vmatmul.mubr.f32.gmra.mrb[0].mxu0 %v9804
  %v10439 = vpop.f32.mrb[0].mxu0
  %v10440 = vadd.f32 0.0, %v10439
  %v10441 = vpop.f32.mrb[0].mxu0
  %10442 = vmatprep.mubr.f32.mxu0 0.0
  %10443 = vmatmul.mubr.f32.gmra.mrb[0].mxu0 %v9807
  %v10444 = vpop.f32.mrb[0].mxu0
  %v10445 = vadd.f32 0.0, %v10444
  %v10446 = vpop.f32.mrb[0].mxu0
  %10447 = vmatprep.mubr.f32.mxu0 0.0
  %10448 = vmatmul.mubr.f32.gmra.mrb[0].mxu0 %v9810
  %v10449 = vpop.f32.mrb[0].mxu0
  %v10450 = vadd.f32 0.0, %v10449
  %v10451 = vpop.f32.mrb[0].mxu0
  %10452 = vmatprep.mubr.f32.mxu0 0.0
  %10453 = vmatmul.mubr.f32.gmra.mrb[0].mxu0 %v9813
  %v10454 = vpop.f32.mrb[0].mxu0
  %v10455 = vadd.f32 0.0, %v10454
  %v10456 = vpop.f32.mrb[0].mxu0
  %10457 = vmatprep.mubr.f32.mxu0 0.0
  %10458 = vmatmul.mubr.f32.gmra.mrb[0].mxu0 %v9816
  %v10459 = vpop.f32.mrb[0].mxu0
  %v10460 = vadd.f32 0.0, %v10459
  %v10461 = vpop.f32.mrb[0].mxu0
  %10462 = vmatprep.mubr.f32.mxu0 0.0
  %10463 = vmatmul.mubr.f32.gmra.mrb[0].mxu0 %v9819
  %v10464 = vpop.f32.mrb[0].mxu0
  %v10465 = vadd.f32 0.0, %v10464
  %v10466 = vpop.f32.mrb[0].mxu0
  %10467 = vmatprep.mubr.f32.mxu0 0.0
  %10468 = vmatmul.mubr.f32.gmra.mrb[0].mxu0 %v9822
  %v10469 = vpop.f32.mrb[0].mxu0
  %v10470 = vadd.f32 0.0, %v10469
  %v10471 = vpop.f32.mrb[0].mxu0
  %10472 = vmatprep.mubr.f32.mxu0 0.0
  %10473 = vmatmul.mubr.f32.gmra.mrb[0].mxu0 %v9825
  %v10474 = vpop.f32.mrb[0].mxu0
  %v10475 = vadd.f32 0.0, %v10474
  %v10476 = vpop.f32.mrb[0].mxu0
  %10477 = vmatprep.mubr.f32.mxu0 0.0
  %10478 = vmatmul.mubr.f32.gmra.mrb[0].mxu0 %v9828
  %v10479 = vpop.f32.mrb[0].mxu0
  %v10480 = vadd.f32 0.0, %v10479
  %v10481 = vpop.f32.mrb[0].mxu0
  %10482 = vmatprep.mubr.f32.mxu0 0.0
  %10483 = vmatmul.mubr.f32.gmra.mrb[0].mxu0 %v9831
  %v10484 = vpop.f32.mrb[0].mxu0
  %v10485 = vadd.f32 0.0, %v10484
  %v10486 = vpop.f32.mrb[0].mxu0
  %10487 = vmatprep.mubr.f32.mxu0 0.0
  %10488 = vmatmul.mubr.f32.gmra.mrb[0].mxu0 %v9834
  %v10489 = vpop.f32.mrb[0].mxu0
  %v10490 = vadd.f32 0.0, %v10489
  %v10491 = vpop.f32.mrb[0].mxu0
  %10492 = vmatprep.mubr.f32.mxu0 0.0
  %10493 = vmatmul.mubr.f32.gmra.mrb[0].mxu0 %v9837
  %v10494 = vpop.f32.mrb[0].mxu0
  %v10495 = vadd.f32 0.0, %v10494
  %v10496 = vpop.f32.mrb[0].mxu0
  %10497 = vmatprep.mubr.f32.mxu0 0.0
  %10498 = vmatmul.mubr.f32.gmra.mrb[0].mxu0 %v9840
  %v10499 = vpop.f32.mrb[0].mxu0
  %v10500 = vadd.f32 0.0, %v10499
  %v10501 = vpop.f32.mrb[0].mxu0
  %10502 = vmatprep.mubr.f32.mxu0 0.0
  %10503 = vmatmul.mubr.f32.gmra.mrb[0].mxu0 %v9843
  %v10504 = vpop.f32.mrb[0].mxu0
  %v10505 = vadd.f32 0.0, %v10504
  %v10506 = vpop.f32.mrb[0].mxu0
  %10507 = vmatprep.mubr.f32.mxu0 0.0
  %10508 = vmatmul.mubr.f32.gmra.mrb[0].mxu0 %v9846
  %v10509 = vpop.f32.mrb[0].mxu0
  %v10510 = vadd.f32 0.0, %v10509
  %v10511 = vpop.f32.mrb[0].mxu0
  %10512 = vmatprep.mubr.f32.mxu0 0.0
  %10513 = vmatmul.mubr.f32.gmra.mrb[0].mxu0 %v9849
  %v10514 = vpop.f32.mrb[0].mxu0
  %v10515 = vadd.f32 0.0, %v10514
  %v10516 = vpop.f32.mrb[0].mxu0
  %10517 = vmatprep.mubr.f32.mxu0 0.0
  %10518 = vmatmul.mubr.f32.gmra.mrb[0].mxu0 %v9852
  %v10519 = vpop.f32.mrb[0].mxu0
  %v10520 = vadd.f32 0.0, %v10519
  %v10521 = vpop.f32.mrb[0].mxu0
  %10522 = vmatprep.mubr.f32.mxu0 0.0
  %10523 = vmatmul.mubr.f32.gmra.mrb[0].mxu0 %v9855
  %v10524 = vpop.f32.mrb[0].mxu0
  %v10525 = vadd.f32 0.0, %v10524
  %v10526 = vpop.f32.mrb[0].mxu0
  %10527 = vmatprep.mubr.f32.mxu0 0.0
  %10528 = vmatmul.mubr.f32.gmra.mrb[0].mxu0 %v9858
  %v10529 = vpop.f32.mrb[0].mxu0
  %v10530 = vadd.f32 0.0, %v10529
  %v10531 = vpop.f32.mrb[0].mxu0
  %10532 = vmatprep.mubr.f32.mxu0 0.0
  %10533 = vmatmul.mubr.f32.gmra.mrb[0].mxu0 %v9861
  %v10534 = vpop.f32.mrb[0].mxu0
  %v10535 = vadd.f32 0.0, %v10534
  %v10536 = vpop.f32.mrb[0].mxu0
  %10537 = vmatprep.mubr.f32.mxu0 0.0
  %10538 = vmatmul.mubr.f32.gmra.mrb[0].mxu0 %v9864
  %v10539 = vpop.f32.mrb[0].mxu0
  %v10540 = vadd.f32 0.0, %v10539
  %v10541 = vpop.f32.mrb[0].mxu0
  %10542 = vmatprep.mubr.f32.mxu0 0.0
  %10543 = vmatmul.mubr.f32.gmra.mrb[0].mxu0 %v9867
  %v10544 = vpop.f32.mrb[0].mxu0
  %v10545 = vadd.f32 0.0, %v10544
  %v10546 = vpop.f32.mrb[0].mxu0
  %10547 = vmatprep.mubr.f32.mxu0 0.0
  %10548 = vmatmul.mubr.f32.gmra.mrb[0].mxu0 %v9870
  %v10549 = vpop.f32.mrb[0].mxu0
  %v10550 = vadd.f32 0.0, %v10549
  %v10551 = vpop.f32.mrb[0].mxu0
  %10552 = vmatprep.mubr.f32.mxu0 0.0
  %10553 = vmatmul.mubr.f32.gmra.mrb[0].mxu0 %v9873
  %v10554 = vpop.f32.mrb[0].mxu0
  %v10555 = vadd.f32 0.0, %v10554
  %v10556 = vpop.f32.mrb[0].mxu0
  %10557 = vmatprep.mubr.f32.mxu0 0.0
  %10558 = vmatmul.mubr.f32.gmra.mrb[0].mxu0 %v9876
  %v10559 = vpop.f32.mrb[0].mxu0
  %v10560 = vadd.f32 0.0, %v10559
  %v10561 = vpop.f32.mrb[0].mxu0
  %10562 = vmatprep.mubr.f32.mxu0 0.0
  %10563 = vmatmul.mubr.f32.gmra.mrb[0].mxu0 %v9879
  %v10564 = vpop.f32.mrb[0].mxu0
  %v10565 = vadd.f32 0.0, %v10564
  %v10566 = vpop.f32.mrb[0].mxu0
  %10567 = vmatprep.mubr.f32.mxu0 0.0
  %10568 = vmatmul.mubr.f32.gmra.mrb[0].mxu0 %v9882
  %v10569 = vpop.f32.mrb[0].mxu0
  %v10570 = vadd.f32 0.0, %v10569
  %v10571 = vpop.f32.mrb[0].mxu0
  %10572 = vmatprep.mubr.f32.mxu0 0.0
  %10573 = vmatmul.mubr.f32.gmra.mrb[0].mxu0 %v9885
  %v10574 = vpop.f32.mrb[0].mxu0
  %v10575 = vadd.f32 0.0, %v10574
  %v10576 = vpop.f32.mrb[0].mxu0
  %10577 = vmatprep.mubr.f32.mxu0 0.0
  %10578 = vmatmul.mubr.f32.gmra.mrb[0].mxu0 %v9888
  %v10579 = vpop.f32.mrb[0].mxu0
  %v10580 = vadd.f32 0.0, %v10579
  %v10581 = vpop.f32.mrb[0].mxu0
  %10582 = vmatprep.mubr.f32.mxu0 0.0
  %10583 = vmatmul.mubr.f32.gmra.mrb[0].mxu0 %v9891
  %v10584 = vpop.f32.mrb[0].mxu0
  %v10585 = vadd.f32 0.0, %v10584
  %v10586 = vpop.f32.mrb[0].mxu0
  %10587 = vmatprep.mubr.f32.mxu0 0.0
  %10588 = vmatmul.mubr.f32.gmra.mrb[0].mxu0 %v9894
  %v10589 = vpop.f32.mrb[0].mxu0
  %v10590 = vadd.f32 0.0, %v10589
  %v10591 = vpop.f32.mrb[0].mxu0
  %10592 = vmatprep.mubr.f32.mxu0 0.0
  %10593 = vmatmul.mubr.f32.gmra.mrb[0].mxu0 %v9897
  %v10594 = vpop.f32.mrb[0].mxu0
  %v10595 = vadd.f32 0.0, %v10594
  %v10596 = vpop.f32.mrb[0].mxu0
  %10597 = vmatprep.mubr.f32.mxu0 0.0
  %10598 = vmatmul.mubr.f32.gmra.mrb[0].mxu0 %v9900
  %v10599 = vpop.f32.mrb[0].mxu0
  %v10600 = vadd.f32 0.0, %v10599
  %v10601 = vpop.f32.mrb[0].mxu0
  %10602 = vmatprep.mubr.f32.mxu0 0.0
  %10603 = vmatmul.mubr.f32.gmra.mrb[0].mxu0 %v9903
  %v10604 = vpop.f32.mrb[0].mxu0
  %v10605 = vadd.f32 0.0, %v10604
  %v10606 = vpop.f32.mrb[0].mxu0
  %10607 = vmatprep.mubr.f32.mxu0 0.0
  %10608 = vmatmul.mubr.f32.gmra.mrb[0].mxu0 %v9906
  %v10609 = vpop.f32.mrb[0].mxu0
  %v10610 = vadd.f32 0.0, %v10609
  %v10611 = vpop.f32.mrb[0].mxu0
  %10612 = vmatprep.mubr.f32.mxu0 0.0
  %10613 = vmatmul.mubr.f32.gmra.mrb[0].mxu0 %v9909
  %v10614 = vpop.f32.mrb[0].mxu0
  %v10615 = vadd.f32 0.0, %v10614
  %v10616 = vpop.f32.mrb[0].mxu0
  %10617 = vmatprep.mubr.f32.mxu0 0.0
  %10618 = vmatmul.mubr.f32.gmra.mrb[0].mxu0 %v9912
  %v10619 = vpop.f32.mrb[0].mxu0
  %v10620 = vadd.f32 0.0, %v10619
  %v10621 = vpop.f32.mrb[0].mxu0
  %10622 = vmatprep.mubr.f32.mxu0 0.0
  %10623 = vmatmul.mubr.f32.gmra.mrb[0].mxu0 %v9915
  %v10624 = vpop.f32.mrb[0].mxu0
  %v10625 = vadd.f32 0.0, %v10624
  %v10626 = vpop.f32.mrb[0].mxu0
  %10627 = vmatprep.mubr.f32.mxu0 0.0
  %10628 = vmatmul.mubr.f32.gmra.mrb[0].mxu0 %v9918
  %v10629 = vpop.f32.mrb[0].mxu0
  %v10630 = vadd.f32 0.0, %v10629
  %v10631 = vpop.f32.mrb[0].mxu0
  %10632 = vmatprep.mubr.f32.mxu0 0.0
  %10633 = vmatmul.mubr.f32.gmra.mrb[0].mxu0 %v9921
  %v10634 = vpop.f32.mrb[0].mxu0
  %v10635 = vadd.f32 0.0, %v10634
  %v10636 = vpop.f32.mrb[0].mxu0
  %10637 = vmatprep.mubr.f32.mxu0 0.0
  %10638 = vmatmul.mubr.f32.gmra.mrb[0].mxu0 %v9924
  %v10639 = vpop.f32.mrb[0].mxu0
  %v10640 = vadd.f32 0.0, %v10639
  %v10641 = vpop.f32.mrb[0].mxu0
  %10642 = vmatprep.mubr.f32.mxu0 0.0
  %10643 = vmatmul.mubr.f32.gmra.mrb[0].mxu0 %v9927
  %v10644 = vpop.f32.mrb[0].mxu0
  %v10645 = vadd.f32 0.0, %v10644
  %v10646 = vpop.f32.mrb[0].mxu0
  %10647 = vmatprep.mubr.f32.mxu0 0.0
  %10648 = vmatmul.mubr.f32.gmra.mrb[0].mxu0 %v9930
  %v10649 = vpop.f32.mrb[0].mxu0
  %v10650 = vadd.f32 0.0, %v10649
  %v10651 = vpop.f32.mrb[0].mxu0
  %10652 = vmatprep.mubr.f32.mxu0 0.0
  %10653 = vmatmul.mubr.f32.gmra.mrb[0].mxu0 %v9933
  %v10654 = vpop.f32.mrb[0].mxu0
  %v10655 = vadd.f32 0.0, %v10654
  %v10656 = vpop.f32.mrb[0].mxu0
  %10657 = vmatprep.mubr.f32.mxu0 0.0
  %10658 = vmatmul.mubr.f32.gmra.mrb[0].mxu0 %v9936
  %v10659 = vpop.f32.mrb[0].mxu0
  %v10660 = vadd.f32 0.0, %v10659
  %v10661 = vpop.f32.mrb[0].mxu0
  %10662 = vdwg.mxu0
  %v10663 = vld [vmem:[%s6] sm:$0xff]
  %v10664 = vld [vmem:[%s6 + $0x8] sm:$0xff]
  %v10665 = vld [vmem:[%s6 + $0x10] sm:$0xff]
  %v10666 = vld [vmem:[%s6 + $0x18] sm:$0xff]
  %v10667 = vld [vmem:[%s6 + $0x20] sm:$0xff]
  %v10668 = vld [vmem:[%s6 + $0x28] sm:$0xff]
  %v10669 = vld [vmem:[%s6 + $0x30] sm:$0xff]
  %v10670 = vld [vmem:[%s6 + $0x38] sm:$0xff]
  %v10671 = vld [vmem:[%s6 + $0x40] sm:$0xff]
  %v10672 = vld [vmem:[%s6 + $0x48] sm:$0xff]
  %v10673 = vld [vmem:[%s6 + $0x50] sm:$0xff]
  %v10674 = vld [vmem:[%s6 + $0x58] sm:$0xff]
  %v10675 = vld [vmem:[%s6 + $0x60] sm:$0xff]
  %v10676 = vld [vmem:[%s6 + $0x68] sm:$0xff]
  %v10677 = vld [vmem:[%s6 + $0x70] sm:$0xff]
  %v10678 = vld [vmem:[%s6 + $0x78] sm:$0xff]
  %v10679 = vld [vmem:[%s6 + $0x80] sm:$0xff]
  %v10680 = vld [vmem:[%s6 + $0x88] sm:$0xff]
  %v10681 = vld [vmem:[%s6 + $0x90] sm:$0xff]
  %v10682 = vld [vmem:[%s6 + $0x98] sm:$0xff]
  %v10683 = vld [vmem:[%s6 + $0xa0] sm:$0xff]
  %v10684 = vld [vmem:[%s6 + $0xa8] sm:$0xff]
  %v10685 = vld [vmem:[%s6 + $0xb0] sm:$0xff]
  %v10686 = vld [vmem:[%s6 + $0xb8] sm:$0xff]
  %v10687 = vld [vmem:[%s6 + $0xc0] sm:$0xff]
  %v10688 = vld [vmem:[%s6 + $0xc8] sm:$0xff]
  %v10689 = vld [vmem:[%s6 + $0xd0] sm:$0xff]
  %v10690 = vld [vmem:[%s6 + $0xd8] sm:$0xff]
  %v10691 = vld [vmem:[%s6 + $0xe0] sm:$0xff]
  %v10692 = vld [vmem:[%s6 + $0xe8] sm:$0xff]
  %v10693 = vld [vmem:[%s6 + $0xf0] sm:$0xff]
  %v10694 = vld [vmem:[%s6 + $0xf8] sm:$0xff]
  %v10695 = vld [vmem:[%s6 + $0x100] sm:$0xff]
  %v10696 = vld [vmem:[%s6 + $0x108] sm:$0xff]
  %v10697 = vld [vmem:[%s6 + $0x110] sm:$0xff]
  %v10698 = vld [vmem:[%s6 + $0x118] sm:$0xff]
  %v10699 = vld [vmem:[%s6 + $0x120] sm:$0xff]
  %v10700 = vld [vmem:[%s6 + $0x128] sm:$0xff]
  %v10701 = vld [vmem:[%s6 + $0x130] sm:$0xff]
  %v10702 = vld [vmem:[%s6 + $0x138] sm:$0xff]
  %v10703 = vld [vmem:[%s6 + $0x140] sm:$0xff]
  %v10704 = vld [vmem:[%s6 + $0x148] sm:$0xff]
  %v10705 = vld [vmem:[%s6 + $0x150] sm:$0xff]
  %v10706 = vld [vmem:[%s6 + $0x158] sm:$0xff]
  %v10707 = vld [vmem:[%s6 + $0x160] sm:$0xff]
  %v10708 = vld [vmem:[%s6 + $0x168] sm:$0xff]
  %v10709 = vld [vmem:[%s6 + $0x170] sm:$0xff]
  %v10710 = vld [vmem:[%s6 + $0x178] sm:$0xff]
  %v10711 = vld [vmem:[%s6 + $0x180] sm:$0xff]
  %v10712 = vld [vmem:[%s6 + $0x188] sm:$0xff]
  %v10713 = vld [vmem:[%s6 + $0x190] sm:$0xff]
  %v10714 = vld [vmem:[%s6 + $0x198] sm:$0xff]
  %v10715 = vld [vmem:[%s6 + $0x1a0] sm:$0xff]
  %v10716 = vld [vmem:[%s6 + $0x1a8] sm:$0xff]
  %v10717 = vld [vmem:[%s6 + $0x1b0] sm:$0xff]
  %v10718 = vld [vmem:[%s6 + $0x1b8] sm:$0xff]
  %v10719 = vld [vmem:[%s6 + $0x1c0] sm:$0xff]
  %v10720 = vld [vmem:[%s6 + $0x1c8] sm:$0xff]
  %v10721 = vld [vmem:[%s6 + $0x1d0] sm:$0xff]
  %v10722 = vld [vmem:[%s6 + $0x1d8] sm:$0xff]
  %v10723 = vld [vmem:[%s6 + $0x1e0] sm:$0xff]
  %v10724 = vld [vmem:[%s6 + $0x1e8] sm:$0xff]
  %v10725 = vld [vmem:[%s6 + $0x1f0] sm:$0xff]
  %v10726 = vld [vmem:[%s6 + $0x1f8] sm:$0xff]
  %v10727 = vld [vmem:[%s6 + $0x200] sm:$0xff]
  %v10728 = vld [vmem:[%s6 + $0x208] sm:$0xff]
  %v10729 = vld [vmem:[%s6 + $0x210] sm:$0xff]
  %v10730 = vld [vmem:[%s6 + $0x218] sm:$0xff]
  %v10731 = vld [vmem:[%s6 + $0x220] sm:$0xff]
  %v10732 = vld [vmem:[%s6 + $0x228] sm:$0xff]
  %v10733 = vld [vmem:[%s6 + $0x230] sm:$0xff]
  %v10734 = vld [vmem:[%s6 + $0x238] sm:$0xff]
  %v10735 = vld [vmem:[%s6 + $0x240] sm:$0xff]
  %v10736 = vld [vmem:[%s6 + $0x248] sm:$0xff]
  %v10737 = vld [vmem:[%s6 + $0x250] sm:$0xff]
  %v10738 = vld [vmem:[%s6 + $0x258] sm:$0xff]
  %v10739 = vld [vmem:[%s6 + $0x260] sm:$0xff]
  %v10740 = vld [vmem:[%s6 + $0x268] sm:$0xff]
  %v10741 = vld [vmem:[%s6 + $0x270] sm:$0xff]
  %v10742 = vld [vmem:[%s6 + $0x278] sm:$0xff]
  %v10743 = vld [vmem:[%s6 + $0x280] sm:$0xff]
  %v10744 = vld [vmem:[%s6 + $0x288] sm:$0xff]
  %v10745 = vld [vmem:[%s6 + $0x290] sm:$0xff]
  %v10746 = vld [vmem:[%s6 + $0x298] sm:$0xff]
  %v10747 = vld [vmem:[%s6 + $0x2a0] sm:$0xff]
  %v10748 = vld [vmem:[%s6 + $0x2a8] sm:$0xff]
  %v10749 = vld [vmem:[%s6 + $0x2b0] sm:$0xff]
  %v10750 = vld [vmem:[%s6 + $0x2b8] sm:$0xff]
  %v10751 = vld [vmem:[%s6 + $0x2c0] sm:$0xff]
  %v10752 = vld [vmem:[%s6 + $0x2c8] sm:$0xff]
  %v10753 = vld [vmem:[%s6 + $0x2d0] sm:$0xff]
  %v10754 = vld [vmem:[%s6 + $0x2d8] sm:$0xff]
  %v10755 = vld [vmem:[%s6 + $0x2e0] sm:$0xff]
  %v10756 = vld [vmem:[%s6 + $0x2e8] sm:$0xff]
  %v10757 = vld [vmem:[%s6 + $0x2f0] sm:$0xff]
  %v10758 = vld [vmem:[%s6 + $0x2f8] sm:$0xff]
  %v10759 = vld [vmem:[%s6 + $0x300] sm:$0xff]
  %v10760 = vld [vmem:[%s6 + $0x308] sm:$0xff]
  %v10761 = vld [vmem:[%s6 + $0x310] sm:$0xff]
  %v10762 = vld [vmem:[%s6 + $0x318] sm:$0xff]
  %v10763 = vld [vmem:[%s6 + $0x320] sm:$0xff]
  %v10764 = vld [vmem:[%s6 + $0x328] sm:$0xff]
  %v10765 = vld [vmem:[%s6 + $0x330] sm:$0xff]
  %v10766 = vld [vmem:[%s6 + $0x338] sm:$0xff]
  %v10767 = vld [vmem:[%s6 + $0x340] sm:$0xff]
  %v10768 = vld [vmem:[%s6 + $0x348] sm:$0xff]
  %v10769 = vld [vmem:[%s6 + $0x350] sm:$0xff]
  %v10770 = vld [vmem:[%s6 + $0x358] sm:$0xff]
  %v10771 = vld [vmem:[%s6 + $0x360] sm:$0xff]
  %v10772 = vld [vmem:[%s6 + $0x368] sm:$0xff]
  %v10773 = vld [vmem:[%s6 + $0x370] sm:$0xff]
  %v10774 = vld [vmem:[%s6 + $0x378] sm:$0xff]
  %v10775 = vld [vmem:[%s6 + $0x380] sm:$0xff]
  %v10776 = vld [vmem:[%s6 + $0x388] sm:$0xff]
  %v10777 = vld [vmem:[%s6 + $0x390] sm:$0xff]
  %v10778 = vld [vmem:[%s6 + $0x398] sm:$0xff]
  %v10779 = vld [vmem:[%s6 + $0x3a0] sm:$0xff]
  %v10780 = vld [vmem:[%s6 + $0x3a8] sm:$0xff]
  %v10781 = vld [vmem:[%s6 + $0x3b0] sm:$0xff]
  %v10782 = vld [vmem:[%s6 + $0x3b8] sm:$0xff]
  %v10783 = vld [vmem:[%s6 + $0x3c0] sm:$0xff]
  %v10784 = vld [vmem:[%s6 + $0x3c8] sm:$0xff]
  %v10785 = vld [vmem:[%s6 + $0x3d0] sm:$0xff]
  %v10786 = vld [vmem:[%s6 + $0x3d8] sm:$0xff]
  %v10787 = vld [vmem:[%s6 + $0x3e0] sm:$0xff]
  %v10788 = vld [vmem:[%s6 + $0x3e8] sm:$0xff]
  %v10789 = vld [vmem:[%s6 + $0x3f0] sm:$0xff]
  %v10790 = vld [vmem:[%s6 + $0x3f8] sm:$0xff]
  %v10791 = vld [vmem:[%s6 + $0x400] sm:$0xff]
  %v10792 = vld [vmem:[%s6 + $0x408] sm:$0xff]
  %v10793 = vld [vmem:[%s6 + $0x410] sm:$0xff]
  %v10794 = vld [vmem:[%s6 + $0x418] sm:$0xf]
  %v10795 = vmul.f32 %v10005, %v10663
  %v10796 = vmul.f32 %v10010, %v10664
  %v10797 = vmul.f32 %v10015, %v10665
  %v10798 = vmul.f32 %v10020, %v10666
  %v10799 = vmul.f32 %v10025, %v10667
  %v10800 = vmul.f32 %v10030, %v10668
  %v10801 = vmul.f32 %v10035, %v10669
  %v10802 = vmul.f32 %v10040, %v10670
  %v10803 = vmul.f32 %v10045, %v10671
  %v10804 = vmul.f32 %v10050, %v10672
  %v10805 = vmul.f32 %v10055, %v10673
  %v10806 = vmul.f32 %v10060, %v10674
  %v10807 = vmul.f32 %v10065, %v10675
  %v10808 = vmul.f32 %v10070, %v10676
  %v10809 = vmul.f32 %v10075, %v10677
  %v10810 = vmul.f32 %v10080, %v10678
  %v10811 = vmul.f32 %v10085, %v10679
  %v10812 = vmul.f32 %v10090, %v10680
  %v10813 = vmul.f32 %v10095, %v10681
  %v10814 = vmul.f32 %v10100, %v10682
  %v10815 = vmul.f32 %v10105, %v10683
  %v10816 = vmul.f32 %v10110, %v10684
  %v10817 = vmul.f32 %v10115, %v10685
  %v10818 = vmul.f32 %v10120, %v10686
  %v10819 = vmul.f32 %v10125, %v10687
  %v10820 = vmul.f32 %v10130, %v10688
  %v10821 = vmul.f32 %v10135, %v10689
  %v10822 = vmul.f32 %v10140, %v10690
  %v10823 = vmul.f32 %v10145, %v10691
  %v10824 = vmul.f32 %v10150, %v10692
  %v10825 = vmul.f32 %v10155, %v10693
  %v10826 = vmul.f32 %v10160, %v10694
  %v10827 = vmul.f32 %v10165, %v10695
  %v10828 = vmul.f32 %v10170, %v10696
  %v10829 = vmul.f32 %v10175, %v10697
  %v10830 = vmul.f32 %v10180, %v10698
  %v10831 = vmul.f32 %v10185, %v10699
  %v10832 = vmul.f32 %v10190, %v10700
  %v10833 = vmul.f32 %v10195, %v10701
  %v10834 = vmul.f32 %v10200, %v10702
  %v10835 = vmul.f32 %v10205, %v10703
  %v10836 = vmul.f32 %v10210, %v10704
  %v10837 = vmul.f32 %v10215, %v10705
  %v10838 = vmul.f32 %v10220, %v10706
  %v10839 = vmul.f32 %v10225, %v10707
  %v10840 = vmul.f32 %v10230, %v10708
  %v10841 = vmul.f32 %v10235, %v10709
  %v10842 = vmul.f32 %v10240, %v10710
  %v10843 = vmul.f32 %v10245, %v10711
  %v10844 = vmul.f32 %v10250, %v10712
  %v10845 = vmul.f32 %v10255, %v10713
  %v10846 = vmul.f32 %v10260, %v10714
  %v10847 = vmul.f32 %v10265, %v10715
  %v10848 = vmul.f32 %v10270, %v10716
  %v10849 = vmul.f32 %v10275, %v10717
  %v10850 = vmul.f32 %v10280, %v10718
  %v10851 = vmul.f32 %v10285, %v10719
  %v10852 = vmul.f32 %v10290, %v10720
  %v10853 = vmul.f32 %v10295, %v10721
  %v10854 = vmul.f32 %v10300, %v10722
  %v10855 = vmul.f32 %v10305, %v10723
  %v10856 = vmul.f32 %v10310, %v10724
  %v10857 = vmul.f32 %v10315, %v10725
  %v10858 = vmul.f32 %v10320, %v10726
  %v10859 = vmul.f32 %v10325, %v10727
  %v10860 = vmul.f32 %v10330, %v10728
  %v10861 = vmul.f32 %v10335, %v10729
  %v10862 = vmul.f32 %v10340, %v10730
  %v10863 = vmul.f32 %v10345, %v10731
  %v10864 = vmul.f32 %v10350, %v10732
  %v10865 = vmul.f32 %v10355, %v10733
  %v10866 = vmul.f32 %v10360, %v10734
  %v10867 = vmul.f32 %v10365, %v10735
  %v10868 = vmul.f32 %v10370, %v10736
  %v10869 = vmul.f32 %v10375, %v10737
  %v10870 = vmul.f32 %v10380, %v10738
  %v10871 = vmul.f32 %v10385, %v10739
  %v10872 = vmul.f32 %v10390, %v10740
  %v10873 = vmul.f32 %v10395, %v10741
  %v10874 = vmul.f32 %v10400, %v10742
  %v10875 = vmul.f32 %v10405, %v10743
  %v10876 = vmul.f32 %v10410, %v10744
  %v10877 = vmul.f32 %v10415, %v10745
  %v10878 = vmul.f32 %v10420, %v10746
  %v10879 = vmul.f32 %v10425, %v10747
  %v10880 = vmul.f32 %v10430, %v10748
  %v10881 = vmul.f32 %v10435, %v10749
  %v10882 = vmul.f32 %v10440, %v10750
  %v10883 = vmul.f32 %v10445, %v10751
  %v10884 = vmul.f32 %v10450, %v10752
  %v10885 = vmul.f32 %v10455, %v10753
  %v10886 = vmul.f32 %v10460, %v10754
  %v10887 = vmul.f32 %v10465, %v10755
  %v10888 = vmul.f32 %v10470, %v10756
  %v10889 = vmul.f32 %v10475, %v10757
  %v10890 = vmul.f32 %v10480, %v10758
  %v10891 = vmul.f32 %v10485, %v10759
  %v10892 = vmul.f32 %v10490, %v10760
  %v10893 = vmul.f32 %v10495, %v10761
  %v10894 = vmul.f32 %v10500, %v10762
  %v10895 = vmul.f32 %v10505, %v10763
  %v10896 = vmul.f32 %v10510, %v10764
  %v10897 = vmul.f32 %v10515, %v10765
  %v10898 = vmul.f32 %v10520, %v10766
  %v10899 = vmul.f32 %v10525, %v10767
  %v10900 = vmul.f32 %v10530, %v10768
  %v10901 = vmul.f32 %v10535, %v10769
  %v10902 = vmul.f32 %v10540, %v10770
  %v10903 = vmul.f32 %v10545, %v10771
  %v10904 = vmul.f32 %v10550, %v10772
  %v10905 = vmul.f32 %v10555, %v10773
  %v10906 = vmul.f32 %v10560, %v10774
  %v10907 = vmul.f32 %v10565, %v10775
  %v10908 = vmul.f32 %v10570, %v10776
  %v10909 = vmul.f32 %v10575, %v10777
  %v10910 = vmul.f32 %v10580, %v10778
  %v10911 = vmul.f32 %v10585, %v10779
  %v10912 = vmul.f32 %v10590, %v10780
  %v10913 = vmul.f32 %v10595, %v10781
  %v10914 = vmul.f32 %v10600, %v10782
  %v10915 = vmul.f32 %v10605, %v10783
  %v10916 = vmul.f32 %v10610, %v10784
  %v10917 = vmul.f32 %v10615, %v10785
  %v10918 = vmul.f32 %v10620, %v10786
  %v10919 = vmul.f32 %v10625, %v10787
  %v10920 = vmul.f32 %v10630, %v10788
  %v10921 = vmul.f32 %v10635, %v10789
  %v10922 = vmul.f32 %v10640, %v10790
  %v10923 = vmul.f32 %v10645, %v10791
  %v10924 = vmul.f32 %v10650, %v10792
  %v10925 = vmul.f32 %v10655, %v10793
  %v10926 = vmul.f32 %v10660, %v10794
  %11059 = vrot.lane.b32.xlu0 %v10795, 120
  %v11060 = vpop.permute.xlu0 %11059
  %11061 = vrot.lane.b32.xlu0 %v10796, 120
  %v11062 = vpop.permute.xlu0 %11061
  %11063 = vrot.lane.b32.xlu0 %v10797, 120
  %v11064 = vpop.permute.xlu0 %11063
  %11065 = vrot.lane.b32.xlu0 %v10798, 120
  %v11066 = vpop.permute.xlu0 %11065
  %11067 = vrot.lane.b32.xlu0 %v10799, 120
  %v11068 = vpop.permute.xlu0 %11067
  %11069 = vrot.lane.b32.xlu0 %v10800, 120
  %v11070 = vpop.permute.xlu0 %11069
  %11071 = vrot.lane.b32.xlu0 %v10801, 120
  %v11072 = vpop.permute.xlu0 %11071
  %11073 = vrot.lane.b32.xlu0 %v10802, 120
  %v11074 = vpop.permute.xlu0 %11073
  %11075 = vrot.lane.b32.xlu0 %v10803, 120
  %v11076 = vpop.permute.xlu0 %11075
  %11077 = vrot.lane.b32.xlu0 %v10804, 120
  %v11078 = vpop.permute.xlu0 %11077
  %11079 = vrot.lane.b32.xlu0 %v10805, 120
  %v11080 = vpop.permute.xlu0 %11079
  %11081 = vrot.lane.b32.xlu0 %v10806, 120
  %v11082 = vpop.permute.xlu0 %11081
  %11083 = vrot.lane.b32.xlu0 %v10807, 120
  %v11084 = vpop.permute.xlu0 %11083
  %11085 = vrot.lane.b32.xlu0 %v10808, 120
  %v11086 = vpop.permute.xlu0 %11085
  %11087 = vrot.lane.b32.xlu0 %v10809, 120
  %v11088 = vpop.permute.xlu0 %11087
  %11089 = vrot.lane.b32.xlu0 %v10810, 120
  %v11090 = vpop.permute.xlu0 %11089
  %11091 = vrot.lane.b32.xlu0 %v10811, 120
  %v11092 = vpop.permute.xlu0 %11091
  %11093 = vrot.lane.b32.xlu0 %v10812, 120
  %v11094 = vpop.permute.xlu0 %11093
  %11095 = vrot.lane.b32.xlu0 %v10813, 120
  %v11096 = vpop.permute.xlu0 %11095
  %11097 = vrot.lane.b32.xlu0 %v10814, 120
  %v11098 = vpop.permute.xlu0 %11097
  %11099 = vrot.lane.b32.xlu0 %v10815, 120
  %v11100 = vpop.permute.xlu0 %11099
  %11101 = vrot.lane.b32.xlu0 %v10816, 120
  %v11102 = vpop.permute.xlu0 %11101
  %11103 = vrot.lane.b32.xlu0 %v10817, 120
  %v11104 = vpop.permute.xlu0 %11103
  %11105 = vrot.lane.b32.xlu0 %v10818, 120
  %v11106 = vpop.permute.xlu0 %11105
  %11107 = vrot.lane.b32.xlu0 %v10819, 120
  %v11108 = vpop.permute.xlu0 %11107
  %11109 = vrot.lane.b32.xlu0 %v10820, 120
  %v11110 = vpop.permute.xlu0 %11109
  %11111 = vrot.lane.b32.xlu0 %v10821, 120
  %v11112 = vpop.permute.xlu0 %11111
  %11113 = vrot.lane.b32.xlu0 %v10822, 120
  %v11114 = vpop.permute.xlu0 %11113
  %11115 = vrot.lane.b32.xlu0 %v10823, 120
  %v11116 = vpop.permute.xlu0 %11115
  %11117 = vrot.lane.b32.xlu0 %v10824, 120
  %v11118 = vpop.permute.xlu0 %11117
  %11119 = vrot.lane.b32.xlu0 %v10825, 120
  %v11120 = vpop.permute.xlu0 %11119
  %11121 = vrot.lane.b32.xlu0 %v10826, 120
  %v11122 = vpop.permute.xlu0 %11121
  %11123 = vrot.lane.b32.xlu0 %v10827, 120
  %v11124 = vpop.permute.xlu0 %11123
  %11125 = vrot.lane.b32.xlu0 %v10828, 120
  %v11126 = vpop.permute.xlu0 %11125
  %11127 = vrot.lane.b32.xlu0 %v10829, 120
  %v11128 = vpop.permute.xlu0 %11127
  %11129 = vrot.lane.b32.xlu0 %v10830, 120
  %v11130 = vpop.permute.xlu0 %11129
  %11131 = vrot.lane.b32.xlu0 %v10831, 120
  %v11132 = vpop.permute.xlu0 %11131
  %11133 = vrot.lane.b32.xlu0 %v10832, 120
  %v11134 = vpop.permute.xlu0 %11133
  %11135 = vrot.lane.b32.xlu0 %v10833, 120
  %v11136 = vpop.permute.xlu0 %11135
  %11137 = vrot.lane.b32.xlu0 %v10834, 120
  %v11138 = vpop.permute.xlu0 %11137
  %11139 = vrot.lane.b32.xlu0 %v10835, 120
  %v11140 = vpop.permute.xlu0 %11139
  %11141 = vrot.lane.b32.xlu0 %v10836, 120
  %v11142 = vpop.permute.xlu0 %11141
  %11143 = vrot.lane.b32.xlu0 %v10837, 120
  %v11144 = vpop.permute.xlu0 %11143
  %11145 = vrot.lane.b32.xlu0 %v10838, 120
  %v11146 = vpop.permute.xlu0 %11145
  %11147 = vrot.lane.b32.xlu0 %v10839, 120
  %v11148 = vpop.permute.xlu0 %11147
  %11149 = vrot.lane.b32.xlu0 %v10840, 120
  %v11150 = vpop.permute.xlu0 %11149
  %11151 = vrot.lane.b32.xlu0 %v10841, 120
  %v11152 = vpop.permute.xlu0 %11151
  %11153 = vrot.lane.b32.xlu0 %v10842, 120
  %v11154 = vpop.permute.xlu0 %11153
  %11155 = vrot.lane.b32.xlu0 %v10843, 120
  %v11156 = vpop.permute.xlu0 %11155
  %11157 = vrot.lane.b32.xlu0 %v10844, 120
  %v11158 = vpop.permute.xlu0 %11157
  %11159 = vrot.lane.b32.xlu0 %v10845, 120
  %v11160 = vpop.permute.xlu0 %11159
  %11161 = vrot.lane.b32.xlu0 %v10846, 120
  %v11162 = vpop.permute.xlu0 %11161
  %11163 = vrot.lane.b32.xlu0 %v10847, 120
  %v11164 = vpop.permute.xlu0 %11163
  %11165 = vrot.lane.b32.xlu0 %v10848, 120
  %v11166 = vpop.permute.xlu0 %11165
  %11167 = vrot.lane.b32.xlu0 %v10849, 120
  %v11168 = vpop.permute.xlu0 %11167
  %11169 = vrot.lane.b32.xlu0 %v10850, 120
  %v11170 = vpop.permute.xlu0 %11169
  %11171 = vrot.lane.b32.xlu0 %v10851, 120
  %v11172 = vpop.permute.xlu0 %11171
  %11173 = vrot.lane.b32.xlu0 %v10852, 120
  %v11174 = vpop.permute.xlu0 %11173
  %11175 = vrot.lane.b32.xlu0 %v10853, 120
  %v11176 = vpop.permute.xlu0 %11175
  %11177 = vrot.lane.b32.xlu0 %v10854, 120
  %v11178 = vpop.permute.xlu0 %11177
  %11179 = vrot.lane.b32.xlu0 %v10855, 120
  %v11180 = vpop.permute.xlu0 %11179
  %11181 = vrot.lane.b32.xlu0 %v10856, 120
  %v11182 = vpop.permute.xlu0 %11181
  %11183 = vrot.lane.b32.xlu0 %v10857, 120
  %v11184 = vpop.permute.xlu0 %11183
  %11185 = vrot.lane.b32.xlu0 %v10858, 120
  %v11186 = vpop.permute.xlu0 %11185
  %11187 = vrot.lane.b32.xlu0 %v10859, 120
  %v11188 = vpop.permute.xlu0 %11187
  %11189 = vrot.lane.b32.xlu0 %v10860, 120
  %v11190 = vpop.permute.xlu0 %11189
  %11191 = vrot.lane.b32.xlu0 %v10861, 120
  %v11192 = vpop.permute.xlu0 %11191
  %11193 = vrot.lane.b32.xlu0 %v10862, 120
  %v11194 = vpop.permute.xlu0 %11193
  %11195 = vrot.lane.b32.xlu0 %v10863, 120
  %v11196 = vpop.permute.xlu0 %11195
  %11197 = vrot.lane.b32.xlu0 %v10864, 120
  %v11198 = vpop.permute.xlu0 %11197
  %11199 = vrot.lane.b32.xlu0 %v10865, 120
  %v11200 = vpop.permute.xlu0 %11199
  %11201 = vrot.lane.b32.xlu0 %v10866, 120
  %v11202 = vpop.permute.xlu0 %11201
  %11203 = vrot.lane.b32.xlu0 %v10867, 120
  %v11204 = vpop.permute.xlu0 %11203
  %11205 = vrot.lane.b32.xlu0 %v10868, 120
  %v11206 = vpop.permute.xlu0 %11205
  %11207 = vrot.lane.b32.xlu0 %v10869, 120
  %v11208 = vpop.permute.xlu0 %11207
  %11209 = vrot.lane.b32.xlu0 %v10870, 120
  %v11210 = vpop.permute.xlu0 %11209
  %11211 = vrot.lane.b32.xlu0 %v10871, 120
  %v11212 = vpop.permute.xlu0 %11211
  %11213 = vrot.lane.b32.xlu0 %v10872, 120
  %v11214 = vpop.permute.xlu0 %11213
  %11215 = vrot.lane.b32.xlu0 %v10873, 120
  %v11216 = vpop.permute.xlu0 %11215
  %11217 = vrot.lane.b32.xlu0 %v10874, 120
  %v11218 = vpop.permute.xlu0 %11217
  %11219 = vrot.lane.b32.xlu0 %v10875, 120
  %v11220 = vpop.permute.xlu0 %11219
  %11221 = vrot.lane.b32.xlu0 %v10876, 120
  %v11222 = vpop.permute.xlu0 %11221
  %11223 = vrot.lane.b32.xlu0 %v10877, 120
  %v11224 = vpop.permute.xlu0 %11223
  %11225 = vrot.lane.b32.xlu0 %v10878, 120
  %v11226 = vpop.permute.xlu0 %11225
  %11227 = vrot.lane.b32.xlu0 %v10879, 120
  %v11228 = vpop.permute.xlu0 %11227
  %11229 = vrot.lane.b32.xlu0 %v10880, 120
  %v11230 = vpop.permute.xlu0 %11229
  %11231 = vrot.lane.b32.xlu0 %v10881, 120
  %v11232 = vpop.permute.xlu0 %11231
  %11233 = vrot.lane.b32.xlu0 %v10882, 120
  %v11234 = vpop.permute.xlu0 %11233
  %11235 = vrot.lane.b32.xlu0 %v10883, 120
  %v11236 = vpop.permute.xlu0 %11235
  %11237 = vrot.lane.b32.xlu0 %v10884, 120
  %v11238 = vpop.permute.xlu0 %11237
  %11239 = vrot.lane.b32.xlu0 %v10885, 120
  %v11240 = vpop.permute.xlu0 %11239
  %11241 = vrot.lane.b32.xlu0 %v10886, 120
  %v11242 = vpop.permute.xlu0 %11241
  %11243 = vrot.lane.b32.xlu0 %v10887, 120
  %v11244 = vpop.permute.xlu0 %11243
  %11245 = vrot.lane.b32.xlu0 %v10888, 120
  %v11246 = vpop.permute.xlu0 %11245
  %11247 = vrot.lane.b32.xlu0 %v10889, 120
  %v11248 = vpop.permute.xlu0 %11247
  %11249 = vrot.lane.b32.xlu0 %v10890, 120
  %v11250 = vpop.permute.xlu0 %11249
  %11251 = vrot.lane.b32.xlu0 %v10891, 120
  %v11252 = vpop.permute.xlu0 %11251
  %11253 = vrot.lane.b32.xlu0 %v10892, 120
  %v11254 = vpop.permute.xlu0 %11253
  %11255 = vrot.lane.b32.xlu0 %v10893, 120
  %v11256 = vpop.permute.xlu0 %11255
  %11257 = vrot.lane.b32.xlu0 %v10894, 120
  %v11258 = vpop.permute.xlu0 %11257
  %11259 = vrot.lane.b32.xlu0 %v10895, 120
  %v11260 = vpop.permute.xlu0 %11259
  %11261 = vrot.lane.b32.xlu0 %v10896, 120
  %v11262 = vpop.permute.xlu0 %11261
  %11263 = vrot.lane.b32.xlu0 %v10897, 120
  %v11264 = vpop.permute.xlu0 %11263
  %11265 = vrot.lane.b32.xlu0 %v10898, 120
  %v11266 = vpop.permute.xlu0 %11265
  %11267 = vrot.lane.b32.xlu0 %v10899, 120
  %v11268 = vpop.permute.xlu0 %11267
  %11269 = vrot.lane.b32.xlu0 %v10900, 120
  %v11270 = vpop.permute.xlu0 %11269
  %11271 = vrot.lane.b32.xlu0 %v10901, 120
  %v11272 = vpop.permute.xlu0 %11271
  %11273 = vrot.lane.b32.xlu0 %v10902, 120
  %v11274 = vpop.permute.xlu0 %11273
  %11275 = vrot.lane.b32.xlu0 %v10903, 120
  %v11276 = vpop.permute.xlu0 %11275
  %11277 = vrot.lane.b32.xlu0 %v10904, 120
  %v11278 = vpop.permute.xlu0 %11277
  %11279 = vrot.lane.b32.xlu0 %v10905, 120
  %v11280 = vpop.permute.xlu0 %11279
  %11281 = vrot.lane.b32.xlu0 %v10906, 120
  %v11282 = vpop.permute.xlu0 %11281
  %11283 = vrot.lane.b32.xlu0 %v10907, 120
  %v11284 = vpop.permute.xlu0 %11283
  %11285 = vrot.lane.b32.xlu0 %v10908, 120
  %v11286 = vpop.permute.xlu0 %11285
  %11287 = vrot.lane.b32.xlu0 %v10909, 120
  %v11288 = vpop.permute.xlu0 %11287
  %11289 = vrot.lane.b32.xlu0 %v10910, 120
  %v11290 = vpop.permute.xlu0 %11289
  %11291 = vrot.lane.b32.xlu0 %v10911, 120
  %v11292 = vpop.permute.xlu0 %11291
  %11293 = vrot.lane.b32.xlu0 %v10912, 120
  %v11294 = vpop.permute.xlu0 %11293
  %11295 = vrot.lane.b32.xlu0 %v10913, 120
  %v11296 = vpop.permute.xlu0 %11295
  %11297 = vrot.lane.b32.xlu0 %v10914, 120
  %v11298 = vpop.permute.xlu0 %11297
  %11299 = vrot.lane.b32.xlu0 %v10915, 120
  %v11300 = vpop.permute.xlu0 %11299
  %11301 = vrot.lane.b32.xlu0 %v10916, 120
  %v11302 = vpop.permute.xlu0 %11301
  %11303 = vrot.lane.b32.xlu0 %v10917, 120
  %v11304 = vpop.permute.xlu0 %11303
  %11305 = vrot.lane.b32.xlu0 %v10918, 120
  %v11306 = vpop.permute.xlu0 %11305
  %11307 = vrot.lane.b32.xlu0 %v10919, 120
  %v11308 = vpop.permute.xlu0 %11307
  %11309 = vrot.lane.b32.xlu0 %v10920, 120
  %v11310 = vpop.permute.xlu0 %11309
  %11311 = vrot.lane.b32.xlu0 %v10921, 120
  %v11312 = vpop.permute.xlu0 %11311
  %11313 = vrot.lane.b32.xlu0 %v10922, 120
  %v11314 = vpop.permute.xlu0 %11313
  %11315 = vrot.lane.b32.xlu0 %v10923, 120
  %v11316 = vpop.permute.xlu0 %11315
  %11317 = vrot.lane.b32.xlu0 %v10924, 120
  %v11318 = vpop.permute.xlu0 %11317
  %11319 = vrot.lane.b32.xlu0 %v10925, 120
  %v11320 = vpop.permute.xlu0 %11319
  %11321 = vrot.lane.b32.xlu0 %v10926, 120
  %v11322 = vpop.permute.xlu0 %11321
  %v11455 = vadd.f32 %v10795, %v11060
  %v11456 = vadd.f32 %v10796, %v11062
  %v11457 = vadd.f32 %v10797, %v11064
  %v11458 = vadd.f32 %v10798, %v11066
  %v11459 = vadd.f32 %v10799, %v11068
  %v11460 = vadd.f32 %v10800, %v11070
  %v11461 = vadd.f32 %v10801, %v11072
  %v11462 = vadd.f32 %v10802, %v11074
  %v11463 = vadd.f32 %v10803, %v11076
  %v11464 = vadd.f32 %v10804, %v11078
  %v11465 = vadd.f32 %v10805, %v11080
  %v11466 = vadd.f32 %v10806, %v11082
  %v11467 = vadd.f32 %v10807, %v11084
  %v11468 = vadd.f32 %v10808, %v11086
  %v11469 = vadd.f32 %v10809, %v11088
  %v11470 = vadd.f32 %v10810, %v11090
  %v11471 = vadd.f32 %v10811, %v11092
  %v11472 = vadd.f32 %v10812, %v11094
  %v11473 = vadd.f32 %v10813, %v11096
  %v11474 = vadd.f32 %v10814, %v11098
  %v11475 = vadd.f32 %v10815, %v11100
  %v11476 = vadd.f32 %v10816, %v11102
  %v11477 = vadd.f32 %v10817, %v11104
  %v11478 = vadd.f32 %v10818, %v11106
  %v11479 = vadd.f32 %v10819, %v11108
  %v11480 = vadd.f32 %v10820, %v11110
  %v11481 = vadd.f32 %v10821, %v11112
  %v11482 = vadd.f32 %v10822, %v11114
  %v11483 = vadd.f32 %v10823, %v11116
  %v11484 = vadd.f32 %v10824, %v11118
  %v11485 = vadd.f32 %v10825, %v11120
  %v11486 = vadd.f32 %v10826, %v11122
  %v11487 = vadd.f32 %v10827, %v11124
  %v11488 = vadd.f32 %v10828, %v11126
  %v11489 = vadd.f32 %v10829, %v11128
  %v11490 = vadd.f32 %v10830, %v11130
  %v11491 = vadd.f32 %v10831, %v11132
  %v11492 = vadd.f32 %v10832, %v11134
  %v11493 = vadd.f32 %v10833, %v11136
  %v11494 = vadd.f32 %v10834, %v11138
  %v11495 = vadd.f32 %v10835, %v11140
  %v11496 = vadd.f32 %v10836, %v11142
  %v11497 = vadd.f32 %v10837, %v11144
  %v11498 = vadd.f32 %v10838, %v11146
  %v11499 = vadd.f32 %v10839, %v11148
  %v11500 = vadd.f32 %v10840, %v11150
  %v11501 = vadd.f32 %v10841, %v11152
  %v11502 = vadd.f32 %v10842, %v11154
  %v11503 = vadd.f32 %v10843, %v11156
  %v11504 = vadd.f32 %v10844, %v11158
  %v11505 = vadd.f32 %v10845, %v11160
  %v11506 = vadd.f32 %v10846, %v11162
  %v11507 = vadd.f32 %v10847, %v11164
  %v11508 = vadd.f32 %v10848, %v11166
  %v11509 = vadd.f32 %v10849, %v11168
  %v11510 = vadd.f32 %v10850, %v11170
  %v11511 = vadd.f32 %v10851, %v11172
  %v11512 = vadd.f32 %v10852, %v11174
  %v11513 = vadd.f32 %v10853, %v11176
  %v11514 = vadd.f32 %v10854, %v11178
  %v11515 = vadd.f32 %v10855, %v11180
  %v11516 = vadd.f32 %v10856, %v11182
  %v11517 = vadd.f32 %v10857, %v11184
  %v11518 = vadd.f32 %v10858, %v11186
  %v11519 = vadd.f32 %v10859, %v11188
  %v11520 = vadd.f32 %v10860, %v11190
  %v11521 = vadd.f32 %v10861, %v11192
  %v11522 = vadd.f32 %v10862, %v11194
  %v11523 = vadd.f32 %v10863, %v11196
  %v11524 = vadd.f32 %v10864, %v11198
  %v11525 = vadd.f32 %v10865, %v11200
  %v11526 = vadd.f32 %v10866, %v11202
  %v11527 = vadd.f32 %v10867, %v11204
  %v11528 = vadd.f32 %v10868, %v11206
  %v11529 = vadd.f32 %v10869, %v11208
  %v11530 = vadd.f32 %v10870, %v11210
  %v11531 = vadd.f32 %v10871, %v11212
  %v11532 = vadd.f32 %v10872, %v11214
  %v11533 = vadd.f32 %v10873, %v11216
  %v11534 = vadd.f32 %v10874, %v11218
  %v11535 = vadd.f32 %v10875, %v11220
  %v11536 = vadd.f32 %v10876, %v11222
  %v11537 = vadd.f32 %v10877, %v11224
  %v11538 = vadd.f32 %v10878, %v11226
  %v11539 = vadd.f32 %v10879, %v11228
  %v11540 = vadd.f32 %v10880, %v11230
  %v11541 = vadd.f32 %v10881, %v11232
  %v11542 = vadd.f32 %v10882, %v11234
  %v11543 = vadd.f32 %v10883, %v11236
  %v11544 = vadd.f32 %v10884, %v11238
  %v11545 = vadd.f32 %v10885, %v11240
  %v11546 = vadd.f32 %v10886, %v11242
  %v11547 = vadd.f32 %v10887, %v11244
  %v11548 = vadd.f32 %v10888, %v11246
  %v11549 = vadd.f32 %v10889, %v11248
  %v11550 = vadd.f32 %v10890, %v11250
  %v11551 = vadd.f32 %v10891, %v11252
  %v11552 = vadd.f32 %v10892, %v11254
  %v11553 = vadd.f32 %v10893, %v11256
  %v11554 = vadd.f32 %v10894, %v11258
  %v11555 = vadd.f32 %v10895, %v11260
  %v11556 = vadd.f32 %v10896, %v11262
  %v11557 = vadd.f32 %v10897, %v11264
  %v11558 = vadd.f32 %v10898, %v11266
  %v11559 = vadd.f32 %v10899, %v11268
  %v11560 = vadd.f32 %v10900, %v11270
  %v11561 = vadd.f32 %v10901, %v11272
  %v11562 = vadd.f32 %v10902, %v11274
  %v11563 = vadd.f32 %v10903, %v11276
  %v11564 = vadd.f32 %v10904, %v11278
  %v11565 = vadd.f32 %v10905, %v11280
  %v11566 = vadd.f32 %v10906, %v11282
  %v11567 = vadd.f32 %v10907, %v11284
  %v11568 = vadd.f32 %v10908, %v11286
  %v11569 = vadd.f32 %v10909, %v11288
  %v11570 = vadd.f32 %v10910, %v11290
  %v11571 = vadd.f32 %v10911, %v11292
  %v11572 = vadd.f32 %v10912, %v11294
  %v11573 = vadd.f32 %v10913, %v11296
  %v11574 = vadd.f32 %v10914, %v11298
  %v11575 = vadd.f32 %v10915, %v11300
  %v11576 = vadd.f32 %v10916, %v11302
  %v11577 = vadd.f32 %v10917, %v11304
  %v11578 = vadd.f32 %v10918, %v11306
  %v11579 = vadd.f32 %v10919, %v11308
  %v11580 = vadd.f32 %v10920, %v11310
  %v11581 = vadd.f32 %v10921, %v11312
  %v11582 = vadd.f32 %v10922, %v11314
  %v11583 = vadd.f32 %v10923, %v11316
  %v11584 = vadd.f32 %v10924, %v11318
  %v11585 = vadd.f32 %v10925, %v11320
  %v11586 = vadd.f32 %v10926, %v11322
  %v11587 = vld [vmem:[%s5] sm:$0x1]
  %v11589 = vlaneseq
  %v11590 = vshrl.u32 %v11589, 7
  %v11591 = vsub.s32 0, %v11590
  %v11592 = vrot.slane %v11587, %v11591
  %v11594 = vadd.f32 %v11455, %v11592
  %v11595 = vadd.f32 %v11456, %v11592
  %v11596 = vadd.f32 %v11457, %v11592
  %v11597 = vadd.f32 %v11458, %v11592
  %v11598 = vadd.f32 %v11459, %v11592
  %v11599 = vadd.f32 %v11460, %v11592
  %v11600 = vadd.f32 %v11461, %v11592
  %v11601 = vadd.f32 %v11462, %v11592
  %v11602 = vadd.f32 %v11463, %v11592
  %v11603 = vadd.f32 %v11464, %v11592
  %v11604 = vadd.f32 %v11465, %v11592
  %v11605 = vadd.f32 %v11466, %v11592
  %v11606 = vadd.f32 %v11467, %v11592
  %v11607 = vadd.f32 %v11468, %v11592
  %v11608 = vadd.f32 %v11469, %v11592
  %v11609 = vadd.f32 %v11470, %v11592
  %v11610 = vadd.f32 %v11471, %v11592
  %v11611 = vadd.f32 %v11472, %v11592
  %v11612 = vadd.f32 %v11473, %v11592
  %v11613 = vadd.f32 %v11474, %v11592
  %v11614 = vadd.f32 %v11475, %v11592
  %v11615 = vadd.f32 %v11476, %v11592
  %v11616 = vadd.f32 %v11477, %v11592
  %v11617 = vadd.f32 %v11478, %v11592
  %v11618 = vadd.f32 %v11479, %v11592
  %v11619 = vadd.f32 %v11480, %v11592
  %v11620 = vadd.f32 %v11481, %v11592
  %v11621 = vadd.f32 %v11482, %v11592
  %v11622 = vadd.f32 %v11483, %v11592
  %v11623 = vadd.f32 %v11484, %v11592
  %v11624 = vadd.f32 %v11485, %v11592
  %v11625 = vadd.f32 %v11486, %v11592
  %v11626 = vadd.f32 %v11487, %v11592
  %v11627 = vadd.f32 %v11488, %v11592
  %v11628 = vadd.f32 %v11489, %v11592
  %v11629 = vadd.f32 %v11490, %v11592
  %v11630 = vadd.f32 %v11491, %v11592
  %v11631 = vadd.f32 %v11492, %v11592
  %v11632 = vadd.f32 %v11493, %v11592
  %v11633 = vadd.f32 %v11494, %v11592
  %v11634 = vadd.f32 %v11495, %v11592
  %v11635 = vadd.f32 %v11496, %v11592
  %v11636 = vadd.f32 %v11497, %v11592
  %v11637 = vadd.f32 %v11498, %v11592
  %v11638 = vadd.f32 %v11499, %v11592
  %v11639 = vadd.f32 %v11500, %v11592
  %v11640 = vadd.f32 %v11501, %v11592
  %v11641 = vadd.f32 %v11502, %v11592
  %v11642 = vadd.f32 %v11503, %v11592
  %v11643 = vadd.f32 %v11504, %v11592
  %v11644 = vadd.f32 %v11505, %v11592
  %v11645 = vadd.f32 %v11506, %v11592
  %v11646 = vadd.f32 %v11507, %v11592
  %v11647 = vadd.f32 %v11508, %v11592
  %v11648 = vadd.f32 %v11509, %v11592
  %v11649 = vadd.f32 %v11510, %v11592
  %v11650 = vadd.f32 %v11511, %v11592
  %v11651 = vadd.f32 %v11512, %v11592
  %v11652 = vadd.f32 %v11513, %v11592
  %v11653 = vadd.f32 %v11514, %v11592
  %v11654 = vadd.f32 %v11515, %v11592
  %v11655 = vadd.f32 %v11516, %v11592
  %v11656 = vadd.f32 %v11517, %v11592
  %v11657 = vadd.f32 %v11518, %v11592
  %v11658 = vadd.f32 %v11519, %v11592
  %v11659 = vadd.f32 %v11520, %v11592
  %v11660 = vadd.f32 %v11521, %v11592
  %v11661 = vadd.f32 %v11522, %v11592
  %v11662 = vadd.f32 %v11523, %v11592
  %v11663 = vadd.f32 %v11524, %v11592
  %v11664 = vadd.f32 %v11525, %v11592
  %v11665 = vadd.f32 %v11526, %v11592
  %v11666 = vadd.f32 %v11527, %v11592
  %v11667 = vadd.f32 %v11528, %v11592
  %v11668 = vadd.f32 %v11529, %v11592
  %v11669 = vadd.f32 %v11530, %v11592
  %v11670 = vadd.f32 %v11531, %v11592
  %v11671 = vadd.f32 %v11532, %v11592
  %v11672 = vadd.f32 %v11533, %v11592
  %v11673 = vadd.f32 %v11534, %v11592
  %v11674 = vadd.f32 %v11535, %v11592
  %v11675 = vadd.f32 %v11536, %v11592
  %v11676 = vadd.f32 %v11537, %v11592
  %v11677 = vadd.f32 %v11538, %v11592
  %v11678 = vadd.f32 %v11539, %v11592
  %v11679 = vadd.f32 %v11540, %v11592
  %v11680 = vadd.f32 %v11541, %v11592
  %v11681 = vadd.f32 %v11542, %v11592
  %v11682 = vadd.f32 %v11543, %v11592
  %v11683 = vadd.f32 %v11544, %v11592
  %v11684 = vadd.f32 %v11545, %v11592
  %v11685 = vadd.f32 %v11546, %v11592
  %v11686 = vadd.f32 %v11547, %v11592
  %v11687 = vadd.f32 %v11548, %v11592
  %v11688 = vadd.f32 %v11549, %v11592
  %v11689 = vadd.f32 %v11550, %v11592
  %v11690 = vadd.f32 %v11551, %v11592
  %v11691 = vadd.f32 %v11552, %v11592
  %v11692 = vadd.f32 %v11553, %v11592
  %v11693 = vadd.f32 %v11554, %v11592
  %v11694 = vadd.f32 %v11555, %v11592
  %v11695 = vadd.f32 %v11556, %v11592
  %v11696 = vadd.f32 %v11557, %v11592
  %v11697 = vadd.f32 %v11558, %v11592
  %v11698 = vadd.f32 %v11559, %v11592
  %v11699 = vadd.f32 %v11560, %v11592
  %v11700 = vadd.f32 %v11561, %v11592
  %v11701 = vadd.f32 %v11562, %v11592
  %v11702 = vadd.f32 %v11563, %v11592
  %v11703 = vadd.f32 %v11564, %v11592
  %v11704 = vadd.f32 %v11565, %v11592
  %v11705 = vadd.f32 %v11566, %v11592
  %v11706 = vadd.f32 %v11567, %v11592
  %v11707 = vadd.f32 %v11568, %v11592
  %v11708 = vadd.f32 %v11569, %v11592
  %v11709 = vadd.f32 %v11570, %v11592
  %v11710 = vadd.f32 %v11571, %v11592
  %v11711 = vadd.f32 %v11572, %v11592
  %v11712 = vadd.f32 %v11573, %v11592
  %v11713 = vadd.f32 %v11574, %v11592
  %v11714 = vadd.f32 %v11575, %v11592
  %v11715 = vadd.f32 %v11576, %v11592
  %v11716 = vadd.f32 %v11577, %v11592
  %v11717 = vadd.f32 %v11578, %v11592
  %v11718 = vadd.f32 %v11579, %v11592
  %v11719 = vadd.f32 %v11580, %v11592
  %v11720 = vadd.f32 %v11581, %v11592
  %v11721 = vadd.f32 %v11582, %v11592
  %v11722 = vadd.f32 %v11583, %v11592
  %v11723 = vadd.f32 %v11584, %v11592
  %v11724 = vadd.f32 %v11585, %v11592
  %v11725 = vadd.f32 %v11586, %v11592
  %v11726 = vmax.f32 %v11594, 0.0
  %v11727 = vmax.f32 %v11595, 0.0
  %v11728 = vmax.f32 %v11596, 0.0
  %v11729 = vmax.f32 %v11597, 0.0
  %v11730 = vmax.f32 %v11598, 0.0
  %v11731 = vmax.f32 %v11599, 0.0
  %v11732 = vmax.f32 %v11600, 0.0
  %v11733 = vmax.f32 %v11601, 0.0
  %v11734 = vmax.f32 %v11602, 0.0
  %v11735 = vmax.f32 %v11603, 0.0
  %v11736 = vmax.f32 %v11604, 0.0
  %v11737 = vmax.f32 %v11605, 0.0
  %v11738 = vmax.f32 %v11606, 0.0
  %v11739 = vmax.f32 %v11607, 0.0
  %v11740 = vmax.f32 %v11608, 0.0
  %v11741 = vmax.f32 %v11609, 0.0
  %v11742 = vmax.f32 %v11610, 0.0
  %v11743 = vmax.f32 %v11611, 0.0
  %v11744 = vmax.f32 %v11612, 0.0
  %v11745 = vmax.f32 %v11613, 0.0
  %v11746 = vmax.f32 %v11614, 0.0
  %v11747 = vmax.f32 %v11615, 0.0
  %v11748 = vmax.f32 %v11616, 0.0
  %v11749 = vmax.f32 %v11617, 0.0
  %v11750 = vmax.f32 %v11618, 0.0
  %v11751 = vmax.f32 %v11619, 0.0
  %v11752 = vmax.f32 %v11620, 0.0
  %v11753 = vmax.f32 %v11621, 0.0
  %v11754 = vmax.f32 %v11622, 0.0
  %v11755 = vmax.f32 %v11623, 0.0
  %v11756 = vmax.f32 %v11624, 0.0
  %v11757 = vmax.f32 %v11625, 0.0
  %v11758 = vmax.f32 %v11626, 0.0
  %v11759 = vmax.f32 %v11627, 0.0
  %v11760 = vmax.f32 %v11628, 0.0
  %v11761 = vmax.f32 %v11629, 0.0
  %v11762 = vmax.f32 %v11630, 0.0
  %v11763 = vmax.f32 %v11631, 0.0
  %v11764 = vmax.f32 %v11632, 0.0
  %v11765 = vmax.f32 %v11633, 0.0
  %v11766 = vmax.f32 %v11634, 0.0
  %v11767 = vmax.f32 %v11635, 0.0
  %v11768 = vmax.f32 %v11636, 0.0
  %v11769 = vmax.f32 %v11637, 0.0
  %v11770 = vmax.f32 %v11638, 0.0
  %v11771 = vmax.f32 %v11639, 0.0
  %v11772 = vmax.f32 %v11640, 0.0
  %v11773 = vmax.f32 %v11641, 0.0
  %v11774 = vmax.f32 %v11642, 0.0
  %v11775 = vmax.f32 %v11643, 0.0
  %v11776 = vmax.f32 %v11644, 0.0
  %v11777 = vmax.f32 %v11645, 0.0
  %v11778 = vmax.f32 %v11646, 0.0
  %v11779 = vmax.f32 %v11647, 0.0
  %v11780 = vmax.f32 %v11648, 0.0
  %v11781 = vmax.f32 %v11649, 0.0
  %v11782 = vmax.f32 %v11650, 0.0
  %v11783 = vmax.f32 %v11651, 0.0
  %v11784 = vmax.f32 %v11652, 0.0
  %v11785 = vmax.f32 %v11653, 0.0
  %v11786 = vmax.f32 %v11654, 0.0
  %v11787 = vmax.f32 %v11655, 0.0
  %v11788 = vmax.f32 %v11656, 0.0
  %v11789 = vmax.f32 %v11657, 0.0
  %v11790 = vmax.f32 %v11658, 0.0
  %v11791 = vmax.f32 %v11659, 0.0
  %v11792 = vmax.f32 %v11660, 0.0
  %v11793 = vmax.f32 %v11661, 0.0
  %v11794 = vmax.f32 %v11662, 0.0
  %v11795 = vmax.f32 %v11663, 0.0
  %v11796 = vmax.f32 %v11664, 0.0
  %v11797 = vmax.f32 %v11665, 0.0
  %v11798 = vmax.f32 %v11666, 0.0
  %v11799 = vmax.f32 %v11667, 0.0
  %v11800 = vmax.f32 %v11668, 0.0
  %v11801 = vmax.f32 %v11669, 0.0
  %v11802 = vmax.f32 %v11670, 0.0
  %v11803 = vmax.f32 %v11671, 0.0
  %v11804 = vmax.f32 %v11672, 0.0
  %v11805 = vmax.f32 %v11673, 0.0
  %v11806 = vmax.f32 %v11674, 0.0
  %v11807 = vmax.f32 %v11675, 0.0
  %v11808 = vmax.f32 %v11676, 0.0
  %v11809 = vmax.f32 %v11677, 0.0
  %v11810 = vmax.f32 %v11678, 0.0
  %v11811 = vmax.f32 %v11679, 0.0
  %v11812 = vmax.f32 %v11680, 0.0
  %v11813 = vmax.f32 %v11681, 0.0
  %v11814 = vmax.f32 %v11682, 0.0
  %v11815 = vmax.f32 %v11683, 0.0
  %v11816 = vmax.f32 %v11684, 0.0
  %v11817 = vmax.f32 %v11685, 0.0
  %v11818 = vmax.f32 %v11686, 0.0
  %v11819 = vmax.f32 %v11687, 0.0
  %v11820 = vmax.f32 %v11688, 0.0
  %v11821 = vmax.f32 %v11689, 0.0
  %v11822 = vmax.f32 %v11690, 0.0
  %v11823 = vmax.f32 %v11691, 0.0
  %v11824 = vmax.f32 %v11692, 0.0
  %v11825 = vmax.f32 %v11693, 0.0
  %v11826 = vmax.f32 %v11694, 0.0
  %v11827 = vmax.f32 %v11695, 0.0
  %v11828 = vmax.f32 %v11696, 0.0
  %v11829 = vmax.f32 %v11697, 0.0
  %v11830 = vmax.f32 %v11698, 0.0
  %v11831 = vmax.f32 %v11699, 0.0
  %v11832 = vmax.f32 %v11700, 0.0
  %v11833 = vmax.f32 %v11701, 0.0
  %v11834 = vmax.f32 %v11702, 0.0
  %v11835 = vmax.f32 %v11703, 0.0
  %v11836 = vmax.f32 %v11704, 0.0
  %v11837 = vmax.f32 %v11705, 0.0
  %v11838 = vmax.f32 %v11706, 0.0
  %v11839 = vmax.f32 %v11707, 0.0
  %v11840 = vmax.f32 %v11708, 0.0
  %v11841 = vmax.f32 %v11709, 0.0
  %v11842 = vmax.f32 %v11710, 0.0
  %v11843 = vmax.f32 %v11711, 0.0
  %v11844 = vmax.f32 %v11712, 0.0
  %v11845 = vmax.f32 %v11713, 0.0
  %v11846 = vmax.f32 %v11714, 0.0
  %v11847 = vmax.f32 %v11715, 0.0
  %v11848 = vmax.f32 %v11716, 0.0
  %v11849 = vmax.f32 %v11717, 0.0
  %v11850 = vmax.f32 %v11718, 0.0
  %v11851 = vmax.f32 %v11719, 0.0
  %v11852 = vmax.f32 %v11720, 0.0
  %v11853 = vmax.f32 %v11721, 0.0
  %v11854 = vmax.f32 %v11722, 0.0
  %v11855 = vmax.f32 %v11723, 0.0
  %v11856 = vmax.f32 %v11724, 0.0
  %v11857 = vmax.f32 %v11725, 0.0
  %v11990 = vrot.slane %v11726, 1
  %v11991 = vrot.slane %v11727, 1
  %v11992 = vsel %vm314, %v11990, %v11991
  %v11993 = vrot.slane %v11728, 1
  %v11994 = vsel %vm314, %v11991, %v11993
  %v11995 = vrot.slane %v11729, 1
  %v11996 = vsel %vm314, %v11993, %v11995
  %v11997 = vrot.slane %v11730, 1
  %v11998 = vsel %vm314, %v11995, %v11997
  %v11999 = vrot.slane %v11731, 1
  %v12000 = vsel %vm314, %v11997, %v11999
  %v12001 = vrot.slane %v11732, 1
  %v12002 = vsel %vm314, %v11999, %v12001
  %v12003 = vrot.slane %v11733, 1
  %v12004 = vsel %vm314, %v12001, %v12003
  %v12005 = vrot.slane %v11734, 1
  %v12006 = vsel %vm314, %v12003, %v12005
  %v12007 = vrot.slane %v11735, 1
  %v12008 = vsel %vm314, %v12005, %v12007
  %v12009 = vrot.slane %v11736, 1
  %v12010 = vsel %vm314, %v12007, %v12009
  %v12011 = vrot.slane %v11737, 1
  %v12012 = vsel %vm314, %v12009, %v12011
  %v12013 = vrot.slane %v11738, 1
  %v12014 = vsel %vm314, %v12011, %v12013
  %v12015 = vrot.slane %v11739, 1
  %v12016 = vsel %vm314, %v12013, %v12015
  %v12017 = vrot.slane %v11740, 1
  %v12018 = vsel %vm314, %v12015, %v12017
  %v12019 = vrot.slane %v11741, 1
  %v12020 = vsel %vm314, %v12017, %v12019
  %v12021 = vrot.slane %v11742, 1
  %v12022 = vsel %vm314, %v12019, %v12021
  %v12023 = vrot.slane %v11743, 1
  %v12024 = vsel %vm314, %v12021, %v12023
  %v12025 = vrot.slane %v11744, 1
  %v12026 = vsel %vm314, %v12023, %v12025
  %v12027 = vrot.slane %v11745, 1
  %v12028 = vsel %vm314, %v12025, %v12027
  %v12029 = vrot.slane %v11746, 1
  %v12030 = vsel %vm314, %v12027, %v12029
  %v12031 = vrot.slane %v11747, 1
  %v12032 = vsel %vm314, %v12029, %v12031
  %v12033 = vrot.slane %v11748, 1
  %v12034 = vsel %vm314, %v12031, %v12033
  %v12035 = vrot.slane %v11749, 1
  %v12036 = vsel %vm314, %v12033, %v12035
  %v12037 = vrot.slane %v11750, 1
  %v12038 = vsel %vm314, %v12035, %v12037
  %v12039 = vrot.slane %v11751, 1
  %v12040 = vsel %vm314, %v12037, %v12039
  %v12041 = vrot.slane %v11752, 1
  %v12042 = vsel %vm314, %v12039, %v12041
  %v12043 = vrot.slane %v11753, 1
  %v12044 = vsel %vm314, %v12041, %v12043
  %v12045 = vrot.slane %v11754, 1
  %v12046 = vsel %vm314, %v12043, %v12045
  %v12047 = vrot.slane %v11755, 1
  %v12048 = vsel %vm314, %v12045, %v12047
  %v12049 = vrot.slane %v11756, 1
  %v12050 = vsel %vm314, %v12047, %v12049
  %v12051 = vrot.slane %v11757, 1
  %v12052 = vsel %vm314, %v12049, %v12051
  %v12053 = vrot.slane %v11758, 1
  %v12054 = vsel %vm314, %v12051, %v12053
  %v12055 = vrot.slane %v11759, 1
  %v12056 = vsel %vm314, %v12053, %v12055
  %v12057 = vrot.slane %v11760, 1
  %v12058 = vsel %vm314, %v12055, %v12057
  %v12059 = vrot.slane %v11761, 1
  %v12060 = vsel %vm314, %v12057, %v12059
  %v12061 = vrot.slane %v11762, 1
  %v12062 = vsel %vm314, %v12059, %v12061
  %v12063 = vrot.slane %v11763, 1
  %v12064 = vsel %vm314, %v12061, %v12063
  %v12065 = vrot.slane %v11764, 1
  %v12066 = vsel %vm314, %v12063, %v12065
  %v12067 = vrot.slane %v11765, 1
  %v12068 = vsel %vm314, %v12065, %v12067
  %v12069 = vrot.slane %v11766, 1
  %v12070 = vsel %vm314, %v12067, %v12069
  %v12071 = vrot.slane %v11767, 1
  %v12072 = vsel %vm314, %v12069, %v12071
  %v12073 = vrot.slane %v11768, 1
  %v12074 = vsel %vm314, %v12071, %v12073
  %v12075 = vrot.slane %v11769, 1
  %v12076 = vsel %vm314, %v12073, %v12075
  %v12077 = vrot.slane %v11770, 1
  %v12078 = vsel %vm314, %v12075, %v12077
  %v12079 = vrot.slane %v11771, 1
  %v12080 = vsel %vm314, %v12077, %v12079
  %v12081 = vrot.slane %v11772, 1
  %v12082 = vsel %vm314, %v12079, %v12081
  %v12083 = vrot.slane %v11773, 1
  %v12084 = vsel %vm314, %v12081, %v12083
  %v12085 = vrot.slane %v11774, 1
  %v12086 = vsel %vm314, %v12083, %v12085
  %v12087 = vrot.slane %v11775, 1
  %v12088 = vsel %vm314, %v12085, %v12087
  %v12089 = vrot.slane %v11776, 1
  %v12090 = vsel %vm314, %v12087, %v12089
  %v12091 = vrot.slane %v11777, 1
  %v12092 = vsel %vm314, %v12089, %v12091
  %v12093 = vrot.slane %v11778, 1
  %v12094 = vsel %vm314, %v12091, %v12093
  %v12095 = vrot.slane %v11779, 1
  %v12096 = vsel %vm314, %v12093, %v12095
  %v12097 = vrot.slane %v11780, 1
  %v12098 = vsel %vm314, %v12095, %v12097
  %v12099 = vrot.slane %v11781, 1
  %v12100 = vsel %vm314, %v12097, %v12099
  %v12101 = vrot.slane %v11782, 1
  %v12102 = vsel %vm314, %v12099, %v12101
  %v12103 = vrot.slane %v11783, 1
  %v12104 = vsel %vm314, %v12101, %v12103
  %v12105 = vrot.slane %v11784, 1
  %v12106 = vsel %vm314, %v12103, %v12105
  %v12107 = vrot.slane %v11785, 1
  %v12108 = vsel %vm314, %v12105, %v12107
  %v12109 = vrot.slane %v11786, 1
  %v12110 = vsel %vm314, %v12107, %v12109
  %v12111 = vrot.slane %v11787, 1
  %v12112 = vsel %vm314, %v12109, %v12111
  %v12113 = vrot.slane %v11788, 1
  %v12114 = vsel %vm314, %v12111, %v12113
  %v12115 = vrot.slane %v11789, 1
  %v12116 = vsel %vm314, %v12113, %v12115
  %v12117 = vrot.slane %v11790, 1
  %v12118 = vsel %vm314, %v12115, %v12117
  %v12119 = vrot.slane %v11791, 1
  %v12120 = vsel %vm314, %v12117, %v12119
  %v12121 = vrot.slane %v11792, 1
  %v12122 = vsel %vm314, %v12119, %v12121
  %v12123 = vrot.slane %v11793, 1
  %v12124 = vsel %vm314, %v12121, %v12123
  %v12125 = vrot.slane %v11794, 1
  %v12126 = vsel %vm314, %v12123, %v12125
  %v12127 = vrot.slane %v11795, 1
  %v12128 = vsel %vm314, %v12125, %v12127
  %v12129 = vrot.slane %v11796, 1
  %v12130 = vsel %vm314, %v12127, %v12129
  %v12131 = vrot.slane %v11797, 1
  %v12132 = vsel %vm314, %v12129, %v12131
  %v12133 = vrot.slane %v11798, 1
  %v12134 = vsel %vm314, %v12131, %v12133
  %v12135 = vrot.slane %v11799, 1
  %v12136 = vsel %vm314, %v12133, %v12135
  %v12137 = vrot.slane %v11800, 1
  %v12138 = vsel %vm314, %v12135, %v12137
  %v12139 = vrot.slane %v11801, 1
  %v12140 = vsel %vm314, %v12137, %v12139
  %v12141 = vrot.slane %v11802, 1
  %v12142 = vsel %vm314, %v12139, %v12141
  %v12143 = vrot.slane %v11803, 1
  %v12144 = vsel %vm314, %v12141, %v12143
  %v12145 = vrot.slane %v11804, 1
  %v12146 = vsel %vm314, %v12143, %v12145
  %v12147 = vrot.slane %v11805, 1
  %v12148 = vsel %vm314, %v12145, %v12147
  %v12149 = vrot.slane %v11806, 1
  %v12150 = vsel %vm314, %v12147, %v12149
  %v12151 = vrot.slane %v11807, 1
  %v12152 = vsel %vm314, %v12149, %v12151
  %v12153 = vrot.slane %v11808, 1
  %v12154 = vsel %vm314, %v12151, %v12153
  %v12155 = vrot.slane %v11809, 1
  %v12156 = vsel %vm314, %v12153, %v12155
  %v12157 = vrot.slane %v11810, 1
  %v12158 = vsel %vm314, %v12155, %v12157
  %v12159 = vrot.slane %v11811, 1
  %v12160 = vsel %vm314, %v12157, %v12159
  %v12161 = vrot.slane %v11812, 1
  %v12162 = vsel %vm314, %v12159, %v12161
  %v12163 = vrot.slane %v11813, 1
  %v12164 = vsel %vm314, %v12161, %v12163
  %v12165 = vrot.slane %v11814, 1
  %v12166 = vsel %vm314, %v12163, %v12165
  %v12167 = vrot.slane %v11815, 1
  %v12168 = vsel %vm314, %v12165, %v12167
  %v12169 = vrot.slane %v11816, 1
  %v12170 = vsel %vm314, %v12167, %v12169
  %v12171 = vrot.slane %v11817, 1
  %v12172 = vsel %vm314, %v12169, %v12171
  %v12173 = vrot.slane %v11818, 1
  %v12174 = vsel %vm314, %v12171, %v12173
  %v12175 = vrot.slane %v11819, 1
  %v12176 = vsel %vm314, %v12173, %v12175
  %v12177 = vrot.slane %v11820, 1
  %v12178 = vsel %vm314, %v12175, %v12177
  %v12179 = vrot.slane %v11821, 1
  %v12180 = vsel %vm314, %v12177, %v12179
  %v12181 = vrot.slane %v11822, 1
  %v12182 = vsel %vm314, %v12179, %v12181
  %v12183 = vrot.slane %v11823, 1
  %v12184 = vsel %vm314, %v12181, %v12183
  %v12185 = vrot.slane %v11824, 1
  %v12186 = vsel %vm314, %v12183, %v12185
  %v12187 = vrot.slane %v11825, 1
  %v12188 = vsel %vm314, %v12185, %v12187
  %v12189 = vrot.slane %v11826, 1
  %v12190 = vsel %vm314, %v12187, %v12189
  %v12191 = vrot.slane %v11827, 1
  %v12192 = vsel %vm314, %v12189, %v12191
  %v12193 = vrot.slane %v11828, 1
  %v12194 = vsel %vm314, %v12191, %v12193
  %v12195 = vrot.slane %v11829, 1
  %v12196 = vsel %vm314, %v12193, %v12195
  %v12197 = vrot.slane %v11830, 1
  %v12198 = vsel %vm314, %v12195, %v12197
  %v12199 = vrot.slane %v11831, 1
  %v12200 = vsel %vm314, %v12197, %v12199
  %v12201 = vrot.slane %v11832, 1
  %v12202 = vsel %vm314, %v12199, %v12201
  %v12203 = vrot.slane %v11833, 1
  %v12204 = vsel %vm314, %v12201, %v12203
  %v12205 = vrot.slane %v11834, 1
  %v12206 = vsel %vm314, %v12203, %v12205
  %v12207 = vrot.slane %v11835, 1
  %v12208 = vsel %vm314, %v12205, %v12207
  %v12209 = vrot.slane %v11836, 1
  %v12210 = vsel %vm314, %v12207, %v12209
  %v12211 = vrot.slane %v11837, 1
  %v12212 = vsel %vm314, %v12209, %v12211
  %v12213 = vrot.slane %v11838, 1
  %v12214 = vsel %vm314, %v12211, %v12213
  %v12215 = vrot.slane %v11839, 1
  %v12216 = vsel %vm314, %v12213, %v12215
  %v12217 = vrot.slane %v11840, 1
  %v12218 = vsel %vm314, %v12215, %v12217
  %v12219 = vrot.slane %v11841, 1
  %v12220 = vsel %vm314, %v12217, %v12219
  %v12221 = vrot.slane %v11842, 1
  %v12222 = vsel %vm314, %v12219, %v12221
  %v12223 = vrot.slane %v11843, 1
  %v12224 = vsel %vm314, %v12221, %v12223
  %v12225 = vrot.slane %v11844, 1
  %v12226 = vsel %vm314, %v12223, %v12225
  %v12227 = vrot.slane %v11845, 1
  %v12228 = vsel %vm314, %v12225, %v12227
  %v12229 = vrot.slane %v11846, 1
  %v12230 = vsel %vm314, %v12227, %v12229
  %v12231 = vrot.slane %v11847, 1
  %v12232 = vsel %vm314, %v12229, %v12231
  %v12233 = vrot.slane %v11848, 1
  %v12234 = vsel %vm314, %v12231, %v12233
  %v12235 = vrot.slane %v11849, 1
  %v12236 = vsel %vm314, %v12233, %v12235
  %v12237 = vrot.slane %v11850, 1
  %v12238 = vsel %vm314, %v12235, %v12237
  %v12239 = vrot.slane %v11851, 1
  %v12240 = vsel %vm314, %v12237, %v12239
  %v12241 = vrot.slane %v11852, 1
  %v12242 = vsel %vm314, %v12239, %v12241
  %v12243 = vrot.slane %v11853, 1
  %v12244 = vsel %vm314, %v12241, %v12243
  %v12245 = vrot.slane %v11854, 1
  %v12246 = vsel %vm314, %v12243, %v12245
  %v12247 = vrot.slane %v11855, 1
  %v12248 = vsel %vm314, %v12245, %v12247
  %v12249 = vrot.slane %v11856, 1
  %v12250 = vsel %vm314, %v12247, %v12249
  %v12251 = vrot.slane %v11857, 1
  %v12252 = vsel %vm314, %v12249, %v12251
  %v12385 = vmax.f32 %v11726, %v11992
  %v12386 = vmax.f32 %v11727, %v11994
  %v12387 = vmax.f32 %v11728, %v11996
  %v12388 = vmax.f32 %v11729, %v11998
  %v12389 = vmax.f32 %v11730, %v12000
  %v12390 = vmax.f32 %v11731, %v12002
  %v12391 = vmax.f32 %v11732, %v12004
  %v12392 = vmax.f32 %v11733, %v12006
  %v12393 = vmax.f32 %v11734, %v12008
  %v12394 = vmax.f32 %v11735, %v12010
  %v12395 = vmax.f32 %v11736, %v12012
  %v12396 = vmax.f32 %v11737, %v12014
  %v12397 = vmax.f32 %v11738, %v12016
  %v12398 = vmax.f32 %v11739, %v12018
  %v12399 = vmax.f32 %v11740, %v12020
  %v12400 = vmax.f32 %v11741, %v12022
  %v12401 = vmax.f32 %v11742, %v12024
  %v12402 = vmax.f32 %v11743, %v12026
  %v12403 = vmax.f32 %v11744, %v12028
  %v12404 = vmax.f32 %v11745, %v12030
  %v12405 = vmax.f32 %v11746, %v12032
  %v12406 = vmax.f32 %v11747, %v12034
  %v12407 = vmax.f32 %v11748, %v12036
  %v12408 = vmax.f32 %v11749, %v12038
  %v12409 = vmax.f32 %v11750, %v12040
  %v12410 = vmax.f32 %v11751, %v12042
  %v12411 = vmax.f32 %v11752, %v12044
  %v12412 = vmax.f32 %v11753, %v12046
  %v12413 = vmax.f32 %v11754, %v12048
  %v12414 = vmax.f32 %v11755, %v12050
  %v12415 = vmax.f32 %v11756, %v12052
  %v12416 = vmax.f32 %v11757, %v12054
  %v12417 = vmax.f32 %v11758, %v12056
  %v12418 = vmax.f32 %v11759, %v12058
  %v12419 = vmax.f32 %v11760, %v12060
  %v12420 = vmax.f32 %v11761, %v12062
  %v12421 = vmax.f32 %v11762, %v12064
  %v12422 = vmax.f32 %v11763, %v12066
  %v12423 = vmax.f32 %v11764, %v12068
  %v12424 = vmax.f32 %v11765, %v12070
  %v12425 = vmax.f32 %v11766, %v12072
  %v12426 = vmax.f32 %v11767, %v12074
  %v12427 = vmax.f32 %v11768, %v12076
  %v12428 = vmax.f32 %v11769, %v12078
  %v12429 = vmax.f32 %v11770, %v12080
  %v12430 = vmax.f32 %v11771, %v12082
  %v12431 = vmax.f32 %v11772, %v12084
  %v12432 = vmax.f32 %v11773, %v12086
  %v12433 = vmax.f32 %v11774, %v12088
  %v12434 = vmax.f32 %v11775, %v12090
  %v12435 = vmax.f32 %v11776, %v12092
  %v12436 = vmax.f32 %v11777, %v12094
  %v12437 = vmax.f32 %v11778, %v12096
  %v12438 = vmax.f32 %v11779, %v12098
  %v12439 = vmax.f32 %v11780, %v12100
  %v12440 = vmax.f32 %v11781, %v12102
  %v12441 = vmax.f32 %v11782, %v12104
  %v12442 = vmax.f32 %v11783, %v12106
  %v12443 = vmax.f32 %v11784, %v12108
  %v12444 = vmax.f32 %v11785, %v12110
  %v12445 = vmax.f32 %v11786, %v12112
  %v12446 = vmax.f32 %v11787, %v12114
  %v12447 = vmax.f32 %v11788, %v12116
  %v12448 = vmax.f32 %v11789, %v12118
  %v12449 = vmax.f32 %v11790, %v12120
  %v12450 = vmax.f32 %v11791, %v12122
  %v12451 = vmax.f32 %v11792, %v12124
  %v12452 = vmax.f32 %v11793, %v12126
  %v12453 = vmax.f32 %v11794, %v12128
  %v12454 = vmax.f32 %v11795, %v12130
  %v12455 = vmax.f32 %v11796, %v12132
  %v12456 = vmax.f32 %v11797, %v12134
  %v12457 = vmax.f32 %v11798, %v12136
  %v12458 = vmax.f32 %v11799, %v12138
  %v12459 = vmax.f32 %v11800, %v12140
  %v12460 = vmax.f32 %v11801, %v12142
  %v12461 = vmax.f32 %v11802, %v12144
  %v12462 = vmax.f32 %v11803, %v12146
  %v12463 = vmax.f32 %v11804, %v12148
  %v12464 = vmax.f32 %v11805, %v12150
  %v12465 = vmax.f32 %v11806, %v12152
  %v12466 = vmax.f32 %v11807, %v12154
  %v12467 = vmax.f32 %v11808, %v12156
  %v12468 = vmax.f32 %v11809, %v12158
  %v12469 = vmax.f32 %v11810, %v12160
  %v12470 = vmax.f32 %v11811, %v12162
  %v12471 = vmax.f32 %v11812, %v12164
  %v12472 = vmax.f32 %v11813, %v12166
  %v12473 = vmax.f32 %v11814, %v12168
  %v12474 = vmax.f32 %v11815, %v12170
  %v12475 = vmax.f32 %v11816, %v12172
  %v12476 = vmax.f32 %v11817, %v12174
  %v12477 = vmax.f32 %v11818, %v12176
  %v12478 = vmax.f32 %v11819, %v12178
  %v12479 = vmax.f32 %v11820, %v12180
  %v12480 = vmax.f32 %v11821, %v12182
  %v12481 = vmax.f32 %v11822, %v12184
  %v12482 = vmax.f32 %v11823, %v12186
  %v12483 = vmax.f32 %v11824, %v12188
  %v12484 = vmax.f32 %v11825, %v12190
  %v12485 = vmax.f32 %v11826, %v12192
  %v12486 = vmax.f32 %v11827, %v12194
  %v12487 = vmax.f32 %v11828, %v12196
  %v12488 = vmax.f32 %v11829, %v12198
  %v12489 = vmax.f32 %v11830, %v12200
  %v12490 = vmax.f32 %v11831, %v12202
  %v12491 = vmax.f32 %v11832, %v12204
  %v12492 = vmax.f32 %v11833, %v12206
  %v12493 = vmax.f32 %v11834, %v12208
  %v12494 = vmax.f32 %v11835, %v12210
  %v12495 = vmax.f32 %v11836, %v12212
  %v12496 = vmax.f32 %v11837, %v12214
  %v12497 = vmax.f32 %v11838, %v12216
  %v12498 = vmax.f32 %v11839, %v12218
  %v12499 = vmax.f32 %v11840, %v12220
  %v12500 = vmax.f32 %v11841, %v12222
  %v12501 = vmax.f32 %v11842, %v12224
  %v12502 = vmax.f32 %v11843, %v12226
  %v12503 = vmax.f32 %v11844, %v12228
  %v12504 = vmax.f32 %v11845, %v12230
  %v12505 = vmax.f32 %v11846, %v12232
  %v12506 = vmax.f32 %v11847, %v12234
  %v12507 = vmax.f32 %v11848, %v12236
  %v12508 = vmax.f32 %v11849, %v12238
  %v12509 = vmax.f32 %v11850, %v12240
  %v12510 = vmax.f32 %v11851, %v12242
  %v12511 = vmax.f32 %v11852, %v12244
  %v12512 = vmax.f32 %v11853, %v12246
  %v12513 = vmax.f32 %v11854, %v12248
  %v12514 = vmax.f32 %v11855, %v12250
  %v12515 = vmax.f32 %v11856, %v12252
  %v12516 = vmax.f32 %v11857, %v12251
  %v12517 = vrot.slane %v11726, 2
  %v12518 = vrot.slane %v11727, 2
  %v12519 = vsel %vm1034, %v12517, %v12518
  %v12520 = vrot.slane %v11728, 2
  %v12521 = vsel %vm1034, %v12518, %v12520
  %v12522 = vrot.slane %v11729, 2
  %v12523 = vsel %vm1034, %v12520, %v12522
  %v12524 = vrot.slane %v11730, 2
  %v12525 = vsel %vm1034, %v12522, %v12524
  %v12526 = vrot.slane %v11731, 2
  %v12527 = vsel %vm1034, %v12524, %v12526
  %v12528 = vrot.slane %v11732, 2
  %v12529 = vsel %vm1034, %v12526, %v12528
  %v12530 = vrot.slane %v11733, 2
  %v12531 = vsel %vm1034, %v12528, %v12530
  %v12532 = vrot.slane %v11734, 2
  %v12533 = vsel %vm1034, %v12530, %v12532
  %v12534 = vrot.slane %v11735, 2
  %v12535 = vsel %vm1034, %v12532, %v12534
  %v12536 = vrot.slane %v11736, 2
  %v12537 = vsel %vm1034, %v12534, %v12536
  %v12538 = vrot.slane %v11737, 2
  %v12539 = vsel %vm1034, %v12536, %v12538
  %v12540 = vrot.slane %v11738, 2
  %v12541 = vsel %vm1034, %v12538, %v12540
  %v12542 = vrot.slane %v11739, 2
  %v12543 = vsel %vm1034, %v12540, %v12542
  %v12544 = vrot.slane %v11740, 2
  %v12545 = vsel %vm1034, %v12542, %v12544
  %v12546 = vrot.slane %v11741, 2
  %v12547 = vsel %vm1034, %v12544, %v12546
  %v12548 = vrot.slane %v11742, 2
  %v12549 = vsel %vm1034, %v12546, %v12548
  %v12550 = vrot.slane %v11743, 2
  %v12551 = vsel %vm1034, %v12548, %v12550
  %v12552 = vrot.slane %v11744, 2
  %v12553 = vsel %vm1034, %v12550, %v12552
  %v12554 = vrot.slane %v11745, 2
  %v12555 = vsel %vm1034, %v12552, %v12554
  %v12556 = vrot.slane %v11746, 2
  %v12557 = vsel %vm1034, %v12554, %v12556
  %v12558 = vrot.slane %v11747, 2
  %v12559 = vsel %vm1034, %v12556, %v12558
  %v12560 = vrot.slane %v11748, 2
  %v12561 = vsel %vm1034, %v12558, %v12560
  %v12562 = vrot.slane %v11749, 2
  %v12563 = vsel %vm1034, %v12560, %v12562
  %v12564 = vrot.slane %v11750, 2
  %v12565 = vsel %vm1034, %v12562, %v12564
  %v12566 = vrot.slane %v11751, 2
  %v12567 = vsel %vm1034, %v12564, %v12566
  %v12568 = vrot.slane %v11752, 2
  %v12569 = vsel %vm1034, %v12566, %v12568
  %v12570 = vrot.slane %v11753, 2
  %v12571 = vsel %vm1034, %v12568, %v12570
  %v12572 = vrot.slane %v11754, 2
  %v12573 = vsel %vm1034, %v12570, %v12572
  %v12574 = vrot.slane %v11755, 2
  %v12575 = vsel %vm1034, %v12572, %v12574
  %v12576 = vrot.slane %v11756, 2
  %v12577 = vsel %vm1034, %v12574, %v12576
  %v12578 = vrot.slane %v11757, 2
  %v12579 = vsel %vm1034, %v12576, %v12578
  %v12580 = vrot.slane %v11758, 2
  %v12581 = vsel %vm1034, %v12578, %v12580
  %v12582 = vrot.slane %v11759, 2
  %v12583 = vsel %vm1034, %v12580, %v12582
  %v12584 = vrot.slane %v11760, 2
  %v12585 = vsel %vm1034, %v12582, %v12584
  %v12586 = vrot.slane %v11761, 2
  %v12587 = vsel %vm1034, %v12584, %v12586
  %v12588 = vrot.slane %v11762, 2
  %v12589 = vsel %vm1034, %v12586, %v12588
  %v12590 = vrot.slane %v11763, 2
  %v12591 = vsel %vm1034, %v12588, %v12590
  %v12592 = vrot.slane %v11764, 2
  %v12593 = vsel %vm1034, %v12590, %v12592
  %v12594 = vrot.slane %v11765, 2
  %v12595 = vsel %vm1034, %v12592, %v12594
  %v12596 = vrot.slane %v11766, 2
  %v12597 = vsel %vm1034, %v12594, %v12596
  %v12598 = vrot.slane %v11767, 2
  %v12599 = vsel %vm1034, %v12596, %v12598
  %v12600 = vrot.slane %v11768, 2
  %v12601 = vsel %vm1034, %v12598, %v12600
  %v12602 = vrot.slane %v11769, 2
  %v12603 = vsel %vm1034, %v12600, %v12602
  %v12604 = vrot.slane %v11770, 2
  %v12605 = vsel %vm1034, %v12602, %v12604
  %v12606 = vrot.slane %v11771, 2
  %v12607 = vsel %vm1034, %v12604, %v12606
  %v12608 = vrot.slane %v11772, 2
  %v12609 = vsel %vm1034, %v12606, %v12608
  %v12610 = vrot.slane %v11773, 2
  %v12611 = vsel %vm1034, %v12608, %v12610
  %v12612 = vrot.slane %v11774, 2
  %v12613 = vsel %vm1034, %v12610, %v12612
  %v12614 = vrot.slane %v11775, 2
  %v12615 = vsel %vm1034, %v12612, %v12614
  %v12616 = vrot.slane %v11776, 2
  %v12617 = vsel %vm1034, %v12614, %v12616
  %v12618 = vrot.slane %v11777, 2
  %v12619 = vsel %vm1034, %v12616, %v12618
  %v12620 = vrot.slane %v11778, 2
  %v12621 = vsel %vm1034, %v12618, %v12620
  %v12622 = vrot.slane %v11779, 2
  %v12623 = vsel %vm1034, %v12620, %v12622
  %v12624 = vrot.slane %v11780, 2
  %v12625 = vsel %vm1034, %v12622, %v12624
  %v12626 = vrot.slane %v11781, 2
  %v12627 = vsel %vm1034, %v12624, %v12626
  %v12628 = vrot.slane %v11782, 2
  %v12629 = vsel %vm1034, %v12626, %v12628
  %v12630 = vrot.slane %v11783, 2
  %v12631 = vsel %vm1034, %v12628, %v12630
  %v12632 = vrot.slane %v11784, 2
  %v12633 = vsel %vm1034, %v12630, %v12632
  %v12634 = vrot.slane %v11785, 2
  %v12635 = vsel %vm1034, %v12632, %v12634
  %v12636 = vrot.slane %v11786, 2
  %v12637 = vsel %vm1034, %v12634, %v12636
  %v12638 = vrot.slane %v11787, 2
  %v12639 = vsel %vm1034, %v12636, %v12638
  %v12640 = vrot.slane %v11788, 2
  %v12641 = vsel %vm1034, %v12638, %v12640
  %v12642 = vrot.slane %v11789, 2
  %v12643 = vsel %vm1034, %v12640, %v12642
  %v12644 = vrot.slane %v11790, 2
  %v12645 = vsel %vm1034, %v12642, %v12644
  %v12646 = vrot.slane %v11791, 2
  %v12647 = vsel %vm1034, %v12644, %v12646
  %v12648 = vrot.slane %v11792, 2
  %v12649 = vsel %vm1034, %v12646, %v12648
  %v12650 = vrot.slane %v11793, 2
  %v12651 = vsel %vm1034, %v12648, %v12650
  %v12652 = vrot.slane %v11794, 2
  %v12653 = vsel %vm1034, %v12650, %v12652
  %v12654 = vrot.slane %v11795, 2
  %v12655 = vsel %vm1034, %v12652, %v12654
  %v12656 = vrot.slane %v11796, 2
  %v12657 = vsel %vm1034, %v12654, %v12656
  %v12658 = vrot.slane %v11797, 2
  %v12659 = vsel %vm1034, %v12656, %v12658
  %v12660 = vrot.slane %v11798, 2
  %v12661 = vsel %vm1034, %v12658, %v12660
  %v12662 = vrot.slane %v11799, 2
  %v12663 = vsel %vm1034, %v12660, %v12662
  %v12664 = vrot.slane %v11800, 2
  %v12665 = vsel %vm1034, %v12662, %v12664
  %v12666 = vrot.slane %v11801, 2
  %v12667 = vsel %vm1034, %v12664, %v12666
  %v12668 = vrot.slane %v11802, 2
  %v12669 = vsel %vm1034, %v12666, %v12668
  %v12670 = vrot.slane %v11803, 2
  %v12671 = vsel %vm1034, %v12668, %v12670
  %v12672 = vrot.slane %v11804, 2
  %v12673 = vsel %vm1034, %v12670, %v12672
  %v12674 = vrot.slane %v11805, 2
  %v12675 = vsel %vm1034, %v12672, %v12674
  %v12676 = vrot.slane %v11806, 2
  %v12677 = vsel %vm1034, %v12674, %v12676
  %v12678 = vrot.slane %v11807, 2
  %v12679 = vsel %vm1034, %v12676, %v12678
  %v12680 = vrot.slane %v11808, 2
  %v12681 = vsel %vm1034, %v12678, %v12680
  %v12682 = vrot.slane %v11809, 2
  %v12683 = vsel %vm1034, %v12680, %v12682
  %v12684 = vrot.slane %v11810, 2
  %v12685 = vsel %vm1034, %v12682, %v12684
  %v12686 = vrot.slane %v11811, 2
  %v12687 = vsel %vm1034, %v12684, %v12686
  %v12688 = vrot.slane %v11812, 2
  %v12689 = vsel %vm1034, %v12686, %v12688
  %v12690 = vrot.slane %v11813, 2
  %v12691 = vsel %vm1034, %v12688, %v12690
  %v12692 = vrot.slane %v11814, 2
  %v12693 = vsel %vm1034, %v12690, %v12692
  %v12694 = vrot.slane %v11815, 2
  %v12695 = vsel %vm1034, %v12692, %v12694
  %v12696 = vrot.slane %v11816, 2
  %v12697 = vsel %vm1034, %v12694, %v12696
  %v12698 = vrot.slane %v11817, 2
  %v12699 = vsel %vm1034, %v12696, %v12698
  %v12700 = vrot.slane %v11818, 2
  %v12701 = vsel %vm1034, %v12698, %v12700
  %v12702 = vrot.slane %v11819, 2
  %v12703 = vsel %vm1034, %v12700, %v12702
  %v12704 = vrot.slane %v11820, 2
  %v12705 = vsel %vm1034, %v12702, %v12704
  %v12706 = vrot.slane %v11821, 2
  %v12707 = vsel %vm1034, %v12704, %v12706
  %v12708 = vrot.slane %v11822, 2
  %v12709 = vsel %vm1034, %v12706, %v12708
  %v12710 = vrot.slane %v11823, 2
  %v12711 = vsel %vm1034, %v12708, %v12710
  %v12712 = vrot.slane %v11824, 2
  %v12713 = vsel %vm1034, %v12710, %v12712
  %v12714 = vrot.slane %v11825, 2
  %v12715 = vsel %vm1034, %v12712, %v12714
  %v12716 = vrot.slane %v11826, 2
  %v12717 = vsel %vm1034, %v12714, %v12716
  %v12718 = vrot.slane %v11827, 2
  %v12719 = vsel %vm1034, %v12716, %v12718
  %v12720 = vrot.slane %v11828, 2
  %v12721 = vsel %vm1034, %v12718, %v12720
  %v12722 = vrot.slane %v11829, 2
  %v12723 = vsel %vm1034, %v12720, %v12722
  %v12724 = vrot.slane %v11830, 2
  %v12725 = vsel %vm1034, %v12722, %v12724
  %v12726 = vrot.slane %v11831, 2
  %v12727 = vsel %vm1034, %v12724, %v12726
  %v12728 = vrot.slane %v11832, 2
  %v12729 = vsel %vm1034, %v12726, %v12728
  %v12730 = vrot.slane %v11833, 2
  %v12731 = vsel %vm1034, %v12728, %v12730
  %v12732 = vrot.slane %v11834, 2
  %v12733 = vsel %vm1034, %v12730, %v12732
  %v12734 = vrot.slane %v11835, 2
  %v12735 = vsel %vm1034, %v12732, %v12734
  %v12736 = vrot.slane %v11836, 2
  %v12737 = vsel %vm1034, %v12734, %v12736
  %v12738 = vrot.slane %v11837, 2
  %v12739 = vsel %vm1034, %v12736, %v12738
  %v12740 = vrot.slane %v11838, 2
  %v12741 = vsel %vm1034, %v12738, %v12740
  %v12742 = vrot.slane %v11839, 2
  %v12743 = vsel %vm1034, %v12740, %v12742
  %v12744 = vrot.slane %v11840, 2
  %v12745 = vsel %vm1034, %v12742, %v12744
  %v12746 = vrot.slane %v11841, 2
  %v12747 = vsel %vm1034, %v12744, %v12746
  %v12748 = vrot.slane %v11842, 2
  %v12749 = vsel %vm1034, %v12746, %v12748
  %v12750 = vrot.slane %v11843, 2
  %v12751 = vsel %vm1034, %v12748, %v12750
  %v12752 = vrot.slane %v11844, 2
  %v12753 = vsel %vm1034, %v12750, %v12752
  %v12754 = vrot.slane %v11845, 2
  %v12755 = vsel %vm1034, %v12752, %v12754
  %v12756 = vrot.slane %v11846, 2
  %v12757 = vsel %vm1034, %v12754, %v12756
  %v12758 = vrot.slane %v11847, 2
  %v12759 = vsel %vm1034, %v12756, %v12758
  %v12760 = vrot.slane %v11848, 2
  %v12761 = vsel %vm1034, %v12758, %v12760
  %v12762 = vrot.slane %v11849, 2
  %v12763 = vsel %vm1034, %v12760, %v12762
  %v12764 = vrot.slane %v11850, 2
  %v12765 = vsel %vm1034, %v12762, %v12764
  %v12766 = vrot.slane %v11851, 2
  %v12767 = vsel %vm1034, %v12764, %v12766
  %v12768 = vrot.slane %v11852, 2
  %v12769 = vsel %vm1034, %v12766, %v12768
  %v12770 = vrot.slane %v11853, 2
  %v12771 = vsel %vm1034, %v12768, %v12770
  %v12772 = vrot.slane %v11854, 2
  %v12773 = vsel %vm1034, %v12770, %v12772
  %v12774 = vrot.slane %v11855, 2
  %v12775 = vsel %vm1034, %v12772, %v12774
  %v12776 = vrot.slane %v11856, 2
  %v12777 = vsel %vm1034, %v12774, %v12776
  %v12778 = vrot.slane %v11857, 2
  %v12779 = vsel %vm1034, %v12776, %v12778
  %v12912 = vmax.f32 %v12385, %v12519
  %v12913 = vmax.f32 %v12386, %v12521
  %v12914 = vmax.f32 %v12387, %v12523
  %v12915 = vmax.f32 %v12388, %v12525
  %v12916 = vmax.f32 %v12389, %v12527
  %v12917 = vmax.f32 %v12390, %v12529
  %v12918 = vmax.f32 %v12391, %v12531
  %v12919 = vmax.f32 %v12392, %v12533
  %v12920 = vmax.f32 %v12393, %v12535
  %v12921 = vmax.f32 %v12394, %v12537
  %v12922 = vmax.f32 %v12395, %v12539
  %v12923 = vmax.f32 %v12396, %v12541
  %v12924 = vmax.f32 %v12397, %v12543
  %v12925 = vmax.f32 %v12398, %v12545
  %v12926 = vmax.f32 %v12399, %v12547
  %v12927 = vmax.f32 %v12400, %v12549
  %v12928 = vmax.f32 %v12401, %v12551
  %v12929 = vmax.f32 %v12402, %v12553
  %v12930 = vmax.f32 %v12403, %v12555
  %v12931 = vmax.f32 %v12404, %v12557
  %v12932 = vmax.f32 %v12405, %v12559
  %v12933 = vmax.f32 %v12406, %v12561
  %v12934 = vmax.f32 %v12407, %v12563
  %v12935 = vmax.f32 %v12408, %v12565
  %v12936 = vmax.f32 %v12409, %v12567
  %v12937 = vmax.f32 %v12410, %v12569
  %v12938 = vmax.f32 %v12411, %v12571
  %v12939 = vmax.f32 %v12412, %v12573
  %v12940 = vmax.f32 %v12413, %v12575
  %v12941 = vmax.f32 %v12414, %v12577
  %v12942 = vmax.f32 %v12415, %v12579
  %v12943 = vmax.f32 %v12416, %v12581
  %v12944 = vmax.f32 %v12417, %v12583
  %v12945 = vmax.f32 %v12418, %v12585
  %v12946 = vmax.f32 %v12419, %v12587
  %v12947 = vmax.f32 %v12420, %v12589
  %v12948 = vmax.f32 %v12421, %v12591
  %v12949 = vmax.f32 %v12422, %v12593
  %v12950 = vmax.f32 %v12423, %v12595
  %v12951 = vmax.f32 %v12424, %v12597
  %v12952 = vmax.f32 %v12425, %v12599
  %v12953 = vmax.f32 %v12426, %v12601
  %v12954 = vmax.f32 %v12427, %v12603
  %v12955 = vmax.f32 %v12428, %v12605
  %v12956 = vmax.f32 %v12429, %v12607
  %v12957 = vmax.f32 %v12430, %v12609
  %v12958 = vmax.f32 %v12431, %v12611
  %v12959 = vmax.f32 %v12432, %v12613
  %v12960 = vmax.f32 %v12433, %v12615
  %v12961 = vmax.f32 %v12434, %v12617
  %v12962 = vmax.f32 %v12435, %v12619
  %v12963 = vmax.f32 %v12436, %v12621
  %v12964 = vmax.f32 %v12437, %v12623
  %v12965 = vmax.f32 %v12438, %v12625
  %v12966 = vmax.f32 %v12439, %v12627
  %v12967 = vmax.f32 %v12440, %v12629
  %v12968 = vmax.f32 %v12441, %v12631
  %v12969 = vmax.f32 %v12442, %v12633
  %v12970 = vmax.f32 %v12443, %v12635
  %v12971 = vmax.f32 %v12444, %v12637
  %v12972 = vmax.f32 %v12445, %v12639
  %v12973 = vmax.f32 %v12446, %v12641
  %v12974 = vmax.f32 %v12447, %v12643
  %v12975 = vmax.f32 %v12448, %v12645
  %v12976 = vmax.f32 %v12449, %v12647
  %v12977 = vmax.f32 %v12450, %v12649
  %v12978 = vmax.f32 %v12451, %v12651
  %v12979 = vmax.f32 %v12452, %v12653
  %v12980 = vmax.f32 %v12453, %v12655
  %v12981 = vmax.f32 %v12454, %v12657
  %v12982 = vmax.f32 %v12455, %v12659
  %v12983 = vmax.f32 %v12456, %v12661
  %v12984 = vmax.f32 %v12457, %v12663
  %v12985 = vmax.f32 %v12458, %v12665
  %v12986 = vmax.f32 %v12459, %v12667
  %v12987 = vmax.f32 %v12460, %v12669
  %v12988 = vmax.f32 %v12461, %v12671
  %v12989 = vmax.f32 %v12462, %v12673
  %v12990 = vmax.f32 %v12463, %v12675
  %v12991 = vmax.f32 %v12464, %v12677
  %v12992 = vmax.f32 %v12465, %v12679
  %v12993 = vmax.f32 %v12466, %v12681
  %v12994 = vmax.f32 %v12467, %v12683
  %v12995 = vmax.f32 %v12468, %v12685
  %v12996 = vmax.f32 %v12469, %v12687
  %v12997 = vmax.f32 %v12470, %v12689
  %v12998 = vmax.f32 %v12471, %v12691
  %v12999 = vmax.f32 %v12472, %v12693
  %v13000 = vmax.f32 %v12473, %v12695
  %v13001 = vmax.f32 %v12474, %v12697
  %v13002 = vmax.f32 %v12475, %v12699
  %v13003 = vmax.f32 %v12476, %v12701
  %v13004 = vmax.f32 %v12477, %v12703
  %v13005 = vmax.f32 %v12478, %v12705
  %v13006 = vmax.f32 %v12479, %v12707
  %v13007 = vmax.f32 %v12480, %v12709
  %v13008 = vmax.f32 %v12481, %v12711
  %v13009 = vmax.f32 %v12482, %v12713
  %v13010 = vmax.f32 %v12483, %v12715
  %v13011 = vmax.f32 %v12484, %v12717
  %v13012 = vmax.f32 %v12485, %v12719
  %v13013 = vmax.f32 %v12486, %v12721
  %v13014 = vmax.f32 %v12487, %v12723
  %v13015 = vmax.f32 %v12488, %v12725
  %v13016 = vmax.f32 %v12489, %v12727
  %v13017 = vmax.f32 %v12490, %v12729
  %v13018 = vmax.f32 %v12491, %v12731
  %v13019 = vmax.f32 %v12492, %v12733
  %v13020 = vmax.f32 %v12493, %v12735
  %v13021 = vmax.f32 %v12494, %v12737
  %v13022 = vmax.f32 %v12495, %v12739
  %v13023 = vmax.f32 %v12496, %v12741
  %v13024 = vmax.f32 %v12497, %v12743
  %v13025 = vmax.f32 %v12498, %v12745
  %v13026 = vmax.f32 %v12499, %v12747
  %v13027 = vmax.f32 %v12500, %v12749
  %v13028 = vmax.f32 %v12501, %v12751
  %v13029 = vmax.f32 %v12502, %v12753
  %v13030 = vmax.f32 %v12503, %v12755
  %v13031 = vmax.f32 %v12504, %v12757
  %v13032 = vmax.f32 %v12505, %v12759
  %v13033 = vmax.f32 %v12506, %v12761
  %v13034 = vmax.f32 %v12507, %v12763
  %v13035 = vmax.f32 %v12508, %v12765
  %v13036 = vmax.f32 %v12509, %v12767
  %v13037 = vmax.f32 %v12510, %v12769
  %v13038 = vmax.f32 %v12511, %v12771
  %v13039 = vmax.f32 %v12512, %v12773
  %v13040 = vmax.f32 %v12513, %v12775
  %v13041 = vmax.f32 %v12514, %v12777
  %v13042 = vmax.f32 %v12515, %v12779
  %v13043 = vmax.f32 %v12516, %v12778
  %v13044 = vmax.f32 %v12912, %v12915
  %v13045 = vmax.f32 %v12913, %v12916
  %v13046 = vmax.f32 %v12914, %v12917
  %v13047 = vmax.f32 %v12915, %v12918
  %v13048 = vmax.f32 %v12916, %v12919
  %v13049 = vmax.f32 %v12917, %v12920
  %v13050 = vmax.f32 %v12918, %v12921
  %v13051 = vmax.f32 %v12919, %v12922
  %v13052 = vmax.f32 %v12920, %v12923
  %v13053 = vmax.f32 %v12921, %v12924
  %v13054 = vmax.f32 %v12922, %v12925
  %v13055 = vmax.f32 %v12923, %v12926
  %v13056 = vmax.f32 %v12924, %v12927
  %v13057 = vmax.f32 %v12925, %v12928
  %v13058 = vmax.f32 %v12926, %v12929
  %v13059 = vmax.f32 %v12927, %v12930
  %v13060 = vmax.f32 %v12928, %v12931
  %v13061 = vmax.f32 %v12929, %v12932
  %v13062 = vmax.f32 %v12930, %v12933
  %v13063 = vmax.f32 %v12931, %v12934
  %v13064 = vmax.f32 %v12932, %v12935
  %v13065 = vmax.f32 %v12933, %v12936
  %v13066 = vmax.f32 %v12934, %v12937
  %v13067 = vmax.f32 %v12935, %v12938
  %v13068 = vmax.f32 %v12936, %v12939
  %v13069 = vmax.f32 %v12937, %v12940
  %v13070 = vmax.f32 %v12938, %v12941
  %v13071 = vmax.f32 %v12939, %v12942
  %v13072 = vmax.f32 %v12940, %v12943
  %v13073 = vmax.f32 %v12941, %v12944
  %v13074 = vmax.f32 %v12942, %v12945
  %v13075 = vmax.f32 %v12943, %v12946
  %v13076 = vmax.f32 %v12944, %v12947
  %v13077 = vmax.f32 %v12945, %v12948
  %v13078 = vmax.f32 %v12946, %v12949
  %v13079 = vmax.f32 %v12947, %v12950
  %v13080 = vmax.f32 %v12948, %v12951
  %v13081 = vmax.f32 %v12949, %v12952
  %v13082 = vmax.f32 %v12950, %v12953
  %v13083 = vmax.f32 %v12951, %v12954
  %v13084 = vmax.f32 %v12952, %v12955
  %v13085 = vmax.f32 %v12953, %v12956
  %v13086 = vmax.f32 %v12954, %v12957
  %v13087 = vmax.f32 %v12955, %v12958
  %v13088 = vmax.f32 %v12956, %v12959
  %v13089 = vmax.f32 %v12957, %v12960
  %v13090 = vmax.f32 %v12958, %v12961
  %v13091 = vmax.f32 %v12959, %v12962
  %v13092 = vmax.f32 %v12960, %v12963
  %v13093 = vmax.f32 %v12961, %v12964
  %v13094 = vmax.f32 %v12962, %v12965
  %v13095 = vmax.f32 %v12963, %v12966
  %v13096 = vmax.f32 %v12964, %v12967
  %v13097 = vmax.f32 %v12965, %v12968
  %v13098 = vmax.f32 %v12966, %v12969
  %v13099 = vmax.f32 %v12967, %v12970
  %v13100 = vmax.f32 %v12968, %v12971
  %v13101 = vmax.f32 %v12969, %v12972
  %v13102 = vmax.f32 %v12970, %v12973
  %v13103 = vmax.f32 %v12971, %v12974
  %v13104 = vmax.f32 %v12972, %v12975
  %v13105 = vmax.f32 %v12973, %v12976
  %v13106 = vmax.f32 %v12974, %v12977
  %v13107 = vmax.f32 %v12975, %v12978
  %v13108 = vmax.f32 %v12976, %v12979
  %v13109 = vmax.f32 %v12977, %v12980
  %v13110 = vmax.f32 %v12978, %v12981
  %v13111 = vmax.f32 %v12979, %v12982
  %v13112 = vmax.f32 %v12980, %v12983
  %v13113 = vmax.f32 %v12981, %v12984
  %v13114 = vmax.f32 %v12982, %v12985
  %v13115 = vmax.f32 %v12983, %v12986
  %v13116 = vmax.f32 %v12984, %v12987
  %v13117 = vmax.f32 %v12985, %v12988
  %v13118 = vmax.f32 %v12986, %v12989
  %v13119 = vmax.f32 %v12987, %v12990
  %v13120 = vmax.f32 %v12988, %v12991
  %v13121 = vmax.f32 %v12989, %v12992
  %v13122 = vmax.f32 %v12990, %v12993
  %v13123 = vmax.f32 %v12991, %v12994
  %v13124 = vmax.f32 %v12992, %v12995
  %v13125 = vmax.f32 %v12993, %v12996
  %v13126 = vmax.f32 %v12994, %v12997
  %v13127 = vmax.f32 %v12995, %v12998
  %v13128 = vmax.f32 %v12996, %v12999
  %v13129 = vmax.f32 %v12997, %v13000
  %v13130 = vmax.f32 %v12998, %v13001
  %v13131 = vmax.f32 %v12999, %v13002
  %v13132 = vmax.f32 %v13000, %v13003
  %v13133 = vmax.f32 %v13001, %v13004
  %v13134 = vmax.f32 %v13002, %v13005
  %v13135 = vmax.f32 %v13003, %v13006
  %v13136 = vmax.f32 %v13004, %v13007
  %v13137 = vmax.f32 %v13005, %v13008
  %v13138 = vmax.f32 %v13006, %v13009
  %v13139 = vmax.f32 %v13007, %v13010
  %v13140 = vmax.f32 %v13008, %v13011
  %v13141 = vmax.f32 %v13009, %v13012
  %v13142 = vmax.f32 %v13010, %v13013
  %v13143 = vmax.f32 %v13011, %v13014
  %v13144 = vmax.f32 %v13012, %v13015
  %v13145 = vmax.f32 %v13013, %v13016
  %v13146 = vmax.f32 %v13014, %v13017
  %v13147 = vmax.f32 %v13015, %v13018
  %v13148 = vmax.f32 %v13016, %v13019
  %v13149 = vmax.f32 %v13017, %v13020
  %v13150 = vmax.f32 %v13018, %v13021
  %v13151 = vmax.f32 %v13019, %v13022
  %v13152 = vmax.f32 %v13020, %v13023
  %v13153 = vmax.f32 %v13021, %v13024
  %v13154 = vmax.f32 %v13022, %v13025
  %v13155 = vmax.f32 %v13023, %v13026
  %v13156 = vmax.f32 %v13024, %v13027
  %v13157 = vmax.f32 %v13025, %v13028
  %v13158 = vmax.f32 %v13026, %v13029
  %v13159 = vmax.f32 %v13027, %v13030
  %v13160 = vmax.f32 %v13028, %v13031
  %v13161 = vmax.f32 %v13029, %v13032
  %v13162 = vmax.f32 %v13030, %v13033
  %v13163 = vmax.f32 %v13031, %v13034
  %v13164 = vmax.f32 %v13032, %v13035
  %v13165 = vmax.f32 %v13033, %v13036
  %v13166 = vmax.f32 %v13034, %v13037
  %v13167 = vmax.f32 %v13035, %v13038
  %v13168 = vmax.f32 %v13036, %v13039
  %v13169 = vmax.f32 %v13037, %v13040
  %v13170 = vmax.f32 %v13044, %v12918
  %v13171 = vmax.f32 %v13045, %v12919
  %v13172 = vmax.f32 %v13046, %v12920
  %v13173 = vmax.f32 %v13047, %v12921
  %v13174 = vmax.f32 %v13048, %v12922
  %v13175 = vmax.f32 %v13049, %v12923
  %v13176 = vmax.f32 %v13050, %v12924
  %v13177 = vmax.f32 %v13051, %v12925
  %v13178 = vmax.f32 %v13052, %v12926
  %v13179 = vmax.f32 %v13053, %v12927
  %v13180 = vmax.f32 %v13054, %v12928
  %v13181 = vmax.f32 %v13055, %v12929
  %v13182 = vmax.f32 %v13056, %v12930
  %v13183 = vmax.f32 %v13057, %v12931
  %v13184 = vmax.f32 %v13058, %v12932
  %v13185 = vmax.f32 %v13059, %v12933
  %v13186 = vmax.f32 %v13060, %v12934
  %v13187 = vmax.f32 %v13061, %v12935
  %v13188 = vmax.f32 %v13062, %v12936
  %v13189 = vmax.f32 %v13063, %v12937
  %v13190 = vmax.f32 %v13064, %v12938
  %v13191 = vmax.f32 %v13065, %v12939
  %v13192 = vmax.f32 %v13066, %v12940
  %v13193 = vmax.f32 %v13067, %v12941
  %v13194 = vmax.f32 %v13068, %v12942
  %v13195 = vmax.f32 %v13069, %v12943
  %v13196 = vmax.f32 %v13070, %v12944
  %v13197 = vmax.f32 %v13071, %v12945
  %v13198 = vmax.f32 %v13072, %v12946
  %v13199 = vmax.f32 %v13073, %v12947
  %v13200 = vmax.f32 %v13074, %v12948
  %v13201 = vmax.f32 %v13075, %v12949
  %v13202 = vmax.f32 %v13076, %v12950
  %v13203 = vmax.f32 %v13077, %v12951
  %v13204 = vmax.f32 %v13078, %v12952
  %v13205 = vmax.f32 %v13079, %v12953
  %v13206 = vmax.f32 %v13080, %v12954
  %v13207 = vmax.f32 %v13081, %v12955
  %v13208 = vmax.f32 %v13082, %v12956
  %v13209 = vmax.f32 %v13083, %v12957
  %v13210 = vmax.f32 %v13084, %v12958
  %v13211 = vmax.f32 %v13085, %v12959
  %v13212 = vmax.f32 %v13086, %v12960
  %v13213 = vmax.f32 %v13087, %v12961
  %v13214 = vmax.f32 %v13088, %v12962
  %v13215 = vmax.f32 %v13089, %v12963
  %v13216 = vmax.f32 %v13090, %v12964
  %v13217 = vmax.f32 %v13091, %v12965
  %v13218 = vmax.f32 %v13092, %v12966
  %v13219 = vmax.f32 %v13093, %v12967
  %v13220 = vmax.f32 %v13094, %v12968
  %v13221 = vmax.f32 %v13095, %v12969
  %v13222 = vmax.f32 %v13096, %v12970
  %v13223 = vmax.f32 %v13097, %v12971
  %v13224 = vmax.f32 %v13098, %v12972
  %v13225 = vmax.f32 %v13099, %v12973
  %v13226 = vmax.f32 %v13100, %v12974
  %v13227 = vmax.f32 %v13101, %v12975
  %v13228 = vmax.f32 %v13102, %v12976
  %v13229 = vmax.f32 %v13103, %v12977
  %v13230 = vmax.f32 %v13104, %v12978
  %v13231 = vmax.f32 %v13105, %v12979
  %v13232 = vmax.f32 %v13106, %v12980
  %v13233 = vmax.f32 %v13107, %v12981
  %v13234 = vmax.f32 %v13108, %v12982
  %v13235 = vmax.f32 %v13109, %v12983
  %v13236 = vmax.f32 %v13110, %v12984
  %v13237 = vmax.f32 %v13111, %v12985
  %v13238 = vmax.f32 %v13112, %v12986
  %v13239 = vmax.f32 %v13113, %v12987
  %v13240 = vmax.f32 %v13114, %v12988
  %v13241 = vmax.f32 %v13115, %v12989
  %v13242 = vmax.f32 %v13116, %v12990
  %v13243 = vmax.f32 %v13117, %v12991
  %v13244 = vmax.f32 %v13118, %v12992
  %v13245 = vmax.f32 %v13119, %v12993
  %v13246 = vmax.f32 %v13120, %v12994
  %v13247 = vmax.f32 %v13121, %v12995
  %v13248 = vmax.f32 %v13122, %v12996
  %v13249 = vmax.f32 %v13123, %v12997
  %v13250 = vmax.f32 %v13124, %v12998
  %v13251 = vmax.f32 %v13125, %v12999
  %v13252 = vmax.f32 %v13126, %v13000
  %v13253 = vmax.f32 %v13127, %v13001
  %v13254 = vmax.f32 %v13128, %v13002
  %v13255 = vmax.f32 %v13129, %v13003
  %v13256 = vmax.f32 %v13130, %v13004
  %v13257 = vmax.f32 %v13131, %v13005
  %v13258 = vmax.f32 %v13132, %v13006
  %v13259 = vmax.f32 %v13133, %v13007
  %v13260 = vmax.f32 %v13134, %v13008
  %v13261 = vmax.f32 %v13135, %v13009
  %v13262 = vmax.f32 %v13136, %v13010
  %v13263 = vmax.f32 %v13137, %v13011
  %v13264 = vmax.f32 %v13138, %v13012
  %v13265 = vmax.f32 %v13139, %v13013
  %v13266 = vmax.f32 %v13140, %v13014
  %v13267 = vmax.f32 %v13141, %v13015
  %v13268 = vmax.f32 %v13142, %v13016
  %v13269 = vmax.f32 %v13143, %v13017
  %v13270 = vmax.f32 %v13144, %v13018
  %v13271 = vmax.f32 %v13145, %v13019
  %v13272 = vmax.f32 %v13146, %v13020
  %v13273 = vmax.f32 %v13147, %v13021
  %v13274 = vmax.f32 %v13148, %v13022
  %v13275 = vmax.f32 %v13149, %v13023
  %v13276 = vmax.f32 %v13150, %v13024
  %v13277 = vmax.f32 %v13151, %v13025
  %v13278 = vmax.f32 %v13152, %v13026
  %v13279 = vmax.f32 %v13153, %v13027
  %v13280 = vmax.f32 %v13154, %v13028
  %v13281 = vmax.f32 %v13155, %v13029
  %v13282 = vmax.f32 %v13156, %v13030
  %v13283 = vmax.f32 %v13157, %v13031
  %v13284 = vmax.f32 %v13158, %v13032
  %v13285 = vmax.f32 %v13159, %v13033
  %v13286 = vmax.f32 %v13160, %v13034
  %v13287 = vmax.f32 %v13161, %v13035
  %v13288 = vmax.f32 %v13162, %v13036
  %v13289 = vmax.f32 %v13163, %v13037
  %v13290 = vmax.f32 %v13164, %v13038
  %v13291 = vmax.f32 %v13165, %v13039
  %v13292 = vmax.f32 %v13166, %v13040
  %v13293 = vmax.f32 %v13167, %v13041
  %v13294 = vmax.f32 %v13168, %v13042
  %v13295 = vmax.f32 %v13169, %v13043
  %13296 = vst.msk [vmem:[#allocation2] sm:$0xff] %vm1899, %v13170
  %13297 = vst.msk [vmem:[#allocation2 + $0x8] sm:$0xff] %vm1899, %v13171
  %13298 = vst.msk [vmem:[#allocation2 + $0x10] sm:$0xff] %vm1899, %v13172
  %13299 = vst.msk [vmem:[#allocation2 + $0x18] sm:$0xff] %vm1899, %v13173
  %13300 = vst.msk [vmem:[#allocation2 + $0x20] sm:$0xff] %vm1899, %v13174
  %13301 = vst.msk [vmem:[#allocation2 + $0x28] sm:$0xff] %vm1899, %v13175
  %13302 = vst.msk [vmem:[#allocation2 + $0x30] sm:$0xff] %vm1899, %v13176
  %13303 = vst.msk [vmem:[#allocation2 + $0x38] sm:$0xff] %vm1899, %v13177
  %13304 = vst.msk [vmem:[#allocation2 + $0x40] sm:$0xff] %vm1899, %v13178
  %13305 = vst.msk [vmem:[#allocation2 + $0x48] sm:$0xff] %vm1899, %v13179
  %13306 = vst.msk [vmem:[#allocation2 + $0x50] sm:$0xff] %vm1899, %v13180
  %13307 = vst.msk [vmem:[#allocation2 + $0x58] sm:$0xff] %vm1899, %v13181
  %13308 = vst.msk [vmem:[#allocation2 + $0x60] sm:$0xff] %vm1899, %v13182
  %13309 = vst.msk [vmem:[#allocation2 + $0x68] sm:$0xff] %vm1899, %v13183
  %13310 = vst.msk [vmem:[#allocation2 + $0x70] sm:$0xff] %vm1899, %v13184
  %13311 = vst.msk [vmem:[#allocation2 + $0x78] sm:$0xff] %vm1899, %v13185
  %13312 = vst.msk [vmem:[#allocation2 + $0x80] sm:$0xff] %vm1899, %v13186
  %13313 = vst.msk [vmem:[#allocation2 + $0x88] sm:$0xff] %vm1899, %v13187
  %13314 = vst.msk [vmem:[#allocation2 + $0x90] sm:$0xff] %vm1899, %v13188
  %13315 = vst.msk [vmem:[#allocation2 + $0x98] sm:$0xff] %vm1899, %v13189
  %13316 = vst.msk [vmem:[#allocation2 + $0xa0] sm:$0xff] %vm1899, %v13190
  %13317 = vst.msk [vmem:[#allocation2 + $0xa8] sm:$0xff] %vm1899, %v13191
  %13318 = vst.msk [vmem:[#allocation2 + $0xb0] sm:$0xff] %vm1899, %v13192
  %13319 = vst.msk [vmem:[#allocation2 + $0xb8] sm:$0xff] %vm1899, %v13193
  %13320 = vst.msk [vmem:[#allocation2 + $0xc0] sm:$0xff] %vm1899, %v13194
  %13321 = vst.msk [vmem:[#allocation2 + $0xc8] sm:$0xff] %vm1899, %v13195
  %13322 = vst.msk [vmem:[#allocation2 + $0xd0] sm:$0xff] %vm1899, %v13196
  %13323 = vst.msk [vmem:[#allocation2 + $0xd8] sm:$0xff] %vm1899, %v13197
  %13324 = vst.msk [vmem:[#allocation2 + $0xe0] sm:$0xff] %vm1899, %v13198
  %13325 = vst.msk [vmem:[#allocation2 + $0xe8] sm:$0xff] %vm1899, %v13199
  %13326 = vst.msk [vmem:[#allocation2 + $0xf0] sm:$0xff] %vm1899, %v13200
  %13327 = vst.msk [vmem:[#allocation2 + $0xf8] sm:$0xff] %vm1899, %v13201
  %13328 = vst.msk [vmem:[#allocation2 + $0x100] sm:$0xff] %vm1899, %v13202
  %13329 = vst.msk [vmem:[#allocation2 + $0x108] sm:$0xff] %vm1899, %v13203
  %13330 = vst.msk [vmem:[#allocation2 + $0x110] sm:$0xff] %vm1899, %v13204
  %13331 = vst.msk [vmem:[#allocation2 + $0x118] sm:$0xff] %vm1899, %v13205
  %13332 = vst.msk [vmem:[#allocation2 + $0x120] sm:$0xff] %vm1899, %v13206
  %13333 = vst.msk [vmem:[#allocation2 + $0x128] sm:$0xff] %vm1899, %v13207
  %13334 = vst.msk [vmem:[#allocation2 + $0x130] sm:$0xff] %vm1899, %v13208
  %13335 = vst.msk [vmem:[#allocation2 + $0x138] sm:$0xff] %vm1899, %v13209
  %13336 = vst.msk [vmem:[#allocation2 + $0x140] sm:$0xff] %vm1899, %v13210
  %13337 = vst.msk [vmem:[#allocation2 + $0x148] sm:$0xff] %vm1899, %v13211
  %13338 = vst.msk [vmem:[#allocation2 + $0x150] sm:$0xff] %vm1899, %v13212
  %13339 = vst.msk [vmem:[#allocation2 + $0x158] sm:$0xff] %vm1899, %v13213
  %13340 = vst.msk [vmem:[#allocation2 + $0x160] sm:$0xff] %vm1899, %v13214
  %13341 = vst.msk [vmem:[#allocation2 + $0x168] sm:$0xff] %vm1899, %v13215
  %13342 = vst.msk [vmem:[#allocation2 + $0x170] sm:$0xff] %vm1899, %v13216
  %13343 = vst.msk [vmem:[#allocation2 + $0x178] sm:$0xff] %vm1899, %v13217
  %13344 = vst.msk [vmem:[#allocation2 + $0x180] sm:$0xff] %vm1899, %v13218
  %13345 = vst.msk [vmem:[#allocation2 + $0x188] sm:$0xff] %vm1899, %v13219
  %13346 = vst.msk [vmem:[#allocation2 + $0x190] sm:$0xff] %vm1899, %v13220
  %13347 = vst.msk [vmem:[#allocation2 + $0x198] sm:$0xff] %vm1899, %v13221
  %13348 = vst.msk [vmem:[#allocation2 + $0x1a0] sm:$0xff] %vm1899, %v13222
  %13349 = vst.msk [vmem:[#allocation2 + $0x1a8] sm:$0xff] %vm1899, %v13223
  %13350 = vst.msk [vmem:[#allocation2 + $0x1b0] sm:$0xff] %vm1899, %v13224
  %13351 = vst.msk [vmem:[#allocation2 + $0x1b8] sm:$0xff] %vm1899, %v13225
  %13352 = vst.msk [vmem:[#allocation2 + $0x1c0] sm:$0xff] %vm1899, %v13226
  %13353 = vst.msk [vmem:[#allocation2 + $0x1c8] sm:$0xff] %vm1899, %v13227
  %13354 = vst.msk [vmem:[#allocation2 + $0x1d0] sm:$0xff] %vm1899, %v13228
  %13355 = vst.msk [vmem:[#allocation2 + $0x1d8] sm:$0xff] %vm1899, %v13229
  %13356 = vst.msk [vmem:[#allocation2 + $0x1e0] sm:$0xff] %vm1899, %v13230
  %13357 = vst.msk [vmem:[#allocation2 + $0x1e8] sm:$0xff] %vm1899, %v13231
  %13358 = vst.msk [vmem:[#allocation2 + $0x1f0] sm:$0xff] %vm1899, %v13232
  %13359 = vst.msk [vmem:[#allocation2 + $0x1f8] sm:$0xff] %vm1899, %v13233
  %13360 = vst.msk [vmem:[#allocation2 + $0x200] sm:$0xff] %vm1899, %v13234
  %13361 = vst.msk [vmem:[#allocation2 + $0x208] sm:$0xff] %vm1899, %v13235
  %13362 = vst.msk [vmem:[#allocation2 + $0x210] sm:$0xff] %vm1899, %v13236
  %13363 = vst.msk [vmem:[#allocation2 + $0x218] sm:$0xff] %vm1899, %v13237
  %13364 = vst.msk [vmem:[#allocation2 + $0x220] sm:$0xff] %vm1899, %v13238
  %13365 = vst.msk [vmem:[#allocation2 + $0x228] sm:$0xff] %vm1899, %v13239
  %13366 = vst.msk [vmem:[#allocation2 + $0x230] sm:$0xff] %vm1899, %v13240
  %13367 = vst.msk [vmem:[#allocation2 + $0x238] sm:$0xff] %vm1899, %v13241
  %13368 = vst.msk [vmem:[#allocation2 + $0x240] sm:$0xff] %vm1899, %v13242
  %13369 = vst.msk [vmem:[#allocation2 + $0x248] sm:$0xff] %vm1899, %v13243
  %13370 = vst.msk [vmem:[#allocation2 + $0x250] sm:$0xff] %vm1899, %v13244
  %13371 = vst.msk [vmem:[#allocation2 + $0x258] sm:$0xff] %vm1899, %v13245
  %13372 = vst.msk [vmem:[#allocation2 + $0x260] sm:$0xff] %vm1899, %v13246
  %13373 = vst.msk [vmem:[#allocation2 + $0x268] sm:$0xff] %vm1899, %v13247
  %13374 = vst.msk [vmem:[#allocation2 + $0x270] sm:$0xff] %vm1899, %v13248
  %13375 = vst.msk [vmem:[#allocation2 + $0x278] sm:$0xff] %vm1899, %v13249
  %13376 = vst.msk [vmem:[#allocation2 + $0x280] sm:$0xff] %vm1899, %v13250
  %13377 = vst.msk [vmem:[#allocation2 + $0x288] sm:$0xff] %vm1899, %v13251
  %13378 = vst.msk [vmem:[#allocation2 + $0x290] sm:$0xff] %vm1899, %v13252
  %13379 = vst.msk [vmem:[#allocation2 + $0x298] sm:$0xff] %vm1899, %v13253
  %13380 = vst.msk [vmem:[#allocation2 + $0x2a0] sm:$0xff] %vm1899, %v13254
  %13381 = vst.msk [vmem:[#allocation2 + $0x2a8] sm:$0xff] %vm1899, %v13255
  %13382 = vst.msk [vmem:[#allocation2 + $0x2b0] sm:$0xff] %vm1899, %v13256
  %13383 = vst.msk [vmem:[#allocation2 + $0x2b8] sm:$0xff] %vm1899, %v13257
  %13384 = vst.msk [vmem:[#allocation2 + $0x2c0] sm:$0xff] %vm1899, %v13258
  %13385 = vst.msk [vmem:[#allocation2 + $0x2c8] sm:$0xff] %vm1899, %v13259
  %13386 = vst.msk [vmem:[#allocation2 + $0x2d0] sm:$0xff] %vm1899, %v13260
  %13387 = vst.msk [vmem:[#allocation2 + $0x2d8] sm:$0xff] %vm1899, %v13261
  %13388 = vst.msk [vmem:[#allocation2 + $0x2e0] sm:$0xff] %vm1899, %v13262
  %13389 = vst.msk [vmem:[#allocation2 + $0x2e8] sm:$0xff] %vm1899, %v13263
  %13390 = vst.msk [vmem:[#allocation2 + $0x2f0] sm:$0xff] %vm1899, %v13264
  %13391 = vst.msk [vmem:[#allocation2 + $0x2f8] sm:$0xff] %vm1899, %v13265
  %13392 = vst.msk [vmem:[#allocation2 + $0x300] sm:$0xff] %vm1899, %v13266
  %13393 = vst.msk [vmem:[#allocation2 + $0x308] sm:$0xff] %vm1899, %v13267
  %13394 = vst.msk [vmem:[#allocation2 + $0x310] sm:$0xff] %vm1899, %v13268
  %13395 = vst.msk [vmem:[#allocation2 + $0x318] sm:$0xff] %vm1899, %v13269
  %13396 = vst.msk [vmem:[#allocation2 + $0x320] sm:$0xff] %vm1899, %v13270
  %13397 = vst.msk [vmem:[#allocation2 + $0x328] sm:$0xff] %vm1899, %v13271
  %13398 = vst.msk [vmem:[#allocation2 + $0x330] sm:$0xff] %vm1899, %v13272
  %13399 = vst.msk [vmem:[#allocation2 + $0x338] sm:$0xff] %vm1899, %v13273
  %13400 = vst.msk [vmem:[#allocation2 + $0x340] sm:$0xff] %vm1899, %v13274
  %13401 = vst.msk [vmem:[#allocation2 + $0x348] sm:$0xff] %vm1899, %v13275
  %13402 = vst.msk [vmem:[#allocation2 + $0x350] sm:$0xff] %vm1899, %v13276
  %13403 = vst.msk [vmem:[#allocation2 + $0x358] sm:$0xff] %vm1899, %v13277
  %13404 = vst.msk [vmem:[#allocation2 + $0x360] sm:$0xff] %vm1899, %v13278
  %13405 = vst.msk [vmem:[#allocation2 + $0x368] sm:$0xff] %vm1899, %v13279
  %13406 = vst.msk [vmem:[#allocation2 + $0x370] sm:$0xff] %vm1899, %v13280
  %13407 = vst.msk [vmem:[#allocation2 + $0x378] sm:$0xff] %vm1899, %v13281
  %13408 = vst.msk [vmem:[#allocation2 + $0x380] sm:$0xff] %vm1899, %v13282
  %13409 = vst.msk [vmem:[#allocation2 + $0x388] sm:$0xff] %vm1899, %v13283
  %13410 = vst.msk [vmem:[#allocation2 + $0x390] sm:$0xff] %vm1899, %v13284
  %13411 = vst.msk [vmem:[#allocation2 + $0x398] sm:$0xff] %vm1899, %v13285
  %13412 = vst.msk [vmem:[#allocation2 + $0x3a0] sm:$0xff] %vm1899, %v13286
  %13413 = vst.msk [vmem:[#allocation2 + $0x3a8] sm:$0xff] %vm1899, %v13287
  %13414 = vst.msk [vmem:[#allocation2 + $0x3b0] sm:$0xff] %vm1899, %v13288
  %13415 = vst.msk [vmem:[#allocation2 + $0x3b8] sm:$0xff] %vm1899, %v13289
  %13416 = vst.msk [vmem:[#allocation2 + $0x3c0] sm:$0xff] %vm1899, %v13290
  %13417 = vst.msk [vmem:[#allocation2 + $0x3c8] sm:$0xff] %vm1899, %v13291
  %13418 = vst.msk [vmem:[#allocation2 + $0x3d0] sm:$0xff] %vm1899, %v13292
  %13419 = vst.msk [vmem:[#allocation2 + $0x3d8] sm:$0xff] %vm1899, %v13293
  %13420 = vst.msk [vmem:[#allocation2 + $0x3e0] sm:$0xff] %vm1899, %v13294
  %vm13421 = vcmask 58368
  %13422 = vst.msk [vmem:[#allocation2 + $0x3e8] sm:$0x3] %vm13421, %v13295
  %v13423 = vld [vmem:[#allocation2] ss:$3 sm:$0x3f]
  %vm13424 = vcmask 62464
  %13425 = vst.msk [vmem:[%s7] sm:$0x3f] %vm13424, %v13423
  %s13426 = scalar_lea.vmem [#allocation2], 72
  %v13427 = vld [vmem:[%s13426] ss:$3 sm:$0x3f]
  %13428 = vst.msk [vmem:[%s7 + $0x6] sm:$0x3f] %vm13424, %v13427
  %s13429 = scalar_lea.vmem [#allocation2], 144
  %v13430 = vld [vmem:[%s13429] ss:$3 sm:$0x3f]
  %13431 = vst.msk [vmem:[%s7 + $0xc] sm:$0x3f] %vm13424, %v13430
  %s13432 = scalar_lea.vmem [#allocation2], 216
  %v13433 = vld [vmem:[%s13432] ss:$3 sm:$0x3f]
  %13434 = vst.msk [vmem:[%s7 + $0x12] sm:$0x3f] %vm13424, %v13433
  %s13435 = scalar_lea.vmem [#allocation2], 288
  %v13436 = vld [vmem:[%s13435] ss:$3 sm:$0x3f]
  %13437 = vst.msk [vmem:[%s7 + $0x18] sm:$0x3f] %vm13424, %v13436
  %s13438 = scalar_lea.vmem [#allocation2], 360
  %v13439 = vld [vmem:[%s13438] ss:$3 sm:$0x3f]
  %13440 = vst.msk [vmem:[%s7 + $0x1e] sm:$0x3f] %vm13424, %v13439
  %s13441 = scalar_lea.vmem [#allocation2], 576
  %v13442 = vld [vmem:[%s13441] ss:$3 sm:$0x3f]
  %s13443 = scalar_lea.vmem %s7, 40
  %13444 = vst.msk [vmem:[%s13443] sm:$0x3f] %vm13424, %v13442
  %s13445 = scalar_lea.vmem [#allocation2], 648
  %v13446 = vld [vmem:[%s13445] ss:$3 sm:$0x3f]
  %13447 = vst.msk [vmem:[%s13443 + $0x6] sm:$0x3f] %vm13424, %v13446
  %s13448 = scalar_lea.vmem [#allocation2], 720
  %v13449 = vld [vmem:[%s13448] ss:$3 sm:$0x3f]
  %13450 = vst.msk [vmem:[%s13443 + $0xc] sm:$0x3f] %vm13424, %v13449
  %s13451 = scalar_lea.vmem [#allocation2], 792
  %v13452 = vld [vmem:[%s13451] ss:$3 sm:$0x3f]
  %13453 = vst.msk [vmem:[%s13443 + $0x12] sm:$0x3f] %vm13424, %v13452
  %s13454 = scalar_lea.vmem [#allocation2], 864
  %v13455 = vld [vmem:[%s13454] ss:$3 sm:$0x3f]
  %13456 = vst.msk [vmem:[%s13443 + $0x18] sm:$0x3f] %vm13424, %v13455
  %s13457 = scalar_lea.vmem [#allocation2], 936
  %v13458 = vld [vmem:[%s13457] ss:$3 sm:$0x3f]
  %13459 = vst.msk [vmem:[%s13443 + $0x1e] sm:$0x3f] %vm13424, %v13458
  // Predicated region
  $region30: #{taenzer_lrlc_block_forward.1} parent=0 // pred_check
    _
  $region31: #{taenzer_lrlc_block_forward.1} parent=0 // pred_check_branch
    %13461 = sbr.rel (0) target = $region33
  $region32: #{taenzer_lrlc_block_forward.1} parent=0 // pred_region
    _
  $region33: #{taenzer_lrlc_block_forward.1} parent=0 // pred_fallthru
    _
  // Predicated region
  $region34: #{taenzer_lrlc_block_forward.1} parent=0 // pred_check
    _
  $region35: #{taenzer_lrlc_block_forward.1} parent=0 // pred_check_branch
    %13463 = sbr.rel (0) target = $region37
  $region36: #{taenzer_lrlc_block_forward.1} parent=0 // pred_region
    _
  $region37: #{taenzer_lrlc_block_forward.1} parent=0 // pred_fallthru
    _

</llo_original>
